<compile_context>
chip_gen: v6e
topology: v6e:2x2x1
jax: 0.10.0
libtpu: 0.0.40
codegen_flags: <defaults>
</compile_context>

<pallas_src>
import functools

import jax
import jax.numpy as jnp
from jax.experimental import pallas as pl
from jax.experimental.pallas import tpu as pltpu

F32 = jnp.float32
BF16 = jnp.bfloat16
EPS = 1e-5
VMEM_LIMIT = 48 * 1024 * 1024


def _round_up(x, m):
    return ((x + m - 1) // m) * m


def _largest_divisor(n, candidates):
    for c in candidates:
        if n % c == 0:
            return c
    return n


# -----------------------------------------------------------------------------
# Fused  activation -> bf16 matmul -> +bias [-> BN stats]  kernels.
# Grid = (M, N, K), K innermost "arbitrary", f32 accumulator in VMEM scratch.
# -----------------------------------------------------------------------------
def _activate(a, act):
    if act == "none":
        return a
    a32 = a.astype(F32)                       # do compare/select in f32 (v5e-safe)
    if act == "leaky":
        a32 = jnp.where(a32 > 0, a32, 0.2 * a32)
    else:                                     # "relu"
        a32 = jnp.maximum(a32, 0.0)
    return a32.astype(BF16)


def _mm_kernel(a_ref, w_ref, b_ref, o_ref, acc_ref, *, act):
    k = pl.program_id(2)

    @pl.when(k == 0)
    def _():
        acc_ref[...] = jnp.zeros_like(acc_ref)

    a = _activate(a_ref[...], act)
    acc_ref[...] += jnp.dot(a, w_ref[...], preferred_element_type=F32)

    @pl.when(k == pl.num_programs(2) - 1)
    def _():
        o_ref[...] = (acc_ref[...] + b_ref[...]).astype(o_ref.dtype)


def _mm_stats_kernel(a_ref, w_ref, b_ref, o_ref, stats_ref, acc_ref, *, act):
    k = pl.program_id(2)

    @pl.when(k == 0)
    def _():
        acc_ref[...] = jnp.zeros_like(acc_ref)

    a = _activate(a_ref[...], act)
    acc_ref[...] += jnp.dot(a, w_ref[...], preferred_element_type=F32)

    @pl.when(k == pl.num_programs(2) - 1)
    def _():
        y = acc_ref[...] + b_ref[...]
        o_ref[...] = y.astype(o_ref.dtype)
        s = jnp.sum(y, axis=0, keepdims=True)
        ss = jnp.sum(y * y, axis=0, keepdims=True)
        stats_ref[0, :, :] = jnp.concatenate([s, ss], axis=0)


def fused_matmul(a, prep, *, act="none", with_stats=False):
    """a: (M, K) -> rows (Mp, Np) bf16 [, per-tile stats (Mb, 2, Np) f32]."""
    M, K = a.shape
    Kp, Np = prep["Kp"], prep["Np"]
    tm = _round_up(M, 8) if M <= 512 else 512
    Mp = _round_up(M, tm)
    tk = Kp if Kp <= 2048 else _largest_divisor(Kp, (2048, 1024, 512, 256, 128))
    tn = 256 if Np % 256 == 0 else 128
    Mb, Nb, Kb = Mp // tm, Np // tn, Kp // tk

    a_p = jnp.pad(a.astype(BF16), ((0, Mp - M), (0, Kp - K)))

    in_specs = [
        pl.BlockSpec((tm, tk), lambda i, j, k: (i, k)),
        pl.BlockSpec((tk, tn), lambda i, j, k: (k, j)),
        pl.BlockSpec((1, tn), lambda i, j, k: (0, j)),
    ]
    cparams = pltpu.CompilerParams(
        dimension_semantics=("parallel", "parallel", "arbitrary"),
        vmem_limit_bytes=VMEM_LIMIT,
    )
    if with_stats:
        return pl.pallas_call(
            functools.partial(_mm_stats_kernel, act=act),
            out_shape=(jax.ShapeDtypeStruct((Mp, Np), BF16),
                       jax.ShapeDtypeStruct((Mb, 2, Np), F32)),
            grid=(Mb, Nb, Kb),
            in_specs=in_specs,
            out_specs=(pl.BlockSpec((tm, tn), lambda i, j, k: (i, j)),
                       pl.BlockSpec((1, 2, tn), lambda i, j, k: (i, 0, j))),
            scratch_shapes=[pltpu.VMEM((tm, tn), F32)],
            compiler_params=cparams,
        )(a_p, prep["w"], prep["b"])

    return pl.pallas_call(
        functools.partial(_mm_kernel, act=act),
        out_shape=jax.ShapeDtypeStruct((Mp, Np), BF16),
        grid=(Mb, Nb, Kb),
        in_specs=in_specs,
        out_specs=pl.BlockSpec((tm, tn), lambda i, j, k: (i, j)),
        scratch_shapes=[pltpu.VMEM((tm, tn), F32)],
        compiler_params=cparams,
    )(a_p, prep["w"], prep["b"])


# -----------------------------------------------------------------------------
# BatchNorm apply (training-mode batch stats, eps=1e-5) on lane-dense rows.
# Stats come from the matmul epilogue; only the tiny scalar math stays in XLA.
# -----------------------------------------------------------------------------
def _bn_apply_kernel(x_ref, s_ref, t_ref, o_ref):
    x = x_ref[...].astype(F32)
    o_ref[...] = (x * s_ref[...] + t_ref[...]).astype(o_ref.dtype)


def bn_apply(rows, stats, gamma, beta, count, real_cols, phases):
    """rows: (Mp, Np) bf16; stats: (Mb, 2, Np) f32 per-tile sums."""
    Mp, Np = rows.shape
    st = jnp.sum(stats, axis=0)                               # (2, Np)
    C = real_cols // phases
    s = st[0, :real_cols].reshape(phases, C).sum(axis=0)      # pool over phases
    ss = st[1, :real_cols].reshape(phases, C).sum(axis=0)
    mean = s / count
    var = ss / count - mean * mean                            # biased variance
    scale_c = gamma.astype(F32) * jax.lax.rsqrt(var + EPS)
    shift_c = beta.astype(F32) - mean * scale_c
    scale = jnp.pad(jnp.tile(scale_c, phases), (0, Np - real_cols)).reshape(1, Np)
    shift = jnp.pad(jnp.tile(shift_c, phases), (0, Np - real_cols)).reshape(1, Np)

    tmb = _largest_divisor(Mp, (512, 256, 128, 64, 32, 16, 8))
    return pl.pallas_call(
        _bn_apply_kernel,
        out_shape=jax.ShapeDtypeStruct((Mp, Np), BF16),
        grid=(Mp // tmb,),
        in_specs=[pl.BlockSpec((tmb, Np), lambda i: (i, 0)),
                  pl.BlockSpec((1, Np), lambda i: (0, 0)),
                  pl.BlockSpec((1, Np), lambda i: (0, 0))],
        out_specs=pl.BlockSpec((tmb, Np), lambda i: (i, 0)),
        compiler_params=pltpu.CompilerParams(
            dimension_semantics=("parallel",), vmem_limit_bytes=VMEM_LIMIT),
    )(rows, scale, shift)


# -----------------------------------------------------------------------------
# Conv / ConvTranspose wrappers (gather in XLA, all heavy compute in Pallas).
# -----------------------------------------------------------------------------
def conv3x3_s1(x, prep, act="none"):
    N, H, W, Cin = x.shape
    x = x.astype(BF16)
    xp = jnp.pad(x, ((0, 0), (1, 1), (1, 1), (0, 0)))
    taps = [xp[:, i:i + H, j:j + W, :] for i in range(3) for j in range(3)]
    col = jnp.concatenate(taps, axis=-1).reshape(N * H * W, 9 * Cin)
    rows = fused_matmul(col, prep, act=act)
    Cout = prep["Cout"]
    return rows[:N * H * W, :Cout].reshape(N, H, W, Cout)


def conv4x4_s2(x, prep, act, bn=None):
    """Conv2d(k=4, s=2, p=1) via space-to-depth -> 2x2/s1 conv (4 taps)."""
    N, H, W, Cin = x.shape
    Ho, Wo = H // 2, W // 2
    M = N * Ho * Wo
    x = x.astype(BF16)
    xp = jnp.pad(x, ((0, 0), (1, 1), (1, 1), (0, 0)))
    s2d = xp.reshape(N, Ho + 1, 2, Wo + 1, 2, Cin).transpose(0, 1, 3, 2, 4, 5)
    s2d = s2d.reshape(N, Ho + 1, Wo + 1, 4 * Cin)
    taps = [s2d[:, di:di + Ho, dj:dj + Wo, :] for di in (0, 1) for dj in (0, 1)]
    col = jnp.concatenate(taps, axis=-1).reshape(M, 16 * Cin)
    Cout = prep["Cout"]
    if bn is None:
        rows = fused_matmul(col, prep, act=act)
    else:
        rows, stats = fused_matmul(col, prep, act=act, with_stats=True)
        rows = bn_apply(rows, stats, bn[0], bn[1], count=M, real_cols=Cout, phases=1)
    return rows[:M, :Cout].reshape(N, Ho, Wo, Cout)


def convT4x4_s2(x, prep, act, bn=None):
    """ConvTranspose2d(k=4, s=2, p=1) as ONE matmul: shared 3x3-tap im2col
    (K = 9*Cin) x phase-concatenated weights (N = 4*Cout), then depth-to-space."""
    N, H, W, Cin = x.shape
    M = N * H * W
    x = x.astype(BF16)
    xp = jnp.pad(x, ((0, 0), (1, 1), (1, 1), (0, 0)))
    taps = [xp[:, di:di + H, dj:dj + W, :] for di in (0, 1, 2) for dj in (0, 1, 2)]
    col = jnp.concatenate(taps, axis=-1).reshape(M, 9 * Cin)
    Cout = prep["Cout"] // 4
    if bn is None:
        rows = fused_matmul(col, prep, act=act)
    else:
        rows, stats = fused_matmul(col, prep, act=act, with_stats=True)
        rows = bn_apply(rows, stats, bn[0], bn[1],
                        count=4 * M, real_cols=4 * Cout, phases=4)
    y = rows[:M, :4 * Cout].reshape(N, H, W, 2, 2, Cout)
    y = y.transpose(0, 1, 3, 2, 4, 5).reshape(N, 2 * H, 2 * W, Cout)
    return y


# -----------------------------------------------------------------------------
# Parameter construction: PyTorch-init weights, then matmul-ready bf16 prep
# (transpose / phase-concat / zero-pad to lane-dense Kp x Np) done ONCE here.
# -----------------------------------------------------------------------------
def _prep_matmul(wmat, bias, cols):
    K = wmat.shape[0]
    Kp = _round_up(K, 128)
    Np = _round_up(cols, 128)
    w = jnp.pad(wmat.astype(BF16), ((0, Kp - K), (0, Np - cols)))
    if bias is None:
        b = jnp.zeros((1, Np), F32)
    else:
        b = jnp.pad(bias.astype(F32).reshape(1, -1), ((0, 0), (0, Np - cols)))
    return {"w": w, "b": b, "Cout": cols, "Kp": Kp, "Np": Np}


def prep_conv3x3(w, b):
    Cout, Cin = w.shape[0], w.shape[1]
    wmat = jnp.transpose(w, (2, 3, 1, 0)).reshape(9 * Cin, Cout)
    return _prep_matmul(wmat, b, Cout)


def prep_conv4x4_s2(w, b):
    Cout, Cin = w.shape[0], w.shape[1]
    # (co,ci,kh,kw) -> (co,ci,di,py,dj,px) -> (di,dj,py,px,ci,co); kh=2*di+py
    wr = w.reshape(Cout, Cin, 2, 2, 2, 2).transpose(2, 4, 3, 5, 1, 0)
    return _prep_matmul(wr.reshape(16 * Cin, Cout), b, Cout)


# output-row parity a -> kernel row used by tap offset di (input row = i-1+di)
_KPOS = {0: (3, 1, None), 1: (None, 2, 0)}


def prep_convT4x4_s2(w, b):
    Cin, Cout = w.shape[0], w.shape[1]
    big = jnp.zeros((3, 3, Cin, 2, 2, Cout), F32)
    for a in (0, 1):
        for di in (0, 1, 2):
            kh = _KPOS[a][di]
            if kh is None:
                continue
            for c in (0, 1):
                for dj in (0, 1, 2):
                    kw = _KPOS[c][dj]
                    if kw is None:
                        continue
                    big = big.at[di, dj, :, a, c, :].set(w[:, :, kh, kw])
    wmat = big.reshape(9 * Cin, 4 * Cout)
    bias = None if b is None else jnp.tile(b, 4)
    return _prep_matmul(wmat, bias, 4 * Cout)


def _conv_params(key, cout, cin, kh, kw, bias):
    kw_, kb_ = jax.random.split(key)
    bound = 1.0 / float((cin * kh * kw) ** 0.5)
    w = jax.random.uniform(kw_, (cout, cin, kh, kw), F32, -bound, bound)
    b = jax.random.uniform(kb_, (cout,), F32, -bound, bound) if bias else None
    return w, b


def _convT_params(key, cin, cout, kh, kw, bias):
    kw_, kb_ = jax.random.split(key)
    bound = 1.0 / float((cin * kh * kw) ** 0.5)
    w = jax.random.uniform(kw_, (cin, cout, kh, kw), F32, -bound, bound)
    b = jax.random.uniform(kb_, (cout,), F32, -bound, bound) if bias else None
    return w, b


def make_block(key, outer_nc, inner_nc, input_nc=None, submodule=None,
               outermost=False, innermost=False):
    if input_nc is None:
        input_nc = outer_nc
    use_bias = False  # norm_layer == BatchNorm2d -> no conv bias
    k_down, k_up = jax.random.split(key)
    p = {"outermost": outermost, "innermost": innermost, "submodule": submodule}
    dw, db = _conv_params(k_down, inner_nc, input_nc, 4, 4, use_bias)
    p["down"] = prep_conv4x4_s2(dw, db)
    if outermost:
        uw, ub = _convT_params(k_up, inner_nc * 2, outer_nc, 4, 4, True)
        p["up"] = prep_convT4x4_s2(uw, ub)
    elif innermost:
        uw, ub = _convT_params(k_up, inner_nc, outer_nc, 4, 4, use_bias)
        p["up"] = prep_convT4x4_s2(uw, ub)
        p["upnorm"] = (jnp.ones((outer_nc,), F32), jnp.zeros((outer_nc,), F32))
    else:
        p["downnorm"] = (jnp.ones((inner_nc,), F32), jnp.zeros((inner_nc,), F32))
        uw, ub = _convT_params(k_up, inner_nc * 2, outer_nc, 4, 4, use_bias)
        p["up"] = prep_convT4x4_s2(uw, ub)
        p["upnorm"] = (jnp.ones((outer_nc,), F32), jnp.zeros((outer_nc,), F32))
    return p


def build_unet_params(key, input_nc, output_nc, num_downs, ngf):
    params = {}
    key, k = jax.random.split(key)
    ciw, cib = _conv_params(k, ngf, input_nc, 3, 3, True)
    params["conv_in"] = prep_conv3x3(ciw, cib)
    key, k = jax.random.split(key)
    block = make_block(k, ngf * 8, ngf * 8, innermost=True)
    for _ in range(num_downs - 5):
        key, k = jax.random.split(key)
        block = make_block(k, ngf * 8, ngf * 8, submodule=block)
    key, k = jax.random.split(key)
    block = make_block(k, ngf * 4, ngf * 8, submodule=block)
    key, k = jax.random.split(key)
    block = make_block(k, ngf * 2, ngf * 4, submodule=block)
    key, k = jax.random.split(key)
    block = make_block(k, ngf, ngf * 2, submodule=block)
    key, k = jax.random.split(key)
    block = make_block(k, output_nc, ngf, input_nc=ngf, submodule=block,
                       outermost=True)
    params["unet"] = block
    return params


# -----------------------------------------------------------------------------
# Forward pass (mirrors UnetSkipConnectionBlock.forward / UnetGenerator.forward).
# LeakyReLU(0.2)/ReLU are fused into the consumer conv's A-load; BatchNorm is
# fused as matmul-epilogue stats + one scale/shift kernel.
# -----------------------------------------------------------------------------
def block_forward(p, x):
    if p["outermost"]:
        h = conv4x4_s2(x, p["down"], act="none")
        h = block_forward(p["submodule"], h)
        h = convT4x4_s2(h, p["up"], act="relu")          # bias, no norm, raw out
        return h
    elif p["innermost"]:
        h = conv4x4_s2(x, p["down"], act="leaky")        # no downnorm (innermost)
        h = convT4x4_s2(h, p["up"], act="relu", bn=p["upnorm"])
        return jnp.concatenate([x, h], axis=-1)
    else:
        h = conv4x4_s2(x, p["down"], act="leaky", bn=p["downnorm"])
        h = block_forward(p["submodule"], h)
        h = convT4x4_s2(h, p["up"], act="relu", bn=p["upnorm"])
        return jnp.concatenate([x, h], axis=-1)
        # TODO(synk): use_dropout=False path only; Dropout(0.5) not implemented.


def unet_generator_forward(params, x_nchw):
    x = jnp.transpose(x_nchw, (0, 2, 3, 1))              # NCHW -> NHWC
    x = conv3x3_s1(x, params["conv_in"], act="none")
    x = block_forward(params["unet"], x)
    # output_sigmoid=False (default) -> raw output
    return jnp.transpose(x, (0, 3, 1, 2)).astype(F32)    # NHWC -> NCHW


# -----------------------------------------------------------------------------
if __name__ == "__main__":
    INPUT_NC, OUTPUT_NC, NUM_DOWNS, NGF = 3, 3, 5, 8
    BATCH, H, W = 2, 32, 32   # spatial must be divisible by 2**num_downs

    root = jax.random.PRNGKey(0)
    k_params, k_input = jax.random.split(root)
    params = build_unet_params(k_params, INPUT_NC, OUTPUT_NC, NUM_DOWNS, NGF)
    x = jax.random.normal(k_input, (BATCH, INPUT_NC, H, W), F32)

    fwd = jax.jit(lambda inp: unet_generator_forward(params, inp))
    out = jax.block_until_ready(fwd(x))

    assert out.shape == (BATCH, OUTPUT_NC, H, W), out.shape
    assert bool(jnp.all(jnp.isfinite(out)))
    print("KERNEL_OK")
</pallas_src>

<mosaic_0001>
module attributes {stable_mosaic.version = 11 : i64} {
  func.func @_mm_kernel(%arg0: i32, %arg1: i32, %arg2: i32, %arg3: memref<512x128xbf16, #tpu.memory_space<vmem>>, %arg4: memref<128x128xbf16, #tpu.memory_space<vmem>>, %arg5: memref<1x128xf32, #tpu.memory_space<vmem>>, %arg6: memref<512x128xbf16, #tpu.memory_space<vmem>>, %arg7: memref<512x128xf32, #tpu.memory_space<vmem>>) attributes {dimension_semantics = [#tpu.dimension_semantics<parallel>, #tpu.dimension_semantics<parallel>, #tpu.dimension_semantics<arbitrary>], iteration_bounds = array<i64: 4, 1, 1>, scalar_prefetch = 0 : i64, scratch_operands = 1 : i64, tpu.core_type = #tpu.core_type<tc>, window_params = [{transform_indices = @transform_0, window_bounds = array<i64: 512, 128>}, {transform_indices = @transform_1, window_bounds = array<i64: 128, 128>}, {transform_indices = @transform_2, window_bounds = array<i64: 1, 128>}, {transform_indices = @transform_3, window_bounds = array<i64: 512, 128>}]} {
    %c0_i32 = arith.constant 0 : i32
    %0 = arith.cmpi eq, %arg2, %c0_i32 : i32
    %1 = arith.extui %0 : i1 to i32
    %c0_i32_0 = arith.constant 0 : i32
    %2 = arith.cmpi ne, %1, %c0_i32_0 : i32
    scf.if %2 {
      %cst_10 = arith.constant 0.000000e+00 : f32
      %12 = vector.broadcast %cst_10 : f32 to vector<512x128xf32>
      %c0_11 = arith.constant 0 : index
      %c0_12 = arith.constant 0 : index
      %13 = vector.load %arg7[%c0_11, %c0_12] : memref<512x128xf32, #tpu.memory_space<vmem>>, vector<512x128xf32>
      tpu.vector_store %arg7[%c0_11, %c0_12], %12 {strides = array<i32>} : memref<512x128xf32, #tpu.memory_space<vmem>>, vector<512x128xf32>,
    } else {
    }
    %c0 = arith.constant 0 : index
    %c0_1 = arith.constant 0 : index
    %3 = vector.load %arg3[%c0, %c0_1] : memref<512x128xbf16, #tpu.memory_space<vmem>>, vector<512x128xbf16>
    %c0_2 = arith.constant 0 : index
    %c0_3 = arith.constant 0 : index
    %4 = vector.load %arg7[%c0_2, %c0_3] : memref<512x128xf32, #tpu.memory_space<vmem>>, vector<512x128xf32>
    %c0_4 = arith.constant 0 : index
    %c0_5 = arith.constant 0 : index
    %5 = vector.load %arg4[%c0_4, %c0_5] : memref<128x128xbf16, #tpu.memory_space<vmem>>, vector<128x128xbf16>
    %cst = arith.constant dense<0.000000e+00> : vector<512x128xf32>
    %6 = tpu.matmul %3, %5, %cst {dimension_numbers = #tpu.dot_dimension_numbers<[1], [0], [0], [1], [0, 0, 1, 1], [], []>} : vector<512x128xbf16>, vector<128x128xbf16>, vector<512x128xf32> -> vector<512x128xf32>
    %7 = arith.addf %4, %6 : vector<512x128xf32>
    %c0_6 = arith.constant 0 : index
    %c0_7 = arith.constant 0 : index
    %8 = vector.load %arg7[%c0_6, %c0_7] : memref<512x128xf32, #tpu.memory_space<vmem>>, vector<512x128xf32>
    tpu.vector_store %arg7[%c0_6, %c0_7], %7 {strides = array<i32>} : memref<512x128xf32, #tpu.memory_space<vmem>>, vector<512x128xf32>,
    %c0_i32_8 = arith.constant 0 : i32
    %9 = arith.cmpi eq, %arg2, %c0_i32_8 : i32
    %10 = arith.extui %9 : i1 to i32
    %c0_i32_9 = arith.constant 0 : i32
    %11 = arith.cmpi ne, %10, %c0_i32_9 : i32
    scf.if %11 {
      %c0_10 = arith.constant 0 : index
      %c0_11 = arith.constant 0 : index
      %12 = vector.load %arg7[%c0_10, %c0_11] : memref<512x128xf32, #tpu.memory_space<vmem>>, vector<512x128xf32>
      %c0_12 = arith.constant 0 : index
      %c0_13 = arith.constant 0 : index
      %13 = vector.load %arg5[%c0_12, %c0_13] : memref<1x128xf32, #tpu.memory_space<vmem>>, vector<1x128xf32>
      %14 = vector.broadcast %13 : vector<1x128xf32> to vector<512x128xf32>
      %15 = arith.addf %12, %14 : vector<512x128xf32>
      %16 = arith.truncf %15 : vector<512x128xf32> to vector<512x128xbf16>
      %c0_14 = arith.constant 0 : index
      %c0_15 = arith.constant 0 : index
      %17 = vector.load %arg6[%c0_14, %c0_15] : memref<512x128xbf16, #tpu.memory_space<vmem>>, vector<512x128xbf16>
      tpu.vector_store %arg6[%c0_14, %c0_15], %16 {strides = array<i32>} : memref<512x128xbf16, #tpu.memory_space<vmem>>, vector<512x128xbf16>,
    } else {
    }
    return
  }
  func.func @transform_0(%arg0: i32, %arg1: i32, %arg2: i32) -> (i32, i32) {
    %c0_i32 = arith.constant 0 : i32
    return %arg0, %arg2 : i32, i32
  }
  func.func @transform_1(%arg0: i32, %arg1: i32, %arg2: i32) -> (i32, i32) {
    %c0_i32 = arith.constant 0 : i32
    return %arg2, %arg1 : i32, i32
  }
  func.func @transform_2(%arg0: i32, %arg1: i32, %arg2: i32) -> (i32, i32) {
    %c0_i32 = arith.constant 0 : i32
    %c0_i32_0 = arith.constant 0 : i32
    return %c0_i32, %arg1 : i32, i32
  }
  func.func @transform_3(%arg0: i32, %arg1: i32, %arg2: i32) -> (i32, i32) {
    %c0_i32 = arith.constant 0 : i32
    return %arg0, %arg1 : i32, i32
  }
}

module attributes {stable_mosaic.version = 11 : i64} {
  func.func @_mm_kernel(%arg0: i32, %arg1: i32, %arg2: i32, %arg3: memref<512x128xbf16, #tpu.memory_space<vmem>>, %arg4: memref<128x128xbf16, #tpu.memory_space<vmem>>, %arg5: memref<1x128xf32, #tpu.memory_space<vmem>>, %arg6: memref<512x128xbf16, #tpu.memory_space<vmem>>, %arg7: memref<512x128xf32, #tpu.memory_space<vmem>>) attributes {dimension_semantics = [#tpu.dimension_semantics<parallel>, #tpu.dimension_semantics<parallel>, #tpu.dimension_semantics<arbitrary>], iteration_bounds = array<i64: 1, 1, 1>, scalar_prefetch = 0 : i64, scratch_operands = 1 : i64, tpu.core_type = #tpu.core_type<tc>, window_params = [{transform_indices = @transform_0, window_bounds = array<i64: 512, 128>}, {transform_indices = @transform_1, window_bounds = array<i64: 128, 128>}, {transform_indices = @transform_2, window_bounds = array<i64: 1, 128>}, {transform_indices = @transform_3, window_bounds = array<i64: 512, 128>}]} {
    %c0_i32 = arith.constant 0 : i32
    %0 = arith.cmpi eq, %arg2, %c0_i32 : i32
    %1 = arith.extui %0 : i1 to i32
    %c0_i32_0 = arith.constant 0 : i32
    %2 = arith.cmpi ne, %1, %c0_i32_0 : i32
    scf.if %2 {
      %cst_10 = arith.constant 0.000000e+00 : f32
      %12 = vector.broadcast %cst_10 : f32 to vector<512x128xf32>
      %c0_11 = arith.constant 0 : index
      %c0_12 = arith.constant 0 : index
      %13 = vector.load %arg7[%c0_11, %c0_12] : memref<512x128xf32, #tpu.memory_space<vmem>>, vector<512x128xf32>
      tpu.vector_store %arg7[%c0_11, %c0_12], %12 {strides = array<i32>} : memref<512x128xf32, #tpu.memory_space<vmem>>, vector<512x128xf32>,
    } else {
    }
    %c0 = arith.constant 0 : index
    %c0_1 = arith.constant 0 : index
    %3 = vector.load %arg3[%c0, %c0_1] : memref<512x128xbf16, #tpu.memory_space<vmem>>, vector<512x128xbf16>
    %c0_2 = arith.constant 0 : index
    %c0_3 = arith.constant 0 : index
    %4 = vector.load %arg7[%c0_2, %c0_3] : memref<512x128xf32, #tpu.memory_space<vmem>>, vector<512x128xf32>
    %c0_4 = arith.constant 0 : index
    %c0_5 = arith.constant 0 : index
    %5 = vector.load %arg4[%c0_4, %c0_5] : memref<128x128xbf16, #tpu.memory_space<vmem>>, vector<128x128xbf16>
    %cst = arith.constant dense<0.000000e+00> : vector<512x128xf32>
    %6 = tpu.matmul %3, %5, %cst {dimension_numbers = #tpu.dot_dimension_numbers<[1], [0], [0], [1], [0, 0, 1, 1], [], []>} : vector<512x128xbf16>, vector<128x128xbf16>, vector<512x128xf32> -> vector<512x128xf32>
    %7 = arith.addf %4, %6 : vector<512x128xf32>
    %c0_6 = arith.constant 0 : index
    %c0_7 = arith.constant 0 : index
    %8 = vector.load %arg7[%c0_6, %c0_7] : memref<512x128xf32, #tpu.memory_space<vmem>>, vector<512x128xf32>
    tpu.vector_store %arg7[%c0_6, %c0_7], %7 {strides = array<i32>} : memref<512x128xf32, #tpu.memory_space<vmem>>, vector<512x128xf32>,
    %c0_i32_8 = arith.constant 0 : i32
    %9 = arith.cmpi eq, %arg2, %c0_i32_8 : i32
    %10 = arith.extui %9 : i1 to i32
    %c0_i32_9 = arith.constant 0 : i32
    %11 = arith.cmpi ne, %10, %c0_i32_9 : i32
    scf.if %11 {
      %c0_10 = arith.constant 0 : index
      %c0_11 = arith.constant 0 : index
      %12 = vector.load %arg7[%c0_10, %c0_11] : memref<512x128xf32, #tpu.memory_space<vmem>>, vector<512x128xf32>
      %c0_12 = arith.constant 0 : index
      %c0_13 = arith.constant 0 : index
      %13 = vector.load %arg5[%c0_12, %c0_13] : memref<1x128xf32, #tpu.memory_space<vmem>>, vector<1x128xf32>
      %14 = vector.broadcast %13 : vector<1x128xf32> to vector<512x128xf32>
      %15 = arith.addf %12, %14 : vector<512x128xf32>
      %16 = arith.truncf %15 : vector<512x128xf32> to vector<512x128xbf16>
      %c0_14 = arith.constant 0 : index
      %c0_15 = arith.constant 0 : index
      %17 = vector.load %arg6[%c0_14, %c0_15] : memref<512x128xbf16, #tpu.memory_space<vmem>>, vector<512x128xbf16>
      tpu.vector_store %arg6[%c0_14, %c0_15], %16 {strides = array<i32>} : memref<512x128xbf16, #tpu.memory_space<vmem>>, vector<512x128xbf16>,
    } else {
    }
    return
  }
  func.func @transform_0(%arg0: i32, %arg1: i32, %arg2: i32) -> (i32, i32) {
    %c0_i32 = arith.constant 0 : i32
    return %arg0, %arg2 : i32, i32
  }
  func.func @transform_1(%arg0: i32, %arg1: i32, %arg2: i32) -> (i32, i32) {
    %c0_i32 = arith.constant 0 : i32
    return %arg2, %arg1 : i32, i32
  }
  func.func @transform_2(%arg0: i32, %arg1: i32, %arg2: i32) -> (i32, i32) {
    %c0_i32 = arith.constant 0 : i32
    %c0_i32_0 = arith.constant 0 : i32
    return %c0_i32, %arg1 : i32, i32
  }
  func.func @transform_3(%arg0: i32, %arg1: i32, %arg2: i32) -> (i32, i32) {
    %c0_i32 = arith.constant 0 : i32
    return %arg0, %arg1 : i32, i32
  }
}

module attributes {stable_mosaic.version = 11 : i64} {
  func.func @_mm_stats_kernel(%arg0: i32, %arg1: i32, %arg2: i32, %arg3: memref<128x128xbf16, #tpu.memory_space<vmem>>, %arg4: memref<128x128xbf16, #tpu.memory_space<vmem>>, %arg5: memref<1x128xf32, #tpu.memory_space<vmem>>, %arg6: memref<128x128xbf16, #tpu.memory_space<vmem>>, %arg7: memref<1x2x128xf32, #tpu.memory_space<vmem>>, %arg8: memref<128x128xf32, #tpu.memory_space<vmem>>) attributes {dimension_semantics = [#tpu.dimension_semantics<parallel>, #tpu.dimension_semantics<parallel>, #tpu.dimension_semantics<arbitrary>], iteration_bounds = array<i64: 1, 1, 1>, scalar_prefetch = 0 : i64, scratch_operands = 1 : i64, tpu.core_type = #tpu.core_type<tc>, window_params = [{transform_indices = @transform_0, window_bounds = array<i64: 128, 128>}, {transform_indices = @transform_1, window_bounds = array<i64: 128, 128>}, {transform_indices = @transform_2, window_bounds = array<i64: 1, 128>}, {transform_indices = @transform_3, window_bounds = array<i64: 128, 128>}, {transform_indices = @transform_4, window_bounds = array<i64: 1, 2, 128>}]} {
    %c0_i32 = arith.constant 0 : i32
    %0 = arith.cmpi eq, %arg2, %c0_i32 : i32
    %1 = arith.extui %0 : i1 to i32
    %c0_i32_0 = arith.constant 0 : i32
    %2 = arith.cmpi ne, %1, %c0_i32_0 : i32
    scf.if %2 {
      %cst_12 = arith.constant 0.000000e+00 : f32
      %19 = vector.broadcast %cst_12 : f32 to vector<128x128xf32>
      %c0_13 = arith.constant 0 : index
      %c0_14 = arith.constant 0 : index
      %20 = vector.load %arg8[%c0_13, %c0_14] : memref<128x128xf32, #tpu.memory_space<vmem>>, vector<128x128xf32>
      tpu.vector_store %arg8[%c0_13, %c0_14], %19 {strides = array<i32>} : memref<128x128xf32, #tpu.memory_space<vmem>>, vector<128x128xf32>,
    } else {
    }
    %c0 = arith.constant 0 : index
    %c0_1 = arith.constant 0 : index
    %3 = vector.load %arg3[%c0, %c0_1] : memref<128x128xbf16, #tpu.memory_space<vmem>>, vector<128x128xbf16>
    %4 = arith.extf %3 : vector<128x128xbf16> to vector<128x128xf32>
    %cst = arith.constant 0.000000e+00 : f32
    %5 = vector.broadcast %cst : f32 to vector<128x128xf32>
    %6 = arith.cmpf ogt, %4, %5 : vector<128x128xf32>
    %cst_2 = arith.constant 2.000000e-01 : f32
    %7 = vector.broadcast %cst_2 : f32 to vector<128x128xf32>
    %8 = arith.mulf %7, %4 : vector<128x128xf32>
    %9 = arith.select %6, %4, %8 : vector<128x128xi1>, vector<128x128xf32>
    %10 = arith.truncf %9 : vector<128x128xf32> to vector<128x128xbf16>
    %c0_3 = arith.constant 0 : index
    %c0_4 = arith.constant 0 : index
    %11 = vector.load %arg8[%c0_3, %c0_4] : memref<128x128xf32, #tpu.memory_space<vmem>>, vector<128x128xf32>
    %c0_5 = arith.constant 0 : index
    %c0_6 = arith.constant 0 : index
    %12 = vector.load %arg4[%c0_5, %c0_6] : memref<128x128xbf16, #tpu.memory_space<vmem>>, vector<128x128xbf16>
    %cst_7 = arith.constant dense<0.000000e+00> : vector<128x128xf32>
    %13 = tpu.matmul %10, %12, %cst_7 {dimension_numbers = #tpu.dot_dimension_numbers<[1], [0], [0], [1], [0, 0, 1, 1], [], []>} : vector<128x128xbf16>, vector<128x128xbf16>, vector<128x128xf32> -> vector<128x128xf32>
    %14 = arith.addf %11, %13 : vector<128x128xf32>
    %c0_8 = arith.constant 0 : index
    %c0_9 = arith.constant 0 : index
    %15 = vector.load %arg8[%c0_8, %c0_9] : memref<128x128xf32, #tpu.memory_space<vmem>>, vector<128x128xf32>
    tpu.vector_store %arg8[%c0_8, %c0_9], %14 {strides = array<i32>} : memref<128x128xf32, #tpu.memory_space<vmem>>, vector<128x128xf32>,
    %c0_i32_10 = arith.constant 0 : i32
    %16 = arith.cmpi eq, %arg2, %c0_i32_10 : i32
    %17 = arith.extui %16 : i1 to i32
    %c0_i32_11 = arith.constant 0 : i32
    %18 = arith.cmpi ne, %17, %c0_i32_11 : i32
    scf.if %18 {
      %c0_12 = arith.constant 0 : index
      %c0_13 = arith.constant 0 : index
      %19 = vector.load %arg8[%c0_12, %c0_13] : memref<128x128xf32, #tpu.memory_space<vmem>>, vector<128x128xf32>
      %c0_14 = arith.constant 0 : index
      %c0_15 = arith.constant 0 : index
      %20 = vector.load %arg5[%c0_14, %c0_15] : memref<1x128xf32, #tpu.memory_space<vmem>>, vector<1x128xf32>
      %21 = vector.broadcast %20 : vector<1x128xf32> to vector<128x128xf32>
      %22 = arith.addf %19, %21 : vector<128x128xf32>
      %23 = arith.truncf %22 : vector<128x128xf32> to vector<128x128xbf16>
      %c0_16 = arith.constant 0 : index
      %c0_17 = arith.constant 0 : index
      %24 = vector.load %arg6[%c0_16, %c0_17] : memref<128x128xbf16, #tpu.memory_space<vmem>>, vector<128x128xbf16>
      tpu.vector_store %arg6[%c0_16, %c0_17], %23 {strides = array<i32>} : memref<128x128xbf16, #tpu.memory_space<vmem>>, vector<128x128xbf16>,
      %cst_18 = arith.constant dense<0.000000e+00> : vector<128xf32>
      %25 = vector.multi_reduction <add>, %22, %cst_18 [0] : vector<128x128xf32> to vector<128xf32>
      %26 = vector.shape_cast %25 : vector<128xf32> to vector<1x128xf32>
      %27 = arith.mulf %22, %22 : vector<128x128xf32>
      %cst_19 = arith.constant dense<0.000000e+00> : vector<128xf32>
      %28 = vector.multi_reduction <add>, %27, %cst_19 [0] : vector<128x128xf32> to vector<128xf32>
      %29 = vector.shape_cast %28 : vector<128xf32> to vector<1x128xf32>
      %30 = tpu.concatenate %26, %29 in 0 : vector<1x128xf32>, vector<1x128xf32> -> vector<2x128xf32>
      %c0_20 = arith.constant 0 : index
      %c0_21 = arith.constant 0 : index
      %c0_22 = arith.constant 0 : index
      %31 = vector.load %arg7[%c0_20, %c0_21, %c0_22] : memref<1x2x128xf32, #tpu.memory_space<vmem>>, vector<1x2x128xf32>
      %32 = vector.shape_cast %31 : vector<1x2x128xf32> to vector<2x128xf32>
      %33 = vector.shape_cast %30 : vector<2x128xf32> to vector<1x2x128xf32>
      tpu.vector_store %arg7[%c0_20, %c0_21, %c0_22], %33 {strides = array<i32>} : memref<1x2x128xf32, #tpu.memory_space<vmem>>, vector<1x2x128xf32>,
    } else {
    }
    return
  }
  func.func @transform_0(%arg0: i32, %arg1: i32, %arg2: i32) -> (i32, i32) {
    %c0_i32 = arith.constant 0 : i32
    return %arg0, %arg2 : i32, i32
  }
  func.func @transform_1(%arg0: i32, %arg1: i32, %arg2: i32) -> (i32, i32) {
    %c0_i32 = arith.constant 0 : i32
    return %arg2, %arg1 : i32, i32
  }
  func.func @transform_2(%arg0: i32, %arg1: i32, %arg2: i32) -> (i32, i32) {
    %c0_i32 = arith.constant 0 : i32
    %c0_i32_0 = arith.constant 0 : i32
    return %c0_i32, %arg1 : i32, i32
  }
  func.func @transform_3(%arg0: i32, %arg1: i32, %arg2: i32) -> (i32, i32) {
    %c0_i32 = arith.constant 0 : i32
    return %arg0, %arg1 : i32, i32
  }
  func.func @transform_4(%arg0: i32, %arg1: i32, %arg2: i32) -> (i32, i32, i32) {
    %c0_i32 = arith.constant 0 : i32
    %c0_i32_0 = arith.constant 0 : i32
    return %arg0, %c0_i32, %arg1 : i32, i32, i32
  }
}

module attributes {stable_mosaic.version = 11 : i64} {
  func.func @_bn_apply_kernel(%arg0: i32, %arg1: memref<128x128xbf16, #tpu.memory_space<vmem>>, %arg2: memref<1x128xf32, #tpu.memory_space<vmem>>, %arg3: memref<1x128xf32, #tpu.memory_space<vmem>>, %arg4: memref<128x128xbf16, #tpu.memory_space<vmem>>) attributes {dimension_semantics = [#tpu.dimension_semantics<parallel>], iteration_bounds = array<i64: 1>, scalar_prefetch = 0 : i64, scratch_operands = 0 : i64, tpu.core_type = #tpu.core_type<tc>, window_params = [{transform_indices = @transform_0, window_bounds = array<i64: 128, 128>}, {pipeline_mode = #tpu.pipeline_mode<synchronous>, transform_indices = @transform_1, window_bounds = array<i64: 1, 128>}, {pipeline_mode = #tpu.pipeline_mode<synchronous>, transform_indices = @transform_2, window_bounds = array<i64: 1, 128>}, {transform_indices = @transform_3, window_bounds = array<i64: 128, 128>}]} {
    %c0 = arith.constant 0 : index
    %c0_0 = arith.constant 0 : index
    %0 = vector.load %arg1[%c0, %c0_0] : memref<128x128xbf16, #tpu.memory_space<vmem>>, vector<128x128xbf16>
    %1 = arith.extf %0 : vector<128x128xbf16> to vector<128x128xf32>
    %c0_1 = arith.constant 0 : index
    %c0_2 = arith.constant 0 : index
    %2 = vector.load %arg2[%c0_1, %c0_2] : memref<1x128xf32, #tpu.memory_space<vmem>>, vector<1x128xf32>
    %3 = vector.broadcast %2 : vector<1x128xf32> to vector<128x128xf32>
    %4 = arith.mulf %1, %3 : vector<128x128xf32>
    %c0_3 = arith.constant 0 : index
    %c0_4 = arith.constant 0 : index
    %5 = vector.load %arg3[%c0_3, %c0_4] : memref<1x128xf32, #tpu.memory_space<vmem>>, vector<1x128xf32>
    %6 = vector.broadcast %5 : vector<1x128xf32> to vector<128x128xf32>
    %7 = arith.addf %4, %6 : vector<128x128xf32>
    %8 = arith.truncf %7 : vector<128x128xf32> to vector<128x128xbf16>
    %c0_5 = arith.constant 0 : index
    %c0_6 = arith.constant 0 : index
    %9 = vector.load %arg4[%c0_5, %c0_6] : memref<128x128xbf16, #tpu.memory_space<vmem>>, vector<128x128xbf16>
    tpu.vector_store %arg4[%c0_5, %c0_6], %8 {strides = array<i32>} : memref<128x128xbf16, #tpu.memory_space<vmem>>, vector<128x128xbf16>,
    return
  }
  func.func @transform_0(%arg0: i32) -> (i32, i32) {
    %c0_i32 = arith.constant 0 : i32
    %c0_i32_0 = arith.constant 0 : i32
    return %arg0, %c0_i32 : i32, i32
  }
  func.func @transform_1(%arg0: i32) -> (i32, i32) {
    %c0_i32 = arith.constant 0 : i32
    %c0_i32_0 = arith.constant 0 : i32
    %c0_i32_1 = arith.constant 0 : i32
    return %c0_i32, %c0_i32_0 : i32, i32
  }
  func.func @transform_2(%arg0: i32) -> (i32, i32) {
    %c0_i32 = arith.constant 0 : i32
    %c0_i32_0 = arith.constant 0 : i32
    %c0_i32_1 = arith.constant 0 : i32
    return %c0_i32, %c0_i32_0 : i32, i32
  }
  func.func @transform_3(%arg0: i32) -> (i32, i32) {
    %c0_i32 = arith.constant 0 : i32
    %c0_i32_0 = arith.constant 0 : i32
    return %arg0, %c0_i32 : i32, i32
  }
}

module attributes {stable_mosaic.version = 11 : i64} {
  func.func @_mm_stats_kernel(%arg0: i32, %arg1: i32, %arg2: i32, %arg3: memref<32x256xbf16, #tpu.memory_space<vmem>>, %arg4: memref<256x128xbf16, #tpu.memory_space<vmem>>, %arg5: memref<1x128xf32, #tpu.memory_space<vmem>>, %arg6: memref<32x128xbf16, #tpu.memory_space<vmem>>, %arg7: memref<1x2x128xf32, #tpu.memory_space<vmem>>, %arg8: memref<32x128xf32, #tpu.memory_space<vmem>>) attributes {dimension_semantics = [#tpu.dimension_semantics<parallel>, #tpu.dimension_semantics<parallel>, #tpu.dimension_semantics<arbitrary>], iteration_bounds = array<i64: 1, 1, 1>, scalar_prefetch = 0 : i64, scratch_operands = 1 : i64, tpu.core_type = #tpu.core_type<tc>, window_params = [{transform_indices = @transform_0, window_bounds = array<i64: 32, 256>}, {transform_indices = @transform_1, window_bounds = array<i64: 256, 128>}, {transform_indices = @transform_2, window_bounds = array<i64: 1, 128>}, {transform_indices = @transform_3, window_bounds = array<i64: 32, 128>}, {transform_indices = @transform_4, window_bounds = array<i64: 1, 2, 128>}]} {
    %c0_i32 = arith.constant 0 : i32
    %0 = arith.cmpi eq, %arg2, %c0_i32 : i32
    %1 = arith.extui %0 : i1 to i32
    %c0_i32_0 = arith.constant 0 : i32
    %2 = arith.cmpi ne, %1, %c0_i32_0 : i32
    scf.if %2 {
      %cst_12 = arith.constant 0.000000e+00 : f32
      %19 = vector.broadcast %cst_12 : f32 to vector<32x128xf32>
      %c0_13 = arith.constant 0 : index
      %c0_14 = arith.constant 0 : index
      %20 = vector.load %arg8[%c0_13, %c0_14] : memref<32x128xf32, #tpu.memory_space<vmem>>, vector<32x128xf32>
      tpu.vector_store %arg8[%c0_13, %c0_14], %19 {strides = array<i32>} : memref<32x128xf32, #tpu.memory_space<vmem>>, vector<32x128xf32>,
    } else {
    }
    %c0 = arith.constant 0 : index
    %c0_1 = arith.constant 0 : index
    %3 = vector.load %arg3[%c0, %c0_1] : memref<32x256xbf16, #tpu.memory_space<vmem>>, vector<32x256xbf16>
    %4 = arith.extf %3 : vector<32x256xbf16> to vector<32x256xf32>
    %cst = arith.constant 0.000000e+00 : f32
    %5 = vector.broadcast %cst : f32 to vector<32x256xf32>
    %6 = arith.cmpf ogt, %4, %5 : vector<32x256xf32>
    %cst_2 = arith.constant 2.000000e-01 : f32
    %7 = vector.broadcast %cst_2 : f32 to vector<32x256xf32>
    %8 = arith.mulf %7, %4 : vector<32x256xf32>
    %9 = arith.select %6, %4, %8 : vector<32x256xi1>, vector<32x256xf32>
    %10 = arith.truncf %9 : vector<32x256xf32> to vector<32x256xbf16>
    %c0_3 = arith.constant 0 : index
    %c0_4 = arith.constant 0 : index
    %11 = vector.load %arg8[%c0_3, %c0_4] : memref<32x128xf32, #tpu.memory_space<vmem>>, vector<32x128xf32>
    %c0_5 = arith.constant 0 : index
    %c0_6 = arith.constant 0 : index
    %12 = vector.load %arg4[%c0_5, %c0_6] : memref<256x128xbf16, #tpu.memory_space<vmem>>, vector<256x128xbf16>
    %cst_7 = arith.constant dense<0.000000e+00> : vector<32x128xf32>
    %13 = tpu.matmul %10, %12, %cst_7 {dimension_numbers = #tpu.dot_dimension_numbers<[1], [0], [0], [1], [0, 0, 1, 1], [], []>} : vector<32x256xbf16>, vector<256x128xbf16>, vector<32x128xf32> -> vector<32x128xf32>
    %14 = arith.addf %11, %13 : vector<32x128xf32>
    %c0_8 = arith.constant 0 : index
    %c0_9 = arith.constant 0 : index
    %15 = vector.load %arg8[%c0_8, %c0_9] : memref<32x128xf32, #tpu.memory_space<vmem>>, vector<32x128xf32>
    tpu.vector_store %arg8[%c0_8, %c0_9], %14 {strides = array<i32>} : memref<32x128xf32, #tpu.memory_space<vmem>>, vector<32x128xf32>,
    %c0_i32_10 = arith.constant 0 : i32
    %16 = arith.cmpi eq, %arg2, %c0_i32_10 : i32
    %17 = arith.extui %16 : i1 to i32
    %c0_i32_11 = arith.constant 0 : i32
    %18 = arith.cmpi ne, %17, %c0_i32_11 : i32
    scf.if %18 {
      %c0_12 = arith.constant 0 : index
      %c0_13 = arith.constant 0 : index
      %19 = vector.load %arg8[%c0_12, %c0_13] : memref<32x128xf32, #tpu.memory_space<vmem>>, vector<32x128xf32>
      %c0_14 = arith.constant 0 : index
      %c0_15 = arith.constant 0 : index
      %20 = vector.load %arg5[%c0_14, %c0_15] : memref<1x128xf32, #tpu.memory_space<vmem>>, vector<1x128xf32>
      %21 = vector.broadcast %20 : vector<1x128xf32> to vector<32x128xf32>
      %22 = arith.addf %19, %21 : vector<32x128xf32>
      %23 = arith.truncf %22 : vector<32x128xf32> to vector<32x128xbf16>
      %c0_16 = arith.constant 0 : index
      %c0_17 = arith.constant 0 : index
      %24 = vector.load %arg6[%c0_16, %c0_17] : memref<32x128xbf16, #tpu.memory_space<vmem>>, vector<32x128xbf16>
      tpu.vector_store %arg6[%c0_16, %c0_17], %23 {strides = array<i32>} : memref<32x128xbf16, #tpu.memory_space<vmem>>, vector<32x128xbf16>,
      %cst_18 = arith.constant dense<0.000000e+00> : vector<128xf32>
      %25 = vector.multi_reduction <add>, %22, %cst_18 [0] : vector<32x128xf32> to vector<128xf32>
      %26 = vector.shape_cast %25 : vector<128xf32> to vector<1x128xf32>
      %27 = arith.mulf %22, %22 : vector<32x128xf32>
      %cst_19 = arith.constant dense<0.000000e+00> : vector<128xf32>
      %28 = vector.multi_reduction <add>, %27, %cst_19 [0] : vector<32x128xf32> to vector<128xf32>
      %29 = vector.shape_cast %28 : vector<128xf32> to vector<1x128xf32>
      %30 = tpu.concatenate %26, %29 in 0 : vector<1x128xf32>, vector<1x128xf32> -> vector<2x128xf32>
      %c0_20 = arith.constant 0 : index
      %c0_21 = arith.constant 0 : index
      %c0_22 = arith.constant 0 : index
      %31 = vector.load %arg7[%c0_20, %c0_21, %c0_22] : memref<1x2x128xf32, #tpu.memory_space<vmem>>, vector<1x2x128xf32>
      %32 = vector.shape_cast %31 : vector<1x2x128xf32> to vector<2x128xf32>
      %33 = vector.shape_cast %30 : vector<2x128xf32> to vector<1x2x128xf32>
      tpu.vector_store %arg7[%c0_20, %c0_21, %c0_22], %33 {strides = array<i32>} : memref<1x2x128xf32, #tpu.memory_space<vmem>>, vector<1x2x128xf32>,
    } else {
    }
    return
  }
  func.func @transform_0(%arg0: i32, %arg1: i32, %arg2: i32) -> (i32, i32) {
    %c0_i32 = arith.constant 0 : i32
    return %arg0, %arg2 : i32, i32
  }
  func.func @transform_1(%arg0: i32, %arg1: i32, %arg2: i32) -> (i32, i32) {
    %c0_i32 = arith.constant 0 : i32
    return %arg2, %arg1 : i32, i32
  }
  func.func @transform_2(%arg0: i32, %arg1: i32, %arg2: i32) -> (i32, i32) {
    %c0_i32 = arith.constant 0 : i32
    %c0_i32_0 = arith.constant 0 : i32
    return %c0_i32, %arg1 : i32, i32
  }
  func.func @transform_3(%arg0: i32, %arg1: i32, %arg2: i32) -> (i32, i32) {
    %c0_i32 = arith.constant 0 : i32
    return %arg0, %arg1 : i32, i32
  }
  func.func @transform_4(%arg0: i32, %arg1: i32, %arg2: i32) -> (i32, i32, i32) {
    %c0_i32 = arith.constant 0 : i32
    %c0_i32_0 = arith.constant 0 : i32
    return %arg0, %c0_i32, %arg1 : i32, i32, i32
  }
}

module attributes {stable_mosaic.version = 11 : i64} {
  func.func @_bn_apply_kernel(%arg0: i32, %arg1: memref<32x128xbf16, #tpu.memory_space<vmem>>, %arg2: memref<1x128xf32, #tpu.memory_space<vmem>>, %arg3: memref<1x128xf32, #tpu.memory_space<vmem>>, %arg4: memref<32x128xbf16, #tpu.memory_space<vmem>>) attributes {dimension_semantics = [#tpu.dimension_semantics<parallel>], iteration_bounds = array<i64: 1>, scalar_prefetch = 0 : i64, scratch_operands = 0 : i64, tpu.core_type = #tpu.core_type<tc>, window_params = [{transform_indices = @transform_0, window_bounds = array<i64: 32, 128>}, {pipeline_mode = #tpu.pipeline_mode<synchronous>, transform_indices = @transform_1, window_bounds = array<i64: 1, 128>}, {pipeline_mode = #tpu.pipeline_mode<synchronous>, transform_indices = @transform_2, window_bounds = array<i64: 1, 128>}, {transform_indices = @transform_3, window_bounds = array<i64: 32, 128>}]} {
    %c0 = arith.constant 0 : index
    %c0_0 = arith.constant 0 : index
    %0 = vector.load %arg1[%c0, %c0_0] : memref<32x128xbf16, #tpu.memory_space<vmem>>, vector<32x128xbf16>
    %1 = arith.extf %0 : vector<32x128xbf16> to vector<32x128xf32>
    %c0_1 = arith.constant 0 : index
    %c0_2 = arith.constant 0 : index
    %2 = vector.load %arg2[%c0_1, %c0_2] : memref<1x128xf32, #tpu.memory_space<vmem>>, vector<1x128xf32>
    %3 = vector.broadcast %2 : vector<1x128xf32> to vector<32x128xf32>
    %4 = arith.mulf %1, %3 : vector<32x128xf32>
    %c0_3 = arith.constant 0 : index
    %c0_4 = arith.constant 0 : index
    %5 = vector.load %arg3[%c0_3, %c0_4] : memref<1x128xf32, #tpu.memory_space<vmem>>, vector<1x128xf32>
    %6 = vector.broadcast %5 : vector<1x128xf32> to vector<32x128xf32>
    %7 = arith.addf %4, %6 : vector<32x128xf32>
    %8 = arith.truncf %7 : vector<32x128xf32> to vector<32x128xbf16>
    %c0_5 = arith.constant 0 : index
    %c0_6 = arith.constant 0 : index
    %9 = vector.load %arg4[%c0_5, %c0_6] : memref<32x128xbf16, #tpu.memory_space<vmem>>, vector<32x128xbf16>
    tpu.vector_store %arg4[%c0_5, %c0_6], %8 {strides = array<i32>} : memref<32x128xbf16, #tpu.memory_space<vmem>>, vector<32x128xbf16>,
    return
  }
  func.func @transform_0(%arg0: i32) -> (i32, i32) {
    %c0_i32 = arith.constant 0 : i32
    %c0_i32_0 = arith.constant 0 : i32
    return %arg0, %c0_i32 : i32, i32
  }
  func.func @transform_1(%arg0: i32) -> (i32, i32) {
    %c0_i32 = arith.constant 0 : i32
    %c0_i32_0 = arith.constant 0 : i32
    %c0_i32_1 = arith.constant 0 : i32
    return %c0_i32, %c0_i32_0 : i32, i32
  }
  func.func @transform_2(%arg0: i32) -> (i32, i32) {
    %c0_i32 = arith.constant 0 : i32
    %c0_i32_0 = arith.constant 0 : i32
    %c0_i32_1 = arith.constant 0 : i32
    return %c0_i32, %c0_i32_0 : i32, i32
  }
  func.func @transform_3(%arg0: i32) -> (i32, i32) {
    %c0_i32 = arith.constant 0 : i32
    %c0_i32_0 = arith.constant 0 : i32
    return %arg0, %c0_i32 : i32, i32
  }
}

module attributes {stable_mosaic.version = 11 : i64} {
  func.func @_bn_apply_kernel(%arg0: i32, %arg1: memref<8x128xbf16, #tpu.memory_space<vmem>>, %arg2: memref<1x128xf32, #tpu.memory_space<vmem>>, %arg3: memref<1x128xf32, #tpu.memory_space<vmem>>, %arg4: memref<8x128xbf16, #tpu.memory_space<vmem>>) attributes {dimension_semantics = [#tpu.dimension_semantics<parallel>], iteration_bounds = array<i64: 1>, scalar_prefetch = 0 : i64, scratch_operands = 0 : i64, tpu.core_type = #tpu.core_type<tc>, window_params = [{transform_indices = @transform_0, window_bounds = array<i64: 8, 128>}, {pipeline_mode = #tpu.pipeline_mode<synchronous>, transform_indices = @transform_1, window_bounds = array<i64: 1, 128>}, {pipeline_mode = #tpu.pipeline_mode<synchronous>, transform_indices = @transform_2, window_bounds = array<i64: 1, 128>}, {transform_indices = @transform_3, window_bounds = array<i64: 8, 128>}]} {
    %c0 = arith.constant 0 : index
    %c0_0 = arith.constant 0 : index
    %0 = vector.load %arg1[%c0, %c0_0] : memref<8x128xbf16, #tpu.memory_space<vmem>>, vector<8x128xbf16>
    %1 = arith.extf %0 : vector<8x128xbf16> to vector<8x128xf32>
    %c0_1 = arith.constant 0 : index
    %c0_2 = arith.constant 0 : index
    %2 = vector.load %arg2[%c0_1, %c0_2] : memref<1x128xf32, #tpu.memory_space<vmem>>, vector<1x128xf32>
    %3 = vector.broadcast %2 : vector<1x128xf32> to vector<8x128xf32>
    %4 = arith.mulf %1, %3 : vector<8x128xf32>
    %c0_3 = arith.constant 0 : index
    %c0_4 = arith.constant 0 : index
    %5 = vector.load %arg3[%c0_3, %c0_4] : memref<1x128xf32, #tpu.memory_space<vmem>>, vector<1x128xf32>
    %6 = vector.broadcast %5 : vector<1x128xf32> to vector<8x128xf32>
    %7 = arith.addf %4, %6 : vector<8x128xf32>
    %8 = arith.truncf %7 : vector<8x128xf32> to vector<8x128xbf16>
    %c0_5 = arith.constant 0 : index
    %c0_6 = arith.constant 0 : index
    %9 = vector.load %arg4[%c0_5, %c0_6] : memref<8x128xbf16, #tpu.memory_space<vmem>>, vector<8x128xbf16>
    tpu.vector_store %arg4[%c0_5, %c0_6], %8 {strides = array<i32>} : memref<8x128xbf16, #tpu.memory_space<vmem>>, vector<8x128xbf16>,
    return
  }
  func.func @transform_0(%arg0: i32) -> (i32, i32) {
    %c0_i32 = arith.constant 0 : i32
    %c0_i32_0 = arith.constant 0 : i32
    return %arg0, %c0_i32 : i32, i32
  }
  func.func @transform_1(%arg0: i32) -> (i32, i32) {
    %c0_i32 = arith.constant 0 : i32
    %c0_i32_0 = arith.constant 0 : i32
    %c0_i32_1 = arith.constant 0 : i32
    return %c0_i32, %c0_i32_0 : i32, i32
  }
  func.func @transform_2(%arg0: i32) -> (i32, i32) {
    %c0_i32 = arith.constant 0 : i32
    %c0_i32_0 = arith.constant 0 : i32
    %c0_i32_1 = arith.constant 0 : i32
    return %c0_i32, %c0_i32_0 : i32, i32
  }
  func.func @transform_3(%arg0: i32) -> (i32, i32) {
    %c0_i32 = arith.constant 0 : i32
    %c0_i32_0 = arith.constant 0 : i32
    return %arg0, %c0_i32 : i32, i32
  }
}

module attributes {stable_mosaic.version = 11 : i64} {
  func.func @_mm_stats_kernel(%arg0: i32, %arg1: i32, %arg2: i32, %arg3: memref<8x512xbf16, #tpu.memory_space<vmem>>, %arg4: memref<512x128xbf16, #tpu.memory_space<vmem>>, %arg5: memref<1x128xf32, #tpu.memory_space<vmem>>, %arg6: memref<8x128xbf16, #tpu.memory_space<vmem>>, %arg7: memref<1x2x128xf32, #tpu.memory_space<vmem>>, %arg8: memref<8x128xf32, #tpu.memory_space<vmem>>) attributes {dimension_semantics = [#tpu.dimension_semantics<parallel>, #tpu.dimension_semantics<parallel>, #tpu.dimension_semantics<arbitrary>], iteration_bounds = array<i64: 1, 1, 1>, scalar_prefetch = 0 : i64, scratch_operands = 1 : i64, tpu.core_type = #tpu.core_type<tc>, window_params = [{transform_indices = @transform_0, window_bounds = array<i64: 8, 512>}, {transform_indices = @transform_1, window_bounds = array<i64: 512, 128>}, {transform_indices = @transform_2, window_bounds = array<i64: 1, 128>}, {transform_indices = @transform_3, window_bounds = array<i64: 8, 128>}, {transform_indices = @transform_4, window_bounds = array<i64: 1, 2, 128>}]} {
    %c0_i32 = arith.constant 0 : i32
    %0 = arith.cmpi eq, %arg2, %c0_i32 : i32
    %1 = arith.extui %0 : i1 to i32
    %c0_i32_0 = arith.constant 0 : i32
    %2 = arith.cmpi ne, %1, %c0_i32_0 : i32
    scf.if %2 {
      %cst_12 = arith.constant 0.000000e+00 : f32
      %19 = vector.broadcast %cst_12 : f32 to vector<8x128xf32>
      %c0_13 = arith.constant 0 : index
      %c0_14 = arith.constant 0 : index
      %20 = vector.load %arg8[%c0_13, %c0_14] : memref<8x128xf32, #tpu.memory_space<vmem>>, vector<8x128xf32>
      tpu.vector_store %arg8[%c0_13, %c0_14], %19 {strides = array<i32>} : memref<8x128xf32, #tpu.memory_space<vmem>>, vector<8x128xf32>,
    } else {
    }
    %c0 = arith.constant 0 : index
    %c0_1 = arith.constant 0 : index
    %3 = vector.load %arg3[%c0, %c0_1] : memref<8x512xbf16, #tpu.memory_space<vmem>>, vector<8x512xbf16>
    %4 = arith.extf %3 : vector<8x512xbf16> to vector<8x512xf32>
    %cst = arith.constant 0.000000e+00 : f32
    %5 = vector.broadcast %cst : f32 to vector<8x512xf32>
    %6 = arith.cmpf ogt, %4, %5 : vector<8x512xf32>
    %cst_2 = arith.constant 2.000000e-01 : f32
    %7 = vector.broadcast %cst_2 : f32 to vector<8x512xf32>
    %8 = arith.mulf %7, %4 : vector<8x512xf32>
    %9 = arith.select %6, %4, %8 : vector<8x512xi1>, vector<8x512xf32>
    %10 = arith.truncf %9 : vector<8x512xf32> to vector<8x512xbf16>
    %c0_3 = arith.constant 0 : index
    %c0_4 = arith.constant 0 : index
    %11 = vector.load %arg8[%c0_3, %c0_4] : memref<8x128xf32, #tpu.memory_space<vmem>>, vector<8x128xf32>
    %c0_5 = arith.constant 0 : index
    %c0_6 = arith.constant 0 : index
    %12 = vector.load %arg4[%c0_5, %c0_6] : memref<512x128xbf16, #tpu.memory_space<vmem>>, vector<512x128xbf16>
    %cst_7 = arith.constant dense<0.000000e+00> : vector<8x128xf32>
    %13 = tpu.matmul %10, %12, %cst_7 {dimension_numbers = #tpu.dot_dimension_numbers<[1], [0], [0], [1], [0, 0, 1, 1], [], []>} : vector<8x512xbf16>, vector<512x128xbf16>, vector<8x128xf32> -> vector<8x128xf32>
    %14 = arith.addf %11, %13 : vector<8x128xf32>
    %c0_8 = arith.constant 0 : index
    %c0_9 = arith.constant 0 : index
    %15 = vector.load %arg8[%c0_8, %c0_9] : memref<8x128xf32, #tpu.memory_space<vmem>>, vector<8x128xf32>
    tpu.vector_store %arg8[%c0_8, %c0_9], %14 {strides = array<i32>} : memref<8x128xf32, #tpu.memory_space<vmem>>, vector<8x128xf32>,
    %c0_i32_10 = arith.constant 0 : i32
    %16 = arith.cmpi eq, %arg2, %c0_i32_10 : i32
    %17 = arith.extui %16 : i1 to i32
    %c0_i32_11 = arith.constant 0 : i32
    %18 = arith.cmpi ne, %17, %c0_i32_11 : i32
    scf.if %18 {
      %c0_12 = arith.constant 0 : index
      %c0_13 = arith.constant 0 : index
      %19 = vector.load %arg8[%c0_12, %c0_13] : memref<8x128xf32, #tpu.memory_space<vmem>>, vector<8x128xf32>
      %c0_14 = arith.constant 0 : index
      %c0_15 = arith.constant 0 : index
      %20 = vector.load %arg5[%c0_14, %c0_15] : memref<1x128xf32, #tpu.memory_space<vmem>>, vector<1x128xf32>
      %21 = vector.broadcast %20 : vector<1x128xf32> to vector<8x128xf32>
      %22 = arith.addf %19, %21 : vector<8x128xf32>
      %23 = arith.truncf %22 : vector<8x128xf32> to vector<8x128xbf16>
      %c0_16 = arith.constant 0 : index
      %c0_17 = arith.constant 0 : index
      %24 = vector.load %arg6[%c0_16, %c0_17] : memref<8x128xbf16, #tpu.memory_space<vmem>>, vector<8x128xbf16>
      tpu.vector_store %arg6[%c0_16, %c0_17], %23 {strides = array<i32>} : memref<8x128xbf16, #tpu.memory_space<vmem>>, vector<8x128xbf16>,
      %cst_18 = arith.constant dense<0.000000e+00> : vector<128xf32>
      %25 = vector.multi_reduction <add>, %22, %cst_18 [0] : vector<8x128xf32> to vector<128xf32>
      %26 = vector.shape_cast %25 : vector<128xf32> to vector<1x128xf32>
      %27 = arith.mulf %22, %22 : vector<8x128xf32>
      %cst_19 = arith.constant dense<0.000000e+00> : vector<128xf32>
      %28 = vector.multi_reduction <add>, %27, %cst_19 [0] : vector<8x128xf32> to vector<128xf32>
      %29 = vector.shape_cast %28 : vector<128xf32> to vector<1x128xf32>
      %30 = tpu.concatenate %26, %29 in 0 : vector<1x128xf32>, vector<1x128xf32> -> vector<2x128xf32>
      %c0_20 = arith.constant 0 : index
      %c0_21 = arith.constant 0 : index
      %c0_22 = arith.constant 0 : index
      %31 = vector.load %arg7[%c0_20, %c0_21, %c0_22] : memref<1x2x128xf32, #tpu.memory_space<vmem>>, vector<1x2x128xf32>
      %32 = vector.shape_cast %31 : vector<1x2x128xf32> to vector<2x128xf32>
      %33 = vector.shape_cast %30 : vector<2x128xf32> to vector<1x2x128xf32>
      tpu.vector_store %arg7[%c0_20, %c0_21, %c0_22], %33 {strides = array<i32>} : memref<1x2x128xf32, #tpu.memory_space<vmem>>, vector<1x2x128xf32>,
    } else {
    }
    return
  }
  func.func @transform_0(%arg0: i32, %arg1: i32, %arg2: i32) -> (i32, i32) {
    %c0_i32 = arith.constant 0 : i32
    return %arg0, %arg2 : i32, i32
  }
  func.func @transform_1(%arg0: i32, %arg1: i32, %arg2: i32) -> (i32, i32) {
    %c0_i32 = arith.constant 0 : i32
    return %arg2, %arg1 : i32, i32
  }
  func.func @transform_2(%arg0: i32, %arg1: i32, %arg2: i32) -> (i32, i32) {
    %c0_i32 = arith.constant 0 : i32
    %c0_i32_0 = arith.constant 0 : i32
    return %c0_i32, %arg1 : i32, i32
  }
  func.func @transform_3(%arg0: i32, %arg1: i32, %arg2: i32) -> (i32, i32) {
    %c0_i32 = arith.constant 0 : i32
    return %arg0, %arg1 : i32, i32
  }
  func.func @transform_4(%arg0: i32, %arg1: i32, %arg2: i32) -> (i32, i32, i32) {
    %c0_i32 = arith.constant 0 : i32
    %c0_i32_0 = arith.constant 0 : i32
    return %arg0, %c0_i32, %arg1 : i32, i32, i32
  }
}

module attributes {stable_mosaic.version = 11 : i64} {
  func.func @_mm_kernel(%arg0: i32, %arg1: i32, %arg2: i32, %arg3: memref<8x1024xbf16, #tpu.memory_space<vmem>>, %arg4: memref<1024x128xbf16, #tpu.memory_space<vmem>>, %arg5: memref<1x128xf32, #tpu.memory_space<vmem>>, %arg6: memref<8x128xbf16, #tpu.memory_space<vmem>>, %arg7: memref<8x128xf32, #tpu.memory_space<vmem>>) attributes {dimension_semantics = [#tpu.dimension_semantics<parallel>, #tpu.dimension_semantics<parallel>, #tpu.dimension_semantics<arbitrary>], iteration_bounds = array<i64: 1, 1, 1>, scalar_prefetch = 0 : i64, scratch_operands = 1 : i64, tpu.core_type = #tpu.core_type<tc>, window_params = [{transform_indices = @transform_0, window_bounds = array<i64: 8, 1024>}, {transform_indices = @transform_1, window_bounds = array<i64: 1024, 128>}, {transform_indices = @transform_2, window_bounds = array<i64: 1, 128>}, {transform_indices = @transform_3, window_bounds = array<i64: 8, 128>}]} {
    %c0_i32 = arith.constant 0 : i32
    %0 = arith.cmpi eq, %arg2, %c0_i32 : i32
    %1 = arith.extui %0 : i1 to i32
    %c0_i32_0 = arith.constant 0 : i32
    %2 = arith.cmpi ne, %1, %c0_i32_0 : i32
    scf.if %2 {
      %cst_12 = arith.constant 0.000000e+00 : f32
      %19 = vector.broadcast %cst_12 : f32 to vector<8x128xf32>
      %c0_13 = arith.constant 0 : index
      %c0_14 = arith.constant 0 : index
      %20 = vector.load %arg7[%c0_13, %c0_14] : memref<8x128xf32, #tpu.memory_space<vmem>>, vector<8x128xf32>
      tpu.vector_store %arg7[%c0_13, %c0_14], %19 {strides = array<i32>} : memref<8x128xf32, #tpu.memory_space<vmem>>, vector<8x128xf32>,
    } else {
    }
    %c0 = arith.constant 0 : index
    %c0_1 = arith.constant 0 : index
    %3 = vector.load %arg3[%c0, %c0_1] : memref<8x1024xbf16, #tpu.memory_space<vmem>>, vector<8x1024xbf16>
    %4 = arith.extf %3 : vector<8x1024xbf16> to vector<8x1024xf32>
    %cst = arith.constant 0.000000e+00 : f32
    %5 = vector.broadcast %cst : f32 to vector<8x1024xf32>
    %6 = arith.cmpf ogt, %4, %5 : vector<8x1024xf32>
    %cst_2 = arith.constant 2.000000e-01 : f32
    %7 = vector.broadcast %cst_2 : f32 to vector<8x1024xf32>
    %8 = arith.mulf %7, %4 : vector<8x1024xf32>
    %9 = arith.select %6, %4, %8 : vector<8x1024xi1>, vector<8x1024xf32>
    %10 = arith.truncf %9 : vector<8x1024xf32> to vector<8x1024xbf16>
    %c0_3 = arith.constant 0 : index
    %c0_4 = arith.constant 0 : index
    %11 = vector.load %arg7[%c0_3, %c0_4] : memref<8x128xf32, #tpu.memory_space<vmem>>, vector<8x128xf32>
    %c0_5 = arith.constant 0 : index
    %c0_6 = arith.constant 0 : index
    %12 = vector.load %arg4[%c0_5, %c0_6] : memref<1024x128xbf16, #tpu.memory_space<vmem>>, vector<1024x128xbf16>
    %cst_7 = arith.constant dense<0.000000e+00> : vector<8x128xf32>
    %13 = tpu.matmul %10, %12, %cst_7 {dimension_numbers = #tpu.dot_dimension_numbers<[1], [0], [0], [1], [0, 0, 1, 1], [], []>} : vector<8x1024xbf16>, vector<1024x128xbf16>, vector<8x128xf32> -> vector<8x128xf32>
    %14 = arith.addf %11, %13 : vector<8x128xf32>
    %c0_8 = arith.constant 0 : index
    %c0_9 = arith.constant 0 : index
    %15 = vector.load %arg7[%c0_8, %c0_9] : memref<8x128xf32, #tpu.memory_space<vmem>>, vector<8x128xf32>
    tpu.vector_store %arg7[%c0_8, %c0_9], %14 {strides = array<i32>} : memref<8x128xf32, #tpu.memory_space<vmem>>, vector<8x128xf32>,
    %c0_i32_10 = arith.constant 0 : i32
    %16 = arith.cmpi eq, %arg2, %c0_i32_10 : i32
    %17 = arith.extui %16 : i1 to i32
    %c0_i32_11 = arith.constant 0 : i32
    %18 = arith.cmpi ne, %17, %c0_i32_11 : i32
    scf.if %18 {
      %c0_12 = arith.constant 0 : index
      %c0_13 = arith.constant 0 : index
      %19 = vector.load %arg7[%c0_12, %c0_13] : memref<8x128xf32, #tpu.memory_space<vmem>>, vector<8x128xf32>
      %c0_14 = arith.constant 0 : index
      %c0_15 = arith.constant 0 : index
      %20 = vector.load %arg5[%c0_14, %c0_15] : memref<1x128xf32, #tpu.memory_space<vmem>>, vector<1x128xf32>
      %21 = vector.broadcast %20 : vector<1x128xf32> to vector<8x128xf32>
      %22 = arith.addf %19, %21 : vector<8x128xf32>
      %23 = arith.truncf %22 : vector<8x128xf32> to vector<8x128xbf16>
      %c0_16 = arith.constant 0 : index
      %c0_17 = arith.constant 0 : index
      %24 = vector.load %arg6[%c0_16, %c0_17] : memref<8x128xbf16, #tpu.memory_space<vmem>>, vector<8x128xbf16>
      tpu.vector_store %arg6[%c0_16, %c0_17], %23 {strides = array<i32>} : memref<8x128xbf16, #tpu.memory_space<vmem>>, vector<8x128xbf16>,
    } else {
    }
    return
  }
  func.func @transform_0(%arg0: i32, %arg1: i32, %arg2: i32) -> (i32, i32) {
    %c0_i32 = arith.constant 0 : i32
    return %arg0, %arg2 : i32, i32
  }
  func.func @transform_1(%arg0: i32, %arg1: i32, %arg2: i32) -> (i32, i32) {
    %c0_i32 = arith.constant 0 : i32
    return %arg2, %arg1 : i32, i32
  }
  func.func @transform_2(%arg0: i32, %arg1: i32, %arg2: i32) -> (i32, i32) {
    %c0_i32 = arith.constant 0 : i32
    %c0_i32_0 = arith.constant 0 : i32
    return %c0_i32, %arg1 : i32, i32
  }
  func.func @transform_3(%arg0: i32, %arg1: i32, %arg2: i32) -> (i32, i32) {
    %c0_i32 = arith.constant 0 : i32
    return %arg0, %arg1 : i32, i32
  }
}

module attributes {stable_mosaic.version = 11 : i64} {
  func.func @_mm_stats_kernel(%arg0: i32, %arg1: i32, %arg2: i32, %arg3: memref<8x640xbf16, #tpu.memory_space<vmem>>, %arg4: memref<640x256xbf16, #tpu.memory_space<vmem>>, %arg5: memref<1x256xf32, #tpu.memory_space<vmem>>, %arg6: memref<8x256xbf16, #tpu.memory_space<vmem>>, %arg7: memref<1x2x256xf32, #tpu.memory_space<vmem>>, %arg8: memref<8x256xf32, #tpu.memory_space<vmem>>) attributes {dimension_semantics = [#tpu.dimension_semantics<parallel>, #tpu.dimension_semantics<parallel>, #tpu.dimension_semantics<arbitrary>], iteration_bounds = array<i64: 1, 1, 1>, scalar_prefetch = 0 : i64, scratch_operands = 1 : i64, tpu.core_type = #tpu.core_type<tc>, window_params = [{transform_indices = @transform_0, window_bounds = array<i64: 8, 640>}, {transform_indices = @transform_1, window_bounds = array<i64: 640, 256>}, {transform_indices = @transform_2, window_bounds = array<i64: 1, 256>}, {transform_indices = @transform_3, window_bounds = array<i64: 8, 256>}, {transform_indices = @transform_4, window_bounds = array<i64: 1, 2, 256>}]} {
    %c0_i32 = arith.constant 0 : i32
    %0 = arith.cmpi eq, %arg2, %c0_i32 : i32
    %1 = arith.extui %0 : i1 to i32
    %c0_i32_0 = arith.constant 0 : i32
    %2 = arith.cmpi ne, %1, %c0_i32_0 : i32
    scf.if %2 {
      %cst_11 = arith.constant 0.000000e+00 : f32
      %16 = vector.broadcast %cst_11 : f32 to vector<8x256xf32>
      %c0_12 = arith.constant 0 : index
      %c0_13 = arith.constant 0 : index
      %17 = vector.load %arg8[%c0_12, %c0_13] : memref<8x256xf32, #tpu.memory_space<vmem>>, vector<8x256xf32>
      tpu.vector_store %arg8[%c0_12, %c0_13], %16 {strides = array<i32>} : memref<8x256xf32, #tpu.memory_space<vmem>>, vector<8x256xf32>,
    } else {
    }
    %c0 = arith.constant 0 : index
    %c0_1 = arith.constant 0 : index
    %3 = vector.load %arg3[%c0, %c0_1] : memref<8x640xbf16, #tpu.memory_space<vmem>>, vector<8x640xbf16>
    %4 = arith.extf %3 : vector<8x640xbf16> to vector<8x640xf32>
    %cst = arith.constant 0.000000e+00 : f32
    %5 = vector.broadcast %cst : f32 to vector<8x640xf32>
    %6 = arith.maximumf %4, %5 : vector<8x640xf32>
    %7 = arith.truncf %6 : vector<8x640xf32> to vector<8x640xbf16>
    %c0_2 = arith.constant 0 : index
    %c0_3 = arith.constant 0 : index
    %8 = vector.load %arg8[%c0_2, %c0_3] : memref<8x256xf32, #tpu.memory_space<vmem>>, vector<8x256xf32>
    %c0_4 = arith.constant 0 : index
    %c0_5 = arith.constant 0 : index
    %9 = vector.load %arg4[%c0_4, %c0_5] : memref<640x256xbf16, #tpu.memory_space<vmem>>, vector<640x256xbf16>
    %cst_6 = arith.constant dense<0.000000e+00> : vector<8x256xf32>
    %10 = tpu.matmul %7, %9, %cst_6 {dimension_numbers = #tpu.dot_dimension_numbers<[1], [0], [0], [1], [0, 0, 1, 1], [], []>} : vector<8x640xbf16>, vector<640x256xbf16>, vector<8x256xf32> -> vector<8x256xf32>
    %11 = arith.addf %8, %10 : vector<8x256xf32>
    %c0_7 = arith.constant 0 : index
    %c0_8 = arith.constant 0 : index
    %12 = vector.load %arg8[%c0_7, %c0_8] : memref<8x256xf32, #tpu.memory_space<vmem>>, vector<8x256xf32>
    tpu.vector_store %arg8[%c0_7, %c0_8], %11 {strides = array<i32>} : memref<8x256xf32, #tpu.memory_space<vmem>>, vector<8x256xf32>,
    %c0_i32_9 = arith.constant 0 : i32
    %13 = arith.cmpi eq, %arg2, %c0_i32_9 : i32
    %14 = arith.extui %13 : i1 to i32
    %c0_i32_10 = arith.constant 0 : i32
    %15 = arith.cmpi ne, %14, %c0_i32_10 : i32
    scf.if %15 {
      %c0_11 = arith.constant 0 : index
      %c0_12 = arith.constant 0 : index
      %16 = vector.load %arg8[%c0_11, %c0_12] : memref<8x256xf32, #tpu.memory_space<vmem>>, vector<8x256xf32>
      %c0_13 = arith.constant 0 : index
      %c0_14 = arith.constant 0 : index
      %17 = vector.load %arg5[%c0_13, %c0_14] : memref<1x256xf32, #tpu.memory_space<vmem>>, vector<1x256xf32>
      %18 = vector.broadcast %17 : vector<1x256xf32> to vector<8x256xf32>
      %19 = arith.addf %16, %18 : vector<8x256xf32>
      %20 = arith.truncf %19 : vector<8x256xf32> to vector<8x256xbf16>
      %c0_15 = arith.constant 0 : index
      %c0_16 = arith.constant 0 : index
      %21 = vector.load %arg6[%c0_15, %c0_16] : memref<8x256xbf16, #tpu.memory_space<vmem>>, vector<8x256xbf16>
      tpu.vector_store %arg6[%c0_15, %c0_16], %20 {strides = array<i32>} : memref<8x256xbf16, #tpu.memory_space<vmem>>, vector<8x256xbf16>,
      %cst_17 = arith.constant dense<0.000000e+00> : vector<256xf32>
      %22 = vector.multi_reduction <add>, %19, %cst_17 [0] : vector<8x256xf32> to vector<256xf32>
      %23 = vector.shape_cast %22 : vector<256xf32> to vector<1x256xf32>
      %24 = arith.mulf %19, %19 : vector<8x256xf32>
      %cst_18 = arith.constant dense<0.000000e+00> : vector<256xf32>
      %25 = vector.multi_reduction <add>, %24, %cst_18 [0] : vector<8x256xf32> to vector<256xf32>
      %26 = vector.shape_cast %25 : vector<256xf32> to vector<1x256xf32>
      %27 = tpu.concatenate %23, %26 in 0 : vector<1x256xf32>, vector<1x256xf32> -> vector<2x256xf32>
      %c0_19 = arith.constant 0 : index
      %c0_20 = arith.constant 0 : index
      %c0_21 = arith.constant 0 : index
      %28 = vector.load %arg7[%c0_19, %c0_20, %c0_21] : memref<1x2x256xf32, #tpu.memory_space<vmem>>, vector<1x2x256xf32>
      %29 = vector.shape_cast %28 : vector<1x2x256xf32> to vector<2x256xf32>
      %30 = vector.shape_cast %27 : vector<2x256xf32> to vector<1x2x256xf32>
      tpu.vector_store %arg7[%c0_19, %c0_20, %c0_21], %30 {strides = array<i32>} : memref<1x2x256xf32, #tpu.memory_space<vmem>>, vector<1x2x256xf32>,
    } else {
    }
    return
  }
  func.func @transform_0(%arg0: i32, %arg1: i32, %arg2: i32) -> (i32, i32) {
    %c0_i32 = arith.constant 0 : i32
    return %arg0, %arg2 : i32, i32
  }
  func.func @transform_1(%arg0: i32, %arg1: i32, %arg2: i32) -> (i32, i32) {
    %c0_i32 = arith.constant 0 : i32
    return %arg2, %arg1 : i32, i32
  }
  func.func @transform_2(%arg0: i32, %arg1: i32, %arg2: i32) -> (i32, i32) {
    %c0_i32 = arith.constant 0 : i32
    %c0_i32_0 = arith.constant 0 : i32
    return %c0_i32, %arg1 : i32, i32
  }
  func.func @transform_3(%arg0: i32, %arg1: i32, %arg2: i32) -> (i32, i32) {
    %c0_i32 = arith.constant 0 : i32
    return %arg0, %arg1 : i32, i32
  }
  func.func @transform_4(%arg0: i32, %arg1: i32, %arg2: i32) -> (i32, i32, i32) {
    %c0_i32 = arith.constant 0 : i32
    %c0_i32_0 = arith.constant 0 : i32
    return %arg0, %c0_i32, %arg1 : i32, i32, i32
  }
}

module attributes {stable_mosaic.version = 11 : i64} {
  func.func @_bn_apply_kernel(%arg0: i32, %arg1: memref<8x256xbf16, #tpu.memory_space<vmem>>, %arg2: memref<1x256xf32, #tpu.memory_space<vmem>>, %arg3: memref<1x256xf32, #tpu.memory_space<vmem>>, %arg4: memref<8x256xbf16, #tpu.memory_space<vmem>>) attributes {dimension_semantics = [#tpu.dimension_semantics<parallel>], iteration_bounds = array<i64: 1>, scalar_prefetch = 0 : i64, scratch_operands = 0 : i64, tpu.core_type = #tpu.core_type<tc>, window_params = [{transform_indices = @transform_0, window_bounds = array<i64: 8, 256>}, {pipeline_mode = #tpu.pipeline_mode<synchronous>, transform_indices = @transform_1, window_bounds = array<i64: 1, 256>}, {pipeline_mode = #tpu.pipeline_mode<synchronous>, transform_indices = @transform_2, window_bounds = array<i64: 1, 256>}, {transform_indices = @transform_3, window_bounds = array<i64: 8, 256>}]} {
    %c0 = arith.constant 0 : index
    %c0_0 = arith.constant 0 : index
    %0 = vector.load %arg1[%c0, %c0_0] : memref<8x256xbf16, #tpu.memory_space<vmem>>, vector<8x256xbf16>
    %1 = arith.extf %0 : vector<8x256xbf16> to vector<8x256xf32>
    %c0_1 = arith.constant 0 : index
    %c0_2 = arith.constant 0 : index
    %2 = vector.load %arg2[%c0_1, %c0_2] : memref<1x256xf32, #tpu.memory_space<vmem>>, vector<1x256xf32>
    %3 = vector.broadcast %2 : vector<1x256xf32> to vector<8x256xf32>
    %4 = arith.mulf %1, %3 : vector<8x256xf32>
    %c0_3 = arith.constant 0 : index
    %c0_4 = arith.constant 0 : index
    %5 = vector.load %arg3[%c0_3, %c0_4] : memref<1x256xf32, #tpu.memory_space<vmem>>, vector<1x256xf32>
    %6 = vector.broadcast %5 : vector<1x256xf32> to vector<8x256xf32>
    %7 = arith.addf %4, %6 : vector<8x256xf32>
    %8 = arith.truncf %7 : vector<8x256xf32> to vector<8x256xbf16>
    %c0_5 = arith.constant 0 : index
    %c0_6 = arith.constant 0 : index
    %9 = vector.load %arg4[%c0_5, %c0_6] : memref<8x256xbf16, #tpu.memory_space<vmem>>, vector<8x256xbf16>
    tpu.vector_store %arg4[%c0_5, %c0_6], %8 {strides = array<i32>} : memref<8x256xbf16, #tpu.memory_space<vmem>>, vector<8x256xbf16>,
    return
  }
  func.func @transform_0(%arg0: i32) -> (i32, i32) {
    %c0_i32 = arith.constant 0 : i32
    %c0_i32_0 = arith.constant 0 : i32
    return %arg0, %c0_i32 : i32, i32
  }
  func.func @transform_1(%arg0: i32) -> (i32, i32) {
    %c0_i32 = arith.constant 0 : i32
    %c0_i32_0 = arith.constant 0 : i32
    %c0_i32_1 = arith.constant 0 : i32
    return %c0_i32, %c0_i32_0 : i32, i32
  }
  func.func @transform_2(%arg0: i32) -> (i32, i32) {
    %c0_i32 = arith.constant 0 : i32
    %c0_i32_0 = arith.constant 0 : i32
    %c0_i32_1 = arith.constant 0 : i32
    return %c0_i32, %c0_i32_0 : i32, i32
  }
  func.func @transform_3(%arg0: i32) -> (i32, i32) {
    %c0_i32 = arith.constant 0 : i32
    %c0_i32_0 = arith.constant 0 : i32
    return %arg0, %c0_i32 : i32, i32
  }
}

module attributes {stable_mosaic.version = 11 : i64} {
  func.func @_mm_stats_kernel(%arg0: i32, %arg1: i32, %arg2: i32, %arg3: memref<8x1152xbf16, #tpu.memory_space<vmem>>, %arg4: memref<1152x128xbf16, #tpu.memory_space<vmem>>, %arg5: memref<1x128xf32, #tpu.memory_space<vmem>>, %arg6: memref<8x128xbf16, #tpu.memory_space<vmem>>, %arg7: memref<1x2x128xf32, #tpu.memory_space<vmem>>, %arg8: memref<8x128xf32, #tpu.memory_space<vmem>>) attributes {dimension_semantics = [#tpu.dimension_semantics<parallel>, #tpu.dimension_semantics<parallel>, #tpu.dimension_semantics<arbitrary>], iteration_bounds = array<i64: 1, 1, 1>, scalar_prefetch = 0 : i64, scratch_operands = 1 : i64, tpu.core_type = #tpu.core_type<tc>, window_params = [{transform_indices = @transform_0, window_bounds = array<i64: 8, 1152>}, {transform_indices = @transform_1, window_bounds = array<i64: 1152, 128>}, {transform_indices = @transform_2, window_bounds = array<i64: 1, 128>}, {transform_indices = @transform_3, window_bounds = array<i64: 8, 128>}, {transform_indices = @transform_4, window_bounds = array<i64: 1, 2, 128>}]} {
    %c0_i32 = arith.constant 0 : i32
    %0 = arith.cmpi eq, %arg2, %c0_i32 : i32
    %1 = arith.extui %0 : i1 to i32
    %c0_i32_0 = arith.constant 0 : i32
    %2 = arith.cmpi ne, %1, %c0_i32_0 : i32
    scf.if %2 {
      %cst_11 = arith.constant 0.000000e+00 : f32
      %16 = vector.broadcast %cst_11 : f32 to vector<8x128xf32>
      %c0_12 = arith.constant 0 : index
      %c0_13 = arith.constant 0 : index
      %17 = vector.load %arg8[%c0_12, %c0_13] : memref<8x128xf32, #tpu.memory_space<vmem>>, vector<8x128xf32>
      tpu.vector_store %arg8[%c0_12, %c0_13], %16 {strides = array<i32>} : memref<8x128xf32, #tpu.memory_space<vmem>>, vector<8x128xf32>,
    } else {
    }
    %c0 = arith.constant 0 : index
    %c0_1 = arith.constant 0 : index
    %3 = vector.load %arg3[%c0, %c0_1] : memref<8x1152xbf16, #tpu.memory_space<vmem>>, vector<8x1152xbf16>
    %4 = arith.extf %3 : vector<8x1152xbf16> to vector<8x1152xf32>
    %cst = arith.constant 0.000000e+00 : f32
    %5 = vector.broadcast %cst : f32 to vector<8x1152xf32>
    %6 = arith.maximumf %4, %5 : vector<8x1152xf32>
    %7 = arith.truncf %6 : vector<8x1152xf32> to vector<8x1152xbf16>
    %c0_2 = arith.constant 0 : index
    %c0_3 = arith.constant 0 : index
    %8 = vector.load %arg8[%c0_2, %c0_3] : memref<8x128xf32, #tpu.memory_space<vmem>>, vector<8x128xf32>
    %c0_4 = arith.constant 0 : index
    %c0_5 = arith.constant 0 : index
    %9 = vector.load %arg4[%c0_4, %c0_5] : memref<1152x128xbf16, #tpu.memory_space<vmem>>, vector<1152x128xbf16>
    %cst_6 = arith.constant dense<0.000000e+00> : vector<8x128xf32>
    %10 = tpu.matmul %7, %9, %cst_6 {dimension_numbers = #tpu.dot_dimension_numbers<[1], [0], [0], [1], [0, 0, 1, 1], [], []>} : vector<8x1152xbf16>, vector<1152x128xbf16>, vector<8x128xf32> -> vector<8x128xf32>
    %11 = arith.addf %8, %10 : vector<8x128xf32>
    %c0_7 = arith.constant 0 : index
    %c0_8 = arith.constant 0 : index
    %12 = vector.load %arg8[%c0_7, %c0_8] : memref<8x128xf32, #tpu.memory_space<vmem>>, vector<8x128xf32>
    tpu.vector_store %arg8[%c0_7, %c0_8], %11 {strides = array<i32>} : memref<8x128xf32, #tpu.memory_space<vmem>>, vector<8x128xf32>,
    %c0_i32_9 = arith.constant 0 : i32
    %13 = arith.cmpi eq, %arg2, %c0_i32_9 : i32
    %14 = arith.extui %13 : i1 to i32
    %c0_i32_10 = arith.constant 0 : i32
    %15 = arith.cmpi ne, %14, %c0_i32_10 : i32
    scf.if %15 {
      %c0_11 = arith.constant 0 : index
      %c0_12 = arith.constant 0 : index
      %16 = vector.load %arg8[%c0_11, %c0_12] : memref<8x128xf32, #tpu.memory_space<vmem>>, vector<8x128xf32>
      %c0_13 = arith.constant 0 : index
      %c0_14 = arith.constant 0 : index
      %17 = vector.load %arg5[%c0_13, %c0_14] : memref<1x128xf32, #tpu.memory_space<vmem>>, vector<1x128xf32>
      %18 = vector.broadcast %17 : vector<1x128xf32> to vector<8x128xf32>
      %19 = arith.addf %16, %18 : vector<8x128xf32>
      %20 = arith.truncf %19 : vector<8x128xf32> to vector<8x128xbf16>
      %c0_15 = arith.constant 0 : index
      %c0_16 = arith.constant 0 : index
      %21 = vector.load %arg6[%c0_15, %c0_16] : memref<8x128xbf16, #tpu.memory_space<vmem>>, vector<8x128xbf16>
      tpu.vector_store %arg6[%c0_15, %c0_16], %20 {strides = array<i32>} : memref<8x128xbf16, #tpu.memory_space<vmem>>, vector<8x128xbf16>,
      %cst_17 = arith.constant dense<0.000000e+00> : vector<128xf32>
      %22 = vector.multi_reduction <add>, %19, %cst_17 [0] : vector<8x128xf32> to vector<128xf32>
      %23 = vector.shape_cast %22 : vector<128xf32> to vector<1x128xf32>
      %24 = arith.mulf %19, %19 : vector<8x128xf32>
      %cst_18 = arith.constant dense<0.000000e+00> : vector<128xf32>
      %25 = vector.multi_reduction <add>, %24, %cst_18 [0] : vector<8x128xf32> to vector<128xf32>
      %26 = vector.shape_cast %25 : vector<128xf32> to vector<1x128xf32>
      %27 = tpu.concatenate %23, %26 in 0 : vector<1x128xf32>, vector<1x128xf32> -> vector<2x128xf32>
      %c0_19 = arith.constant 0 : index
      %c0_20 = arith.constant 0 : index
      %c0_21 = arith.constant 0 : index
      %28 = vector.load %arg7[%c0_19, %c0_20, %c0_21] : memref<1x2x128xf32, #tpu.memory_space<vmem>>, vector<1x2x128xf32>
      %29 = vector.shape_cast %28 : vector<1x2x128xf32> to vector<2x128xf32>
      %30 = vector.shape_cast %27 : vector<2x128xf32> to vector<1x2x128xf32>
      tpu.vector_store %arg7[%c0_19, %c0_20, %c0_21], %30 {strides = array<i32>} : memref<1x2x128xf32, #tpu.memory_space<vmem>>, vector<1x2x128xf32>,
    } else {
    }
    return
  }
  func.func @transform_0(%arg0: i32, %arg1: i32, %arg2: i32) -> (i32, i32) {
    %c0_i32 = arith.constant 0 : i32
    return %arg0, %arg2 : i32, i32
  }
  func.func @transform_1(%arg0: i32, %arg1: i32, %arg2: i32) -> (i32, i32) {
    %c0_i32 = arith.constant 0 : i32
    return %arg2, %arg1 : i32, i32
  }
  func.func @transform_2(%arg0: i32, %arg1: i32, %arg2: i32) -> (i32, i32) {
    %c0_i32 = arith.constant 0 : i32
    %c0_i32_0 = arith.constant 0 : i32
    return %c0_i32, %arg1 : i32, i32
  }
  func.func @transform_3(%arg0: i32, %arg1: i32, %arg2: i32) -> (i32, i32) {
    %c0_i32 = arith.constant 0 : i32
    return %arg0, %arg1 : i32, i32
  }
  func.func @transform_4(%arg0: i32, %arg1: i32, %arg2: i32) -> (i32, i32, i32) {
    %c0_i32 = arith.constant 0 : i32
    %c0_i32_0 = arith.constant 0 : i32
    return %arg0, %c0_i32, %arg1 : i32, i32, i32
  }
}

module attributes {stable_mosaic.version = 11 : i64} {
  func.func @_mm_stats_kernel(%arg0: i32, %arg1: i32, %arg2: i32, %arg3: memref<32x640xbf16, #tpu.memory_space<vmem>>, %arg4: memref<640x128xbf16, #tpu.memory_space<vmem>>, %arg5: memref<1x128xf32, #tpu.memory_space<vmem>>, %arg6: memref<32x128xbf16, #tpu.memory_space<vmem>>, %arg7: memref<1x2x128xf32, #tpu.memory_space<vmem>>, %arg8: memref<32x128xf32, #tpu.memory_space<vmem>>) attributes {dimension_semantics = [#tpu.dimension_semantics<parallel>, #tpu.dimension_semantics<parallel>, #tpu.dimension_semantics<arbitrary>], iteration_bounds = array<i64: 1, 1, 1>, scalar_prefetch = 0 : i64, scratch_operands = 1 : i64, tpu.core_type = #tpu.core_type<tc>, window_params = [{transform_indices = @transform_0, window_bounds = array<i64: 32, 640>}, {transform_indices = @transform_1, window_bounds = array<i64: 640, 128>}, {transform_indices = @transform_2, window_bounds = array<i64: 1, 128>}, {transform_indices = @transform_3, window_bounds = array<i64: 32, 128>}, {transform_indices = @transform_4, window_bounds = array<i64: 1, 2, 128>}]} {
    %c0_i32 = arith.constant 0 : i32
    %0 = arith.cmpi eq, %arg2, %c0_i32 : i32
    %1 = arith.extui %0 : i1 to i32
    %c0_i32_0 = arith.constant 0 : i32
    %2 = arith.cmpi ne, %1, %c0_i32_0 : i32
    scf.if %2 {
      %cst_11 = arith.constant 0.000000e+00 : f32
      %16 = vector.broadcast %cst_11 : f32 to vector<32x128xf32>
      %c0_12 = arith.constant 0 : index
      %c0_13 = arith.constant 0 : index
      %17 = vector.load %arg8[%c0_12, %c0_13] : memref<32x128xf32, #tpu.memory_space<vmem>>, vector<32x128xf32>
      tpu.vector_store %arg8[%c0_12, %c0_13], %16 {strides = array<i32>} : memref<32x128xf32, #tpu.memory_space<vmem>>, vector<32x128xf32>,
    } else {
    }
    %c0 = arith.constant 0 : index
    %c0_1 = arith.constant 0 : index
    %3 = vector.load %arg3[%c0, %c0_1] : memref<32x640xbf16, #tpu.memory_space<vmem>>, vector<32x640xbf16>
    %4 = arith.extf %3 : vector<32x640xbf16> to vector<32x640xf32>
    %cst = arith.constant 0.000000e+00 : f32
    %5 = vector.broadcast %cst : f32 to vector<32x640xf32>
    %6 = arith.maximumf %4, %5 : vector<32x640xf32>
    %7 = arith.truncf %6 : vector<32x640xf32> to vector<32x640xbf16>
    %c0_2 = arith.constant 0 : index
    %c0_3 = arith.constant 0 : index
    %8 = vector.load %arg8[%c0_2, %c0_3] : memref<32x128xf32, #tpu.memory_space<vmem>>, vector<32x128xf32>
    %c0_4 = arith.constant 0 : index
    %c0_5 = arith.constant 0 : index
    %9 = vector.load %arg4[%c0_4, %c0_5] : memref<640x128xbf16, #tpu.memory_space<vmem>>, vector<640x128xbf16>
    %cst_6 = arith.constant dense<0.000000e+00> : vector<32x128xf32>
    %10 = tpu.matmul %7, %9, %cst_6 {dimension_numbers = #tpu.dot_dimension_numbers<[1], [0], [0], [1], [0, 0, 1, 1], [], []>} : vector<32x640xbf16>, vector<640x128xbf16>, vector<32x128xf32> -> vector<32x128xf32>
    %11 = arith.addf %8, %10 : vector<32x128xf32>
    %c0_7 = arith.constant 0 : index
    %c0_8 = arith.constant 0 : index
    %12 = vector.load %arg8[%c0_7, %c0_8] : memref<32x128xf32, #tpu.memory_space<vmem>>, vector<32x128xf32>
    tpu.vector_store %arg8[%c0_7, %c0_8], %11 {strides = array<i32>} : memref<32x128xf32, #tpu.memory_space<vmem>>, vector<32x128xf32>,
    %c0_i32_9 = arith.constant 0 : i32
    %13 = arith.cmpi eq, %arg2, %c0_i32_9 : i32
    %14 = arith.extui %13 : i1 to i32
    %c0_i32_10 = arith.constant 0 : i32
    %15 = arith.cmpi ne, %14, %c0_i32_10 : i32
    scf.if %15 {
      %c0_11 = arith.constant 0 : index
      %c0_12 = arith.constant 0 : index
      %16 = vector.load %arg8[%c0_11, %c0_12] : memref<32x128xf32, #tpu.memory_space<vmem>>, vector<32x128xf32>
      %c0_13 = arith.constant 0 : index
      %c0_14 = arith.constant 0 : index
      %17 = vector.load %arg5[%c0_13, %c0_14] : memref<1x128xf32, #tpu.memory_space<vmem>>, vector<1x128xf32>
      %18 = vector.broadcast %17 : vector<1x128xf32> to vector<32x128xf32>
      %19 = arith.addf %16, %18 : vector<32x128xf32>
      %20 = arith.truncf %19 : vector<32x128xf32> to vector<32x128xbf16>
      %c0_15 = arith.constant 0 : index
      %c0_16 = arith.constant 0 : index
      %21 = vector.load %arg6[%c0_15, %c0_16] : memref<32x128xbf16, #tpu.memory_space<vmem>>, vector<32x128xbf16>
      tpu.vector_store %arg6[%c0_15, %c0_16], %20 {strides = array<i32>} : memref<32x128xbf16, #tpu.memory_space<vmem>>, vector<32x128xbf16>,
      %cst_17 = arith.constant dense<0.000000e+00> : vector<128xf32>
      %22 = vector.multi_reduction <add>, %19, %cst_17 [0] : vector<32x128xf32> to vector<128xf32>
      %23 = vector.shape_cast %22 : vector<128xf32> to vector<1x128xf32>
      %24 = arith.mulf %19, %19 : vector<32x128xf32>
      %cst_18 = arith.constant dense<0.000000e+00> : vector<128xf32>
      %25 = vector.multi_reduction <add>, %24, %cst_18 [0] : vector<32x128xf32> to vector<128xf32>
      %26 = vector.shape_cast %25 : vector<128xf32> to vector<1x128xf32>
      %27 = tpu.concatenate %23, %26 in 0 : vector<1x128xf32>, vector<1x128xf32> -> vector<2x128xf32>
      %c0_19 = arith.constant 0 : index
      %c0_20 = arith.constant 0 : index
      %c0_21 = arith.constant 0 : index
      %28 = vector.load %arg7[%c0_19, %c0_20, %c0_21] : memref<1x2x128xf32, #tpu.memory_space<vmem>>, vector<1x2x128xf32>
      %29 = vector.shape_cast %28 : vector<1x2x128xf32> to vector<2x128xf32>
      %30 = vector.shape_cast %27 : vector<2x128xf32> to vector<1x2x128xf32>
      tpu.vector_store %arg7[%c0_19, %c0_20, %c0_21], %30 {strides = array<i32>} : memref<1x2x128xf32, #tpu.memory_space<vmem>>, vector<1x2x128xf32>,
    } else {
    }
    return
  }
  func.func @transform_0(%arg0: i32, %arg1: i32, %arg2: i32) -> (i32, i32) {
    %c0_i32 = arith.constant 0 : i32
    return %arg0, %arg2 : i32, i32
  }
  func.func @transform_1(%arg0: i32, %arg1: i32, %arg2: i32) -> (i32, i32) {
    %c0_i32 = arith.constant 0 : i32
    return %arg2, %arg1 : i32, i32
  }
  func.func @transform_2(%arg0: i32, %arg1: i32, %arg2: i32) -> (i32, i32) {
    %c0_i32 = arith.constant 0 : i32
    %c0_i32_0 = arith.constant 0 : i32
    return %c0_i32, %arg1 : i32, i32
  }
  func.func @transform_3(%arg0: i32, %arg1: i32, %arg2: i32) -> (i32, i32) {
    %c0_i32 = arith.constant 0 : i32
    return %arg0, %arg1 : i32, i32
  }
  func.func @transform_4(%arg0: i32, %arg1: i32, %arg2: i32) -> (i32, i32, i32) {
    %c0_i32 = arith.constant 0 : i32
    %c0_i32_0 = arith.constant 0 : i32
    return %arg0, %c0_i32, %arg1 : i32, i32, i32
  }
}

module attributes {stable_mosaic.version = 11 : i64} {
  func.func @_mm_stats_kernel(%arg0: i32, %arg1: i32, %arg2: i32, %arg3: memref<128x384xbf16, #tpu.memory_space<vmem>>, %arg4: memref<384x128xbf16, #tpu.memory_space<vmem>>, %arg5: memref<1x128xf32, #tpu.memory_space<vmem>>, %arg6: memref<128x128xbf16, #tpu.memory_space<vmem>>, %arg7: memref<1x2x128xf32, #tpu.memory_space<vmem>>, %arg8: memref<128x128xf32, #tpu.memory_space<vmem>>) attributes {dimension_semantics = [#tpu.dimension_semantics<parallel>, #tpu.dimension_semantics<parallel>, #tpu.dimension_semantics<arbitrary>], iteration_bounds = array<i64: 1, 1, 1>, scalar_prefetch = 0 : i64, scratch_operands = 1 : i64, tpu.core_type = #tpu.core_type<tc>, window_params = [{transform_indices = @transform_0, window_bounds = array<i64: 128, 384>}, {transform_indices = @transform_1, window_bounds = array<i64: 384, 128>}, {transform_indices = @transform_2, window_bounds = array<i64: 1, 128>}, {transform_indices = @transform_3, window_bounds = array<i64: 128, 128>}, {transform_indices = @transform_4, window_bounds = array<i64: 1, 2, 128>}]} {
    %c0_i32 = arith.constant 0 : i32
    %0 = arith.cmpi eq, %arg2, %c0_i32 : i32
    %1 = arith.extui %0 : i1 to i32
    %c0_i32_0 = arith.constant 0 : i32
    %2 = arith.cmpi ne, %1, %c0_i32_0 : i32
    scf.if %2 {
      %cst_11 = arith.constant 0.000000e+00 : f32
      %16 = vector.broadcast %cst_11 : f32 to vector<128x128xf32>
      %c0_12 = arith.constant 0 : index
      %c0_13 = arith.constant 0 : index
      %17 = vector.load %arg8[%c0_12, %c0_13] : memref<128x128xf32, #tpu.memory_space<vmem>>, vector<128x128xf32>
      tpu.vector_store %arg8[%c0_12, %c0_13], %16 {strides = array<i32>} : memref<128x128xf32, #tpu.memory_space<vmem>>, vector<128x128xf32>,
    } else {
    }
    %c0 = arith.constant 0 : index
    %c0_1 = arith.constant 0 : index
    %3 = vector.load %arg3[%c0, %c0_1] : memref<128x384xbf16, #tpu.memory_space<vmem>>, vector<128x384xbf16>
    %4 = arith.extf %3 : vector<128x384xbf16> to vector<128x384xf32>
    %cst = arith.constant 0.000000e+00 : f32
    %5 = vector.broadcast %cst : f32 to vector<128x384xf32>
    %6 = arith.maximumf %4, %5 : vector<128x384xf32>
    %7 = arith.truncf %6 : vector<128x384xf32> to vector<128x384xbf16>
    %c0_2 = arith.constant 0 : index
    %c0_3 = arith.constant 0 : index
    %8 = vector.load %arg8[%c0_2, %c0_3] : memref<128x128xf32, #tpu.memory_space<vmem>>, vector<128x128xf32>
    %c0_4 = arith.constant 0 : index
    %c0_5 = arith.constant 0 : index
    %9 = vector.load %arg4[%c0_4, %c0_5] : memref<384x128xbf16, #tpu.memory_space<vmem>>, vector<384x128xbf16>
    %cst_6 = arith.constant dense<0.000000e+00> : vector<128x128xf32>
    %10 = tpu.matmul %7, %9, %cst_6 {dimension_numbers = #tpu.dot_dimension_numbers<[1], [0], [0], [1], [0, 0, 1, 1], [], []>} : vector<128x384xbf16>, vector<384x128xbf16>, vector<128x128xf32> -> vector<128x128xf32>
    %11 = arith.addf %8, %10 : vector<128x128xf32>
    %c0_7 = arith.constant 0 : index
    %c0_8 = arith.constant 0 : index
    %12 = vector.load %arg8[%c0_7, %c0_8] : memref<128x128xf32, #tpu.memory_space<vmem>>, vector<128x128xf32>
    tpu.vector_store %arg8[%c0_7, %c0_8], %11 {strides = array<i32>} : memref<128x128xf32, #tpu.memory_space<vmem>>, vector<128x128xf32>,
    %c0_i32_9 = arith.constant 0 : i32
    %13 = arith.cmpi eq, %arg2, %c0_i32_9 : i32
    %14 = arith.extui %13 : i1 to i32
    %c0_i32_10 = arith.constant 0 : i32
    %15 = arith.cmpi ne, %14, %c0_i32_10 : i32
    scf.if %15 {
      %c0_11 = arith.constant 0 : index
      %c0_12 = arith.constant 0 : index
      %16 = vector.load %arg8[%c0_11, %c0_12] : memref<128x128xf32, #tpu.memory_space<vmem>>, vector<128x128xf32>
      %c0_13 = arith.constant 0 : index
      %c0_14 = arith.constant 0 : index
      %17 = vector.load %arg5[%c0_13, %c0_14] : memref<1x128xf32, #tpu.memory_space<vmem>>, vector<1x128xf32>
      %18 = vector.broadcast %17 : vector<1x128xf32> to vector<128x128xf32>
      %19 = arith.addf %16, %18 : vector<128x128xf32>
      %20 = arith.truncf %19 : vector<128x128xf32> to vector<128x128xbf16>
      %c0_15 = arith.constant 0 : index
      %c0_16 = arith.constant 0 : index
      %21 = vector.load %arg6[%c0_15, %c0_16] : memref<128x128xbf16, #tpu.memory_space<vmem>>, vector<128x128xbf16>
      tpu.vector_store %arg6[%c0_15, %c0_16], %20 {strides = array<i32>} : memref<128x128xbf16, #tpu.memory_space<vmem>>, vector<128x128xbf16>,
      %cst_17 = arith.constant dense<0.000000e+00> : vector<128xf32>
      %22 = vector.multi_reduction <add>, %19, %cst_17 [0] : vector<128x128xf32> to vector<128xf32>
      %23 = vector.shape_cast %22 : vector<128xf32> to vector<1x128xf32>
      %24 = arith.mulf %19, %19 : vector<128x128xf32>
      %cst_18 = arith.constant dense<0.000000e+00> : vector<128xf32>
      %25 = vector.multi_reduction <add>, %24, %cst_18 [0] : vector<128x128xf32> to vector<128xf32>
      %26 = vector.shape_cast %25 : vector<128xf32> to vector<1x128xf32>
      %27 = tpu.concatenate %23, %26 in 0 : vector<1x128xf32>, vector<1x128xf32> -> vector<2x128xf32>
      %c0_19 = arith.constant 0 : index
      %c0_20 = arith.constant 0 : index
      %c0_21 = arith.constant 0 : index
      %28 = vector.load %arg7[%c0_19, %c0_20, %c0_21] : memref<1x2x128xf32, #tpu.memory_space<vmem>>, vector<1x2x128xf32>
      %29 = vector.shape_cast %28 : vector<1x2x128xf32> to vector<2x128xf32>
      %30 = vector.shape_cast %27 : vector<2x128xf32> to vector<1x2x128xf32>
      tpu.vector_store %arg7[%c0_19, %c0_20, %c0_21], %30 {strides = array<i32>} : memref<1x2x128xf32, #tpu.memory_space<vmem>>, vector<1x2x128xf32>,
    } else {
    }
    return
  }
  func.func @transform_0(%arg0: i32, %arg1: i32, %arg2: i32) -> (i32, i32) {
    %c0_i32 = arith.constant 0 : i32
    return %arg0, %arg2 : i32, i32
  }
  func.func @transform_1(%arg0: i32, %arg1: i32, %arg2: i32) -> (i32, i32) {
    %c0_i32 = arith.constant 0 : i32
    return %arg2, %arg1 : i32, i32
  }
  func.func @transform_2(%arg0: i32, %arg1: i32, %arg2: i32) -> (i32, i32) {
    %c0_i32 = arith.constant 0 : i32
    %c0_i32_0 = arith.constant 0 : i32
    return %c0_i32, %arg1 : i32, i32
  }
  func.func @transform_3(%arg0: i32, %arg1: i32, %arg2: i32) -> (i32, i32) {
    %c0_i32 = arith.constant 0 : i32
    return %arg0, %arg1 : i32, i32
  }
  func.func @transform_4(%arg0: i32, %arg1: i32, %arg2: i32) -> (i32, i32, i32) {
    %c0_i32 = arith.constant 0 : i32
    %c0_i32_0 = arith.constant 0 : i32
    return %arg0, %c0_i32, %arg1 : i32, i32, i32
  }
}

module attributes {stable_mosaic.version = 11 : i64} {
  func.func @_mm_kernel(%arg0: i32, %arg1: i32, %arg2: i32, %arg3: memref<512x256xbf16, #tpu.memory_space<vmem>>, %arg4: memref<256x128xbf16, #tpu.memory_space<vmem>>, %arg5: memref<1x128xf32, #tpu.memory_space<vmem>>, %arg6: memref<512x128xbf16, #tpu.memory_space<vmem>>, %arg7: memref<512x128xf32, #tpu.memory_space<vmem>>) attributes {dimension_semantics = [#tpu.dimension_semantics<parallel>, #tpu.dimension_semantics<parallel>, #tpu.dimension_semantics<arbitrary>], iteration_bounds = array<i64: 1, 1, 1>, scalar_prefetch = 0 : i64, scratch_operands = 1 : i64, tpu.core_type = #tpu.core_type<tc>, window_params = [{transform_indices = @transform_0, window_bounds = array<i64: 512, 256>}, {transform_indices = @transform_1, window_bounds = array<i64: 256, 128>}, {transform_indices = @transform_2, window_bounds = array<i64: 1, 128>}, {transform_indices = @transform_3, window_bounds = array<i64: 512, 128>}]} {
    %c0_i32 = arith.constant 0 : i32
    %0 = arith.cmpi eq, %arg2, %c0_i32 : i32
    %1 = arith.extui %0 : i1 to i32
    %c0_i32_0 = arith.constant 0 : i32
    %2 = arith.cmpi ne, %1, %c0_i32_0 : i32
    scf.if %2 {
      %cst_11 = arith.constant 0.000000e+00 : f32
      %16 = vector.broadcast %cst_11 : f32 to vector<512x128xf32>
      %c0_12 = arith.constant 0 : index
      %c0_13 = arith.constant 0 : index
      %17 = vector.load %arg7[%c0_12, %c0_13] : memref<512x128xf32, #tpu.memory_space<vmem>>, vector<512x128xf32>
      tpu.vector_store %arg7[%c0_12, %c0_13], %16 {strides = array<i32>} : memref<512x128xf32, #tpu.memory_space<vmem>>, vector<512x128xf32>,
    } else {
    }
    %c0 = arith.constant 0 : index
    %c0_1 = arith.constant 0 : index
    %3 = vector.load %arg3[%c0, %c0_1] : memref<512x256xbf16, #tpu.memory_space<vmem>>, vector<512x256xbf16>
    %4 = arith.extf %3 : vector<512x256xbf16> to vector<512x256xf32>
    %cst = arith.constant 0.000000e+00 : f32
    %5 = vector.broadcast %cst : f32 to vector<512x256xf32>
    %6 = arith.maximumf %4, %5 : vector<512x256xf32>
    %7 = arith.truncf %6 : vector<512x256xf32> to vector<512x256xbf16>
    %c0_2 = arith.constant 0 : index
    %c0_3 = arith.constant 0 : index
    %8 = vector.load %arg7[%c0_2, %c0_3] : memref<512x128xf32, #tpu.memory_space<vmem>>, vector<512x128xf32>
    %c0_4 = arith.constant 0 : index
    %c0_5 = arith.constant 0 : index
    %9 = vector.load %arg4[%c0_4, %c0_5] : memref<256x128xbf16, #tpu.memory_space<vmem>>, vector<256x128xbf16>
    %cst_6 = arith.constant dense<0.000000e+00> : vector<512x128xf32>
    %10 = tpu.matmul %7, %9, %cst_6 {dimension_numbers = #tpu.dot_dimension_numbers<[1], [0], [0], [1], [0, 0, 1, 1], [], []>} : vector<512x256xbf16>, vector<256x128xbf16>, vector<512x128xf32> -> vector<512x128xf32>
    %11 = arith.addf %8, %10 : vector<512x128xf32>
    %c0_7 = arith.constant 0 : index
    %c0_8 = arith.constant 0 : index
    %12 = vector.load %arg7[%c0_7, %c0_8] : memref<512x128xf32, #tpu.memory_space<vmem>>, vector<512x128xf32>
    tpu.vector_store %arg7[%c0_7, %c0_8], %11 {strides = array<i32>} : memref<512x128xf32, #tpu.memory_space<vmem>>, vector<512x128xf32>,
    %c0_i32_9 = arith.constant 0 : i32
    %13 = arith.cmpi eq, %arg2, %c0_i32_9 : i32
    %14 = arith.extui %13 : i1 to i32
    %c0_i32_10 = arith.constant 0 : i32
    %15 = arith.cmpi ne, %14, %c0_i32_10 : i32
    scf.if %15 {
      %c0_11 = arith.constant 0 : index
      %c0_12 = arith.constant 0 : index
      %16 = vector.load %arg7[%c0_11, %c0_12] : memref<512x128xf32, #tpu.memory_space<vmem>>, vector<512x128xf32>
      %c0_13 = arith.constant 0 : index
      %c0_14 = arith.constant 0 : index
      %17 = vector.load %arg5[%c0_13, %c0_14] : memref<1x128xf32, #tpu.memory_space<vmem>>, vector<1x128xf32>
      %18 = vector.broadcast %17 : vector<1x128xf32> to vector<512x128xf32>
      %19 = arith.addf %16, %18 : vector<512x128xf32>
      %20 = arith.truncf %19 : vector<512x128xf32> to vector<512x128xbf16>
      %c0_15 = arith.constant 0 : index
      %c0_16 = arith.constant 0 : index
      %21 = vector.load %arg6[%c0_15, %c0_16] : memref<512x128xbf16, #tpu.memory_space<vmem>>, vector<512x128xbf16>
      tpu.vector_store %arg6[%c0_15, %c0_16], %20 {strides = array<i32>} : memref<512x128xbf16, #tpu.memory_space<vmem>>, vector<512x128xbf16>,
    } else {
    }
    return
  }
  func.func @transform_0(%arg0: i32, %arg1: i32, %arg2: i32) -> (i32, i32) {
    %c0_i32 = arith.constant 0 : i32
    return %arg0, %arg2 : i32, i32
  }
  func.func @transform_1(%arg0: i32, %arg1: i32, %arg2: i32) -> (i32, i32) {
    %c0_i32 = arith.constant 0 : i32
    return %arg2, %arg1 : i32, i32
  }
  func.func @transform_2(%arg0: i32, %arg1: i32, %arg2: i32) -> (i32, i32) {
    %c0_i32 = arith.constant 0 : i32
    %c0_i32_0 = arith.constant 0 : i32
    return %c0_i32, %arg1 : i32, i32
  }
  func.func @transform_3(%arg0: i32, %arg1: i32, %arg2: i32) -> (i32, i32) {
    %c0_i32 = arith.constant 0 : i32
    return %arg0, %arg1 : i32, i32
  }
}

</mosaic_0001>

<llo_original>
// kernel: _lambda_.18
$region0: #{_lambda_.18}
  #allocation0 [shape = 'u32[]', space=smem, size = 0x4, offset = 0x4, fixed_abs, tag = 'smem constant byte address 0x4 - core index']
  #allocation1 [shape = 'u32[144,128]{1,0:T(1,128)}', space=vmem, size = 0x12000, scoped, tag = 'internal scratch']
  #allocation2 [shape = 'f32[512,128]{1,0:T(8,128)}', space=vmem, size = 0x40000, scoped, tag = 'scratch operand']
  %s0 = inlined_call_operand.vmem [shape: bf16[2048,128], index: 0, kind: input, shape index: {}]
  %s1 = inlined_call_operand.vmem [shape: bf16[128,128], index: 1, kind: input, shape index: {}]
  %s2 = inlined_call_operand.vmem [shape: f32[1,128], index: 2, kind: input, shape index: {}]
  %s3 = inlined_call_operand.vmem [shape: bf16[2048,128], index: 3, kind: output, shape index: {}]
  %s4 = sld [smem:[#allocation0]]
  $region53: #{_lambda_.18} parent=0
    _
  %s6 = ssub.s32 1, %s4
  %s7 = scalar_select 0, %s6, %s4
  loop: start=0, step=1, limit=6
  $region2: #{_lambda_.18} parent=0 // loop_pre_header
    _
  $region3: #{_lambda_.18} parent=0 // loop_header
    %s9 = sphi 0, %s13
    %p10 = scmp.ge.s32.totalorder %s9, 6
    %s16 = sphi 0, %s35
    %s17 = sphi 0, %s31
    %s18 = sphi 0, %s27
    %s19 = sphi 0, %s16
    %s20 = sphi 0, %s17
    %s21 = sphi 0, %s18
    %s22 = sphi 0, %s19
    %s23 = sphi 0, %s20
    %s24 = sphi 0, %s21
    %s40 = sphi 0, %s42
    %s43 = sphi 0, %s40
    %s44 = sphi 0, %s43
    %s60 = sphi 0, %s44
    %s68 = sphi 0, %s70
    %s71 = sphi 0, %s68
    %s72 = sphi 0, %s71
    %s88 = sphi 0, %s72
    %s94 = sphi 0, %s96
    %s97 = sphi 0, %s94
    %s98 = sphi 0, %s97
    %s114 = sphi 0, %s98
    %s122 = sphi 0, %s124
    %s125 = sphi 0, %s122
    %s126 = sphi 0, %s125
    %s142 = sphi 0, %s126
  $region4: #{_lambda_.18} parent=0 // loop_header_branch
    %12 = sbr.rel (%p10) target = $region8
  $region5: #{_lambda_.18} parent=0 // loop_body
    %s14 = ssub.s32 %s9, 1
    %s15 = ssub.s32 %s9, 2
    %s25 = sadd.s32 1, %s18
    %p26 = scmp.ge.s32.totalorder %s25, 1
    %s27 = scalar_select %p26, 0, %s25
    %s28 = sadd.s32 1, %s17
    %s29 = scalar_select %p26, %s28, %s17
    %p30 = scmp.ge.s32.totalorder %s29, 1
    %s31 = scalar_select %p30, 0, %s29
    %s32 = sadd.s32 1, %s16
    %s33 = scalar_select %p30, %s32, %s16
    %p34 = scmp.ge.s32.totalorder %s33, 4
    %s35 = scalar_select %p34, 0, %s33
    %s36 = ssub.s32 %s16, %s35
    %s37 = ssub.s32 %s18, %s27
    %s38 = sor.u32 %s36, %s37
    %p39 = scmp.eq.s32.totalorder %s38, 0
    %s41 = sadd.s32 %s40, 1
    %s42 = scalar_select %p39, %s40, %s41
    %p45 = pneg %p39
    %p46 = scmp.eq.s32.totalorder %s9, 3
    %p47 = por %p45, %p46
    %p48 = scmp.ne.s32.totalorder %s40, %s43
    %p49 = scmp.eq.s32.totalorder %s9, 0
    %p50 = por %p48, %p49
    %p51 = scmp.ne.s32.totalorder %s40, %s43
    %p52 = scmp.eq.s32.totalorder %s14, 3
    %p53 = por %p51, %p52
    %p54 = scmp.ne.s32.totalorder %s43, %s44
    %p55 = scmp.eq.s32.totalorder %s14, 0
    %p56 = por %p54, %p55
    %p57 = scmp.ne.s32.totalorder %s43, %s44
    %p58 = scmp.eq.s32.totalorder %s15, 3
    %p59 = por %p57, %p58
    %p61 = scmp.ne.s32.totalorder %s44, %s60
    %p62 = scmp.eq.s32.totalorder %s15, 0
    %p63 = por %p61, %p62
    %s64 = ssub.s32 %s18, %s27
    %s65 = ssub.s32 %s17, %s31
    %s66 = sor.u32 %s64, %s65
    %p67 = scmp.eq.s32.totalorder %s66, 0
    %s69 = sadd.s32 %s68, 1
    %s70 = scalar_select %p67, %s68, %s69
    %p73 = pneg %p67
    %p74 = scmp.eq.s32.totalorder %s9, 3
    %p75 = por %p73, %p74
    %p76 = scmp.ne.s32.totalorder %s68, %s71
    %p77 = scmp.eq.s32.totalorder %s9, 0
    %p78 = por %p76, %p77
    %p79 = scmp.ne.s32.totalorder %s68, %s71
    %p80 = scmp.eq.s32.totalorder %s14, 3
    %p81 = por %p79, %p80
    %p82 = scmp.ne.s32.totalorder %s71, %s72
    %p83 = scmp.eq.s32.totalorder %s14, 0
    %p84 = por %p82, %p83
    %p85 = scmp.ne.s32.totalorder %s71, %s72
    %p86 = scmp.eq.s32.totalorder %s15, 3
    %p87 = por %p85, %p86
    %p89 = scmp.ne.s32.totalorder %s72, %s88
    %p90 = scmp.eq.s32.totalorder %s15, 0
    %p91 = por %p89, %p90
    %s92 = ssub.s32 %s17, %s31
    %p93 = scmp.eq.s32.totalorder %s92, 0
    %s95 = sadd.s32 %s94, 1
    %s96 = scalar_select %p93, %s94, %s95
    %p99 = pneg %p93
    %p100 = scmp.eq.s32.totalorder %s9, 3
    %p101 = por %p99, %p100
    %p102 = scmp.ne.s32.totalorder %s94, %s97
    %p103 = scmp.eq.s32.totalorder %s9, 0
    %p104 = por %p102, %p103
    %p105 = scmp.ne.s32.totalorder %s94, %s97
    %p106 = scmp.eq.s32.totalorder %s14, 3
    %p107 = por %p105, %p106
    %p108 = scmp.ne.s32.totalorder %s97, %s98
    %p109 = scmp.eq.s32.totalorder %s14, 0
    %p110 = por %p108, %p109
    %p111 = scmp.ne.s32.totalorder %s97, %s98
    %p112 = scmp.eq.s32.totalorder %s15, 3
    %p113 = por %p111, %p112
    %p115 = scmp.ne.s32.totalorder %s98, %s114
    %p116 = scmp.eq.s32.totalorder %s15, 0
    %p117 = por %p115, %p116
    %s118 = ssub.s32 %s16, %s35
    %s119 = ssub.s32 %s17, %s31
    %s120 = sor.u32 %s118, %s119
    %p121 = scmp.eq.s32.totalorder %s120, 0
    %s123 = sadd.s32 %s122, 1
    %s124 = scalar_select %p121, %s122, %s123
    %p127 = pneg %p121
    %p128 = scmp.eq.s32.totalorder %s9, 3
    %p129 = por %p127, %p128
    %p130 = scmp.ne.s32.totalorder %s122, %s125
    %p131 = scmp.eq.s32.totalorder %s9, 0
    %p132 = por %p130, %p131
    %p133 = scmp.ne.s32.totalorder %s122, %s125
    %p134 = scmp.eq.s32.totalorder %s14, 3
    %p135 = por %p133, %p134
    %p136 = scmp.ne.s32.totalorder %s125, %s126
    %p137 = scmp.eq.s32.totalorder %s14, 0
    %p138 = por %p136, %p137
    %p139 = scmp.ne.s32.totalorder %s125, %s126
    %p140 = scmp.eq.s32.totalorder %s15, 3
    %p141 = por %p139, %p140
    %p143 = scmp.ne.s32.totalorder %s126, %s142
    %p144 = scmp.eq.s32.totalorder %s15, 0
    %p145 = por %p143, %p144
    %p146 = scmp.le.s32.totalorder 1, %s9
    %p147 = scmp.lt.s32.totalorder %s9, 5
    %p148 = pnand %p146, %p147
    %p149 = pneg %p148
    // Predicated region
    $region9: #{_lambda_.18} parent=5 // pred_check
      _
    $region10: #{_lambda_.18} parent=5 // pred_check_branch
      %151 = sbr.rel (%p148) target = $region12
    $region11: #{_lambda_.18} parent=5 // pred_region
      %s152 = ssub.s32 %s9, 1
      // Predicated region
      $region13: #{_lambda_.18} parent=11 // pred_check
        %p153 = pneg %p84
      $region14: #{_lambda_.18} parent=11 // pred_check_branch
        %155 = sbr.rel (%p153) target = $region16
      $region15: #{_lambda_.18} parent=11 // pred_region
        %s156 = smul.u32 16, %s21
        %p157 = scmp.lt.s32.totalorder %s156, 15
        %s158 = scalar_select %p157, %s156, 15
        %p159 = scmp.lt.s32.totalorder %s20, 0
        %s160 = scalar_select %p159, %s20, 0
        %s161 = sadd.s32 %s160, %s158
        %s162 = smul.addr %s161, 4
        %s163 = scalar_lea.vmem %s1, %s162
        %s164 = smul.u32 16, %s21
      $region16: #{_lambda_.18} parent=11 // pred_fallthru
        _
      // Predicated region
      $region17: #{_lambda_.18} parent=11 // pred_check
        %p165 = pneg %p110
      $region18: #{_lambda_.18} parent=11 // pred_check_branch
        %167 = sbr.rel (%p165) target = $region20
      $region19: #{_lambda_.18} parent=11 // pred_region
        %p168 = scmp.lt.s32.totalorder %s20, 0
        %s169 = scalar_select %p168, %s20, 0
        %s170 = scalar_lea.vmem %s2, %s169
      $region20: #{_lambda_.18} parent=11 // pred_fallthru
        _
    $region12: #{_lambda_.18} parent=5 // pred_fallthru
      _
    %p171 = scmp.lt.s32.totalorder %s9, 4
    // Predicated region
    $region21: #{_lambda_.18} parent=5 // pred_check
      %p172 = pneg %p171
    $region22: #{_lambda_.18} parent=5 // pred_check_branch
      %174 = sbr.rel (%p172) target = $region24
    $region23: #{_lambda_.18} parent=5 // pred_region
      // Predicated region
      $region25: #{_lambda_.18} parent=23 // pred_check
        %p175 = pneg %p50
      $region26: #{_lambda_.18} parent=23 // pred_check_branch
        %177 = sbr.rel (%p175) target = $region28
      $region27: #{_lambda_.18} parent=23 // pred_region
        %s178 = smul.u32 64, %s16
        %p179 = scmp.lt.s32.totalorder %s178, 255
        %s180 = scalar_select %p179, %s178, 255
        %p181 = scmp.lt.s32.totalorder %s18, 0
        %s182 = scalar_select %p181, %s18, 0
        %s183 = sadd.s32 %s182, %s180
        %s184 = smul.addr %s183, 4
        %s185 = scalar_lea.vmem %s0, %s184
        %s186 = smul.u32 64, %s16
      $region28: #{_lambda_.18} parent=23 // pred_fallthru
        _
    $region24: #{_lambda_.18} parent=5 // pred_fallthru
      _
    %p187 = scmp.le.s32.totalorder 1, %s9
    %p188 = scmp.lt.s32.totalorder %s9, 5
    %p189 = pnand %p187, %p188
    %p190 = pneg %p189
    // Predicated region
    $region29: #{_lambda_.18} parent=5 // pred_check
      _
    $region30: #{_lambda_.18} parent=5 // pred_check_branch
      %192 = sbr.rel (%p189) target = $region32
    $region31: #{_lambda_.18} parent=5 // pred_region
      %s193 = ssub.s32 %s9, 1
      %s194 = smul.u32 64, %s19
      %p195 = scmp.lt.s32.totalorder %s194, 255
      %s196 = scalar_select %p195, %s194, 255
      %p197 = scmp.lt.s32.totalorder %s21, 0
      %s198 = scalar_select %p197, %s21, 0
      %s199 = sadd.s32 %s198, %s196
      %s200 = smul.addr %s199, 4
      %s201 = scalar_lea.vmem %s0, %s200
      %p202 = pneg %p56
      %p203 = pneg %p53
      %s204 = smul.u32 16, %s21
      %p205 = scmp.lt.s32.totalorder %s204, 15
      %s206 = scalar_select %p205, %s204, 15
      %p207 = scmp.lt.s32.totalorder %s20, 0
      %s208 = scalar_select %p207, %s20, 0
      %s209 = sadd.s32 %s208, %s206
      %s210 = smul.addr %s209, 4
      %s211 = scalar_lea.vmem %s1, %s210
      %p212 = pneg %p84
      %p213 = pneg %p81
      %p214 = scmp.lt.s32.totalorder %s20, 0
      %s215 = scalar_select %p214, %s20, 0
      %s216 = scalar_lea.vmem %s2, %s215
      %p217 = pneg %p110
      %p218 = pneg %p107
      %p219 = pneg %p138
      %p220 = pneg %p135
      %s221 = smul.u32 64, %s19
      %p222 = scmp.lt.s32.totalorder %s221, 255
      %s223 = scalar_select %p222, %s221, 255
      %p224 = scmp.lt.s32.totalorder %s20, 0
      %s225 = scalar_select %p224, %s20, 0
      %s226 = sadd.s32 %s225, %s223
      %s227 = smul.addr %s226, 4
      %s228 = scalar_lea.vmem %s3, %s227
      %s229 = smul.u32 64, %s19
      %p230 = scmp.lt.s32.totalorder %s229, 255
      %s231 = scalar_select %p230, %s229, 255
      %p232 = scmp.lt.s32.totalorder %s21, 0
      %s233 = scalar_select %p232, %s21, 0
      %s234 = sadd.s32 %s233, %s231
      %s235 = smul.addr %s234, 4
      %s236 = scalar_lea.vmem %s0, %s235
      %s237 = smul.u32 64, %s19
      %s238 = smul.u32 16, %s21
      %p239 = scmp.lt.s32.totalorder %s238, 15
      %s240 = scalar_select %p239, %s238, 15
      %p241 = scmp.lt.s32.totalorder %s20, 0
      %s242 = scalar_select %p241, %s20, 0
      %s243 = sadd.s32 %s242, %s240
      %s244 = smul.addr %s243, 4
      %s245 = scalar_lea.vmem %s1, %s244
      %s246 = smul.u32 16, %s21
      %p247 = scmp.lt.s32.totalorder %s20, 0
      %s248 = scalar_select %p247, %s20, 0
      %s249 = scalar_lea.vmem %s2, %s248
      %s250 = smul.u32 64, %s19
      %p251 = scmp.lt.s32.totalorder %s250, 255
      %s252 = scalar_select %p251, %s250, 255
      %p253 = scmp.lt.s32.totalorder %s20, 0
      %s254 = scalar_select %p253, %s20, 0
      %s255 = sadd.s32 %s254, %s252
      %s256 = smul.addr %s255, 4
      %s257 = scalar_lea.vmem %s3, %s256
      %s258 = smul.u32 64, %s19
      %p260 = scmp.eq.s32.totalorder %s21, 0
      // Predicated region
      $region33: #{_lambda_.18} parent=31 // pred_check
        %p261 = pneg %p260
      $region34: #{_lambda_.18} parent=31 // pred_check_branch
        %263 = sbr.rel (%p261) target = $region36
      $region35: #{_lambda_.18} parent=31 // pred_region
        %264 = vst [vmem:[#allocation2] sm:$0xff] 0.0
        %265 = vst [vmem:[#allocation2 + $0x8] sm:$0xff] 0.0
        %266 = vst [vmem:[#allocation2 + $0x10] sm:$0xff] 0.0
        %267 = vst [vmem:[#allocation2 + $0x18] sm:$0xff] 0.0
        %268 = vst [vmem:[#allocation2 + $0x20] sm:$0xff] 0.0
        %269 = vst [vmem:[#allocation2 + $0x28] sm:$0xff] 0.0
        %270 = vst [vmem:[#allocation2 + $0x30] sm:$0xff] 0.0
        %271 = vst [vmem:[#allocation2 + $0x38] sm:$0xff] 0.0
        %272 = vst [vmem:[#allocation2 + $0x40] sm:$0xff] 0.0
        %273 = vst [vmem:[#allocation2 + $0x48] sm:$0xff] 0.0
        %274 = vst [vmem:[#allocation2 + $0x50] sm:$0xff] 0.0
        %275 = vst [vmem:[#allocation2 + $0x58] sm:$0xff] 0.0
        %276 = vst [vmem:[#allocation2 + $0x60] sm:$0xff] 0.0
        %277 = vst [vmem:[#allocation2 + $0x68] sm:$0xff] 0.0
        %278 = vst [vmem:[#allocation2 + $0x70] sm:$0xff] 0.0
        %279 = vst [vmem:[#allocation2 + $0x78] sm:$0xff] 0.0
        %280 = vst [vmem:[#allocation2 + $0x80] sm:$0xff] 0.0
        %281 = vst [vmem:[#allocation2 + $0x88] sm:$0xff] 0.0
        %282 = vst [vmem:[#allocation2 + $0x90] sm:$0xff] 0.0
        %283 = vst [vmem:[#allocation2 + $0x98] sm:$0xff] 0.0
        %284 = vst [vmem:[#allocation2 + $0xa0] sm:$0xff] 0.0
        %285 = vst [vmem:[#allocation2 + $0xa8] sm:$0xff] 0.0
        %286 = vst [vmem:[#allocation2 + $0xb0] sm:$0xff] 0.0
        %287 = vst [vmem:[#allocation2 + $0xb8] sm:$0xff] 0.0
        %288 = vst [vmem:[#allocation2 + $0xc0] sm:$0xff] 0.0
        %289 = vst [vmem:[#allocation2 + $0xc8] sm:$0xff] 0.0
        %290 = vst [vmem:[#allocation2 + $0xd0] sm:$0xff] 0.0
        %291 = vst [vmem:[#allocation2 + $0xd8] sm:$0xff] 0.0
        %292 = vst [vmem:[#allocation2 + $0xe0] sm:$0xff] 0.0
        %293 = vst [vmem:[#allocation2 + $0xe8] sm:$0xff] 0.0
        %294 = vst [vmem:[#allocation2 + $0xf0] sm:$0xff] 0.0
        %295 = vst [vmem:[#allocation2 + $0xf8] sm:$0xff] 0.0
        %296 = vst [vmem:[#allocation2 + $0x100] sm:$0xff] 0.0
        %297 = vst [vmem:[#allocation2 + $0x108] sm:$0xff] 0.0
        %298 = vst [vmem:[#allocation2 + $0x110] sm:$0xff] 0.0
        %299 = vst [vmem:[#allocation2 + $0x118] sm:$0xff] 0.0
        %300 = vst [vmem:[#allocation2 + $0x120] sm:$0xff] 0.0
        %301 = vst [vmem:[#allocation2 + $0x128] sm:$0xff] 0.0
        %302 = vst [vmem:[#allocation2 + $0x130] sm:$0xff] 0.0
        %303 = vst [vmem:[#allocation2 + $0x138] sm:$0xff] 0.0
        %304 = vst [vmem:[#allocation2 + $0x140] sm:$0xff] 0.0
        %305 = vst [vmem:[#allocation2 + $0x148] sm:$0xff] 0.0
        %306 = vst [vmem:[#allocation2 + $0x150] sm:$0xff] 0.0
        %307 = vst [vmem:[#allocation2 + $0x158] sm:$0xff] 0.0
        %308 = vst [vmem:[#allocation2 + $0x160] sm:$0xff] 0.0
        %309 = vst [vmem:[#allocation2 + $0x168] sm:$0xff] 0.0
        %310 = vst [vmem:[#allocation2 + $0x170] sm:$0xff] 0.0
        %311 = vst [vmem:[#allocation2 + $0x178] sm:$0xff] 0.0
        %312 = vst [vmem:[#allocation2 + $0x180] sm:$0xff] 0.0
        %313 = vst [vmem:[#allocation2 + $0x188] sm:$0xff] 0.0
        %314 = vst [vmem:[#allocation2 + $0x190] sm:$0xff] 0.0
        %315 = vst [vmem:[#allocation2 + $0x198] sm:$0xff] 0.0
        %316 = vst [vmem:[#allocation2 + $0x1a0] sm:$0xff] 0.0
        %317 = vst [vmem:[#allocation2 + $0x1a8] sm:$0xff] 0.0
        %318 = vst [vmem:[#allocation2 + $0x1b0] sm:$0xff] 0.0
        %319 = vst [vmem:[#allocation2 + $0x1b8] sm:$0xff] 0.0
        %320 = vst [vmem:[#allocation2 + $0x1c0] sm:$0xff] 0.0
        %321 = vst [vmem:[#allocation2 + $0x1c8] sm:$0xff] 0.0
        %322 = vst [vmem:[#allocation2 + $0x1d0] sm:$0xff] 0.0
        %323 = vst [vmem:[#allocation2 + $0x1d8] sm:$0xff] 0.0
        %324 = vst [vmem:[#allocation2 + $0x1e0] sm:$0xff] 0.0
        %325 = vst [vmem:[#allocation2 + $0x1e8] sm:$0xff] 0.0
        %326 = vst [vmem:[#allocation2 + $0x1f0] sm:$0xff] 0.0
        %327 = vst [vmem:[#allocation2 + $0x1f8] sm:$0xff] 0.0
      $region36: #{_lambda_.18} parent=31 // pred_fallthru
        _
      %v328 = vld [vmem:[%s236] sm:$0xf]
      %v329 = vld [vmem:[%s236 + $0x4] sm:$0xf]
      %v330 = vld [vmem:[%s236 + $0x8] sm:$0xf]
      %v331 = vld [vmem:[%s236 + $0xc] sm:$0xf]
      %v332 = vld [vmem:[%s236 + $0x10] sm:$0xf]
      %v333 = vld [vmem:[%s236 + $0x14] sm:$0xf]
      %v334 = vld [vmem:[%s236 + $0x18] sm:$0xf]
      %v335 = vld [vmem:[%s236 + $0x1c] sm:$0xf]
      %v336 = vld [vmem:[%s236 + $0x20] sm:$0xf]
      %v337 = vld [vmem:[%s236 + $0x24] sm:$0xf]
      %v338 = vld [vmem:[%s236 + $0x28] sm:$0xf]
      %v339 = vld [vmem:[%s236 + $0x2c] sm:$0xf]
      %v340 = vld [vmem:[%s236 + $0x30] sm:$0xf]
      %v341 = vld [vmem:[%s236 + $0x34] sm:$0xf]
      %v342 = vld [vmem:[%s236 + $0x38] sm:$0xf]
      %v343 = vld [vmem:[%s236 + $0x3c] sm:$0xf]
      %v344 = vld [vmem:[%s236 + $0x40] sm:$0xf]
      %v345 = vld [vmem:[%s236 + $0x44] sm:$0xf]
      %v346 = vld [vmem:[%s236 + $0x48] sm:$0xf]
      %v347 = vld [vmem:[%s236 + $0x4c] sm:$0xf]
      %v348 = vld [vmem:[%s236 + $0x50] sm:$0xf]
      %v349 = vld [vmem:[%s236 + $0x54] sm:$0xf]
      %v350 = vld [vmem:[%s236 + $0x58] sm:$0xf]
      %v351 = vld [vmem:[%s236 + $0x5c] sm:$0xf]
      %v352 = vld [vmem:[%s236 + $0x60] sm:$0xf]
      %v353 = vld [vmem:[%s236 + $0x64] sm:$0xf]
      %v354 = vld [vmem:[%s236 + $0x68] sm:$0xf]
      %v355 = vld [vmem:[%s236 + $0x6c] sm:$0xf]
      %v356 = vld [vmem:[%s236 + $0x70] sm:$0xf]
      %v357 = vld [vmem:[%s236 + $0x74] sm:$0xf]
      %v358 = vld [vmem:[%s236 + $0x78] sm:$0xf]
      %v359 = vld [vmem:[%s236 + $0x7c] sm:$0xf]
      %v360 = vld [vmem:[%s236 + $0x80] sm:$0xf]
      %v361 = vld [vmem:[%s236 + $0x84] sm:$0xf]
      %v362 = vld [vmem:[%s236 + $0x88] sm:$0xf]
      %v363 = vld [vmem:[%s236 + $0x8c] sm:$0xf]
      %v364 = vld [vmem:[%s236 + $0x90] sm:$0xf]
      %v365 = vld [vmem:[%s236 + $0x94] sm:$0xf]
      %v366 = vld [vmem:[%s236 + $0x98] sm:$0xf]
      %v367 = vld [vmem:[%s236 + $0x9c] sm:$0xf]
      %v368 = vld [vmem:[%s236 + $0xa0] sm:$0xf]
      %v369 = vld [vmem:[%s236 + $0xa4] sm:$0xf]
      %v370 = vld [vmem:[%s236 + $0xa8] sm:$0xf]
      %v371 = vld [vmem:[%s236 + $0xac] sm:$0xf]
      %v372 = vld [vmem:[%s236 + $0xb0] sm:$0xf]
      %v373 = vld [vmem:[%s236 + $0xb4] sm:$0xf]
      %v374 = vld [vmem:[%s236 + $0xb8] sm:$0xf]
      %v375 = vld [vmem:[%s236 + $0xbc] sm:$0xf]
      %v376 = vld [vmem:[%s236 + $0xc0] sm:$0xf]
      %v377 = vld [vmem:[%s236 + $0xc4] sm:$0xf]
      %v378 = vld [vmem:[%s236 + $0xc8] sm:$0xf]
      %v379 = vld [vmem:[%s236 + $0xcc] sm:$0xf]
      %v380 = vld [vmem:[%s236 + $0xd0] sm:$0xf]
      %v381 = vld [vmem:[%s236 + $0xd4] sm:$0xf]
      %v382 = vld [vmem:[%s236 + $0xd8] sm:$0xf]
      %v383 = vld [vmem:[%s236 + $0xdc] sm:$0xf]
      %v384 = vld [vmem:[%s236 + $0xe0] sm:$0xf]
      %v385 = vld [vmem:[%s236 + $0xe4] sm:$0xf]
      %v386 = vld [vmem:[%s236 + $0xe8] sm:$0xf]
      %v387 = vld [vmem:[%s236 + $0xec] sm:$0xf]
      %v388 = vld [vmem:[%s236 + $0xf0] sm:$0xf]
      %v389 = vld [vmem:[%s236 + $0xf4] sm:$0xf]
      %v390 = vld [vmem:[%s236 + $0xf8] sm:$0xf]
      %v391 = vld [vmem:[%s236 + $0xfc] sm:$0xf]
      %v392 = vld [vmem:[#allocation2] sm:$0xff]
      %v393 = vld [vmem:[#allocation2 + $0x8] sm:$0xff]
      %v394 = vld [vmem:[#allocation2 + $0x10] sm:$0xff]
      %v395 = vld [vmem:[#allocation2 + $0x18] sm:$0xff]
      %v396 = vld [vmem:[#allocation2 + $0x20] sm:$0xff]
      %v397 = vld [vmem:[#allocation2 + $0x28] sm:$0xff]
      %v398 = vld [vmem:[#allocation2 + $0x30] sm:$0xff]
      %v399 = vld [vmem:[#allocation2 + $0x38] sm:$0xff]
      %v400 = vld [vmem:[#allocation2 + $0x40] sm:$0xff]
      %v401 = vld [vmem:[#allocation2 + $0x48] sm:$0xff]
      %v402 = vld [vmem:[#allocation2 + $0x50] sm:$0xff]
      %v403 = vld [vmem:[#allocation2 + $0x58] sm:$0xff]
      %v404 = vld [vmem:[#allocation2 + $0x60] sm:$0xff]
      %v405 = vld [vmem:[#allocation2 + $0x68] sm:$0xff]
      %v406 = vld [vmem:[#allocation2 + $0x70] sm:$0xff]
      %v407 = vld [vmem:[#allocation2 + $0x78] sm:$0xff]
      %v408 = vld [vmem:[#allocation2 + $0x80] sm:$0xff]
      %v409 = vld [vmem:[#allocation2 + $0x88] sm:$0xff]
      %v410 = vld [vmem:[#allocation2 + $0x90] sm:$0xff]
      %v411 = vld [vmem:[#allocation2 + $0x98] sm:$0xff]
      %v412 = vld [vmem:[#allocation2 + $0xa0] sm:$0xff]
      %v413 = vld [vmem:[#allocation2 + $0xa8] sm:$0xff]
      %v414 = vld [vmem:[#allocation2 + $0xb0] sm:$0xff]
      %v415 = vld [vmem:[#allocation2 + $0xb8] sm:$0xff]
      %v416 = vld [vmem:[#allocation2 + $0xc0] sm:$0xff]
      %v417 = vld [vmem:[#allocation2 + $0xc8] sm:$0xff]
      %v418 = vld [vmem:[#allocation2 + $0xd0] sm:$0xff]
      %v419 = vld [vmem:[#allocation2 + $0xd8] sm:$0xff]
      %v420 = vld [vmem:[#allocation2 + $0xe0] sm:$0xff]
      %v421 = vld [vmem:[#allocation2 + $0xe8] sm:$0xff]
      %v422 = vld [vmem:[#allocation2 + $0xf0] sm:$0xff]
      %v423 = vld [vmem:[#allocation2 + $0xf8] sm:$0xff]
      %v424 = vld [vmem:[#allocation2 + $0x100] sm:$0xff]
      %v425 = vld [vmem:[#allocation2 + $0x108] sm:$0xff]
      %v426 = vld [vmem:[#allocation2 + $0x110] sm:$0xff]
      %v427 = vld [vmem:[#allocation2 + $0x118] sm:$0xff]
      %v428 = vld [vmem:[#allocation2 + $0x120] sm:$0xff]
      %v429 = vld [vmem:[#allocation2 + $0x128] sm:$0xff]
      %v430 = vld [vmem:[#allocation2 + $0x130] sm:$0xff]
      %v431 = vld [vmem:[#allocation2 + $0x138] sm:$0xff]
      %v432 = vld [vmem:[#allocation2 + $0x140] sm:$0xff]
      %v433 = vld [vmem:[#allocation2 + $0x148] sm:$0xff]
      %v434 = vld [vmem:[#allocation2 + $0x150] sm:$0xff]
      %v435 = vld [vmem:[#allocation2 + $0x158] sm:$0xff]
      %v436 = vld [vmem:[#allocation2 + $0x160] sm:$0xff]
      %v437 = vld [vmem:[#allocation2 + $0x168] sm:$0xff]
      %v438 = vld [vmem:[#allocation2 + $0x170] sm:$0xff]
      %v439 = vld [vmem:[#allocation2 + $0x178] sm:$0xff]
      %v440 = vld [vmem:[#allocation2 + $0x180] sm:$0xff]
      %v441 = vld [vmem:[#allocation2 + $0x188] sm:$0xff]
      %v442 = vld [vmem:[#allocation2 + $0x190] sm:$0xff]
      %v443 = vld [vmem:[#allocation2 + $0x198] sm:$0xff]
      %v444 = vld [vmem:[#allocation2 + $0x1a0] sm:$0xff]
      %v445 = vld [vmem:[#allocation2 + $0x1a8] sm:$0xff]
      %v446 = vld [vmem:[#allocation2 + $0x1b0] sm:$0xff]
      %v447 = vld [vmem:[#allocation2 + $0x1b8] sm:$0xff]
      %v448 = vld [vmem:[#allocation2 + $0x1c0] sm:$0xff]
      %v449 = vld [vmem:[#allocation2 + $0x1c8] sm:$0xff]
      %v450 = vld [vmem:[#allocation2 + $0x1d0] sm:$0xff]
      %v451 = vld [vmem:[#allocation2 + $0x1d8] sm:$0xff]
      %v452 = vld [vmem:[#allocation2 + $0x1e0] sm:$0xff]
      %v453 = vld [vmem:[#allocation2 + $0x1e8] sm:$0xff]
      %v454 = vld [vmem:[#allocation2 + $0x1f0] sm:$0xff]
      %v455 = vld [vmem:[#allocation2 + $0x1f8] sm:$0xff]
      %v456 = vld [vmem:[%s245] sm:$0xf]
      %v457 = vld [vmem:[%s245 + $0x4] sm:$0xf]
      %v458 = vld [vmem:[%s245 + $0x8] sm:$0xf]
      %v459 = vld [vmem:[%s245 + $0xc] sm:$0xf]
      %v460 = vld [vmem:[%s245 + $0x10] sm:$0xf]
      %v461 = vld [vmem:[%s245 + $0x14] sm:$0xf]
      %v462 = vld [vmem:[%s245 + $0x18] sm:$0xf]
      %v463 = vld [vmem:[%s245 + $0x1c] sm:$0xf]
      %v464 = vld [vmem:[%s245 + $0x20] sm:$0xf]
      %v465 = vld [vmem:[%s245 + $0x24] sm:$0xf]
      %v466 = vld [vmem:[%s245 + $0x28] sm:$0xf]
      %v467 = vld [vmem:[%s245 + $0x2c] sm:$0xf]
      %v468 = vld [vmem:[%s245 + $0x30] sm:$0xf]
      %v469 = vld [vmem:[%s245 + $0x34] sm:$0xf]
      %v470 = vld [vmem:[%s245 + $0x38] sm:$0xf]
      %v471 = vld [vmem:[%s245 + $0x3c] sm:$0xf]
      %v536 = vunpack.c.l.b16 %v328
      %v537 = vunpack.c.l.b16 %v329
      %v538 = vunpack.c.l.b16 %v330
      %v539 = vunpack.c.l.b16 %v331
      %v540 = vunpack.c.l.b16 %v332
      %v541 = vunpack.c.l.b16 %v333
      %v542 = vunpack.c.l.b16 %v334
      %v543 = vunpack.c.l.b16 %v335
      %v544 = vunpack.c.l.b16 %v336
      %v545 = vunpack.c.l.b16 %v337
      %v546 = vunpack.c.l.b16 %v338
      %v547 = vunpack.c.l.b16 %v339
      %v548 = vunpack.c.l.b16 %v340
      %v549 = vunpack.c.l.b16 %v341
      %v550 = vunpack.c.l.b16 %v342
      %v551 = vunpack.c.l.b16 %v343
      %v552 = vunpack.c.l.b16 %v344
      %v553 = vunpack.c.l.b16 %v345
      %v554 = vunpack.c.l.b16 %v346
      %v555 = vunpack.c.l.b16 %v347
      %v556 = vunpack.c.l.b16 %v348
      %v557 = vunpack.c.l.b16 %v349
      %v558 = vunpack.c.l.b16 %v350
      %v559 = vunpack.c.l.b16 %v351
      %v560 = vunpack.c.l.b16 %v352
      %v561 = vunpack.c.l.b16 %v353
      %v562 = vunpack.c.l.b16 %v354
      %v563 = vunpack.c.l.b16 %v355
      %v564 = vunpack.c.l.b16 %v356
      %v565 = vunpack.c.l.b16 %v357
      %v566 = vunpack.c.l.b16 %v358
      %v567 = vunpack.c.l.b16 %v359
      %v568 = vunpack.c.l.b16 %v360
      %v569 = vunpack.c.l.b16 %v361
      %v570 = vunpack.c.l.b16 %v362
      %v571 = vunpack.c.l.b16 %v363
      %v572 = vunpack.c.l.b16 %v364
      %v573 = vunpack.c.l.b16 %v365
      %v574 = vunpack.c.l.b16 %v366
      %v575 = vunpack.c.l.b16 %v367
      %v576 = vunpack.c.l.b16 %v368
      %v577 = vunpack.c.l.b16 %v369
      %v578 = vunpack.c.l.b16 %v370
      %v579 = vunpack.c.l.b16 %v371
      %v580 = vunpack.c.l.b16 %v372
      %v581 = vunpack.c.l.b16 %v373
      %v582 = vunpack.c.l.b16 %v374
      %v583 = vunpack.c.l.b16 %v375
      %v584 = vunpack.c.l.b16 %v376
      %v585 = vunpack.c.l.b16 %v377
      %v586 = vunpack.c.l.b16 %v378
      %v587 = vunpack.c.l.b16 %v379
      %v588 = vunpack.c.l.b16 %v380
      %v589 = vunpack.c.l.b16 %v381
      %v590 = vunpack.c.l.b16 %v382
      %v591 = vunpack.c.l.b16 %v383
      %v592 = vunpack.c.l.b16 %v384
      %v593 = vunpack.c.l.b16 %v385
      %v594 = vunpack.c.l.b16 %v386
      %v595 = vunpack.c.l.b16 %v387
      %v596 = vunpack.c.l.b16 %v388
      %v597 = vunpack.c.l.b16 %v389
      %v598 = vunpack.c.l.b16 %v390
      %v599 = vunpack.c.l.b16 %v391
      %v600 = vpack.c.b16 %v537, %v536
      %v601 = vpack.c.b16 %v539, %v538
      %v602 = vpack.c.b16 %v541, %v540
      %v603 = vpack.c.b16 %v543, %v542
      %v604 = vpack.c.b16 %v545, %v544
      %v605 = vpack.c.b16 %v547, %v546
      %v606 = vpack.c.b16 %v549, %v548
      %v607 = vpack.c.b16 %v551, %v550
      %v608 = vpack.c.b16 %v553, %v552
      %v609 = vpack.c.b16 %v555, %v554
      %v610 = vpack.c.b16 %v557, %v556
      %v611 = vpack.c.b16 %v559, %v558
      %v612 = vpack.c.b16 %v561, %v560
      %v613 = vpack.c.b16 %v563, %v562
      %v614 = vpack.c.b16 %v565, %v564
      %v615 = vpack.c.b16 %v567, %v566
      %v616 = vpack.c.b16 %v569, %v568
      %v617 = vpack.c.b16 %v571, %v570
      %v618 = vpack.c.b16 %v573, %v572
      %v619 = vpack.c.b16 %v575, %v574
      %v620 = vpack.c.b16 %v577, %v576
      %v621 = vpack.c.b16 %v579, %v578
      %v622 = vpack.c.b16 %v581, %v580
      %v623 = vpack.c.b16 %v583, %v582
      %v624 = vpack.c.b16 %v585, %v584
      %v625 = vpack.c.b16 %v587, %v586
      %v626 = vpack.c.b16 %v589, %v588
      %v627 = vpack.c.b16 %v591, %v590
      %v628 = vpack.c.b16 %v593, %v592
      %v629 = vpack.c.b16 %v595, %v594
      %v630 = vpack.c.b16 %v597, %v596
      %v631 = vpack.c.b16 %v599, %v598
      %v680 = vunpack.c.l.b16 %v456
      %v681 = vunpack.c.l.b16 %v457
      %v682 = vunpack.c.l.b16 %v458
      %v683 = vunpack.c.l.b16 %v459
      %v684 = vunpack.c.l.b16 %v460
      %v685 = vunpack.c.l.b16 %v461
      %v686 = vunpack.c.l.b16 %v462
      %v687 = vunpack.c.l.b16 %v463
      %v688 = vunpack.c.l.b16 %v464
      %v689 = vunpack.c.l.b16 %v465
      %v690 = vunpack.c.l.b16 %v466
      %v691 = vunpack.c.l.b16 %v467
      %v692 = vunpack.c.l.b16 %v468
      %v693 = vunpack.c.l.b16 %v469
      %v694 = vunpack.c.l.b16 %v470
      %v695 = vunpack.c.l.b16 %v471
      %v696 = vpack.c.b16 %v681, %v680
      %v697 = vpack.c.b16 %v683, %v682
      %v698 = vpack.c.b16 %v685, %v684
      %v699 = vpack.c.b16 %v687, %v686
      %v700 = vpack.c.b16 %v689, %v688
      %v701 = vpack.c.b16 %v691, %v690
      %v702 = vpack.c.b16 %v693, %v692
      %v703 = vpack.c.b16 %v695, %v694
      %712 = vmatprep.subr.bf16.mxu0 0
      %713 = vmatpush1.bf16.msra.mxu0 %v703
      %714 = vmatprep.subr.bf16.mxu0 0
      %715 = vmatpush1.bf16.msra.mxu0 %v702
      %716 = vmatprep.subr.bf16.mxu0 0
      %717 = vmatpush1.bf16.msra.mxu0 %v701
      %718 = vmatprep.subr.bf16.mxu0 0
      %719 = vmatpush1.bf16.msra.mxu0 %v700
      %720 = vmatprep.subr.bf16.mxu0 0
      %721 = vmatpush1.bf16.msra.mxu0 %v699
      %722 = vmatprep.subr.bf16.mxu0 0
      %723 = vmatpush1.bf16.msra.mxu0 %v698
      %724 = vmatprep.subr.bf16.mxu0 0
      %725 = vmatpush1.bf16.msra.mxu0 %v697
      %726 = vmatprep.subr.bf16.mxu0 0
      %727 = vmatpush1.bf16.msra.mxu0 %v696
      %728 = vmatprep.subr.bf16.mxu0 0
      %729 = vmatpush2.bf16.msra.mxu0 0
      %730 = vmatprep.subr.bf16.mxu0 0
      %731 = vmatpush2.bf16.msra.mxu0 0
      %732 = vmatprep.subr.bf16.mxu0 0
      %733 = vmatpush2.bf16.msra.mxu0 0
      %734 = vmatprep.subr.bf16.mxu0 0
      %735 = vmatpush2.bf16.msra.mxu0 0
      %736 = vmatprep.subr.bf16.mxu0 0
      %737 = vmatpush2.bf16.msra.mxu0 0
      %738 = vmatprep.subr.bf16.mxu0 0
      %739 = vmatpush2.bf16.msra.mxu0 0
      %740 = vmatprep.subr.bf16.mxu0 0
      %741 = vmatpush2.bf16.msra.mxu0 0
      %742 = vmatprep.subr.bf16.mxu0 0
      %743 = vmatpush2.bf16.msra.mxu0 0
      %744 = vmatprep.mubr.bf16.mxu0 0
      %745 = vmatmul.mubr.bf16.gmra.mxu0 %v600
      %v746 = vpop.f32.mrf.mxu0
      %v747 = vadd.f32 0.0, %v746
      %v748 = vpop.f32.mrf.mxu0
      %v749 = vpop.f32.mrf.mxu0
      %v750 = vadd.f32 0.0, %v749
      %v751 = vpop.f32.mrf.mxu0
      %752 = vmatprep.mubr.bf16.mxu0 0
      %753 = vmatmul.mubr.bf16.gmra.mxu0 %v601
      %v754 = vpop.f32.mrf.mxu0
      %v755 = vadd.f32 0.0, %v754
      %v756 = vpop.f32.mrf.mxu0
      %v757 = vpop.f32.mrf.mxu0
      %v758 = vadd.f32 0.0, %v757
      %v759 = vpop.f32.mrf.mxu0
      %760 = vmatprep.mubr.bf16.mxu0 0
      %761 = vmatmul.mubr.bf16.gmra.mxu0 %v602
      %v762 = vpop.f32.mrf.mxu0
      %v763 = vadd.f32 0.0, %v762
      %v764 = vpop.f32.mrf.mxu0
      %v765 = vpop.f32.mrf.mxu0
      %v766 = vadd.f32 0.0, %v765
      %v767 = vpop.f32.mrf.mxu0
      %768 = vmatprep.mubr.bf16.mxu0 0
      %769 = vmatmul.mubr.bf16.gmra.mxu0 %v603
      %v770 = vpop.f32.mrf.mxu0
      %v771 = vadd.f32 0.0, %v770
      %v772 = vpop.f32.mrf.mxu0
      %v773 = vpop.f32.mrf.mxu0
      %v774 = vadd.f32 0.0, %v773
      %v775 = vpop.f32.mrf.mxu0
      %776 = vmatprep.mubr.bf16.mxu0 0
      %777 = vmatmul.mubr.bf16.gmra.mxu0 %v604
      %v778 = vpop.f32.mrf.mxu0
      %v779 = vadd.f32 0.0, %v778
      %v780 = vpop.f32.mrf.mxu0
      %v781 = vpop.f32.mrf.mxu0
      %v782 = vadd.f32 0.0, %v781
      %v783 = vpop.f32.mrf.mxu0
      %784 = vmatprep.mubr.bf16.mxu0 0
      %785 = vmatmul.mubr.bf16.gmra.mxu0 %v605
      %v786 = vpop.f32.mrf.mxu0
      %v787 = vadd.f32 0.0, %v786
      %v788 = vpop.f32.mrf.mxu0
      %v789 = vpop.f32.mrf.mxu0
      %v790 = vadd.f32 0.0, %v789
      %v791 = vpop.f32.mrf.mxu0
      %792 = vmatprep.mubr.bf16.mxu0 0
      %793 = vmatmul.mubr.bf16.gmra.mxu0 %v606
      %v794 = vpop.f32.mrf.mxu0
      %v795 = vadd.f32 0.0, %v794
      %v796 = vpop.f32.mrf.mxu0
      %v797 = vpop.f32.mrf.mxu0
      %v798 = vadd.f32 0.0, %v797
      %v799 = vpop.f32.mrf.mxu0
      %800 = vmatprep.mubr.bf16.mxu0 0
      %801 = vmatmul.mubr.bf16.gmra.mxu0 %v607
      %v802 = vpop.f32.mrf.mxu0
      %v803 = vadd.f32 0.0, %v802
      %v804 = vpop.f32.mrf.mxu0
      %v805 = vpop.f32.mrf.mxu0
      %v806 = vadd.f32 0.0, %v805
      %v807 = vpop.f32.mrf.mxu0
      %808 = vmatprep.mubr.bf16.mxu0 0
      %809 = vmatmul.mubr.bf16.gmra.mxu0 %v608
      %v810 = vpop.f32.mrf.mxu0
      %v811 = vadd.f32 0.0, %v810
      %v812 = vpop.f32.mrf.mxu0
      %v813 = vpop.f32.mrf.mxu0
      %v814 = vadd.f32 0.0, %v813
      %v815 = vpop.f32.mrf.mxu0
      %816 = vmatprep.mubr.bf16.mxu0 0
      %817 = vmatmul.mubr.bf16.gmra.mxu0 %v609
      %v818 = vpop.f32.mrf.mxu0
      %v819 = vadd.f32 0.0, %v818
      %v820 = vpop.f32.mrf.mxu0
      %v821 = vpop.f32.mrf.mxu0
      %v822 = vadd.f32 0.0, %v821
      %v823 = vpop.f32.mrf.mxu0
      %824 = vmatprep.mubr.bf16.mxu0 0
      %825 = vmatmul.mubr.bf16.gmra.mxu0 %v610
      %v826 = vpop.f32.mrf.mxu0
      %v827 = vadd.f32 0.0, %v826
      %v828 = vpop.f32.mrf.mxu0
      %v829 = vpop.f32.mrf.mxu0
      %v830 = vadd.f32 0.0, %v829
      %v831 = vpop.f32.mrf.mxu0
      %832 = vmatprep.mubr.bf16.mxu0 0
      %833 = vmatmul.mubr.bf16.gmra.mxu0 %v611
      %v834 = vpop.f32.mrf.mxu0
      %v835 = vadd.f32 0.0, %v834
      %v836 = vpop.f32.mrf.mxu0
      %v837 = vpop.f32.mrf.mxu0
      %v838 = vadd.f32 0.0, %v837
      %v839 = vpop.f32.mrf.mxu0
      %840 = vmatprep.mubr.bf16.mxu0 0
      %841 = vmatmul.mubr.bf16.gmra.mxu0 %v612
      %v842 = vpop.f32.mrf.mxu0
      %v843 = vadd.f32 0.0, %v842
      %v844 = vpop.f32.mrf.mxu0
      %v845 = vpop.f32.mrf.mxu0
      %v846 = vadd.f32 0.0, %v845
      %v847 = vpop.f32.mrf.mxu0
      %848 = vmatprep.mubr.bf16.mxu0 0
      %849 = vmatmul.mubr.bf16.gmra.mxu0 %v613
      %v850 = vpop.f32.mrf.mxu0
      %v851 = vadd.f32 0.0, %v850
      %v852 = vpop.f32.mrf.mxu0
      %v853 = vpop.f32.mrf.mxu0
      %v854 = vadd.f32 0.0, %v853
      %v855 = vpop.f32.mrf.mxu0
      %856 = vmatprep.mubr.bf16.mxu0 0
      %857 = vmatmul.mubr.bf16.gmra.mxu0 %v614
      %v858 = vpop.f32.mrf.mxu0
      %v859 = vadd.f32 0.0, %v858
      %v860 = vpop.f32.mrf.mxu0
      %v861 = vpop.f32.mrf.mxu0
      %v862 = vadd.f32 0.0, %v861
      %v863 = vpop.f32.mrf.mxu0
      %864 = vmatprep.mubr.bf16.mxu0 0
      %865 = vmatmul.mubr.bf16.gmra.mxu0 %v615
      %v866 = vpop.f32.mrf.mxu0
      %v867 = vadd.f32 0.0, %v866
      %v868 = vpop.f32.mrf.mxu0
      %v869 = vpop.f32.mrf.mxu0
      %v870 = vadd.f32 0.0, %v869
      %v871 = vpop.f32.mrf.mxu0
      %872 = vmatprep.mubr.bf16.mxu0 0
      %873 = vmatmul.mubr.bf16.gmra.mxu0 %v616
      %v874 = vpop.f32.mrf.mxu0
      %v875 = vadd.f32 0.0, %v874
      %v876 = vpop.f32.mrf.mxu0
      %v877 = vpop.f32.mrf.mxu0
      %v878 = vadd.f32 0.0, %v877
      %v879 = vpop.f32.mrf.mxu0
      %880 = vmatprep.mubr.bf16.mxu0 0
      %881 = vmatmul.mubr.bf16.gmra.mxu0 %v617
      %v882 = vpop.f32.mrf.mxu0
      %v883 = vadd.f32 0.0, %v882
      %v884 = vpop.f32.mrf.mxu0
      %v885 = vpop.f32.mrf.mxu0
      %v886 = vadd.f32 0.0, %v885
      %v887 = vpop.f32.mrf.mxu0
      %888 = vmatprep.mubr.bf16.mxu0 0
      %889 = vmatmul.mubr.bf16.gmra.mxu0 %v618
      %v890 = vpop.f32.mrf.mxu0
      %v891 = vadd.f32 0.0, %v890
      %v892 = vpop.f32.mrf.mxu0
      %v893 = vpop.f32.mrf.mxu0
      %v894 = vadd.f32 0.0, %v893
      %v895 = vpop.f32.mrf.mxu0
      %896 = vmatprep.mubr.bf16.mxu0 0
      %897 = vmatmul.mubr.bf16.gmra.mxu0 %v619
      %v898 = vpop.f32.mrf.mxu0
      %v899 = vadd.f32 0.0, %v898
      %v900 = vpop.f32.mrf.mxu0
      %v901 = vpop.f32.mrf.mxu0
      %v902 = vadd.f32 0.0, %v901
      %v903 = vpop.f32.mrf.mxu0
      %904 = vmatprep.mubr.bf16.mxu0 0
      %905 = vmatmul.mubr.bf16.gmra.mxu0 %v620
      %v906 = vpop.f32.mrf.mxu0
      %v907 = vadd.f32 0.0, %v906
      %v908 = vpop.f32.mrf.mxu0
      %v909 = vpop.f32.mrf.mxu0
      %v910 = vadd.f32 0.0, %v909
      %v911 = vpop.f32.mrf.mxu0
      %912 = vmatprep.mubr.bf16.mxu0 0
      %913 = vmatmul.mubr.bf16.gmra.mxu0 %v621
      %v914 = vpop.f32.mrf.mxu0
      %v915 = vadd.f32 0.0, %v914
      %v916 = vpop.f32.mrf.mxu0
      %v917 = vpop.f32.mrf.mxu0
      %v918 = vadd.f32 0.0, %v917
      %v919 = vpop.f32.mrf.mxu0
      %920 = vmatprep.mubr.bf16.mxu0 0
      %921 = vmatmul.mubr.bf16.gmra.mxu0 %v622
      %v922 = vpop.f32.mrf.mxu0
      %v923 = vadd.f32 0.0, %v922
      %v924 = vpop.f32.mrf.mxu0
      %v925 = vpop.f32.mrf.mxu0
      %v926 = vadd.f32 0.0, %v925
      %v927 = vpop.f32.mrf.mxu0
      %928 = vmatprep.mubr.bf16.mxu0 0
      %929 = vmatmul.mubr.bf16.gmra.mxu0 %v623
      %v930 = vpop.f32.mrf.mxu0
      %v931 = vadd.f32 0.0, %v930
      %v932 = vpop.f32.mrf.mxu0
      %v933 = vpop.f32.mrf.mxu0
      %v934 = vadd.f32 0.0, %v933
      %v935 = vpop.f32.mrf.mxu0
      %936 = vmatprep.mubr.bf16.mxu0 0
      %937 = vmatmul.mubr.bf16.gmra.mxu0 %v624
      %v938 = vpop.f32.mrf.mxu0
      %v939 = vadd.f32 0.0, %v938
      %v940 = vpop.f32.mrf.mxu0
      %v941 = vpop.f32.mrf.mxu0
      %v942 = vadd.f32 0.0, %v941
      %v943 = vpop.f32.mrf.mxu0
      %944 = vmatprep.mubr.bf16.mxu0 0
      %945 = vmatmul.mubr.bf16.gmra.mxu0 %v625
      %v946 = vpop.f32.mrf.mxu0
      %v947 = vadd.f32 0.0, %v946
      %v948 = vpop.f32.mrf.mxu0
      %v949 = vpop.f32.mrf.mxu0
      %v950 = vadd.f32 0.0, %v949
      %v951 = vpop.f32.mrf.mxu0
      %952 = vmatprep.mubr.bf16.mxu0 0
      %953 = vmatmul.mubr.bf16.gmra.mxu0 %v626
      %v954 = vpop.f32.mrf.mxu0
      %v955 = vadd.f32 0.0, %v954
      %v956 = vpop.f32.mrf.mxu0
      %v957 = vpop.f32.mrf.mxu0
      %v958 = vadd.f32 0.0, %v957
      %v959 = vpop.f32.mrf.mxu0
      %960 = vmatprep.mubr.bf16.mxu0 0
      %961 = vmatmul.mubr.bf16.gmra.mxu0 %v627
      %v962 = vpop.f32.mrf.mxu0
      %v963 = vadd.f32 0.0, %v962
      %v964 = vpop.f32.mrf.mxu0
      %v965 = vpop.f32.mrf.mxu0
      %v966 = vadd.f32 0.0, %v965
      %v967 = vpop.f32.mrf.mxu0
      %968 = vmatprep.mubr.bf16.mxu0 0
      %969 = vmatmul.mubr.bf16.gmra.mxu0 %v628
      %v970 = vpop.f32.mrf.mxu0
      %v971 = vadd.f32 0.0, %v970
      %v972 = vpop.f32.mrf.mxu0
      %v973 = vpop.f32.mrf.mxu0
      %v974 = vadd.f32 0.0, %v973
      %v975 = vpop.f32.mrf.mxu0
      %976 = vmatprep.mubr.bf16.mxu0 0
      %977 = vmatmul.mubr.bf16.gmra.mxu0 %v629
      %v978 = vpop.f32.mrf.mxu0
      %v979 = vadd.f32 0.0, %v978
      %v980 = vpop.f32.mrf.mxu0
      %v981 = vpop.f32.mrf.mxu0
      %v982 = vadd.f32 0.0, %v981
      %v983 = vpop.f32.mrf.mxu0
      %984 = vmatprep.mubr.bf16.mxu0 0
      %985 = vmatmul.mubr.bf16.gmra.mxu0 %v630
      %v986 = vpop.f32.mrf.mxu0
      %v987 = vadd.f32 0.0, %v986
      %v988 = vpop.f32.mrf.mxu0
      %v989 = vpop.f32.mrf.mxu0
      %v990 = vadd.f32 0.0, %v989
      %v991 = vpop.f32.mrf.mxu0
      %992 = vmatprep.mubr.bf16.mxu0 0
      %993 = vmatmul.mubr.bf16.gmra.mxu0 %v631
      %v994 = vpop.f32.mrf.mxu0
      %v995 = vadd.f32 0.0, %v994
      %v996 = vpop.f32.mrf.mxu0
      %v997 = vpop.f32.mrf.mxu0
      %v998 = vadd.f32 0.0, %v997
      %v999 = vpop.f32.mrf.mxu0
      %1000 = vdwg.mxu0
      %v1001 = vadd.f32 %v392, %v747
      %v1002 = vadd.f32 %v393, %v750
      %v1003 = vadd.f32 %v394, %v755
      %v1004 = vadd.f32 %v395, %v758
      %v1005 = vadd.f32 %v396, %v763
      %v1006 = vadd.f32 %v397, %v766
      %v1007 = vadd.f32 %v398, %v771
      %v1008 = vadd.f32 %v399, %v774
      %v1009 = vadd.f32 %v400, %v779
      %v1010 = vadd.f32 %v401, %v782
      %v1011 = vadd.f32 %v402, %v787
      %v1012 = vadd.f32 %v403, %v790
      %v1013 = vadd.f32 %v404, %v795
      %v1014 = vadd.f32 %v405, %v798
      %v1015 = vadd.f32 %v406, %v803
      %v1016 = vadd.f32 %v407, %v806
      %v1017 = vadd.f32 %v408, %v811
      %v1018 = vadd.f32 %v409, %v814
      %v1019 = vadd.f32 %v410, %v819
      %v1020 = vadd.f32 %v411, %v822
      %v1021 = vadd.f32 %v412, %v827
      %v1022 = vadd.f32 %v413, %v830
      %v1023 = vadd.f32 %v414, %v835
      %v1024 = vadd.f32 %v415, %v838
      %v1025 = vadd.f32 %v416, %v843
      %v1026 = vadd.f32 %v417, %v846
      %v1027 = vadd.f32 %v418, %v851
      %v1028 = vadd.f32 %v419, %v854
      %v1029 = vadd.f32 %v420, %v859
      %v1030 = vadd.f32 %v421, %v862
      %v1031 = vadd.f32 %v422, %v867
      %v1032 = vadd.f32 %v423, %v870
      %v1033 = vadd.f32 %v424, %v875
      %v1034 = vadd.f32 %v425, %v878
      %v1035 = vadd.f32 %v426, %v883
      %v1036 = vadd.f32 %v427, %v886
      %v1037 = vadd.f32 %v428, %v891
      %v1038 = vadd.f32 %v429, %v894
      %v1039 = vadd.f32 %v430, %v899
      %v1040 = vadd.f32 %v431, %v902
      %v1041 = vadd.f32 %v432, %v907
      %v1042 = vadd.f32 %v433, %v910
      %v1043 = vadd.f32 %v434, %v915
      %v1044 = vadd.f32 %v435, %v918
      %v1045 = vadd.f32 %v436, %v923
      %v1046 = vadd.f32 %v437, %v926
      %v1047 = vadd.f32 %v438, %v931
      %v1048 = vadd.f32 %v439, %v934
      %v1049 = vadd.f32 %v440, %v939
      %v1050 = vadd.f32 %v441, %v942
      %v1051 = vadd.f32 %v442, %v947
      %v1052 = vadd.f32 %v443, %v950
      %v1053 = vadd.f32 %v444, %v955
      %v1054 = vadd.f32 %v445, %v958
      %v1055 = vadd.f32 %v446, %v963
      %v1056 = vadd.f32 %v447, %v966
      %v1057 = vadd.f32 %v448, %v971
      %v1058 = vadd.f32 %v449, %v974
      %v1059 = vadd.f32 %v450, %v979
      %v1060 = vadd.f32 %v451, %v982
      %v1061 = vadd.f32 %v452, %v987
      %v1062 = vadd.f32 %v453, %v990
      %v1063 = vadd.f32 %v454, %v995
      %v1064 = vadd.f32 %v455, %v998
      %1065 = vst [vmem:[#allocation2] sm:$0xff] %v1001
      %1066 = vst [vmem:[#allocation2 + $0x8] sm:$0xff] %v1002
      %1067 = vst [vmem:[#allocation2 + $0x10] sm:$0xff] %v1003
      %1068 = vst [vmem:[#allocation2 + $0x18] sm:$0xff] %v1004
      %1069 = vst [vmem:[#allocation2 + $0x20] sm:$0xff] %v1005
      %1070 = vst [vmem:[#allocation2 + $0x28] sm:$0xff] %v1006
      %1071 = vst [vmem:[#allocation2 + $0x30] sm:$0xff] %v1007
      %1072 = vst [vmem:[#allocation2 + $0x38] sm:$0xff] %v1008
      %1073 = vst [vmem:[#allocation2 + $0x40] sm:$0xff] %v1009
      %1074 = vst [vmem:[#allocation2 + $0x48] sm:$0xff] %v1010
      %1075 = vst [vmem:[#allocation2 + $0x50] sm:$0xff] %v1011
      %1076 = vst [vmem:[#allocation2 + $0x58] sm:$0xff] %v1012
      %1077 = vst [vmem:[#allocation2 + $0x60] sm:$0xff] %v1013
      %1078 = vst [vmem:[#allocation2 + $0x68] sm:$0xff] %v1014
      %1079 = vst [vmem:[#allocation2 + $0x70] sm:$0xff] %v1015
      %1080 = vst [vmem:[#allocation2 + $0x78] sm:$0xff] %v1016
      %1081 = vst [vmem:[#allocation2 + $0x80] sm:$0xff] %v1017
      %1082 = vst [vmem:[#allocation2 + $0x88] sm:$0xff] %v1018
      %1083 = vst [vmem:[#allocation2 + $0x90] sm:$0xff] %v1019
      %1084 = vst [vmem:[#allocation2 + $0x98] sm:$0xff] %v1020
      %1085 = vst [vmem:[#allocation2 + $0xa0] sm:$0xff] %v1021
      %1086 = vst [vmem:[#allocation2 + $0xa8] sm:$0xff] %v1022
      %1087 = vst [vmem:[#allocation2 + $0xb0] sm:$0xff] %v1023
      %1088 = vst [vmem:[#allocation2 + $0xb8] sm:$0xff] %v1024
      %1089 = vst [vmem:[#allocation2 + $0xc0] sm:$0xff] %v1025
      %1090 = vst [vmem:[#allocation2 + $0xc8] sm:$0xff] %v1026
      %1091 = vst [vmem:[#allocation2 + $0xd0] sm:$0xff] %v1027
      %1092 = vst [vmem:[#allocation2 + $0xd8] sm:$0xff] %v1028
      %1093 = vst [vmem:[#allocation2 + $0xe0] sm:$0xff] %v1029
      %1094 = vst [vmem:[#allocation2 + $0xe8] sm:$0xff] %v1030
      %1095 = vst [vmem:[#allocation2 + $0xf0] sm:$0xff] %v1031
      %1096 = vst [vmem:[#allocation2 + $0xf8] sm:$0xff] %v1032
      %1097 = vst [vmem:[#allocation2 + $0x100] sm:$0xff] %v1033
      %1098 = vst [vmem:[#allocation2 + $0x108] sm:$0xff] %v1034
      %1099 = vst [vmem:[#allocation2 + $0x110] sm:$0xff] %v1035
      %1100 = vst [vmem:[#allocation2 + $0x118] sm:$0xff] %v1036
      %1101 = vst [vmem:[#allocation2 + $0x120] sm:$0xff] %v1037
      %1102 = vst [vmem:[#allocation2 + $0x128] sm:$0xff] %v1038
      %1103 = vst [vmem:[#allocation2 + $0x130] sm:$0xff] %v1039
      %1104 = vst [vmem:[#allocation2 + $0x138] sm:$0xff] %v1040
      %1105 = vst [vmem:[#allocation2 + $0x140] sm:$0xff] %v1041
      %1106 = vst [vmem:[#allocation2 + $0x148] sm:$0xff] %v1042
      %1107 = vst [vmem:[#allocation2 + $0x150] sm:$0xff] %v1043
      %1108 = vst [vmem:[#allocation2 + $0x158] sm:$0xff] %v1044
      %1109 = vst [vmem:[#allocation2 + $0x160] sm:$0xff] %v1045
      %1110 = vst [vmem:[#allocation2 + $0x168] sm:$0xff] %v1046
      %1111 = vst [vmem:[#allocation2 + $0x170] sm:$0xff] %v1047
      %1112 = vst [vmem:[#allocation2 + $0x178] sm:$0xff] %v1048
      %1113 = vst [vmem:[#allocation2 + $0x180] sm:$0xff] %v1049
      %1114 = vst [vmem:[#allocation2 + $0x188] sm:$0xff] %v1050
      %1115 = vst [vmem:[#allocation2 + $0x190] sm:$0xff] %v1051
      %1116 = vst [vmem:[#allocation2 + $0x198] sm:$0xff] %v1052
      %1117 = vst [vmem:[#allocation2 + $0x1a0] sm:$0xff] %v1053
      %1118 = vst [vmem:[#allocation2 + $0x1a8] sm:$0xff] %v1054
      %1119 = vst [vmem:[#allocation2 + $0x1b0] sm:$0xff] %v1055
      %1120 = vst [vmem:[#allocation2 + $0x1b8] sm:$0xff] %v1056
      %1121 = vst [vmem:[#allocation2 + $0x1c0] sm:$0xff] %v1057
      %1122 = vst [vmem:[#allocation2 + $0x1c8] sm:$0xff] %v1058
      %1123 = vst [vmem:[#allocation2 + $0x1d0] sm:$0xff] %v1059
      %1124 = vst [vmem:[#allocation2 + $0x1d8] sm:$0xff] %v1060
      %1125 = vst [vmem:[#allocation2 + $0x1e0] sm:$0xff] %v1061
      %1126 = vst [vmem:[#allocation2 + $0x1e8] sm:$0xff] %v1062
      %1127 = vst [vmem:[#allocation2 + $0x1f0] sm:$0xff] %v1063
      %1128 = vst [vmem:[#allocation2 + $0x1f8] sm:$0xff] %v1064
      // Predicated region
      $region37: #{_lambda_.18} parent=31 // pred_check
        %p1129 = pneg %p260
      $region38: #{_lambda_.18} parent=31 // pred_check_branch
        %1131 = sbr.rel (%p1129) target = $region40
      $region39: #{_lambda_.18} parent=31 // pred_region
        %v1132 = vld [vmem:[#allocation2] sm:$0xff]
        %v1133 = vld [vmem:[#allocation2 + $0x8] sm:$0xff]
        %v1134 = vld [vmem:[#allocation2 + $0x10] sm:$0xff]
        %v1135 = vld [vmem:[#allocation2 + $0x18] sm:$0xff]
        %v1136 = vld [vmem:[#allocation2 + $0x20] sm:$0xff]
        %v1137 = vld [vmem:[#allocation2 + $0x28] sm:$0xff]
        %v1138 = vld [vmem:[#allocation2 + $0x30] sm:$0xff]
        %v1139 = vld [vmem:[#allocation2 + $0x38] sm:$0xff]
        %v1140 = vld [vmem:[#allocation2 + $0x40] sm:$0xff]
        %v1141 = vld [vmem:[#allocation2 + $0x48] sm:$0xff]
        %v1142 = vld [vmem:[#allocation2 + $0x50] sm:$0xff]
        %v1143 = vld [vmem:[#allocation2 + $0x58] sm:$0xff]
        %v1144 = vld [vmem:[#allocation2 + $0x60] sm:$0xff]
        %v1145 = vld [vmem:[#allocation2 + $0x68] sm:$0xff]
        %v1146 = vld [vmem:[#allocation2 + $0x70] sm:$0xff]
        %v1147 = vld [vmem:[#allocation2 + $0x78] sm:$0xff]
        %v1148 = vld [vmem:[#allocation2 + $0x80] sm:$0xff]
        %v1149 = vld [vmem:[#allocation2 + $0x88] sm:$0xff]
        %v1150 = vld [vmem:[#allocation2 + $0x90] sm:$0xff]
        %v1151 = vld [vmem:[#allocation2 + $0x98] sm:$0xff]
        %v1152 = vld [vmem:[#allocation2 + $0xa0] sm:$0xff]
        %v1153 = vld [vmem:[#allocation2 + $0xa8] sm:$0xff]
        %v1154 = vld [vmem:[#allocation2 + $0xb0] sm:$0xff]
        %v1155 = vld [vmem:[#allocation2 + $0xb8] sm:$0xff]
        %v1156 = vld [vmem:[#allocation2 + $0xc0] sm:$0xff]
        %v1157 = vld [vmem:[#allocation2 + $0xc8] sm:$0xff]
        %v1158 = vld [vmem:[#allocation2 + $0xd0] sm:$0xff]
        %v1159 = vld [vmem:[#allocation2 + $0xd8] sm:$0xff]
        %v1160 = vld [vmem:[#allocation2 + $0xe0] sm:$0xff]
        %v1161 = vld [vmem:[#allocation2 + $0xe8] sm:$0xff]
        %v1162 = vld [vmem:[#allocation2 + $0xf0] sm:$0xff]
        %v1163 = vld [vmem:[#allocation2 + $0xf8] sm:$0xff]
        %v1164 = vld [vmem:[#allocation2 + $0x100] sm:$0xff]
        %v1165 = vld [vmem:[#allocation2 + $0x108] sm:$0xff]
        %v1166 = vld [vmem:[#allocation2 + $0x110] sm:$0xff]
        %v1167 = vld [vmem:[#allocation2 + $0x118] sm:$0xff]
        %v1168 = vld [vmem:[#allocation2 + $0x120] sm:$0xff]
        %v1169 = vld [vmem:[#allocation2 + $0x128] sm:$0xff]
        %v1170 = vld [vmem:[#allocation2 + $0x130] sm:$0xff]
        %v1171 = vld [vmem:[#allocation2 + $0x138] sm:$0xff]
        %v1172 = vld [vmem:[#allocation2 + $0x140] sm:$0xff]
        %v1173 = vld [vmem:[#allocation2 + $0x148] sm:$0xff]
        %v1174 = vld [vmem:[#allocation2 + $0x150] sm:$0xff]
        %v1175 = vld [vmem:[#allocation2 + $0x158] sm:$0xff]
        %v1176 = vld [vmem:[#allocation2 + $0x160] sm:$0xff]
        %v1177 = vld [vmem:[#allocation2 + $0x168] sm:$0xff]
        %v1178 = vld [vmem:[#allocation2 + $0x170] sm:$0xff]
        %v1179 = vld [vmem:[#allocation2 + $0x178] sm:$0xff]
        %v1180 = vld [vmem:[#allocation2 + $0x180] sm:$0xff]
        %v1181 = vld [vmem:[#allocation2 + $0x188] sm:$0xff]
        %v1182 = vld [vmem:[#allocation2 + $0x190] sm:$0xff]
        %v1183 = vld [vmem:[#allocation2 + $0x198] sm:$0xff]
        %v1184 = vld [vmem:[#allocation2 + $0x1a0] sm:$0xff]
        %v1185 = vld [vmem:[#allocation2 + $0x1a8] sm:$0xff]
        %v1186 = vld [vmem:[#allocation2 + $0x1b0] sm:$0xff]
        %v1187 = vld [vmem:[#allocation2 + $0x1b8] sm:$0xff]
        %v1188 = vld [vmem:[#allocation2 + $0x1c0] sm:$0xff]
        %v1189 = vld [vmem:[#allocation2 + $0x1c8] sm:$0xff]
        %v1190 = vld [vmem:[#allocation2 + $0x1d0] sm:$0xff]
        %v1191 = vld [vmem:[#allocation2 + $0x1d8] sm:$0xff]
        %v1192 = vld [vmem:[#allocation2 + $0x1e0] sm:$0xff]
        %v1193 = vld [vmem:[#allocation2 + $0x1e8] sm:$0xff]
        %v1194 = vld [vmem:[#allocation2 + $0x1f0] sm:$0xff]
        %v1195 = vld [vmem:[#allocation2 + $0x1f8] sm:$0xff]
        %v1196 = vld [vmem:[%s249] sm:$0x1]
        %v1198 = vlaneseq
        %v1199 = vshrl.u32 %v1198, 7
        %v1200 = vsub.s32 0, %v1199
        %v1201 = vrot.slane %v1196, %v1200
        %v1203 = vadd.f32 %v1132, %v1201
        %v1204 = vadd.f32 %v1133, %v1201
        %v1205 = vadd.f32 %v1134, %v1201
        %v1206 = vadd.f32 %v1135, %v1201
        %v1207 = vadd.f32 %v1136, %v1201
        %v1208 = vadd.f32 %v1137, %v1201
        %v1209 = vadd.f32 %v1138, %v1201
        %v1210 = vadd.f32 %v1139, %v1201
        %v1211 = vadd.f32 %v1140, %v1201
        %v1212 = vadd.f32 %v1141, %v1201
        %v1213 = vadd.f32 %v1142, %v1201
        %v1214 = vadd.f32 %v1143, %v1201
        %v1215 = vadd.f32 %v1144, %v1201
        %v1216 = vadd.f32 %v1145, %v1201
        %v1217 = vadd.f32 %v1146, %v1201
        %v1218 = vadd.f32 %v1147, %v1201
        %v1219 = vadd.f32 %v1148, %v1201
        %v1220 = vadd.f32 %v1149, %v1201
        %v1221 = vadd.f32 %v1150, %v1201
        %v1222 = vadd.f32 %v1151, %v1201
        %v1223 = vadd.f32 %v1152, %v1201
        %v1224 = vadd.f32 %v1153, %v1201
        %v1225 = vadd.f32 %v1154, %v1201
        %v1226 = vadd.f32 %v1155, %v1201
        %v1227 = vadd.f32 %v1156, %v1201
        %v1228 = vadd.f32 %v1157, %v1201
        %v1229 = vadd.f32 %v1158, %v1201
        %v1230 = vadd.f32 %v1159, %v1201
        %v1231 = vadd.f32 %v1160, %v1201
        %v1232 = vadd.f32 %v1161, %v1201
        %v1233 = vadd.f32 %v1162, %v1201
        %v1234 = vadd.f32 %v1163, %v1201
        %v1235 = vadd.f32 %v1164, %v1201
        %v1236 = vadd.f32 %v1165, %v1201
        %v1237 = vadd.f32 %v1166, %v1201
        %v1238 = vadd.f32 %v1167, %v1201
        %v1239 = vadd.f32 %v1168, %v1201
        %v1240 = vadd.f32 %v1169, %v1201
        %v1241 = vadd.f32 %v1170, %v1201
        %v1242 = vadd.f32 %v1171, %v1201
        %v1243 = vadd.f32 %v1172, %v1201
        %v1244 = vadd.f32 %v1173, %v1201
        %v1245 = vadd.f32 %v1174, %v1201
        %v1246 = vadd.f32 %v1175, %v1201
        %v1247 = vadd.f32 %v1176, %v1201
        %v1248 = vadd.f32 %v1177, %v1201
        %v1249 = vadd.f32 %v1178, %v1201
        %v1250 = vadd.f32 %v1179, %v1201
        %v1251 = vadd.f32 %v1180, %v1201
        %v1252 = vadd.f32 %v1181, %v1201
        %v1253 = vadd.f32 %v1182, %v1201
        %v1254 = vadd.f32 %v1183, %v1201
        %v1255 = vadd.f32 %v1184, %v1201
        %v1256 = vadd.f32 %v1185, %v1201
        %v1257 = vadd.f32 %v1186, %v1201
        %v1258 = vadd.f32 %v1187, %v1201
        %v1259 = vadd.f32 %v1188, %v1201
        %v1260 = vadd.f32 %v1189, %v1201
        %v1261 = vadd.f32 %v1190, %v1201
        %v1262 = vadd.f32 %v1191, %v1201
        %v1263 = vadd.f32 %v1192, %v1201
        %v1264 = vadd.f32 %v1193, %v1201
        %v1265 = vadd.f32 %v1194, %v1201
        %v1266 = vadd.f32 %v1195, %v1201
        %v1267 = vpack.c.bf16 %v1204, %v1203
        %v1268 = vpack.c.bf16 %v1206, %v1205
        %v1269 = vpack.c.bf16 %v1208, %v1207
        %v1270 = vpack.c.bf16 %v1210, %v1209
        %v1271 = vpack.c.bf16 %v1212, %v1211
        %v1272 = vpack.c.bf16 %v1214, %v1213
        %v1273 = vpack.c.bf16 %v1216, %v1215
        %v1274 = vpack.c.bf16 %v1218, %v1217
        %v1275 = vpack.c.bf16 %v1220, %v1219
        %v1276 = vpack.c.bf16 %v1222, %v1221
        %v1277 = vpack.c.bf16 %v1224, %v1223
        %v1278 = vpack.c.bf16 %v1226, %v1225
        %v1279 = vpack.c.bf16 %v1228, %v1227
        %v1280 = vpack.c.bf16 %v1230, %v1229
        %v1281 = vpack.c.bf16 %v1232, %v1231
        %v1282 = vpack.c.bf16 %v1234, %v1233
        %v1283 = vpack.c.bf16 %v1236, %v1235
        %v1284 = vpack.c.bf16 %v1238, %v1237
        %v1285 = vpack.c.bf16 %v1240, %v1239
        %v1286 = vpack.c.bf16 %v1242, %v1241
        %v1287 = vpack.c.bf16 %v1244, %v1243
        %v1288 = vpack.c.bf16 %v1246, %v1245
        %v1289 = vpack.c.bf16 %v1248, %v1247
        %v1290 = vpack.c.bf16 %v1250, %v1249
        %v1291 = vpack.c.bf16 %v1252, %v1251
        %v1292 = vpack.c.bf16 %v1254, %v1253
        %v1293 = vpack.c.bf16 %v1256, %v1255
        %v1294 = vpack.c.bf16 %v1258, %v1257
        %v1295 = vpack.c.bf16 %v1260, %v1259
        %v1296 = vpack.c.bf16 %v1262, %v1261
        %v1297 = vpack.c.bf16 %v1264, %v1263
        %v1298 = vpack.c.bf16 %v1266, %v1265
        %v1331 = vunpack.c.l.b16 %v1267
        %v1332 = vunpack.c.h.b16 %v1267
        %v1333 = vunpack.c.l.b16 %v1268
        %v1334 = vunpack.c.h.b16 %v1268
        %v1335 = vunpack.c.l.b16 %v1269
        %v1336 = vunpack.c.h.b16 %v1269
        %v1337 = vunpack.c.l.b16 %v1270
        %v1338 = vunpack.c.h.b16 %v1270
        %v1339 = vunpack.c.l.b16 %v1271
        %v1340 = vunpack.c.h.b16 %v1271
        %v1341 = vunpack.c.l.b16 %v1272
        %v1342 = vunpack.c.h.b16 %v1272
        %v1343 = vunpack.c.l.b16 %v1273
        %v1344 = vunpack.c.h.b16 %v1273
        %v1345 = vunpack.c.l.b16 %v1274
        %v1346 = vunpack.c.h.b16 %v1274
        %v1347 = vunpack.c.l.b16 %v1275
        %v1348 = vunpack.c.h.b16 %v1275
        %v1349 = vunpack.c.l.b16 %v1276
        %v1350 = vunpack.c.h.b16 %v1276
        %v1351 = vunpack.c.l.b16 %v1277
        %v1352 = vunpack.c.h.b16 %v1277
        %v1353 = vunpack.c.l.b16 %v1278
        %v1354 = vunpack.c.h.b16 %v1278
        %v1355 = vunpack.c.l.b16 %v1279
        %v1356 = vunpack.c.h.b16 %v1279
        %v1357 = vunpack.c.l.b16 %v1280
        %v1358 = vunpack.c.h.b16 %v1280
        %v1359 = vunpack.c.l.b16 %v1281
        %v1360 = vunpack.c.h.b16 %v1281
        %v1361 = vunpack.c.l.b16 %v1282
        %v1362 = vunpack.c.h.b16 %v1282
        %v1363 = vunpack.c.l.b16 %v1283
        %v1364 = vunpack.c.h.b16 %v1283
        %v1365 = vunpack.c.l.b16 %v1284
        %v1366 = vunpack.c.h.b16 %v1284
        %v1367 = vunpack.c.l.b16 %v1285
        %v1368 = vunpack.c.h.b16 %v1285
        %v1369 = vunpack.c.l.b16 %v1286
        %v1370 = vunpack.c.h.b16 %v1286
        %v1371 = vunpack.c.l.b16 %v1287
        %v1372 = vunpack.c.h.b16 %v1287
        %v1373 = vunpack.c.l.b16 %v1288
        %v1374 = vunpack.c.h.b16 %v1288
        %v1375 = vunpack.c.l.b16 %v1289
        %v1376 = vunpack.c.h.b16 %v1289
        %v1377 = vunpack.c.l.b16 %v1290
        %v1378 = vunpack.c.h.b16 %v1290
        %v1379 = vunpack.c.l.b16 %v1291
        %v1380 = vunpack.c.h.b16 %v1291
        %v1381 = vunpack.c.l.b16 %v1292
        %v1382 = vunpack.c.h.b16 %v1292
        %v1383 = vunpack.c.l.b16 %v1293
        %v1384 = vunpack.c.h.b16 %v1293
        %v1385 = vunpack.c.l.b16 %v1294
        %v1386 = vunpack.c.h.b16 %v1294
        %v1387 = vunpack.c.l.b16 %v1295
        %v1388 = vunpack.c.h.b16 %v1295
        %v1389 = vunpack.c.l.b16 %v1296
        %v1390 = vunpack.c.h.b16 %v1296
        %v1391 = vunpack.c.l.b16 %v1297
        %v1392 = vunpack.c.h.b16 %v1297
        %v1393 = vunpack.c.l.b16 %v1298
        %v1394 = vunpack.c.h.b16 %v1298
        %v1395 = vpack.c.b16 %v1331, %v1331
        %v1396 = vpack.c.b16 %v1332, %v1332
        %v1397 = vpack.c.b16 %v1333, %v1333
        %v1398 = vpack.c.b16 %v1334, %v1334
        %v1399 = vpack.c.b16 %v1335, %v1335
        %v1400 = vpack.c.b16 %v1336, %v1336
        %v1401 = vpack.c.b16 %v1337, %v1337
        %v1402 = vpack.c.b16 %v1338, %v1338
        %v1403 = vpack.c.b16 %v1339, %v1339
        %v1404 = vpack.c.b16 %v1340, %v1340
        %v1405 = vpack.c.b16 %v1341, %v1341
        %v1406 = vpack.c.b16 %v1342, %v1342
        %v1407 = vpack.c.b16 %v1343, %v1343
        %v1408 = vpack.c.b16 %v1344, %v1344
        %v1409 = vpack.c.b16 %v1345, %v1345
        %v1410 = vpack.c.b16 %v1346, %v1346
        %v1411 = vpack.c.b16 %v1347, %v1347
        %v1412 = vpack.c.b16 %v1348, %v1348
        %v1413 = vpack.c.b16 %v1349, %v1349
        %v1414 = vpack.c.b16 %v1350, %v1350
        %v1415 = vpack.c.b16 %v1351, %v1351
        %v1416 = vpack.c.b16 %v1352, %v1352
        %v1417 = vpack.c.b16 %v1353, %v1353
        %v1418 = vpack.c.b16 %v1354, %v1354
        %v1419 = vpack.c.b16 %v1355, %v1355
        %v1420 = vpack.c.b16 %v1356, %v1356
        %v1421 = vpack.c.b16 %v1357, %v1357
        %v1422 = vpack.c.b16 %v1358, %v1358
        %v1423 = vpack.c.b16 %v1359, %v1359
        %v1424 = vpack.c.b16 %v1360, %v1360
        %v1425 = vpack.c.b16 %v1361, %v1361
        %v1426 = vpack.c.b16 %v1362, %v1362
        %v1427 = vpack.c.b16 %v1363, %v1363
        %v1428 = vpack.c.b16 %v1364, %v1364
        %v1429 = vpack.c.b16 %v1365, %v1365
        %v1430 = vpack.c.b16 %v1366, %v1366
        %v1431 = vpack.c.b16 %v1367, %v1367
        %v1432 = vpack.c.b16 %v1368, %v1368
        %v1433 = vpack.c.b16 %v1369, %v1369
        %v1434 = vpack.c.b16 %v1370, %v1370
        %v1435 = vpack.c.b16 %v1371, %v1371
        %v1436 = vpack.c.b16 %v1372, %v1372
        %v1437 = vpack.c.b16 %v1373, %v1373
        %v1438 = vpack.c.b16 %v1374, %v1374
        %v1439 = vpack.c.b16 %v1375, %v1375
        %v1440 = vpack.c.b16 %v1376, %v1376
        %v1441 = vpack.c.b16 %v1377, %v1377
        %v1442 = vpack.c.b16 %v1378, %v1378
        %v1443 = vpack.c.b16 %v1379, %v1379
        %v1444 = vpack.c.b16 %v1380, %v1380
        %v1445 = vpack.c.b16 %v1381, %v1381
        %v1446 = vpack.c.b16 %v1382, %v1382
        %v1447 = vpack.c.b16 %v1383, %v1383
        %v1448 = vpack.c.b16 %v1384, %v1384
        %v1449 = vpack.c.b16 %v1385, %v1385
        %v1450 = vpack.c.b16 %v1386, %v1386
        %v1451 = vpack.c.b16 %v1387, %v1387
        %v1452 = vpack.c.b16 %v1388, %v1388
        %v1453 = vpack.c.b16 %v1389, %v1389
        %v1454 = vpack.c.b16 %v1390, %v1390
        %v1455 = vpack.c.b16 %v1391, %v1391
        %v1456 = vpack.c.b16 %v1392, %v1392
        %v1457 = vpack.c.b16 %v1393, %v1393
        %v1458 = vpack.c.b16 %v1394, %v1394
        %1523 = vst [vmem:[%s257] sm:$0xf] %v1395
        %1524 = vst [vmem:[%s257 + $0x4] sm:$0xf] %v1396
        %1525 = vst [vmem:[%s257 + $0x8] sm:$0xf] %v1397
        %1526 = vst [vmem:[%s257 + $0xc] sm:$0xf] %v1398
        %1527 = vst [vmem:[%s257 + $0x10] sm:$0xf] %v1399
        %1528 = vst [vmem:[%s257 + $0x14] sm:$0xf] %v1400
        %1529 = vst [vmem:[%s257 + $0x18] sm:$0xf] %v1401
        %1530 = vst [vmem:[%s257 + $0x1c] sm:$0xf] %v1402
        %1531 = vst [vmem:[%s257 + $0x20] sm:$0xf] %v1403
        %1532 = vst [vmem:[%s257 + $0x24] sm:$0xf] %v1404
        %1533 = vst [vmem:[%s257 + $0x28] sm:$0xf] %v1405
        %1534 = vst [vmem:[%s257 + $0x2c] sm:$0xf] %v1406
        %1535 = vst [vmem:[%s257 + $0x30] sm:$0xf] %v1407
        %1536 = vst [vmem:[%s257 + $0x34] sm:$0xf] %v1408
        %1537 = vst [vmem:[%s257 + $0x38] sm:$0xf] %v1409
        %1538 = vst [vmem:[%s257 + $0x3c] sm:$0xf] %v1410
        %1539 = vst [vmem:[%s257 + $0x40] sm:$0xf] %v1411
        %1540 = vst [vmem:[%s257 + $0x44] sm:$0xf] %v1412
        %1541 = vst [vmem:[%s257 + $0x48] sm:$0xf] %v1413
        %1542 = vst [vmem:[%s257 + $0x4c] sm:$0xf] %v1414
        %1543 = vst [vmem:[%s257 + $0x50] sm:$0xf] %v1415
        %1544 = vst [vmem:[%s257 + $0x54] sm:$0xf] %v1416
        %1545 = vst [vmem:[%s257 + $0x58] sm:$0xf] %v1417
        %1546 = vst [vmem:[%s257 + $0x5c] sm:$0xf] %v1418
        %1547 = vst [vmem:[%s257 + $0x60] sm:$0xf] %v1419
        %1548 = vst [vmem:[%s257 + $0x64] sm:$0xf] %v1420
        %1549 = vst [vmem:[%s257 + $0x68] sm:$0xf] %v1421
        %1550 = vst [vmem:[%s257 + $0x6c] sm:$0xf] %v1422
        %1551 = vst [vmem:[%s257 + $0x70] sm:$0xf] %v1423
        %1552 = vst [vmem:[%s257 + $0x74] sm:$0xf] %v1424
        %1553 = vst [vmem:[%s257 + $0x78] sm:$0xf] %v1425
        %1554 = vst [vmem:[%s257 + $0x7c] sm:$0xf] %v1426
        %1555 = vst [vmem:[%s257 + $0x80] sm:$0xf] %v1427
        %1556 = vst [vmem:[%s257 + $0x84] sm:$0xf] %v1428
        %1557 = vst [vmem:[%s257 + $0x88] sm:$0xf] %v1429
        %1558 = vst [vmem:[%s257 + $0x8c] sm:$0xf] %v1430
        %1559 = vst [vmem:[%s257 + $0x90] sm:$0xf] %v1431
        %1560 = vst [vmem:[%s257 + $0x94] sm:$0xf] %v1432
        %1561 = vst [vmem:[%s257 + $0x98] sm:$0xf] %v1433
        %1562 = vst [vmem:[%s257 + $0x9c] sm:$0xf] %v1434
        %1563 = vst [vmem:[%s257 + $0xa0] sm:$0xf] %v1435
        %1564 = vst [vmem:[%s257 + $0xa4] sm:$0xf] %v1436
        %1565 = vst [vmem:[%s257 + $0xa8] sm:$0xf] %v1437
        %1566 = vst [vmem:[%s257 + $0xac] sm:$0xf] %v1438
        %1567 = vst [vmem:[%s257 + $0xb0] sm:$0xf] %v1439
        %1568 = vst [vmem:[%s257 + $0xb4] sm:$0xf] %v1440
        %1569 = vst [vmem:[%s257 + $0xb8] sm:$0xf] %v1441
        %1570 = vst [vmem:[%s257 + $0xbc] sm:$0xf] %v1442
        %1571 = vst [vmem:[%s257 + $0xc0] sm:$0xf] %v1443
        %1572 = vst [vmem:[%s257 + $0xc4] sm:$0xf] %v1444
        %1573 = vst [vmem:[%s257 + $0xc8] sm:$0xf] %v1445
        %1574 = vst [vmem:[%s257 + $0xcc] sm:$0xf] %v1446
        %1575 = vst [vmem:[%s257 + $0xd0] sm:$0xf] %v1447
        %1576 = vst [vmem:[%s257 + $0xd4] sm:$0xf] %v1448
        %1577 = vst [vmem:[%s257 + $0xd8] sm:$0xf] %v1449
        %1578 = vst [vmem:[%s257 + $0xdc] sm:$0xf] %v1450
        %1579 = vst [vmem:[%s257 + $0xe0] sm:$0xf] %v1451
        %1580 = vst [vmem:[%s257 + $0xe4] sm:$0xf] %v1452
        %1581 = vst [vmem:[%s257 + $0xe8] sm:$0xf] %v1453
        %1582 = vst [vmem:[%s257 + $0xec] sm:$0xf] %v1454
        %1583 = vst [vmem:[%s257 + $0xf0] sm:$0xf] %v1455
        %1584 = vst [vmem:[%s257 + $0xf4] sm:$0xf] %v1456
        %1585 = vst [vmem:[%s257 + $0xf8] sm:$0xf] %v1457
        %1586 = vst [vmem:[%s257 + $0xfc] sm:$0xf] %v1458
      $region40: #{_lambda_.18} parent=31 // pred_fallthru
        _
      %s1587 = smul.u32 64, %s19
      %p1588 = scmp.lt.s32.totalorder %s1587, 255
      %s1589 = scalar_select %p1588, %s1587, 255
      %p1590 = scmp.lt.s32.totalorder %s20, 0
      %s1591 = scalar_select %p1590, %s20, 0
      %s1592 = sadd.s32 %s1591, %s1589
      %s1593 = smul.addr %s1592, 4
      %s1594 = scalar_lea.vmem %s3, %s1593
      // Predicated region
      $region41: #{_lambda_.18} parent=31 // pred_check
        %p1595 = pneg %p135
      $region42: #{_lambda_.18} parent=31 // pred_check_branch
        %1597 = sbr.rel (%p1595) target = $region44
      $region43: #{_lambda_.18} parent=31 // pred_region
        %s1598 = smul.u32 64, %s19
      $region44: #{_lambda_.18} parent=31 // pred_fallthru
        _
    $region32: #{_lambda_.18} parent=5 // pred_fallthru
      _
    %p1599 = scmp.le.s32.totalorder 2, %s9
    // Predicated region
    $region45: #{_lambda_.18} parent=5 // pred_check
      %p1600 = pneg %p1599
    $region46: #{_lambda_.18} parent=5 // pred_check_branch
      %1602 = sbr.rel (%p1600) target = $region48
    $region47: #{_lambda_.18} parent=5 // pred_region
      %s1603 = ssub.s32 %s9, 2
      // Predicated region
      $region49: #{_lambda_.18} parent=47 // pred_check
        %p1604 = pneg %p141
      $region50: #{_lambda_.18} parent=47 // pred_check_branch
        %1606 = sbr.rel (%p1604) target = $region52
      $region51: #{_lambda_.18} parent=47 // pred_region
        %s1607 = smul.u32 64, %s22
        %p1608 = scmp.lt.s32.totalorder %s1607, 255
        %s1609 = scalar_select %p1608, %s1607, 255
        %p1610 = scmp.lt.s32.totalorder %s23, 0
        %s1611 = scalar_select %p1610, %s23, 0
        %s1612 = sadd.s32 %s1611, %s1609
        %s1613 = smul.addr %s1612, 4
        %s1614 = scalar_lea.vmem %s3, %s1613
      $region52: #{_lambda_.18} parent=47 // pred_fallthru
        _
    $region48: #{_lambda_.18} parent=5 // pred_fallthru
      _
  $region6: #{_lambda_.18} parent=0 // loop_footer
    %s13 = sadd.s32 1, %s9
  $region7: #{_lambda_.18} parent=0 // loop_footer_branch
    %8 = sbr.rel target = $region3
  $region8: #{_lambda_.18} parent=0 // loop_exit
    _

// kernel: _lambda_.19
$region0: #{_lambda_.19}
  #allocation0 [shape = 'u32[]', space=smem, size = 0x4, offset = 0x4, fixed_abs, tag = 'smem constant byte address 0x4 - core index']
  #allocation1 [shape = 'u32[144,128]{1,0:T(1,128)}', space=vmem, size = 0x12000, scoped, tag = 'internal scratch']
  #allocation2 [shape = 'f32[512,128]{1,0:T(8,128)}', space=vmem, size = 0x40000, scoped, tag = 'scratch operand']
  %s0 = inlined_call_operand.vmem [shape: bf16[512,128], index: 0, kind: input, shape index: {}]
  %s1 = inlined_call_operand.vmem [shape: bf16[128,128], index: 1, kind: input, shape index: {}]
  %s2 = inlined_call_operand.vmem [shape: f32[1,128], index: 2, kind: input, shape index: {}]
  %s3 = inlined_call_operand.vmem [shape: bf16[512,128], index: 3, kind: output, shape index: {}]
  %s4 = sld [smem:[#allocation0]]
  $region30: #{_lambda_.19} parent=0
    _
  %s6 = ssub.s32 1, %s4
  %s7 = scalar_select 0, %s6, %s4
  // Predicated region
  $region2: #{_lambda_.19} parent=0 // pred_check
    _
  $region3: #{_lambda_.19} parent=0 // pred_check_branch
    %9 = sbr.rel (0) target = $region5
  $region4: #{_lambda_.19} parent=0 // pred_region
    _
  $region5: #{_lambda_.19} parent=0 // pred_fallthru
    _
  // Predicated region
  $region6: #{_lambda_.19} parent=0 // pred_check
    _
  $region7: #{_lambda_.19} parent=0 // pred_check_branch
    %11 = sbr.rel (0) target = $region9
  $region8: #{_lambda_.19} parent=0 // pred_region
    _
  $region9: #{_lambda_.19} parent=0 // pred_fallthru
    _
  // Predicated region
  $region10: #{_lambda_.19} parent=0 // pred_check
    _
  $region11: #{_lambda_.19} parent=0 // pred_check_branch
    %13 = sbr.rel (0) target = $region13
  $region12: #{_lambda_.19} parent=0 // pred_region
    _
  $region13: #{_lambda_.19} parent=0 // pred_fallthru
    _
  %p15 = scmp.eq.s32.totalorder 0, 0
  // Predicated region
  $region14: #{_lambda_.19} parent=0 // pred_check
    %p16 = pneg %p15
  $region15: #{_lambda_.19} parent=0 // pred_check_branch
    %18 = sbr.rel (%p16) target = $region17
  $region16: #{_lambda_.19} parent=0 // pred_region
    %19 = vst [vmem:[#allocation2] sm:$0xff] 0.0
    %20 = vst [vmem:[#allocation2 + $0x8] sm:$0xff] 0.0
    %21 = vst [vmem:[#allocation2 + $0x10] sm:$0xff] 0.0
    %22 = vst [vmem:[#allocation2 + $0x18] sm:$0xff] 0.0
    %23 = vst [vmem:[#allocation2 + $0x20] sm:$0xff] 0.0
    %24 = vst [vmem:[#allocation2 + $0x28] sm:$0xff] 0.0
    %25 = vst [vmem:[#allocation2 + $0x30] sm:$0xff] 0.0
    %26 = vst [vmem:[#allocation2 + $0x38] sm:$0xff] 0.0
    %27 = vst [vmem:[#allocation2 + $0x40] sm:$0xff] 0.0
    %28 = vst [vmem:[#allocation2 + $0x48] sm:$0xff] 0.0
    %29 = vst [vmem:[#allocation2 + $0x50] sm:$0xff] 0.0
    %30 = vst [vmem:[#allocation2 + $0x58] sm:$0xff] 0.0
    %31 = vst [vmem:[#allocation2 + $0x60] sm:$0xff] 0.0
    %32 = vst [vmem:[#allocation2 + $0x68] sm:$0xff] 0.0
    %33 = vst [vmem:[#allocation2 + $0x70] sm:$0xff] 0.0
    %34 = vst [vmem:[#allocation2 + $0x78] sm:$0xff] 0.0
    %35 = vst [vmem:[#allocation2 + $0x80] sm:$0xff] 0.0
    %36 = vst [vmem:[#allocation2 + $0x88] sm:$0xff] 0.0
    %37 = vst [vmem:[#allocation2 + $0x90] sm:$0xff] 0.0
    %38 = vst [vmem:[#allocation2 + $0x98] sm:$0xff] 0.0
    %39 = vst [vmem:[#allocation2 + $0xa0] sm:$0xff] 0.0
    %40 = vst [vmem:[#allocation2 + $0xa8] sm:$0xff] 0.0
    %41 = vst [vmem:[#allocation2 + $0xb0] sm:$0xff] 0.0
    %42 = vst [vmem:[#allocation2 + $0xb8] sm:$0xff] 0.0
    %43 = vst [vmem:[#allocation2 + $0xc0] sm:$0xff] 0.0
    %44 = vst [vmem:[#allocation2 + $0xc8] sm:$0xff] 0.0
    %45 = vst [vmem:[#allocation2 + $0xd0] sm:$0xff] 0.0
    %46 = vst [vmem:[#allocation2 + $0xd8] sm:$0xff] 0.0
    %47 = vst [vmem:[#allocation2 + $0xe0] sm:$0xff] 0.0
    %48 = vst [vmem:[#allocation2 + $0xe8] sm:$0xff] 0.0
    %49 = vst [vmem:[#allocation2 + $0xf0] sm:$0xff] 0.0
    %50 = vst [vmem:[#allocation2 + $0xf8] sm:$0xff] 0.0
    %51 = vst [vmem:[#allocation2 + $0x100] sm:$0xff] 0.0
    %52 = vst [vmem:[#allocation2 + $0x108] sm:$0xff] 0.0
    %53 = vst [vmem:[#allocation2 + $0x110] sm:$0xff] 0.0
    %54 = vst [vmem:[#allocation2 + $0x118] sm:$0xff] 0.0
    %55 = vst [vmem:[#allocation2 + $0x120] sm:$0xff] 0.0
    %56 = vst [vmem:[#allocation2 + $0x128] sm:$0xff] 0.0
    %57 = vst [vmem:[#allocation2 + $0x130] sm:$0xff] 0.0
    %58 = vst [vmem:[#allocation2 + $0x138] sm:$0xff] 0.0
    %59 = vst [vmem:[#allocation2 + $0x140] sm:$0xff] 0.0
    %60 = vst [vmem:[#allocation2 + $0x148] sm:$0xff] 0.0
    %61 = vst [vmem:[#allocation2 + $0x150] sm:$0xff] 0.0
    %62 = vst [vmem:[#allocation2 + $0x158] sm:$0xff] 0.0
    %63 = vst [vmem:[#allocation2 + $0x160] sm:$0xff] 0.0
    %64 = vst [vmem:[#allocation2 + $0x168] sm:$0xff] 0.0
    %65 = vst [vmem:[#allocation2 + $0x170] sm:$0xff] 0.0
    %66 = vst [vmem:[#allocation2 + $0x178] sm:$0xff] 0.0
    %67 = vst [vmem:[#allocation2 + $0x180] sm:$0xff] 0.0
    %68 = vst [vmem:[#allocation2 + $0x188] sm:$0xff] 0.0
    %69 = vst [vmem:[#allocation2 + $0x190] sm:$0xff] 0.0
    %70 = vst [vmem:[#allocation2 + $0x198] sm:$0xff] 0.0
    %71 = vst [vmem:[#allocation2 + $0x1a0] sm:$0xff] 0.0
    %72 = vst [vmem:[#allocation2 + $0x1a8] sm:$0xff] 0.0
    %73 = vst [vmem:[#allocation2 + $0x1b0] sm:$0xff] 0.0
    %74 = vst [vmem:[#allocation2 + $0x1b8] sm:$0xff] 0.0
    %75 = vst [vmem:[#allocation2 + $0x1c0] sm:$0xff] 0.0
    %76 = vst [vmem:[#allocation2 + $0x1c8] sm:$0xff] 0.0
    %77 = vst [vmem:[#allocation2 + $0x1d0] sm:$0xff] 0.0
    %78 = vst [vmem:[#allocation2 + $0x1d8] sm:$0xff] 0.0
    %79 = vst [vmem:[#allocation2 + $0x1e0] sm:$0xff] 0.0
    %80 = vst [vmem:[#allocation2 + $0x1e8] sm:$0xff] 0.0
    %81 = vst [vmem:[#allocation2 + $0x1f0] sm:$0xff] 0.0
    %82 = vst [vmem:[#allocation2 + $0x1f8] sm:$0xff] 0.0
  $region17: #{_lambda_.19} parent=0 // pred_fallthru
    _
  %v83 = vld [vmem:[%s0] sm:$0xf]
  %v84 = vld [vmem:[%s0 + $0x4] sm:$0xf]
  %v85 = vld [vmem:[%s0 + $0x8] sm:$0xf]
  %v86 = vld [vmem:[%s0 + $0xc] sm:$0xf]
  %v87 = vld [vmem:[%s0 + $0x10] sm:$0xf]
  %v88 = vld [vmem:[%s0 + $0x14] sm:$0xf]
  %v89 = vld [vmem:[%s0 + $0x18] sm:$0xf]
  %v90 = vld [vmem:[%s0 + $0x1c] sm:$0xf]
  %v91 = vld [vmem:[%s0 + $0x20] sm:$0xf]
  %v92 = vld [vmem:[%s0 + $0x24] sm:$0xf]
  %v93 = vld [vmem:[%s0 + $0x28] sm:$0xf]
  %v94 = vld [vmem:[%s0 + $0x2c] sm:$0xf]
  %v95 = vld [vmem:[%s0 + $0x30] sm:$0xf]
  %v96 = vld [vmem:[%s0 + $0x34] sm:$0xf]
  %v97 = vld [vmem:[%s0 + $0x38] sm:$0xf]
  %v98 = vld [vmem:[%s0 + $0x3c] sm:$0xf]
  %v99 = vld [vmem:[%s0 + $0x40] sm:$0xf]
  %v100 = vld [vmem:[%s0 + $0x44] sm:$0xf]
  %v101 = vld [vmem:[%s0 + $0x48] sm:$0xf]
  %v102 = vld [vmem:[%s0 + $0x4c] sm:$0xf]
  %v103 = vld [vmem:[%s0 + $0x50] sm:$0xf]
  %v104 = vld [vmem:[%s0 + $0x54] sm:$0xf]
  %v105 = vld [vmem:[%s0 + $0x58] sm:$0xf]
  %v106 = vld [vmem:[%s0 + $0x5c] sm:$0xf]
  %v107 = vld [vmem:[%s0 + $0x60] sm:$0xf]
  %v108 = vld [vmem:[%s0 + $0x64] sm:$0xf]
  %v109 = vld [vmem:[%s0 + $0x68] sm:$0xf]
  %v110 = vld [vmem:[%s0 + $0x6c] sm:$0xf]
  %v111 = vld [vmem:[%s0 + $0x70] sm:$0xf]
  %v112 = vld [vmem:[%s0 + $0x74] sm:$0xf]
  %v113 = vld [vmem:[%s0 + $0x78] sm:$0xf]
  %v114 = vld [vmem:[%s0 + $0x7c] sm:$0xf]
  %v115 = vld [vmem:[%s0 + $0x80] sm:$0xf]
  %v116 = vld [vmem:[%s0 + $0x84] sm:$0xf]
  %v117 = vld [vmem:[%s0 + $0x88] sm:$0xf]
  %v118 = vld [vmem:[%s0 + $0x8c] sm:$0xf]
  %v119 = vld [vmem:[%s0 + $0x90] sm:$0xf]
  %v120 = vld [vmem:[%s0 + $0x94] sm:$0xf]
  %v121 = vld [vmem:[%s0 + $0x98] sm:$0xf]
  %v122 = vld [vmem:[%s0 + $0x9c] sm:$0xf]
  %v123 = vld [vmem:[%s0 + $0xa0] sm:$0xf]
  %v124 = vld [vmem:[%s0 + $0xa4] sm:$0xf]
  %v125 = vld [vmem:[%s0 + $0xa8] sm:$0xf]
  %v126 = vld [vmem:[%s0 + $0xac] sm:$0xf]
  %v127 = vld [vmem:[%s0 + $0xb0] sm:$0xf]
  %v128 = vld [vmem:[%s0 + $0xb4] sm:$0xf]
  %v129 = vld [vmem:[%s0 + $0xb8] sm:$0xf]
  %v130 = vld [vmem:[%s0 + $0xbc] sm:$0xf]
  %v131 = vld [vmem:[%s0 + $0xc0] sm:$0xf]
  %v132 = vld [vmem:[%s0 + $0xc4] sm:$0xf]
  %v133 = vld [vmem:[%s0 + $0xc8] sm:$0xf]
  %v134 = vld [vmem:[%s0 + $0xcc] sm:$0xf]
  %v135 = vld [vmem:[%s0 + $0xd0] sm:$0xf]
  %v136 = vld [vmem:[%s0 + $0xd4] sm:$0xf]
  %v137 = vld [vmem:[%s0 + $0xd8] sm:$0xf]
  %v138 = vld [vmem:[%s0 + $0xdc] sm:$0xf]
  %v139 = vld [vmem:[%s0 + $0xe0] sm:$0xf]
  %v140 = vld [vmem:[%s0 + $0xe4] sm:$0xf]
  %v141 = vld [vmem:[%s0 + $0xe8] sm:$0xf]
  %v142 = vld [vmem:[%s0 + $0xec] sm:$0xf]
  %v143 = vld [vmem:[%s0 + $0xf0] sm:$0xf]
  %v144 = vld [vmem:[%s0 + $0xf4] sm:$0xf]
  %v145 = vld [vmem:[%s0 + $0xf8] sm:$0xf]
  %v146 = vld [vmem:[%s0 + $0xfc] sm:$0xf]
  %v147 = vld [vmem:[#allocation2] sm:$0xff]
  %v148 = vld [vmem:[#allocation2 + $0x8] sm:$0xff]
  %v149 = vld [vmem:[#allocation2 + $0x10] sm:$0xff]
  %v150 = vld [vmem:[#allocation2 + $0x18] sm:$0xff]
  %v151 = vld [vmem:[#allocation2 + $0x20] sm:$0xff]
  %v152 = vld [vmem:[#allocation2 + $0x28] sm:$0xff]
  %v153 = vld [vmem:[#allocation2 + $0x30] sm:$0xff]
  %v154 = vld [vmem:[#allocation2 + $0x38] sm:$0xff]
  %v155 = vld [vmem:[#allocation2 + $0x40] sm:$0xff]
  %v156 = vld [vmem:[#allocation2 + $0x48] sm:$0xff]
  %v157 = vld [vmem:[#allocation2 + $0x50] sm:$0xff]
  %v158 = vld [vmem:[#allocation2 + $0x58] sm:$0xff]
  %v159 = vld [vmem:[#allocation2 + $0x60] sm:$0xff]
  %v160 = vld [vmem:[#allocation2 + $0x68] sm:$0xff]
  %v161 = vld [vmem:[#allocation2 + $0x70] sm:$0xff]
  %v162 = vld [vmem:[#allocation2 + $0x78] sm:$0xff]
  %v163 = vld [vmem:[#allocation2 + $0x80] sm:$0xff]
  %v164 = vld [vmem:[#allocation2 + $0x88] sm:$0xff]
  %v165 = vld [vmem:[#allocation2 + $0x90] sm:$0xff]
  %v166 = vld [vmem:[#allocation2 + $0x98] sm:$0xff]
  %v167 = vld [vmem:[#allocation2 + $0xa0] sm:$0xff]
  %v168 = vld [vmem:[#allocation2 + $0xa8] sm:$0xff]
  %v169 = vld [vmem:[#allocation2 + $0xb0] sm:$0xff]
  %v170 = vld [vmem:[#allocation2 + $0xb8] sm:$0xff]
  %v171 = vld [vmem:[#allocation2 + $0xc0] sm:$0xff]
  %v172 = vld [vmem:[#allocation2 + $0xc8] sm:$0xff]
  %v173 = vld [vmem:[#allocation2 + $0xd0] sm:$0xff]
  %v174 = vld [vmem:[#allocation2 + $0xd8] sm:$0xff]
  %v175 = vld [vmem:[#allocation2 + $0xe0] sm:$0xff]
  %v176 = vld [vmem:[#allocation2 + $0xe8] sm:$0xff]
  %v177 = vld [vmem:[#allocation2 + $0xf0] sm:$0xff]
  %v178 = vld [vmem:[#allocation2 + $0xf8] sm:$0xff]
  %v179 = vld [vmem:[#allocation2 + $0x100] sm:$0xff]
  %v180 = vld [vmem:[#allocation2 + $0x108] sm:$0xff]
  %v181 = vld [vmem:[#allocation2 + $0x110] sm:$0xff]
  %v182 = vld [vmem:[#allocation2 + $0x118] sm:$0xff]
  %v183 = vld [vmem:[#allocation2 + $0x120] sm:$0xff]
  %v184 = vld [vmem:[#allocation2 + $0x128] sm:$0xff]
  %v185 = vld [vmem:[#allocation2 + $0x130] sm:$0xff]
  %v186 = vld [vmem:[#allocation2 + $0x138] sm:$0xff]
  %v187 = vld [vmem:[#allocation2 + $0x140] sm:$0xff]
  %v188 = vld [vmem:[#allocation2 + $0x148] sm:$0xff]
  %v189 = vld [vmem:[#allocation2 + $0x150] sm:$0xff]
  %v190 = vld [vmem:[#allocation2 + $0x158] sm:$0xff]
  %v191 = vld [vmem:[#allocation2 + $0x160] sm:$0xff]
  %v192 = vld [vmem:[#allocation2 + $0x168] sm:$0xff]
  %v193 = vld [vmem:[#allocation2 + $0x170] sm:$0xff]
  %v194 = vld [vmem:[#allocation2 + $0x178] sm:$0xff]
  %v195 = vld [vmem:[#allocation2 + $0x180] sm:$0xff]
  %v196 = vld [vmem:[#allocation2 + $0x188] sm:$0xff]
  %v197 = vld [vmem:[#allocation2 + $0x190] sm:$0xff]
  %v198 = vld [vmem:[#allocation2 + $0x198] sm:$0xff]
  %v199 = vld [vmem:[#allocation2 + $0x1a0] sm:$0xff]
  %v200 = vld [vmem:[#allocation2 + $0x1a8] sm:$0xff]
  %v201 = vld [vmem:[#allocation2 + $0x1b0] sm:$0xff]
  %v202 = vld [vmem:[#allocation2 + $0x1b8] sm:$0xff]
  %v203 = vld [vmem:[#allocation2 + $0x1c0] sm:$0xff]
  %v204 = vld [vmem:[#allocation2 + $0x1c8] sm:$0xff]
  %v205 = vld [vmem:[#allocation2 + $0x1d0] sm:$0xff]
  %v206 = vld [vmem:[#allocation2 + $0x1d8] sm:$0xff]
  %v207 = vld [vmem:[#allocation2 + $0x1e0] sm:$0xff]
  %v208 = vld [vmem:[#allocation2 + $0x1e8] sm:$0xff]
  %v209 = vld [vmem:[#allocation2 + $0x1f0] sm:$0xff]
  %v210 = vld [vmem:[#allocation2 + $0x1f8] sm:$0xff]
  %v211 = vld [vmem:[%s1] sm:$0xf]
  %v212 = vld [vmem:[%s1 + $0x4] sm:$0xf]
  %v213 = vld [vmem:[%s1 + $0x8] sm:$0xf]
  %v214 = vld [vmem:[%s1 + $0xc] sm:$0xf]
  %v215 = vld [vmem:[%s1 + $0x10] sm:$0xf]
  %v216 = vld [vmem:[%s1 + $0x14] sm:$0xf]
  %v217 = vld [vmem:[%s1 + $0x18] sm:$0xf]
  %v218 = vld [vmem:[%s1 + $0x1c] sm:$0xf]
  %v219 = vld [vmem:[%s1 + $0x20] sm:$0xf]
  %v220 = vld [vmem:[%s1 + $0x24] sm:$0xf]
  %v221 = vld [vmem:[%s1 + $0x28] sm:$0xf]
  %v222 = vld [vmem:[%s1 + $0x2c] sm:$0xf]
  %v223 = vld [vmem:[%s1 + $0x30] sm:$0xf]
  %v224 = vld [vmem:[%s1 + $0x34] sm:$0xf]
  %v225 = vld [vmem:[%s1 + $0x38] sm:$0xf]
  %v226 = vld [vmem:[%s1 + $0x3c] sm:$0xf]
  %v291 = vunpack.c.l.b16 %v83
  %v292 = vunpack.c.l.b16 %v84
  %v293 = vunpack.c.l.b16 %v85
  %v294 = vunpack.c.l.b16 %v86
  %v295 = vunpack.c.l.b16 %v87
  %v296 = vunpack.c.l.b16 %v88
  %v297 = vunpack.c.l.b16 %v89
  %v298 = vunpack.c.l.b16 %v90
  %v299 = vunpack.c.l.b16 %v91
  %v300 = vunpack.c.l.b16 %v92
  %v301 = vunpack.c.l.b16 %v93
  %v302 = vunpack.c.l.b16 %v94
  %v303 = vunpack.c.l.b16 %v95
  %v304 = vunpack.c.l.b16 %v96
  %v305 = vunpack.c.l.b16 %v97
  %v306 = vunpack.c.l.b16 %v98
  %v307 = vunpack.c.l.b16 %v99
  %v308 = vunpack.c.l.b16 %v100
  %v309 = vunpack.c.l.b16 %v101
  %v310 = vunpack.c.l.b16 %v102
  %v311 = vunpack.c.l.b16 %v103
  %v312 = vunpack.c.l.b16 %v104
  %v313 = vunpack.c.l.b16 %v105
  %v314 = vunpack.c.l.b16 %v106
  %v315 = vunpack.c.l.b16 %v107
  %v316 = vunpack.c.l.b16 %v108
  %v317 = vunpack.c.l.b16 %v109
  %v318 = vunpack.c.l.b16 %v110
  %v319 = vunpack.c.l.b16 %v111
  %v320 = vunpack.c.l.b16 %v112
  %v321 = vunpack.c.l.b16 %v113
  %v322 = vunpack.c.l.b16 %v114
  %v323 = vunpack.c.l.b16 %v115
  %v324 = vunpack.c.l.b16 %v116
  %v325 = vunpack.c.l.b16 %v117
  %v326 = vunpack.c.l.b16 %v118
  %v327 = vunpack.c.l.b16 %v119
  %v328 = vunpack.c.l.b16 %v120
  %v329 = vunpack.c.l.b16 %v121
  %v330 = vunpack.c.l.b16 %v122
  %v331 = vunpack.c.l.b16 %v123
  %v332 = vunpack.c.l.b16 %v124
  %v333 = vunpack.c.l.b16 %v125
  %v334 = vunpack.c.l.b16 %v126
  %v335 = vunpack.c.l.b16 %v127
  %v336 = vunpack.c.l.b16 %v128
  %v337 = vunpack.c.l.b16 %v129
  %v338 = vunpack.c.l.b16 %v130
  %v339 = vunpack.c.l.b16 %v131
  %v340 = vunpack.c.l.b16 %v132
  %v341 = vunpack.c.l.b16 %v133
  %v342 = vunpack.c.l.b16 %v134
  %v343 = vunpack.c.l.b16 %v135
  %v344 = vunpack.c.l.b16 %v136
  %v345 = vunpack.c.l.b16 %v137
  %v346 = vunpack.c.l.b16 %v138
  %v347 = vunpack.c.l.b16 %v139
  %v348 = vunpack.c.l.b16 %v140
  %v349 = vunpack.c.l.b16 %v141
  %v350 = vunpack.c.l.b16 %v142
  %v351 = vunpack.c.l.b16 %v143
  %v352 = vunpack.c.l.b16 %v144
  %v353 = vunpack.c.l.b16 %v145
  %v354 = vunpack.c.l.b16 %v146
  %v355 = vpack.c.b16 %v292, %v291
  %v356 = vpack.c.b16 %v294, %v293
  %v357 = vpack.c.b16 %v296, %v295
  %v358 = vpack.c.b16 %v298, %v297
  %v359 = vpack.c.b16 %v300, %v299
  %v360 = vpack.c.b16 %v302, %v301
  %v361 = vpack.c.b16 %v304, %v303
  %v362 = vpack.c.b16 %v306, %v305
  %v363 = vpack.c.b16 %v308, %v307
  %v364 = vpack.c.b16 %v310, %v309
  %v365 = vpack.c.b16 %v312, %v311
  %v366 = vpack.c.b16 %v314, %v313
  %v367 = vpack.c.b16 %v316, %v315
  %v368 = vpack.c.b16 %v318, %v317
  %v369 = vpack.c.b16 %v320, %v319
  %v370 = vpack.c.b16 %v322, %v321
  %v371 = vpack.c.b16 %v324, %v323
  %v372 = vpack.c.b16 %v326, %v325
  %v373 = vpack.c.b16 %v328, %v327
  %v374 = vpack.c.b16 %v330, %v329
  %v375 = vpack.c.b16 %v332, %v331
  %v376 = vpack.c.b16 %v334, %v333
  %v377 = vpack.c.b16 %v336, %v335
  %v378 = vpack.c.b16 %v338, %v337
  %v379 = vpack.c.b16 %v340, %v339
  %v380 = vpack.c.b16 %v342, %v341
  %v381 = vpack.c.b16 %v344, %v343
  %v382 = vpack.c.b16 %v346, %v345
  %v383 = vpack.c.b16 %v348, %v347
  %v384 = vpack.c.b16 %v350, %v349
  %v385 = vpack.c.b16 %v352, %v351
  %v386 = vpack.c.b16 %v354, %v353
  %v435 = vunpack.c.l.b16 %v211
  %v436 = vunpack.c.l.b16 %v212
  %v437 = vunpack.c.l.b16 %v213
  %v438 = vunpack.c.l.b16 %v214
  %v439 = vunpack.c.l.b16 %v215
  %v440 = vunpack.c.l.b16 %v216
  %v441 = vunpack.c.l.b16 %v217
  %v442 = vunpack.c.l.b16 %v218
  %v443 = vunpack.c.l.b16 %v219
  %v444 = vunpack.c.l.b16 %v220
  %v445 = vunpack.c.l.b16 %v221
  %v446 = vunpack.c.l.b16 %v222
  %v447 = vunpack.c.l.b16 %v223
  %v448 = vunpack.c.l.b16 %v224
  %v449 = vunpack.c.l.b16 %v225
  %v450 = vunpack.c.l.b16 %v226
  %v451 = vpack.c.b16 %v436, %v435
  %v452 = vpack.c.b16 %v438, %v437
  %v453 = vpack.c.b16 %v440, %v439
  %v454 = vpack.c.b16 %v442, %v441
  %v455 = vpack.c.b16 %v444, %v443
  %v456 = vpack.c.b16 %v446, %v445
  %v457 = vpack.c.b16 %v448, %v447
  %v458 = vpack.c.b16 %v450, %v449
  %467 = vmatprep.subr.bf16.mxu0 0
  %468 = vmatpush1.bf16.msra.mxu0 %v458
  %469 = vmatprep.subr.bf16.mxu0 0
  %470 = vmatpush1.bf16.msra.mxu0 %v457
  %471 = vmatprep.subr.bf16.mxu0 0
  %472 = vmatpush1.bf16.msra.mxu0 %v456
  %473 = vmatprep.subr.bf16.mxu0 0
  %474 = vmatpush1.bf16.msra.mxu0 %v455
  %475 = vmatprep.subr.bf16.mxu0 0
  %476 = vmatpush1.bf16.msra.mxu0 %v454
  %477 = vmatprep.subr.bf16.mxu0 0
  %478 = vmatpush1.bf16.msra.mxu0 %v453
  %479 = vmatprep.subr.bf16.mxu0 0
  %480 = vmatpush1.bf16.msra.mxu0 %v452
  %481 = vmatprep.subr.bf16.mxu0 0
  %482 = vmatpush1.bf16.msra.mxu0 %v451
  %483 = vmatprep.subr.bf16.mxu0 0
  %484 = vmatpush2.bf16.msra.mxu0 0
  %485 = vmatprep.subr.bf16.mxu0 0
  %486 = vmatpush2.bf16.msra.mxu0 0
  %487 = vmatprep.subr.bf16.mxu0 0
  %488 = vmatpush2.bf16.msra.mxu0 0
  %489 = vmatprep.subr.bf16.mxu0 0
  %490 = vmatpush2.bf16.msra.mxu0 0
  %491 = vmatprep.subr.bf16.mxu0 0
  %492 = vmatpush2.bf16.msra.mxu0 0
  %493 = vmatprep.subr.bf16.mxu0 0
  %494 = vmatpush2.bf16.msra.mxu0 0
  %495 = vmatprep.subr.bf16.mxu0 0
  %496 = vmatpush2.bf16.msra.mxu0 0
  %497 = vmatprep.subr.bf16.mxu0 0
  %498 = vmatpush2.bf16.msra.mxu0 0
  %499 = vmatprep.mubr.bf16.mxu0 0
  %500 = vmatmul.mubr.bf16.gmra.mxu0 %v355
  %v501 = vpop.f32.mrf.mxu0
  %v502 = vadd.f32 0.0, %v501
  %v503 = vpop.f32.mrf.mxu0
  %v504 = vpop.f32.mrf.mxu0
  %v505 = vadd.f32 0.0, %v504
  %v506 = vpop.f32.mrf.mxu0
  %507 = vmatprep.mubr.bf16.mxu0 0
  %508 = vmatmul.mubr.bf16.gmra.mxu0 %v356
  %v509 = vpop.f32.mrf.mxu0
  %v510 = vadd.f32 0.0, %v509
  %v511 = vpop.f32.mrf.mxu0
  %v512 = vpop.f32.mrf.mxu0
  %v513 = vadd.f32 0.0, %v512
  %v514 = vpop.f32.mrf.mxu0
  %515 = vmatprep.mubr.bf16.mxu0 0
  %516 = vmatmul.mubr.bf16.gmra.mxu0 %v357
  %v517 = vpop.f32.mrf.mxu0
  %v518 = vadd.f32 0.0, %v517
  %v519 = vpop.f32.mrf.mxu0
  %v520 = vpop.f32.mrf.mxu0
  %v521 = vadd.f32 0.0, %v520
  %v522 = vpop.f32.mrf.mxu0
  %523 = vmatprep.mubr.bf16.mxu0 0
  %524 = vmatmul.mubr.bf16.gmra.mxu0 %v358
  %v525 = vpop.f32.mrf.mxu0
  %v526 = vadd.f32 0.0, %v525
  %v527 = vpop.f32.mrf.mxu0
  %v528 = vpop.f32.mrf.mxu0
  %v529 = vadd.f32 0.0, %v528
  %v530 = vpop.f32.mrf.mxu0
  %531 = vmatprep.mubr.bf16.mxu0 0
  %532 = vmatmul.mubr.bf16.gmra.mxu0 %v359
  %v533 = vpop.f32.mrf.mxu0
  %v534 = vadd.f32 0.0, %v533
  %v535 = vpop.f32.mrf.mxu0
  %v536 = vpop.f32.mrf.mxu0
  %v537 = vadd.f32 0.0, %v536
  %v538 = vpop.f32.mrf.mxu0
  %539 = vmatprep.mubr.bf16.mxu0 0
  %540 = vmatmul.mubr.bf16.gmra.mxu0 %v360
  %v541 = vpop.f32.mrf.mxu0
  %v542 = vadd.f32 0.0, %v541
  %v543 = vpop.f32.mrf.mxu0
  %v544 = vpop.f32.mrf.mxu0
  %v545 = vadd.f32 0.0, %v544
  %v546 = vpop.f32.mrf.mxu0
  %547 = vmatprep.mubr.bf16.mxu0 0
  %548 = vmatmul.mubr.bf16.gmra.mxu0 %v361
  %v549 = vpop.f32.mrf.mxu0
  %v550 = vadd.f32 0.0, %v549
  %v551 = vpop.f32.mrf.mxu0
  %v552 = vpop.f32.mrf.mxu0
  %v553 = vadd.f32 0.0, %v552
  %v554 = vpop.f32.mrf.mxu0
  %555 = vmatprep.mubr.bf16.mxu0 0
  %556 = vmatmul.mubr.bf16.gmra.mxu0 %v362
  %v557 = vpop.f32.mrf.mxu0
  %v558 = vadd.f32 0.0, %v557
  %v559 = vpop.f32.mrf.mxu0
  %v560 = vpop.f32.mrf.mxu0
  %v561 = vadd.f32 0.0, %v560
  %v562 = vpop.f32.mrf.mxu0
  %563 = vmatprep.mubr.bf16.mxu0 0
  %564 = vmatmul.mubr.bf16.gmra.mxu0 %v363
  %v565 = vpop.f32.mrf.mxu0
  %v566 = vadd.f32 0.0, %v565
  %v567 = vpop.f32.mrf.mxu0
  %v568 = vpop.f32.mrf.mxu0
  %v569 = vadd.f32 0.0, %v568
  %v570 = vpop.f32.mrf.mxu0
  %571 = vmatprep.mubr.bf16.mxu0 0
  %572 = vmatmul.mubr.bf16.gmra.mxu0 %v364
  %v573 = vpop.f32.mrf.mxu0
  %v574 = vadd.f32 0.0, %v573
  %v575 = vpop.f32.mrf.mxu0
  %v576 = vpop.f32.mrf.mxu0
  %v577 = vadd.f32 0.0, %v576
  %v578 = vpop.f32.mrf.mxu0
  %579 = vmatprep.mubr.bf16.mxu0 0
  %580 = vmatmul.mubr.bf16.gmra.mxu0 %v365
  %v581 = vpop.f32.mrf.mxu0
  %v582 = vadd.f32 0.0, %v581
  %v583 = vpop.f32.mrf.mxu0
  %v584 = vpop.f32.mrf.mxu0
  %v585 = vadd.f32 0.0, %v584
  %v586 = vpop.f32.mrf.mxu0
  %587 = vmatprep.mubr.bf16.mxu0 0
  %588 = vmatmul.mubr.bf16.gmra.mxu0 %v366
  %v589 = vpop.f32.mrf.mxu0
  %v590 = vadd.f32 0.0, %v589
  %v591 = vpop.f32.mrf.mxu0
  %v592 = vpop.f32.mrf.mxu0
  %v593 = vadd.f32 0.0, %v592
  %v594 = vpop.f32.mrf.mxu0
  %595 = vmatprep.mubr.bf16.mxu0 0
  %596 = vmatmul.mubr.bf16.gmra.mxu0 %v367
  %v597 = vpop.f32.mrf.mxu0
  %v598 = vadd.f32 0.0, %v597
  %v599 = vpop.f32.mrf.mxu0
  %v600 = vpop.f32.mrf.mxu0
  %v601 = vadd.f32 0.0, %v600
  %v602 = vpop.f32.mrf.mxu0
  %603 = vmatprep.mubr.bf16.mxu0 0
  %604 = vmatmul.mubr.bf16.gmra.mxu0 %v368
  %v605 = vpop.f32.mrf.mxu0
  %v606 = vadd.f32 0.0, %v605
  %v607 = vpop.f32.mrf.mxu0
  %v608 = vpop.f32.mrf.mxu0
  %v609 = vadd.f32 0.0, %v608
  %v610 = vpop.f32.mrf.mxu0
  %611 = vmatprep.mubr.bf16.mxu0 0
  %612 = vmatmul.mubr.bf16.gmra.mxu0 %v369
  %v613 = vpop.f32.mrf.mxu0
  %v614 = vadd.f32 0.0, %v613
  %v615 = vpop.f32.mrf.mxu0
  %v616 = vpop.f32.mrf.mxu0
  %v617 = vadd.f32 0.0, %v616
  %v618 = vpop.f32.mrf.mxu0
  %619 = vmatprep.mubr.bf16.mxu0 0
  %620 = vmatmul.mubr.bf16.gmra.mxu0 %v370
  %v621 = vpop.f32.mrf.mxu0
  %v622 = vadd.f32 0.0, %v621
  %v623 = vpop.f32.mrf.mxu0
  %v624 = vpop.f32.mrf.mxu0
  %v625 = vadd.f32 0.0, %v624
  %v626 = vpop.f32.mrf.mxu0
  %627 = vmatprep.mubr.bf16.mxu0 0
  %628 = vmatmul.mubr.bf16.gmra.mxu0 %v371
  %v629 = vpop.f32.mrf.mxu0
  %v630 = vadd.f32 0.0, %v629
  %v631 = vpop.f32.mrf.mxu0
  %v632 = vpop.f32.mrf.mxu0
  %v633 = vadd.f32 0.0, %v632
  %v634 = vpop.f32.mrf.mxu0
  %635 = vmatprep.mubr.bf16.mxu0 0
  %636 = vmatmul.mubr.bf16.gmra.mxu0 %v372
  %v637 = vpop.f32.mrf.mxu0
  %v638 = vadd.f32 0.0, %v637
  %v639 = vpop.f32.mrf.mxu0
  %v640 = vpop.f32.mrf.mxu0
  %v641 = vadd.f32 0.0, %v640
  %v642 = vpop.f32.mrf.mxu0
  %643 = vmatprep.mubr.bf16.mxu0 0
  %644 = vmatmul.mubr.bf16.gmra.mxu0 %v373
  %v645 = vpop.f32.mrf.mxu0
  %v646 = vadd.f32 0.0, %v645
  %v647 = vpop.f32.mrf.mxu0
  %v648 = vpop.f32.mrf.mxu0
  %v649 = vadd.f32 0.0, %v648
  %v650 = vpop.f32.mrf.mxu0
  %651 = vmatprep.mubr.bf16.mxu0 0
  %652 = vmatmul.mubr.bf16.gmra.mxu0 %v374
  %v653 = vpop.f32.mrf.mxu0
  %v654 = vadd.f32 0.0, %v653
  %v655 = vpop.f32.mrf.mxu0
  %v656 = vpop.f32.mrf.mxu0
  %v657 = vadd.f32 0.0, %v656
  %v658 = vpop.f32.mrf.mxu0
  %659 = vmatprep.mubr.bf16.mxu0 0
  %660 = vmatmul.mubr.bf16.gmra.mxu0 %v375
  %v661 = vpop.f32.mrf.mxu0
  %v662 = vadd.f32 0.0, %v661
  %v663 = vpop.f32.mrf.mxu0
  %v664 = vpop.f32.mrf.mxu0
  %v665 = vadd.f32 0.0, %v664
  %v666 = vpop.f32.mrf.mxu0
  %667 = vmatprep.mubr.bf16.mxu0 0
  %668 = vmatmul.mubr.bf16.gmra.mxu0 %v376
  %v669 = vpop.f32.mrf.mxu0
  %v670 = vadd.f32 0.0, %v669
  %v671 = vpop.f32.mrf.mxu0
  %v672 = vpop.f32.mrf.mxu0
  %v673 = vadd.f32 0.0, %v672
  %v674 = vpop.f32.mrf.mxu0
  %675 = vmatprep.mubr.bf16.mxu0 0
  %676 = vmatmul.mubr.bf16.gmra.mxu0 %v377
  %v677 = vpop.f32.mrf.mxu0
  %v678 = vadd.f32 0.0, %v677
  %v679 = vpop.f32.mrf.mxu0
  %v680 = vpop.f32.mrf.mxu0
  %v681 = vadd.f32 0.0, %v680
  %v682 = vpop.f32.mrf.mxu0
  %683 = vmatprep.mubr.bf16.mxu0 0
  %684 = vmatmul.mubr.bf16.gmra.mxu0 %v378
  %v685 = vpop.f32.mrf.mxu0
  %v686 = vadd.f32 0.0, %v685
  %v687 = vpop.f32.mrf.mxu0
  %v688 = vpop.f32.mrf.mxu0
  %v689 = vadd.f32 0.0, %v688
  %v690 = vpop.f32.mrf.mxu0
  %691 = vmatprep.mubr.bf16.mxu0 0
  %692 = vmatmul.mubr.bf16.gmra.mxu0 %v379
  %v693 = vpop.f32.mrf.mxu0
  %v694 = vadd.f32 0.0, %v693
  %v695 = vpop.f32.mrf.mxu0
  %v696 = vpop.f32.mrf.mxu0
  %v697 = vadd.f32 0.0, %v696
  %v698 = vpop.f32.mrf.mxu0
  %699 = vmatprep.mubr.bf16.mxu0 0
  %700 = vmatmul.mubr.bf16.gmra.mxu0 %v380
  %v701 = vpop.f32.mrf.mxu0
  %v702 = vadd.f32 0.0, %v701
  %v703 = vpop.f32.mrf.mxu0
  %v704 = vpop.f32.mrf.mxu0
  %v705 = vadd.f32 0.0, %v704
  %v706 = vpop.f32.mrf.mxu0
  %707 = vmatprep.mubr.bf16.mxu0 0
  %708 = vmatmul.mubr.bf16.gmra.mxu0 %v381
  %v709 = vpop.f32.mrf.mxu0
  %v710 = vadd.f32 0.0, %v709
  %v711 = vpop.f32.mrf.mxu0
  %v712 = vpop.f32.mrf.mxu0
  %v713 = vadd.f32 0.0, %v712
  %v714 = vpop.f32.mrf.mxu0
  %715 = vmatprep.mubr.bf16.mxu0 0
  %716 = vmatmul.mubr.bf16.gmra.mxu0 %v382
  %v717 = vpop.f32.mrf.mxu0
  %v718 = vadd.f32 0.0, %v717
  %v719 = vpop.f32.mrf.mxu0
  %v720 = vpop.f32.mrf.mxu0
  %v721 = vadd.f32 0.0, %v720
  %v722 = vpop.f32.mrf.mxu0
  %723 = vmatprep.mubr.bf16.mxu0 0
  %724 = vmatmul.mubr.bf16.gmra.mxu0 %v383
  %v725 = vpop.f32.mrf.mxu0
  %v726 = vadd.f32 0.0, %v725
  %v727 = vpop.f32.mrf.mxu0
  %v728 = vpop.f32.mrf.mxu0
  %v729 = vadd.f32 0.0, %v728
  %v730 = vpop.f32.mrf.mxu0
  %731 = vmatprep.mubr.bf16.mxu0 0
  %732 = vmatmul.mubr.bf16.gmra.mxu0 %v384
  %v733 = vpop.f32.mrf.mxu0
  %v734 = vadd.f32 0.0, %v733
  %v735 = vpop.f32.mrf.mxu0
  %v736 = vpop.f32.mrf.mxu0
  %v737 = vadd.f32 0.0, %v736
  %v738 = vpop.f32.mrf.mxu0
  %739 = vmatprep.mubr.bf16.mxu0 0
  %740 = vmatmul.mubr.bf16.gmra.mxu0 %v385
  %v741 = vpop.f32.mrf.mxu0
  %v742 = vadd.f32 0.0, %v741
  %v743 = vpop.f32.mrf.mxu0
  %v744 = vpop.f32.mrf.mxu0
  %v745 = vadd.f32 0.0, %v744
  %v746 = vpop.f32.mrf.mxu0
  %747 = vmatprep.mubr.bf16.mxu0 0
  %748 = vmatmul.mubr.bf16.gmra.mxu0 %v386
  %v749 = vpop.f32.mrf.mxu0
  %v750 = vadd.f32 0.0, %v749
  %v751 = vpop.f32.mrf.mxu0
  %v752 = vpop.f32.mrf.mxu0
  %v753 = vadd.f32 0.0, %v752
  %v754 = vpop.f32.mrf.mxu0
  %755 = vdwg.mxu0
  %v756 = vadd.f32 %v147, %v502
  %v757 = vadd.f32 %v148, %v505
  %v758 = vadd.f32 %v149, %v510
  %v759 = vadd.f32 %v150, %v513
  %v760 = vadd.f32 %v151, %v518
  %v761 = vadd.f32 %v152, %v521
  %v762 = vadd.f32 %v153, %v526
  %v763 = vadd.f32 %v154, %v529
  %v764 = vadd.f32 %v155, %v534
  %v765 = vadd.f32 %v156, %v537
  %v766 = vadd.f32 %v157, %v542
  %v767 = vadd.f32 %v158, %v545
  %v768 = vadd.f32 %v159, %v550
  %v769 = vadd.f32 %v160, %v553
  %v770 = vadd.f32 %v161, %v558
  %v771 = vadd.f32 %v162, %v561
  %v772 = vadd.f32 %v163, %v566
  %v773 = vadd.f32 %v164, %v569
  %v774 = vadd.f32 %v165, %v574
  %v775 = vadd.f32 %v166, %v577
  %v776 = vadd.f32 %v167, %v582
  %v777 = vadd.f32 %v168, %v585
  %v778 = vadd.f32 %v169, %v590
  %v779 = vadd.f32 %v170, %v593
  %v780 = vadd.f32 %v171, %v598
  %v781 = vadd.f32 %v172, %v601
  %v782 = vadd.f32 %v173, %v606
  %v783 = vadd.f32 %v174, %v609
  %v784 = vadd.f32 %v175, %v614
  %v785 = vadd.f32 %v176, %v617
  %v786 = vadd.f32 %v177, %v622
  %v787 = vadd.f32 %v178, %v625
  %v788 = vadd.f32 %v179, %v630
  %v789 = vadd.f32 %v180, %v633
  %v790 = vadd.f32 %v181, %v638
  %v791 = vadd.f32 %v182, %v641
  %v792 = vadd.f32 %v183, %v646
  %v793 = vadd.f32 %v184, %v649
  %v794 = vadd.f32 %v185, %v654
  %v795 = vadd.f32 %v186, %v657
  %v796 = vadd.f32 %v187, %v662
  %v797 = vadd.f32 %v188, %v665
  %v798 = vadd.f32 %v189, %v670
  %v799 = vadd.f32 %v190, %v673
  %v800 = vadd.f32 %v191, %v678
  %v801 = vadd.f32 %v192, %v681
  %v802 = vadd.f32 %v193, %v686
  %v803 = vadd.f32 %v194, %v689
  %v804 = vadd.f32 %v195, %v694
  %v805 = vadd.f32 %v196, %v697
  %v806 = vadd.f32 %v197, %v702
  %v807 = vadd.f32 %v198, %v705
  %v808 = vadd.f32 %v199, %v710
  %v809 = vadd.f32 %v200, %v713
  %v810 = vadd.f32 %v201, %v718
  %v811 = vadd.f32 %v202, %v721
  %v812 = vadd.f32 %v203, %v726
  %v813 = vadd.f32 %v204, %v729
  %v814 = vadd.f32 %v205, %v734
  %v815 = vadd.f32 %v206, %v737
  %v816 = vadd.f32 %v207, %v742
  %v817 = vadd.f32 %v208, %v745
  %v818 = vadd.f32 %v209, %v750
  %v819 = vadd.f32 %v210, %v753
  %820 = vst [vmem:[#allocation2] sm:$0xff] %v756
  %821 = vst [vmem:[#allocation2 + $0x8] sm:$0xff] %v757
  %822 = vst [vmem:[#allocation2 + $0x10] sm:$0xff] %v758
  %823 = vst [vmem:[#allocation2 + $0x18] sm:$0xff] %v759
  %824 = vst [vmem:[#allocation2 + $0x20] sm:$0xff] %v760
  %825 = vst [vmem:[#allocation2 + $0x28] sm:$0xff] %v761
  %826 = vst [vmem:[#allocation2 + $0x30] sm:$0xff] %v762
  %827 = vst [vmem:[#allocation2 + $0x38] sm:$0xff] %v763
  %828 = vst [vmem:[#allocation2 + $0x40] sm:$0xff] %v764
  %829 = vst [vmem:[#allocation2 + $0x48] sm:$0xff] %v765
  %830 = vst [vmem:[#allocation2 + $0x50] sm:$0xff] %v766
  %831 = vst [vmem:[#allocation2 + $0x58] sm:$0xff] %v767
  %832 = vst [vmem:[#allocation2 + $0x60] sm:$0xff] %v768
  %833 = vst [vmem:[#allocation2 + $0x68] sm:$0xff] %v769
  %834 = vst [vmem:[#allocation2 + $0x70] sm:$0xff] %v770
  %835 = vst [vmem:[#allocation2 + $0x78] sm:$0xff] %v771
  %836 = vst [vmem:[#allocation2 + $0x80] sm:$0xff] %v772
  %837 = vst [vmem:[#allocation2 + $0x88] sm:$0xff] %v773
  %838 = vst [vmem:[#allocation2 + $0x90] sm:$0xff] %v774
  %839 = vst [vmem:[#allocation2 + $0x98] sm:$0xff] %v775
  %840 = vst [vmem:[#allocation2 + $0xa0] sm:$0xff] %v776
  %841 = vst [vmem:[#allocation2 + $0xa8] sm:$0xff] %v777
  %842 = vst [vmem:[#allocation2 + $0xb0] sm:$0xff] %v778
  %843 = vst [vmem:[#allocation2 + $0xb8] sm:$0xff] %v779
  %844 = vst [vmem:[#allocation2 + $0xc0] sm:$0xff] %v780
  %845 = vst [vmem:[#allocation2 + $0xc8] sm:$0xff] %v781
  %846 = vst [vmem:[#allocation2 + $0xd0] sm:$0xff] %v782
  %847 = vst [vmem:[#allocation2 + $0xd8] sm:$0xff] %v783
  %848 = vst [vmem:[#allocation2 + $0xe0] sm:$0xff] %v784
  %849 = vst [vmem:[#allocation2 + $0xe8] sm:$0xff] %v785
  %850 = vst [vmem:[#allocation2 + $0xf0] sm:$0xff] %v786
  %851 = vst [vmem:[#allocation2 + $0xf8] sm:$0xff] %v787
  %852 = vst [vmem:[#allocation2 + $0x100] sm:$0xff] %v788
  %853 = vst [vmem:[#allocation2 + $0x108] sm:$0xff] %v789
  %854 = vst [vmem:[#allocation2 + $0x110] sm:$0xff] %v790
  %855 = vst [vmem:[#allocation2 + $0x118] sm:$0xff] %v791
  %856 = vst [vmem:[#allocation2 + $0x120] sm:$0xff] %v792
  %857 = vst [vmem:[#allocation2 + $0x128] sm:$0xff] %v793
  %858 = vst [vmem:[#allocation2 + $0x130] sm:$0xff] %v794
  %859 = vst [vmem:[#allocation2 + $0x138] sm:$0xff] %v795
  %860 = vst [vmem:[#allocation2 + $0x140] sm:$0xff] %v796
  %861 = vst [vmem:[#allocation2 + $0x148] sm:$0xff] %v797
  %862 = vst [vmem:[#allocation2 + $0x150] sm:$0xff] %v798
  %863 = vst [vmem:[#allocation2 + $0x158] sm:$0xff] %v799
  %864 = vst [vmem:[#allocation2 + $0x160] sm:$0xff] %v800
  %865 = vst [vmem:[#allocation2 + $0x168] sm:$0xff] %v801
  %866 = vst [vmem:[#allocation2 + $0x170] sm:$0xff] %v802
  %867 = vst [vmem:[#allocation2 + $0x178] sm:$0xff] %v803
  %868 = vst [vmem:[#allocation2 + $0x180] sm:$0xff] %v804
  %869 = vst [vmem:[#allocation2 + $0x188] sm:$0xff] %v805
  %870 = vst [vmem:[#allocation2 + $0x190] sm:$0xff] %v806
  %871 = vst [vmem:[#allocation2 + $0x198] sm:$0xff] %v807
  %872 = vst [vmem:[#allocation2 + $0x1a0] sm:$0xff] %v808
  %873 = vst [vmem:[#allocation2 + $0x1a8] sm:$0xff] %v809
  %874 = vst [vmem:[#allocation2 + $0x1b0] sm:$0xff] %v810
  %875 = vst [vmem:[#allocation2 + $0x1b8] sm:$0xff] %v811
  %876 = vst [vmem:[#allocation2 + $0x1c0] sm:$0xff] %v812
  %877 = vst [vmem:[#allocation2 + $0x1c8] sm:$0xff] %v813
  %878 = vst [vmem:[#allocation2 + $0x1d0] sm:$0xff] %v814
  %879 = vst [vmem:[#allocation2 + $0x1d8] sm:$0xff] %v815
  %880 = vst [vmem:[#allocation2 + $0x1e0] sm:$0xff] %v816
  %881 = vst [vmem:[#allocation2 + $0x1e8] sm:$0xff] %v817
  %882 = vst [vmem:[#allocation2 + $0x1f0] sm:$0xff] %v818
  %883 = vst [vmem:[#allocation2 + $0x1f8] sm:$0xff] %v819
  // Predicated region
  $region18: #{_lambda_.19} parent=0 // pred_check
    %p884 = pneg %p15
  $region19: #{_lambda_.19} parent=0 // pred_check_branch
    %886 = sbr.rel (%p884) target = $region21
  $region20: #{_lambda_.19} parent=0 // pred_region
    %v887 = vld [vmem:[#allocation2] sm:$0xff]
    %v888 = vld [vmem:[#allocation2 + $0x8] sm:$0xff]
    %v889 = vld [vmem:[#allocation2 + $0x10] sm:$0xff]
    %v890 = vld [vmem:[#allocation2 + $0x18] sm:$0xff]
    %v891 = vld [vmem:[#allocation2 + $0x20] sm:$0xff]
    %v892 = vld [vmem:[#allocation2 + $0x28] sm:$0xff]
    %v893 = vld [vmem:[#allocation2 + $0x30] sm:$0xff]
    %v894 = vld [vmem:[#allocation2 + $0x38] sm:$0xff]
    %v895 = vld [vmem:[#allocation2 + $0x40] sm:$0xff]
    %v896 = vld [vmem:[#allocation2 + $0x48] sm:$0xff]
    %v897 = vld [vmem:[#allocation2 + $0x50] sm:$0xff]
    %v898 = vld [vmem:[#allocation2 + $0x58] sm:$0xff]
    %v899 = vld [vmem:[#allocation2 + $0x60] sm:$0xff]
    %v900 = vld [vmem:[#allocation2 + $0x68] sm:$0xff]
    %v901 = vld [vmem:[#allocation2 + $0x70] sm:$0xff]
    %v902 = vld [vmem:[#allocation2 + $0x78] sm:$0xff]
    %v903 = vld [vmem:[#allocation2 + $0x80] sm:$0xff]
    %v904 = vld [vmem:[#allocation2 + $0x88] sm:$0xff]
    %v905 = vld [vmem:[#allocation2 + $0x90] sm:$0xff]
    %v906 = vld [vmem:[#allocation2 + $0x98] sm:$0xff]
    %v907 = vld [vmem:[#allocation2 + $0xa0] sm:$0xff]
    %v908 = vld [vmem:[#allocation2 + $0xa8] sm:$0xff]
    %v909 = vld [vmem:[#allocation2 + $0xb0] sm:$0xff]
    %v910 = vld [vmem:[#allocation2 + $0xb8] sm:$0xff]
    %v911 = vld [vmem:[#allocation2 + $0xc0] sm:$0xff]
    %v912 = vld [vmem:[#allocation2 + $0xc8] sm:$0xff]
    %v913 = vld [vmem:[#allocation2 + $0xd0] sm:$0xff]
    %v914 = vld [vmem:[#allocation2 + $0xd8] sm:$0xff]
    %v915 = vld [vmem:[#allocation2 + $0xe0] sm:$0xff]
    %v916 = vld [vmem:[#allocation2 + $0xe8] sm:$0xff]
    %v917 = vld [vmem:[#allocation2 + $0xf0] sm:$0xff]
    %v918 = vld [vmem:[#allocation2 + $0xf8] sm:$0xff]
    %v919 = vld [vmem:[#allocation2 + $0x100] sm:$0xff]
    %v920 = vld [vmem:[#allocation2 + $0x108] sm:$0xff]
    %v921 = vld [vmem:[#allocation2 + $0x110] sm:$0xff]
    %v922 = vld [vmem:[#allocation2 + $0x118] sm:$0xff]
    %v923 = vld [vmem:[#allocation2 + $0x120] sm:$0xff]
    %v924 = vld [vmem:[#allocation2 + $0x128] sm:$0xff]
    %v925 = vld [vmem:[#allocation2 + $0x130] sm:$0xff]
    %v926 = vld [vmem:[#allocation2 + $0x138] sm:$0xff]
    %v927 = vld [vmem:[#allocation2 + $0x140] sm:$0xff]
    %v928 = vld [vmem:[#allocation2 + $0x148] sm:$0xff]
    %v929 = vld [vmem:[#allocation2 + $0x150] sm:$0xff]
    %v930 = vld [vmem:[#allocation2 + $0x158] sm:$0xff]
    %v931 = vld [vmem:[#allocation2 + $0x160] sm:$0xff]
    %v932 = vld [vmem:[#allocation2 + $0x168] sm:$0xff]
    %v933 = vld [vmem:[#allocation2 + $0x170] sm:$0xff]
    %v934 = vld [vmem:[#allocation2 + $0x178] sm:$0xff]
    %v935 = vld [vmem:[#allocation2 + $0x180] sm:$0xff]
    %v936 = vld [vmem:[#allocation2 + $0x188] sm:$0xff]
    %v937 = vld [vmem:[#allocation2 + $0x190] sm:$0xff]
    %v938 = vld [vmem:[#allocation2 + $0x198] sm:$0xff]
    %v939 = vld [vmem:[#allocation2 + $0x1a0] sm:$0xff]
    %v940 = vld [vmem:[#allocation2 + $0x1a8] sm:$0xff]
    %v941 = vld [vmem:[#allocation2 + $0x1b0] sm:$0xff]
    %v942 = vld [vmem:[#allocation2 + $0x1b8] sm:$0xff]
    %v943 = vld [vmem:[#allocation2 + $0x1c0] sm:$0xff]
    %v944 = vld [vmem:[#allocation2 + $0x1c8] sm:$0xff]
    %v945 = vld [vmem:[#allocation2 + $0x1d0] sm:$0xff]
    %v946 = vld [vmem:[#allocation2 + $0x1d8] sm:$0xff]
    %v947 = vld [vmem:[#allocation2 + $0x1e0] sm:$0xff]
    %v948 = vld [vmem:[#allocation2 + $0x1e8] sm:$0xff]
    %v949 = vld [vmem:[#allocation2 + $0x1f0] sm:$0xff]
    %v950 = vld [vmem:[#allocation2 + $0x1f8] sm:$0xff]
    %v951 = vld [vmem:[%s2] sm:$0x1]
    %v953 = vlaneseq
    %v954 = vshrl.u32 %v953, 7
    %v955 = vsub.s32 0, %v954
    %v956 = vrot.slane %v951, %v955
    %v958 = vadd.f32 %v887, %v956
    %v959 = vadd.f32 %v888, %v956
    %v960 = vadd.f32 %v889, %v956
    %v961 = vadd.f32 %v890, %v956
    %v962 = vadd.f32 %v891, %v956
    %v963 = vadd.f32 %v892, %v956
    %v964 = vadd.f32 %v893, %v956
    %v965 = vadd.f32 %v894, %v956
    %v966 = vadd.f32 %v895, %v956
    %v967 = vadd.f32 %v896, %v956
    %v968 = vadd.f32 %v897, %v956
    %v969 = vadd.f32 %v898, %v956
    %v970 = vadd.f32 %v899, %v956
    %v971 = vadd.f32 %v900, %v956
    %v972 = vadd.f32 %v901, %v956
    %v973 = vadd.f32 %v902, %v956
    %v974 = vadd.f32 %v903, %v956
    %v975 = vadd.f32 %v904, %v956
    %v976 = vadd.f32 %v905, %v956
    %v977 = vadd.f32 %v906, %v956
    %v978 = vadd.f32 %v907, %v956
    %v979 = vadd.f32 %v908, %v956
    %v980 = vadd.f32 %v909, %v956
    %v981 = vadd.f32 %v910, %v956
    %v982 = vadd.f32 %v911, %v956
    %v983 = vadd.f32 %v912, %v956
    %v984 = vadd.f32 %v913, %v956
    %v985 = vadd.f32 %v914, %v956
    %v986 = vadd.f32 %v915, %v956
    %v987 = vadd.f32 %v916, %v956
    %v988 = vadd.f32 %v917, %v956
    %v989 = vadd.f32 %v918, %v956
    %v990 = vadd.f32 %v919, %v956
    %v991 = vadd.f32 %v920, %v956
    %v992 = vadd.f32 %v921, %v956
    %v993 = vadd.f32 %v922, %v956
    %v994 = vadd.f32 %v923, %v956
    %v995 = vadd.f32 %v924, %v956
    %v996 = vadd.f32 %v925, %v956
    %v997 = vadd.f32 %v926, %v956
    %v998 = vadd.f32 %v927, %v956
    %v999 = vadd.f32 %v928, %v956
    %v1000 = vadd.f32 %v929, %v956
    %v1001 = vadd.f32 %v930, %v956
    %v1002 = vadd.f32 %v931, %v956
    %v1003 = vadd.f32 %v932, %v956
    %v1004 = vadd.f32 %v933, %v956
    %v1005 = vadd.f32 %v934, %v956
    %v1006 = vadd.f32 %v935, %v956
    %v1007 = vadd.f32 %v936, %v956
    %v1008 = vadd.f32 %v937, %v956
    %v1009 = vadd.f32 %v938, %v956
    %v1010 = vadd.f32 %v939, %v956
    %v1011 = vadd.f32 %v940, %v956
    %v1012 = vadd.f32 %v941, %v956
    %v1013 = vadd.f32 %v942, %v956
    %v1014 = vadd.f32 %v943, %v956
    %v1015 = vadd.f32 %v944, %v956
    %v1016 = vadd.f32 %v945, %v956
    %v1017 = vadd.f32 %v946, %v956
    %v1018 = vadd.f32 %v947, %v956
    %v1019 = vadd.f32 %v948, %v956
    %v1020 = vadd.f32 %v949, %v956
    %v1021 = vadd.f32 %v950, %v956
    %v1022 = vpack.c.bf16 %v959, %v958
    %v1023 = vpack.c.bf16 %v961, %v960
    %v1024 = vpack.c.bf16 %v963, %v962
    %v1025 = vpack.c.bf16 %v965, %v964
    %v1026 = vpack.c.bf16 %v967, %v966
    %v1027 = vpack.c.bf16 %v969, %v968
    %v1028 = vpack.c.bf16 %v971, %v970
    %v1029 = vpack.c.bf16 %v973, %v972
    %v1030 = vpack.c.bf16 %v975, %v974
    %v1031 = vpack.c.bf16 %v977, %v976
    %v1032 = vpack.c.bf16 %v979, %v978
    %v1033 = vpack.c.bf16 %v981, %v980
    %v1034 = vpack.c.bf16 %v983, %v982
    %v1035 = vpack.c.bf16 %v985, %v984
    %v1036 = vpack.c.bf16 %v987, %v986
    %v1037 = vpack.c.bf16 %v989, %v988
    %v1038 = vpack.c.bf16 %v991, %v990
    %v1039 = vpack.c.bf16 %v993, %v992
    %v1040 = vpack.c.bf16 %v995, %v994
    %v1041 = vpack.c.bf16 %v997, %v996
    %v1042 = vpack.c.bf16 %v999, %v998
    %v1043 = vpack.c.bf16 %v1001, %v1000
    %v1044 = vpack.c.bf16 %v1003, %v1002
    %v1045 = vpack.c.bf16 %v1005, %v1004
    %v1046 = vpack.c.bf16 %v1007, %v1006
    %v1047 = vpack.c.bf16 %v1009, %v1008
    %v1048 = vpack.c.bf16 %v1011, %v1010
    %v1049 = vpack.c.bf16 %v1013, %v1012
    %v1050 = vpack.c.bf16 %v1015, %v1014
    %v1051 = vpack.c.bf16 %v1017, %v1016
    %v1052 = vpack.c.bf16 %v1019, %v1018
    %v1053 = vpack.c.bf16 %v1021, %v1020
    %v1086 = vunpack.c.l.b16 %v1022
    %v1087 = vunpack.c.h.b16 %v1022
    %v1088 = vunpack.c.l.b16 %v1023
    %v1089 = vunpack.c.h.b16 %v1023
    %v1090 = vunpack.c.l.b16 %v1024
    %v1091 = vunpack.c.h.b16 %v1024
    %v1092 = vunpack.c.l.b16 %v1025
    %v1093 = vunpack.c.h.b16 %v1025
    %v1094 = vunpack.c.l.b16 %v1026
    %v1095 = vunpack.c.h.b16 %v1026
    %v1096 = vunpack.c.l.b16 %v1027
    %v1097 = vunpack.c.h.b16 %v1027
    %v1098 = vunpack.c.l.b16 %v1028
    %v1099 = vunpack.c.h.b16 %v1028
    %v1100 = vunpack.c.l.b16 %v1029
    %v1101 = vunpack.c.h.b16 %v1029
    %v1102 = vunpack.c.l.b16 %v1030
    %v1103 = vunpack.c.h.b16 %v1030
    %v1104 = vunpack.c.l.b16 %v1031
    %v1105 = vunpack.c.h.b16 %v1031
    %v1106 = vunpack.c.l.b16 %v1032
    %v1107 = vunpack.c.h.b16 %v1032
    %v1108 = vunpack.c.l.b16 %v1033
    %v1109 = vunpack.c.h.b16 %v1033
    %v1110 = vunpack.c.l.b16 %v1034
    %v1111 = vunpack.c.h.b16 %v1034
    %v1112 = vunpack.c.l.b16 %v1035
    %v1113 = vunpack.c.h.b16 %v1035
    %v1114 = vunpack.c.l.b16 %v1036
    %v1115 = vunpack.c.h.b16 %v1036
    %v1116 = vunpack.c.l.b16 %v1037
    %v1117 = vunpack.c.h.b16 %v1037
    %v1118 = vunpack.c.l.b16 %v1038
    %v1119 = vunpack.c.h.b16 %v1038
    %v1120 = vunpack.c.l.b16 %v1039
    %v1121 = vunpack.c.h.b16 %v1039
    %v1122 = vunpack.c.l.b16 %v1040
    %v1123 = vunpack.c.h.b16 %v1040
    %v1124 = vunpack.c.l.b16 %v1041
    %v1125 = vunpack.c.h.b16 %v1041
    %v1126 = vunpack.c.l.b16 %v1042
    %v1127 = vunpack.c.h.b16 %v1042
    %v1128 = vunpack.c.l.b16 %v1043
    %v1129 = vunpack.c.h.b16 %v1043
    %v1130 = vunpack.c.l.b16 %v1044
    %v1131 = vunpack.c.h.b16 %v1044
    %v1132 = vunpack.c.l.b16 %v1045
    %v1133 = vunpack.c.h.b16 %v1045
    %v1134 = vunpack.c.l.b16 %v1046
    %v1135 = vunpack.c.h.b16 %v1046
    %v1136 = vunpack.c.l.b16 %v1047
    %v1137 = vunpack.c.h.b16 %v1047
    %v1138 = vunpack.c.l.b16 %v1048
    %v1139 = vunpack.c.h.b16 %v1048
    %v1140 = vunpack.c.l.b16 %v1049
    %v1141 = vunpack.c.h.b16 %v1049
    %v1142 = vunpack.c.l.b16 %v1050
    %v1143 = vunpack.c.h.b16 %v1050
    %v1144 = vunpack.c.l.b16 %v1051
    %v1145 = vunpack.c.h.b16 %v1051
    %v1146 = vunpack.c.l.b16 %v1052
    %v1147 = vunpack.c.h.b16 %v1052
    %v1148 = vunpack.c.l.b16 %v1053
    %v1149 = vunpack.c.h.b16 %v1053
    %v1150 = vpack.c.b16 %v1086, %v1086
    %v1151 = vpack.c.b16 %v1087, %v1087
    %v1152 = vpack.c.b16 %v1088, %v1088
    %v1153 = vpack.c.b16 %v1089, %v1089
    %v1154 = vpack.c.b16 %v1090, %v1090
    %v1155 = vpack.c.b16 %v1091, %v1091
    %v1156 = vpack.c.b16 %v1092, %v1092
    %v1157 = vpack.c.b16 %v1093, %v1093
    %v1158 = vpack.c.b16 %v1094, %v1094
    %v1159 = vpack.c.b16 %v1095, %v1095
    %v1160 = vpack.c.b16 %v1096, %v1096
    %v1161 = vpack.c.b16 %v1097, %v1097
    %v1162 = vpack.c.b16 %v1098, %v1098
    %v1163 = vpack.c.b16 %v1099, %v1099
    %v1164 = vpack.c.b16 %v1100, %v1100
    %v1165 = vpack.c.b16 %v1101, %v1101
    %v1166 = vpack.c.b16 %v1102, %v1102
    %v1167 = vpack.c.b16 %v1103, %v1103
    %v1168 = vpack.c.b16 %v1104, %v1104
    %v1169 = vpack.c.b16 %v1105, %v1105
    %v1170 = vpack.c.b16 %v1106, %v1106
    %v1171 = vpack.c.b16 %v1107, %v1107
    %v1172 = vpack.c.b16 %v1108, %v1108
    %v1173 = vpack.c.b16 %v1109, %v1109
    %v1174 = vpack.c.b16 %v1110, %v1110
    %v1175 = vpack.c.b16 %v1111, %v1111
    %v1176 = vpack.c.b16 %v1112, %v1112
    %v1177 = vpack.c.b16 %v1113, %v1113
    %v1178 = vpack.c.b16 %v1114, %v1114
    %v1179 = vpack.c.b16 %v1115, %v1115
    %v1180 = vpack.c.b16 %v1116, %v1116
    %v1181 = vpack.c.b16 %v1117, %v1117
    %v1182 = vpack.c.b16 %v1118, %v1118
    %v1183 = vpack.c.b16 %v1119, %v1119
    %v1184 = vpack.c.b16 %v1120, %v1120
    %v1185 = vpack.c.b16 %v1121, %v1121
    %v1186 = vpack.c.b16 %v1122, %v1122
    %v1187 = vpack.c.b16 %v1123, %v1123
    %v1188 = vpack.c.b16 %v1124, %v1124
    %v1189 = vpack.c.b16 %v1125, %v1125
    %v1190 = vpack.c.b16 %v1126, %v1126
    %v1191 = vpack.c.b16 %v1127, %v1127
    %v1192 = vpack.c.b16 %v1128, %v1128
    %v1193 = vpack.c.b16 %v1129, %v1129
    %v1194 = vpack.c.b16 %v1130, %v1130
    %v1195 = vpack.c.b16 %v1131, %v1131
    %v1196 = vpack.c.b16 %v1132, %v1132
    %v1197 = vpack.c.b16 %v1133, %v1133
    %v1198 = vpack.c.b16 %v1134, %v1134
    %v1199 = vpack.c.b16 %v1135, %v1135
    %v1200 = vpack.c.b16 %v1136, %v1136
    %v1201 = vpack.c.b16 %v1137, %v1137
    %v1202 = vpack.c.b16 %v1138, %v1138
    %v1203 = vpack.c.b16 %v1139, %v1139
    %v1204 = vpack.c.b16 %v1140, %v1140
    %v1205 = vpack.c.b16 %v1141, %v1141
    %v1206 = vpack.c.b16 %v1142, %v1142
    %v1207 = vpack.c.b16 %v1143, %v1143
    %v1208 = vpack.c.b16 %v1144, %v1144
    %v1209 = vpack.c.b16 %v1145, %v1145
    %v1210 = vpack.c.b16 %v1146, %v1146
    %v1211 = vpack.c.b16 %v1147, %v1147
    %v1212 = vpack.c.b16 %v1148, %v1148
    %v1213 = vpack.c.b16 %v1149, %v1149
    %1278 = vst [vmem:[%s3] sm:$0xf] %v1150
    %1279 = vst [vmem:[%s3 + $0x4] sm:$0xf] %v1151
    %1280 = vst [vmem:[%s3 + $0x8] sm:$0xf] %v1152
    %1281 = vst [vmem:[%s3 + $0xc] sm:$0xf] %v1153
    %1282 = vst [vmem:[%s3 + $0x10] sm:$0xf] %v1154
    %1283 = vst [vmem:[%s3 + $0x14] sm:$0xf] %v1155
    %1284 = vst [vmem:[%s3 + $0x18] sm:$0xf] %v1156
    %1285 = vst [vmem:[%s3 + $0x1c] sm:$0xf] %v1157
    %1286 = vst [vmem:[%s3 + $0x20] sm:$0xf] %v1158
    %1287 = vst [vmem:[%s3 + $0x24] sm:$0xf] %v1159
    %1288 = vst [vmem:[%s3 + $0x28] sm:$0xf] %v1160
    %1289 = vst [vmem:[%s3 + $0x2c] sm:$0xf] %v1161
    %1290 = vst [vmem:[%s3 + $0x30] sm:$0xf] %v1162
    %1291 = vst [vmem:[%s3 + $0x34] sm:$0xf] %v1163
    %1292 = vst [vmem:[%s3 + $0x38] sm:$0xf] %v1164
    %1293 = vst [vmem:[%s3 + $0x3c] sm:$0xf] %v1165
    %1294 = vst [vmem:[%s3 + $0x40] sm:$0xf] %v1166
    %1295 = vst [vmem:[%s3 + $0x44] sm:$0xf] %v1167
    %1296 = vst [vmem:[%s3 + $0x48] sm:$0xf] %v1168
    %1297 = vst [vmem:[%s3 + $0x4c] sm:$0xf] %v1169
    %1298 = vst [vmem:[%s3 + $0x50] sm:$0xf] %v1170
    %1299 = vst [vmem:[%s3 + $0x54] sm:$0xf] %v1171
    %1300 = vst [vmem:[%s3 + $0x58] sm:$0xf] %v1172
    %1301 = vst [vmem:[%s3 + $0x5c] sm:$0xf] %v1173
    %1302 = vst [vmem:[%s3 + $0x60] sm:$0xf] %v1174
    %1303 = vst [vmem:[%s3 + $0x64] sm:$0xf] %v1175
    %1304 = vst [vmem:[%s3 + $0x68] sm:$0xf] %v1176
    %1305 = vst [vmem:[%s3 + $0x6c] sm:$0xf] %v1177
    %1306 = vst [vmem:[%s3 + $0x70] sm:$0xf] %v1178
    %1307 = vst [vmem:[%s3 + $0x74] sm:$0xf] %v1179
    %1308 = vst [vmem:[%s3 + $0x78] sm:$0xf] %v1180
    %1309 = vst [vmem:[%s3 + $0x7c] sm:$0xf] %v1181
    %1310 = vst [vmem:[%s3 + $0x80] sm:$0xf] %v1182
    %1311 = vst [vmem:[%s3 + $0x84] sm:$0xf] %v1183
    %1312 = vst [vmem:[%s3 + $0x88] sm:$0xf] %v1184
    %1313 = vst [vmem:[%s3 + $0x8c] sm:$0xf] %v1185
    %1314 = vst [vmem:[%s3 + $0x90] sm:$0xf] %v1186
    %1315 = vst [vmem:[%s3 + $0x94] sm:$0xf] %v1187
    %1316 = vst [vmem:[%s3 + $0x98] sm:$0xf] %v1188
    %1317 = vst [vmem:[%s3 + $0x9c] sm:$0xf] %v1189
    %1318 = vst [vmem:[%s3 + $0xa0] sm:$0xf] %v1190
    %1319 = vst [vmem:[%s3 + $0xa4] sm:$0xf] %v1191
    %1320 = vst [vmem:[%s3 + $0xa8] sm:$0xf] %v1192
    %1321 = vst [vmem:[%s3 + $0xac] sm:$0xf] %v1193
    %1322 = vst [vmem:[%s3 + $0xb0] sm:$0xf] %v1194
    %1323 = vst [vmem:[%s3 + $0xb4] sm:$0xf] %v1195
    %1324 = vst [vmem:[%s3 + $0xb8] sm:$0xf] %v1196
    %1325 = vst [vmem:[%s3 + $0xbc] sm:$0xf] %v1197
    %1326 = vst [vmem:[%s3 + $0xc0] sm:$0xf] %v1198
    %1327 = vst [vmem:[%s3 + $0xc4] sm:$0xf] %v1199
    %1328 = vst [vmem:[%s3 + $0xc8] sm:$0xf] %v1200
    %1329 = vst [vmem:[%s3 + $0xcc] sm:$0xf] %v1201
    %1330 = vst [vmem:[%s3 + $0xd0] sm:$0xf] %v1202
    %1331 = vst [vmem:[%s3 + $0xd4] sm:$0xf] %v1203
    %1332 = vst [vmem:[%s3 + $0xd8] sm:$0xf] %v1204
    %1333 = vst [vmem:[%s3 + $0xdc] sm:$0xf] %v1205
    %1334 = vst [vmem:[%s3 + $0xe0] sm:$0xf] %v1206
    %1335 = vst [vmem:[%s3 + $0xe4] sm:$0xf] %v1207
    %1336 = vst [vmem:[%s3 + $0xe8] sm:$0xf] %v1208
    %1337 = vst [vmem:[%s3 + $0xec] sm:$0xf] %v1209
    %1338 = vst [vmem:[%s3 + $0xf0] sm:$0xf] %v1210
    %1339 = vst [vmem:[%s3 + $0xf4] sm:$0xf] %v1211
    %1340 = vst [vmem:[%s3 + $0xf8] sm:$0xf] %v1212
    %1341 = vst [vmem:[%s3 + $0xfc] sm:$0xf] %v1213
  $region21: #{_lambda_.19} parent=0 // pred_fallthru
    _
  // Predicated region
  $region22: #{_lambda_.19} parent=0 // pred_check
    _
  $region23: #{_lambda_.19} parent=0 // pred_check_branch
    %1343 = sbr.rel (0) target = $region25
  $region24: #{_lambda_.19} parent=0 // pred_region
    _
  $region25: #{_lambda_.19} parent=0 // pred_fallthru
    _
  // Predicated region
  $region26: #{_lambda_.19} parent=0 // pred_check
    _
  $region27: #{_lambda_.19} parent=0 // pred_check_branch
    %1345 = sbr.rel (0) target = $region29
  $region28: #{_lambda_.19} parent=0 // pred_region
    _
  $region29: #{_lambda_.19} parent=0 // pred_fallthru
    _

// kernel: _lambda_.20
$region0: #{_lambda_.20}
  #allocation0 [shape = 'u32[]', space=smem, size = 0x4, offset = 0x4, fixed_abs, tag = 'smem constant byte address 0x4 - core index']
  #allocation1 [shape = 'u32[144,128]{1,0:T(1,128)}', space=vmem, size = 0x12000, scoped, tag = 'internal scratch']
  #allocation2 [shape = 'f32[128,128]{1,0:T(8,128)}', space=vmem, size = 0x10000, scoped, tag = 'scratch operand']
  %s0 = inlined_call_operand.vmem [shape: bf16[128,128], index: 0, kind: input, shape index: {}]
  %s1 = inlined_call_operand.vmem [shape: bf16[128,128], index: 1, kind: input, shape index: {}]
  %s2 = inlined_call_operand.vmem [shape: f32[1,128], index: 2, kind: input, shape index: {}]
  %s3 = inlined_call_operand.vmem [shape: bf16[128,128], index: 3, kind: output, shape index: {0}]
  %s4 = inlined_call_operand.vmem [shape: f32[1,2,128], index: 4, kind: output, shape index: {1}]
  %5 = xla_tuple %s3, %s4
  %s6 = sld [smem:[#allocation0]]
  $region38: #{_lambda_.20} parent=0
    _
  %s8 = ssub.s32 1, %s6
  %s9 = scalar_select 0, %s8, %s6
  // Predicated region
  $region2: #{_lambda_.20} parent=0 // pred_check
    _
  $region3: #{_lambda_.20} parent=0 // pred_check_branch
    %11 = sbr.rel (0) target = $region5
  $region4: #{_lambda_.20} parent=0 // pred_region
    _
  $region5: #{_lambda_.20} parent=0 // pred_fallthru
    _
  // Predicated region
  $region6: #{_lambda_.20} parent=0 // pred_check
    _
  $region7: #{_lambda_.20} parent=0 // pred_check_branch
    %13 = sbr.rel (0) target = $region9
  $region8: #{_lambda_.20} parent=0 // pred_region
    _
  $region9: #{_lambda_.20} parent=0 // pred_fallthru
    _
  // Predicated region
  $region10: #{_lambda_.20} parent=0 // pred_check
    _
  $region11: #{_lambda_.20} parent=0 // pred_check_branch
    %15 = sbr.rel (0) target = $region13
  $region12: #{_lambda_.20} parent=0 // pred_region
    _
  $region13: #{_lambda_.20} parent=0 // pred_fallthru
    _
  %p17 = scmp.eq.s32.totalorder 0, 0
  // Predicated region
  $region14: #{_lambda_.20} parent=0 // pred_check
    %p18 = pneg %p17
  $region15: #{_lambda_.20} parent=0 // pred_check_branch
    %20 = sbr.rel (%p18) target = $region17
  $region16: #{_lambda_.20} parent=0 // pred_region
    %21 = vst [vmem:[#allocation2] sm:$0xff] 0.0
    %22 = vst [vmem:[#allocation2 + $0x8] sm:$0xff] 0.0
    %23 = vst [vmem:[#allocation2 + $0x10] sm:$0xff] 0.0
    %24 = vst [vmem:[#allocation2 + $0x18] sm:$0xff] 0.0
    %25 = vst [vmem:[#allocation2 + $0x20] sm:$0xff] 0.0
    %26 = vst [vmem:[#allocation2 + $0x28] sm:$0xff] 0.0
    %27 = vst [vmem:[#allocation2 + $0x30] sm:$0xff] 0.0
    %28 = vst [vmem:[#allocation2 + $0x38] sm:$0xff] 0.0
    %29 = vst [vmem:[#allocation2 + $0x40] sm:$0xff] 0.0
    %30 = vst [vmem:[#allocation2 + $0x48] sm:$0xff] 0.0
    %31 = vst [vmem:[#allocation2 + $0x50] sm:$0xff] 0.0
    %32 = vst [vmem:[#allocation2 + $0x58] sm:$0xff] 0.0
    %33 = vst [vmem:[#allocation2 + $0x60] sm:$0xff] 0.0
    %34 = vst [vmem:[#allocation2 + $0x68] sm:$0xff] 0.0
    %35 = vst [vmem:[#allocation2 + $0x70] sm:$0xff] 0.0
    %36 = vst [vmem:[#allocation2 + $0x78] sm:$0xff] 0.0
  $region17: #{_lambda_.20} parent=0 // pred_fallthru
    _
  %v37 = vld [vmem:[%s0] sm:$0xf]
  %v38 = vld [vmem:[%s0 + $0x4] sm:$0xf]
  %v39 = vld [vmem:[%s0 + $0x8] sm:$0xf]
  %v40 = vld [vmem:[%s0 + $0xc] sm:$0xf]
  %v41 = vld [vmem:[%s0 + $0x10] sm:$0xf]
  %v42 = vld [vmem:[%s0 + $0x14] sm:$0xf]
  %v43 = vld [vmem:[%s0 + $0x18] sm:$0xf]
  %v44 = vld [vmem:[%s0 + $0x1c] sm:$0xf]
  %v45 = vld [vmem:[%s0 + $0x20] sm:$0xf]
  %v46 = vld [vmem:[%s0 + $0x24] sm:$0xf]
  %v47 = vld [vmem:[%s0 + $0x28] sm:$0xf]
  %v48 = vld [vmem:[%s0 + $0x2c] sm:$0xf]
  %v49 = vld [vmem:[%s0 + $0x30] sm:$0xf]
  %v50 = vld [vmem:[%s0 + $0x34] sm:$0xf]
  %v51 = vld [vmem:[%s0 + $0x38] sm:$0xf]
  %v52 = vld [vmem:[%s0 + $0x3c] sm:$0xf]
  %v53 = vunpack.c.l.bf16 %v37
  %v54 = vunpack.c.l.bf16 %v38
  %v55 = vunpack.c.l.bf16 %v39
  %v56 = vunpack.c.l.bf16 %v40
  %v57 = vunpack.c.l.bf16 %v41
  %v58 = vunpack.c.l.bf16 %v42
  %v59 = vunpack.c.l.bf16 %v43
  %v60 = vunpack.c.l.bf16 %v44
  %v61 = vunpack.c.l.bf16 %v45
  %v62 = vunpack.c.l.bf16 %v46
  %v63 = vunpack.c.l.bf16 %v47
  %v64 = vunpack.c.l.bf16 %v48
  %v65 = vunpack.c.l.bf16 %v49
  %v66 = vunpack.c.l.bf16 %v50
  %v67 = vunpack.c.l.bf16 %v51
  %v68 = vunpack.c.l.bf16 %v52
  %vm69 = vcmp.gt.f32.partialorder %v53, 0.0
  %vm70 = vcmp.gt.f32.partialorder %v54, 0.0
  %vm71 = vcmp.gt.f32.partialorder %v55, 0.0
  %vm72 = vcmp.gt.f32.partialorder %v56, 0.0
  %vm73 = vcmp.gt.f32.partialorder %v57, 0.0
  %vm74 = vcmp.gt.f32.partialorder %v58, 0.0
  %vm75 = vcmp.gt.f32.partialorder %v59, 0.0
  %vm76 = vcmp.gt.f32.partialorder %v60, 0.0
  %vm77 = vcmp.gt.f32.partialorder %v61, 0.0
  %vm78 = vcmp.gt.f32.partialorder %v62, 0.0
  %vm79 = vcmp.gt.f32.partialorder %v63, 0.0
  %vm80 = vcmp.gt.f32.partialorder %v64, 0.0
  %vm81 = vcmp.gt.f32.partialorder %v65, 0.0
  %vm82 = vcmp.gt.f32.partialorder %v66, 0.0
  %vm83 = vcmp.gt.f32.partialorder %v67, 0.0
  %vm84 = vcmp.gt.f32.partialorder %v68, 0.0
  %v85 = vmul.f32 %v53, 0.2
  %v86 = vmul.f32 %v54, 0.2
  %v87 = vmul.f32 %v55, 0.2
  %v88 = vmul.f32 %v56, 0.2
  %v89 = vmul.f32 %v57, 0.2
  %v90 = vmul.f32 %v58, 0.2
  %v91 = vmul.f32 %v59, 0.2
  %v92 = vmul.f32 %v60, 0.2
  %v93 = vmul.f32 %v61, 0.2
  %v94 = vmul.f32 %v62, 0.2
  %v95 = vmul.f32 %v63, 0.2
  %v96 = vmul.f32 %v64, 0.2
  %v97 = vmul.f32 %v65, 0.2
  %v98 = vmul.f32 %v66, 0.2
  %v99 = vmul.f32 %v67, 0.2
  %v100 = vmul.f32 %v68, 0.2
  %v101 = vsel %vm69, %v53, %v85
  %v102 = vsel %vm70, %v54, %v86
  %v103 = vsel %vm71, %v55, %v87
  %v104 = vsel %vm72, %v56, %v88
  %v105 = vsel %vm73, %v57, %v89
  %v106 = vsel %vm74, %v58, %v90
  %v107 = vsel %vm75, %v59, %v91
  %v108 = vsel %vm76, %v60, %v92
  %v109 = vsel %vm77, %v61, %v93
  %v110 = vsel %vm78, %v62, %v94
  %v111 = vsel %vm79, %v63, %v95
  %v112 = vsel %vm80, %v64, %v96
  %v113 = vsel %vm81, %v65, %v97
  %v114 = vsel %vm82, %v66, %v98
  %v115 = vsel %vm83, %v67, %v99
  %v116 = vsel %vm84, %v68, %v100
  %v117 = vpack.c.bf16 %v102, %v101
  %v118 = vpack.c.bf16 %v104, %v103
  %v119 = vpack.c.bf16 %v106, %v105
  %v120 = vpack.c.bf16 %v108, %v107
  %v121 = vpack.c.bf16 %v110, %v109
  %v122 = vpack.c.bf16 %v112, %v111
  %v123 = vpack.c.bf16 %v114, %v113
  %v124 = vpack.c.bf16 %v116, %v115
  %v125 = vld [vmem:[#allocation2] sm:$0xff]
  %v126 = vld [vmem:[#allocation2 + $0x8] sm:$0xff]
  %v127 = vld [vmem:[#allocation2 + $0x10] sm:$0xff]
  %v128 = vld [vmem:[#allocation2 + $0x18] sm:$0xff]
  %v129 = vld [vmem:[#allocation2 + $0x20] sm:$0xff]
  %v130 = vld [vmem:[#allocation2 + $0x28] sm:$0xff]
  %v131 = vld [vmem:[#allocation2 + $0x30] sm:$0xff]
  %v132 = vld [vmem:[#allocation2 + $0x38] sm:$0xff]
  %v133 = vld [vmem:[#allocation2 + $0x40] sm:$0xff]
  %v134 = vld [vmem:[#allocation2 + $0x48] sm:$0xff]
  %v135 = vld [vmem:[#allocation2 + $0x50] sm:$0xff]
  %v136 = vld [vmem:[#allocation2 + $0x58] sm:$0xff]
  %v137 = vld [vmem:[#allocation2 + $0x60] sm:$0xff]
  %v138 = vld [vmem:[#allocation2 + $0x68] sm:$0xff]
  %v139 = vld [vmem:[#allocation2 + $0x70] sm:$0xff]
  %v140 = vld [vmem:[#allocation2 + $0x78] sm:$0xff]
  %v141 = vld [vmem:[%s1] sm:$0xf]
  %v142 = vld [vmem:[%s1 + $0x4] sm:$0xf]
  %v143 = vld [vmem:[%s1 + $0x8] sm:$0xf]
  %v144 = vld [vmem:[%s1 + $0xc] sm:$0xf]
  %v145 = vld [vmem:[%s1 + $0x10] sm:$0xf]
  %v146 = vld [vmem:[%s1 + $0x14] sm:$0xf]
  %v147 = vld [vmem:[%s1 + $0x18] sm:$0xf]
  %v148 = vld [vmem:[%s1 + $0x1c] sm:$0xf]
  %v149 = vld [vmem:[%s1 + $0x20] sm:$0xf]
  %v150 = vld [vmem:[%s1 + $0x24] sm:$0xf]
  %v151 = vld [vmem:[%s1 + $0x28] sm:$0xf]
  %v152 = vld [vmem:[%s1 + $0x2c] sm:$0xf]
  %v153 = vld [vmem:[%s1 + $0x30] sm:$0xf]
  %v154 = vld [vmem:[%s1 + $0x34] sm:$0xf]
  %v155 = vld [vmem:[%s1 + $0x38] sm:$0xf]
  %v156 = vld [vmem:[%s1 + $0x3c] sm:$0xf]
  %v173 = vunpack.c.l.b16 %v141
  %v174 = vunpack.c.l.b16 %v142
  %v175 = vunpack.c.l.b16 %v143
  %v176 = vunpack.c.l.b16 %v144
  %v177 = vunpack.c.l.b16 %v145
  %v178 = vunpack.c.l.b16 %v146
  %v179 = vunpack.c.l.b16 %v147
  %v180 = vunpack.c.l.b16 %v148
  %v181 = vunpack.c.l.b16 %v149
  %v182 = vunpack.c.l.b16 %v150
  %v183 = vunpack.c.l.b16 %v151
  %v184 = vunpack.c.l.b16 %v152
  %v185 = vunpack.c.l.b16 %v153
  %v186 = vunpack.c.l.b16 %v154
  %v187 = vunpack.c.l.b16 %v155
  %v188 = vunpack.c.l.b16 %v156
  %v189 = vpack.c.b16 %v174, %v173
  %v190 = vpack.c.b16 %v176, %v175
  %v191 = vpack.c.b16 %v178, %v177
  %v192 = vpack.c.b16 %v180, %v179
  %v193 = vpack.c.b16 %v182, %v181
  %v194 = vpack.c.b16 %v184, %v183
  %v195 = vpack.c.b16 %v186, %v185
  %v196 = vpack.c.b16 %v188, %v187
  %205 = vmatprep.subr.bf16.mxu0 0
  %206 = vmatpush1.bf16.msra.mxu0 %v196
  %207 = vmatprep.subr.bf16.mxu0 0
  %208 = vmatpush1.bf16.msra.mxu0 %v195
  %209 = vmatprep.subr.bf16.mxu0 0
  %210 = vmatpush1.bf16.msra.mxu0 %v194
  %211 = vmatprep.subr.bf16.mxu0 0
  %212 = vmatpush1.bf16.msra.mxu0 %v193
  %213 = vmatprep.subr.bf16.mxu0 0
  %214 = vmatpush1.bf16.msra.mxu0 %v192
  %215 = vmatprep.subr.bf16.mxu0 0
  %216 = vmatpush1.bf16.msra.mxu0 %v191
  %217 = vmatprep.subr.bf16.mxu0 0
  %218 = vmatpush1.bf16.msra.mxu0 %v190
  %219 = vmatprep.subr.bf16.mxu0 0
  %220 = vmatpush1.bf16.msra.mxu0 %v189
  %221 = vmatprep.subr.bf16.mxu0 0
  %222 = vmatpush2.bf16.msra.mxu0 0
  %223 = vmatprep.subr.bf16.mxu0 0
  %224 = vmatpush2.bf16.msra.mxu0 0
  %225 = vmatprep.subr.bf16.mxu0 0
  %226 = vmatpush2.bf16.msra.mxu0 0
  %227 = vmatprep.subr.bf16.mxu0 0
  %228 = vmatpush2.bf16.msra.mxu0 0
  %229 = vmatprep.subr.bf16.mxu0 0
  %230 = vmatpush2.bf16.msra.mxu0 0
  %231 = vmatprep.subr.bf16.mxu0 0
  %232 = vmatpush2.bf16.msra.mxu0 0
  %233 = vmatprep.subr.bf16.mxu0 0
  %234 = vmatpush2.bf16.msra.mxu0 0
  %235 = vmatprep.subr.bf16.mxu0 0
  %236 = vmatpush2.bf16.msra.mxu0 0
  %237 = vmatprep.mubr.bf16.mxu0 0
  %238 = vmatmul.mubr.bf16.gmra.mxu0 %v117
  %v239 = vpop.f32.mrf.mxu0
  %v240 = vadd.f32 0.0, %v239
  %v241 = vpop.f32.mrf.mxu0
  %v242 = vpop.f32.mrf.mxu0
  %v243 = vadd.f32 0.0, %v242
  %v244 = vpop.f32.mrf.mxu0
  %245 = vmatprep.mubr.bf16.mxu0 0
  %246 = vmatmul.mubr.bf16.gmra.mxu0 %v118
  %v247 = vpop.f32.mrf.mxu0
  %v248 = vadd.f32 0.0, %v247
  %v249 = vpop.f32.mrf.mxu0
  %v250 = vpop.f32.mrf.mxu0
  %v251 = vadd.f32 0.0, %v250
  %v252 = vpop.f32.mrf.mxu0
  %253 = vmatprep.mubr.bf16.mxu0 0
  %254 = vmatmul.mubr.bf16.gmra.mxu0 %v119
  %v255 = vpop.f32.mrf.mxu0
  %v256 = vadd.f32 0.0, %v255
  %v257 = vpop.f32.mrf.mxu0
  %v258 = vpop.f32.mrf.mxu0
  %v259 = vadd.f32 0.0, %v258
  %v260 = vpop.f32.mrf.mxu0
  %261 = vmatprep.mubr.bf16.mxu0 0
  %262 = vmatmul.mubr.bf16.gmra.mxu0 %v120
  %v263 = vpop.f32.mrf.mxu0
  %v264 = vadd.f32 0.0, %v263
  %v265 = vpop.f32.mrf.mxu0
  %v266 = vpop.f32.mrf.mxu0
  %v267 = vadd.f32 0.0, %v266
  %v268 = vpop.f32.mrf.mxu0
  %269 = vmatprep.mubr.bf16.mxu0 0
  %270 = vmatmul.mubr.bf16.gmra.mxu0 %v121
  %v271 = vpop.f32.mrf.mxu0
  %v272 = vadd.f32 0.0, %v271
  %v273 = vpop.f32.mrf.mxu0
  %v274 = vpop.f32.mrf.mxu0
  %v275 = vadd.f32 0.0, %v274
  %v276 = vpop.f32.mrf.mxu0
  %277 = vmatprep.mubr.bf16.mxu0 0
  %278 = vmatmul.mubr.bf16.gmra.mxu0 %v122
  %v279 = vpop.f32.mrf.mxu0
  %v280 = vadd.f32 0.0, %v279
  %v281 = vpop.f32.mrf.mxu0
  %v282 = vpop.f32.mrf.mxu0
  %v283 = vadd.f32 0.0, %v282
  %v284 = vpop.f32.mrf.mxu0
  %285 = vmatprep.mubr.bf16.mxu0 0
  %286 = vmatmul.mubr.bf16.gmra.mxu0 %v123
  %v287 = vpop.f32.mrf.mxu0
  %v288 = vadd.f32 0.0, %v287
  %v289 = vpop.f32.mrf.mxu0
  %v290 = vpop.f32.mrf.mxu0
  %v291 = vadd.f32 0.0, %v290
  %v292 = vpop.f32.mrf.mxu0
  %293 = vmatprep.mubr.bf16.mxu0 0
  %294 = vmatmul.mubr.bf16.gmra.mxu0 %v124
  %v295 = vpop.f32.mrf.mxu0
  %v296 = vadd.f32 0.0, %v295
  %v297 = vpop.f32.mrf.mxu0
  %v298 = vpop.f32.mrf.mxu0
  %v299 = vadd.f32 0.0, %v298
  %v300 = vpop.f32.mrf.mxu0
  %301 = vdwg.mxu0
  %v302 = vadd.f32 %v125, %v240
  %v303 = vadd.f32 %v126, %v243
  %v304 = vadd.f32 %v127, %v248
  %v305 = vadd.f32 %v128, %v251
  %v306 = vadd.f32 %v129, %v256
  %v307 = vadd.f32 %v130, %v259
  %v308 = vadd.f32 %v131, %v264
  %v309 = vadd.f32 %v132, %v267
  %v310 = vadd.f32 %v133, %v272
  %v311 = vadd.f32 %v134, %v275
  %v312 = vadd.f32 %v135, %v280
  %v313 = vadd.f32 %v136, %v283
  %v314 = vadd.f32 %v137, %v288
  %v315 = vadd.f32 %v138, %v291
  %v316 = vadd.f32 %v139, %v296
  %v317 = vadd.f32 %v140, %v299
  %318 = vst [vmem:[#allocation2] sm:$0xff] %v302
  %319 = vst [vmem:[#allocation2 + $0x8] sm:$0xff] %v303
  %320 = vst [vmem:[#allocation2 + $0x10] sm:$0xff] %v304
  %321 = vst [vmem:[#allocation2 + $0x18] sm:$0xff] %v305
  %322 = vst [vmem:[#allocation2 + $0x20] sm:$0xff] %v306
  %323 = vst [vmem:[#allocation2 + $0x28] sm:$0xff] %v307
  %324 = vst [vmem:[#allocation2 + $0x30] sm:$0xff] %v308
  %325 = vst [vmem:[#allocation2 + $0x38] sm:$0xff] %v309
  %326 = vst [vmem:[#allocation2 + $0x40] sm:$0xff] %v310
  %327 = vst [vmem:[#allocation2 + $0x48] sm:$0xff] %v311
  %328 = vst [vmem:[#allocation2 + $0x50] sm:$0xff] %v312
  %329 = vst [vmem:[#allocation2 + $0x58] sm:$0xff] %v313
  %330 = vst [vmem:[#allocation2 + $0x60] sm:$0xff] %v314
  %331 = vst [vmem:[#allocation2 + $0x68] sm:$0xff] %v315
  %332 = vst [vmem:[#allocation2 + $0x70] sm:$0xff] %v316
  %333 = vst [vmem:[#allocation2 + $0x78] sm:$0xff] %v317
  // Predicated region
  $region18: #{_lambda_.20} parent=0 // pred_check
    %p334 = pneg %p17
  $region19: #{_lambda_.20} parent=0 // pred_check_branch
    %336 = sbr.rel (%p334) target = $region21
  $region20: #{_lambda_.20} parent=0 // pred_region
    %v337 = vld [vmem:[#allocation2] sm:$0xff]
    %v338 = vld [vmem:[#allocation2 + $0x8] sm:$0xff]
    %v339 = vld [vmem:[#allocation2 + $0x10] sm:$0xff]
    %v340 = vld [vmem:[#allocation2 + $0x18] sm:$0xff]
    %v341 = vld [vmem:[#allocation2 + $0x20] sm:$0xff]
    %v342 = vld [vmem:[#allocation2 + $0x28] sm:$0xff]
    %v343 = vld [vmem:[#allocation2 + $0x30] sm:$0xff]
    %v344 = vld [vmem:[#allocation2 + $0x38] sm:$0xff]
    %v345 = vld [vmem:[#allocation2 + $0x40] sm:$0xff]
    %v346 = vld [vmem:[#allocation2 + $0x48] sm:$0xff]
    %v347 = vld [vmem:[#allocation2 + $0x50] sm:$0xff]
    %v348 = vld [vmem:[#allocation2 + $0x58] sm:$0xff]
    %v349 = vld [vmem:[#allocation2 + $0x60] sm:$0xff]
    %v350 = vld [vmem:[#allocation2 + $0x68] sm:$0xff]
    %v351 = vld [vmem:[#allocation2 + $0x70] sm:$0xff]
    %v352 = vld [vmem:[#allocation2 + $0x78] sm:$0xff]
    %v353 = vld [vmem:[%s2] sm:$0x1]
    %v355 = vlaneseq
    %v356 = vshrl.u32 %v355, 7
    %v357 = vsub.s32 0, %v356
    %v358 = vrot.slane %v353, %v357
    %v360 = vadd.f32 %v337, %v358
    %v361 = vadd.f32 %v338, %v358
    %v362 = vadd.f32 %v339, %v358
    %v363 = vadd.f32 %v340, %v358
    %v364 = vadd.f32 %v341, %v358
    %v365 = vadd.f32 %v342, %v358
    %v366 = vadd.f32 %v343, %v358
    %v367 = vadd.f32 %v344, %v358
    %v368 = vadd.f32 %v345, %v358
    %v369 = vadd.f32 %v346, %v358
    %v370 = vadd.f32 %v347, %v358
    %v371 = vadd.f32 %v348, %v358
    %v372 = vadd.f32 %v349, %v358
    %v373 = vadd.f32 %v350, %v358
    %v374 = vadd.f32 %v351, %v358
    %v375 = vadd.f32 %v352, %v358
    %v376 = vpack.c.bf16 %v361, %v360
    %v377 = vpack.c.bf16 %v363, %v362
    %v378 = vpack.c.bf16 %v365, %v364
    %v379 = vpack.c.bf16 %v367, %v366
    %v380 = vpack.c.bf16 %v369, %v368
    %v381 = vpack.c.bf16 %v371, %v370
    %v382 = vpack.c.bf16 %v373, %v372
    %v383 = vpack.c.bf16 %v375, %v374
    %v392 = vunpack.c.l.b16 %v376
    %v393 = vunpack.c.h.b16 %v376
    %v394 = vunpack.c.l.b16 %v377
    %v395 = vunpack.c.h.b16 %v377
    %v396 = vunpack.c.l.b16 %v378
    %v397 = vunpack.c.h.b16 %v378
    %v398 = vunpack.c.l.b16 %v379
    %v399 = vunpack.c.h.b16 %v379
    %v400 = vunpack.c.l.b16 %v380
    %v401 = vunpack.c.h.b16 %v380
    %v402 = vunpack.c.l.b16 %v381
    %v403 = vunpack.c.h.b16 %v381
    %v404 = vunpack.c.l.b16 %v382
    %v405 = vunpack.c.h.b16 %v382
    %v406 = vunpack.c.l.b16 %v383
    %v407 = vunpack.c.h.b16 %v383
    %v408 = vpack.c.b16 %v392, %v392
    %v409 = vpack.c.b16 %v393, %v393
    %v410 = vpack.c.b16 %v394, %v394
    %v411 = vpack.c.b16 %v395, %v395
    %v412 = vpack.c.b16 %v396, %v396
    %v413 = vpack.c.b16 %v397, %v397
    %v414 = vpack.c.b16 %v398, %v398
    %v415 = vpack.c.b16 %v399, %v399
    %v416 = vpack.c.b16 %v400, %v400
    %v417 = vpack.c.b16 %v401, %v401
    %v418 = vpack.c.b16 %v402, %v402
    %v419 = vpack.c.b16 %v403, %v403
    %v420 = vpack.c.b16 %v404, %v404
    %v421 = vpack.c.b16 %v405, %v405
    %v422 = vpack.c.b16 %v406, %v406
    %v423 = vpack.c.b16 %v407, %v407
    %440 = vst [vmem:[%s3] sm:$0xf] %v408
    %441 = vst [vmem:[%s3 + $0x4] sm:$0xf] %v409
    %442 = vst [vmem:[%s3 + $0x8] sm:$0xf] %v410
    %443 = vst [vmem:[%s3 + $0xc] sm:$0xf] %v411
    %444 = vst [vmem:[%s3 + $0x10] sm:$0xf] %v412
    %445 = vst [vmem:[%s3 + $0x14] sm:$0xf] %v413
    %446 = vst [vmem:[%s3 + $0x18] sm:$0xf] %v414
    %447 = vst [vmem:[%s3 + $0x1c] sm:$0xf] %v415
    %448 = vst [vmem:[%s3 + $0x20] sm:$0xf] %v416
    %449 = vst [vmem:[%s3 + $0x24] sm:$0xf] %v417
    %450 = vst [vmem:[%s3 + $0x28] sm:$0xf] %v418
    %451 = vst [vmem:[%s3 + $0x2c] sm:$0xf] %v419
    %452 = vst [vmem:[%s3 + $0x30] sm:$0xf] %v420
    %453 = vst [vmem:[%s3 + $0x34] sm:$0xf] %v421
    %454 = vst [vmem:[%s3 + $0x38] sm:$0xf] %v422
    %455 = vst [vmem:[%s3 + $0x3c] sm:$0xf] %v423
    %v456 = vadd.f32 %v360, %v361
    %v457 = vadd.f32 %v456, %v362
    %v458 = vadd.f32 %v457, %v363
    %v459 = vadd.f32 %v458, %v364
    %v460 = vadd.f32 %v459, %v365
    %v461 = vadd.f32 %v460, %v366
    %v462 = vadd.f32 %v461, %v367
    %v463 = vadd.f32 %v462, %v368
    %v464 = vadd.f32 %v463, %v369
    %v465 = vadd.f32 %v464, %v370
    %v466 = vadd.f32 %v465, %v371
    %v467 = vadd.f32 %v466, %v372
    %v468 = vadd.f32 %v467, %v373
    %v469 = vadd.f32 %v468, %v374
    %v470 = vadd.f32 %v469, %v375
    %v471 = vrot.slane %v470, 4
    %v472 = vadd.f32 %v470, %v471
    %v473 = vrot.slane %v472, 2
    %v474 = vadd.f32 %v472, %v473
    %v475 = vrot.slane %v474, 1
    %v476 = vadd.f32 %v474, %v475
    %v477 = vmul.f32 %v360, %v360
    %v478 = vmul.f32 %v361, %v361
    %v479 = vmul.f32 %v362, %v362
    %v480 = vmul.f32 %v363, %v363
    %v481 = vmul.f32 %v364, %v364
    %v482 = vmul.f32 %v365, %v365
    %v483 = vmul.f32 %v366, %v366
    %v484 = vmul.f32 %v367, %v367
    %v485 = vmul.f32 %v368, %v368
    %v486 = vmul.f32 %v369, %v369
    %v487 = vmul.f32 %v370, %v370
    %v488 = vmul.f32 %v371, %v371
    %v489 = vmul.f32 %v372, %v372
    %v490 = vmul.f32 %v373, %v373
    %v491 = vmul.f32 %v374, %v374
    %v492 = vmul.f32 %v375, %v375
    %v493 = vadd.f32 %v477, %v478
    %v494 = vadd.f32 %v493, %v479
    %v495 = vadd.f32 %v494, %v480
    %v496 = vadd.f32 %v495, %v481
    %v497 = vadd.f32 %v496, %v482
    %v498 = vadd.f32 %v497, %v483
    %v499 = vadd.f32 %v498, %v484
    %v500 = vadd.f32 %v499, %v485
    %v501 = vadd.f32 %v500, %v486
    %v502 = vadd.f32 %v501, %v487
    %v503 = vadd.f32 %v502, %v488
    %v504 = vadd.f32 %v503, %v489
    %v505 = vadd.f32 %v504, %v490
    %v506 = vadd.f32 %v505, %v491
    %v507 = vadd.f32 %v506, %v492
    %v508 = vrot.slane %v507, 4
    %v509 = vadd.f32 %v507, %v508
    %v510 = vrot.slane %v509, 2
    %v511 = vadd.f32 %v509, %v510
    %v512 = vrot.slane %v511, 1
    %v513 = vadd.f32 %v511, %v512
    %vm514 = vcmask 1040384
    %v515 = vsel %vm514, %v476, %v513
    %516 = vst [vmem:[%s4] sm:$0x3] %v515
  $region21: #{_lambda_.20} parent=0 // pred_fallthru
    _
  // Predicated region
  $region22: #{_lambda_.20} parent=0 // pred_check
    _
  $region23: #{_lambda_.20} parent=0 // pred_check_branch
    %518 = sbr.rel (0) target = $region25
  $region24: #{_lambda_.20} parent=0 // pred_region
    _
  $region25: #{_lambda_.20} parent=0 // pred_fallthru
    _
  // Predicated region
  $region26: #{_lambda_.20} parent=0 // pred_check
    _
  $region27: #{_lambda_.20} parent=0 // pred_check_branch
    %520 = sbr.rel (0) target = $region29
  $region28: #{_lambda_.20} parent=0 // pred_region
    _
  $region29: #{_lambda_.20} parent=0 // pred_fallthru
    _
  // Predicated region
  $region30: #{_lambda_.20} parent=0 // pred_check
    _
  $region31: #{_lambda_.20} parent=0 // pred_check_branch
    %522 = sbr.rel (0) target = $region33
  $region32: #{_lambda_.20} parent=0 // pred_region
    _
  $region33: #{_lambda_.20} parent=0 // pred_fallthru
    _
  // Predicated region
  $region34: #{_lambda_.20} parent=0 // pred_check
    _
  $region35: #{_lambda_.20} parent=0 // pred_check_branch
    %524 = sbr.rel (0) target = $region37
  $region36: #{_lambda_.20} parent=0 // pred_region
    _
  $region37: #{_lambda_.20} parent=0 // pred_fallthru
    _

// kernel: _lambda_.21
$region0: #{_lambda_.21}
  #allocation0 [shape = 'u32[]', space=smem, size = 0x4, offset = 0x4, fixed_abs, tag = 'smem constant byte address 0x4 - core index']
  #allocation1 [shape = 'u32[144,128]{1,0:T(1,128)}', space=vmem, size = 0x12000, scoped, tag = 'internal scratch']
  %s0 = inlined_call_operand.vmem [shape: bf16[128,128], index: 0, kind: input, shape index: {}]
  %s1 = inlined_call_operand.vmem [shape: f32[1,128], index: 1, kind: input, shape index: {}]
  %s2 = inlined_call_operand.vmem [shape: f32[1,128], index: 2, kind: input, shape index: {}]
  %s3 = inlined_call_operand.vmem [shape: bf16[128,128], index: 3, kind: output, shape index: {}]
  %s4 = sld [smem:[#allocation0]]
  $region22: #{_lambda_.21} parent=0
    _
  %s6 = ssub.s32 1, %s4
  %s7 = scalar_select 0, %s6, %s4
  // Predicated region
  $region2: #{_lambda_.21} parent=0 // pred_check
    _
  $region3: #{_lambda_.21} parent=0 // pred_check_branch
    %9 = sbr.rel (0) target = $region5
  $region4: #{_lambda_.21} parent=0 // pred_region
    _
  $region5: #{_lambda_.21} parent=0 // pred_fallthru
    _
  // Predicated region
  $region6: #{_lambda_.21} parent=0 // pred_check
    _
  $region7: #{_lambda_.21} parent=0 // pred_check_branch
    %11 = sbr.rel (0) target = $region9
  $region8: #{_lambda_.21} parent=0 // pred_region
    _
  $region9: #{_lambda_.21} parent=0 // pred_fallthru
    _
  // Predicated region
  $region10: #{_lambda_.21} parent=0 // pred_check
    _
  $region11: #{_lambda_.21} parent=0 // pred_check_branch
    %13 = sbr.rel (0) target = $region13
  $region12: #{_lambda_.21} parent=0 // pred_region
    _
  $region13: #{_lambda_.21} parent=0 // pred_fallthru
    _
  %v14 = vld [vmem:[%s0] sm:$0xf]
  %v15 = vld [vmem:[%s0 + $0x4] sm:$0xf]
  %v16 = vld [vmem:[%s0 + $0x8] sm:$0xf]
  %v17 = vld [vmem:[%s0 + $0xc] sm:$0xf]
  %v18 = vld [vmem:[%s0 + $0x10] sm:$0xf]
  %v19 = vld [vmem:[%s0 + $0x14] sm:$0xf]
  %v20 = vld [vmem:[%s0 + $0x18] sm:$0xf]
  %v21 = vld [vmem:[%s0 + $0x1c] sm:$0xf]
  %v22 = vld [vmem:[%s0 + $0x20] sm:$0xf]
  %v23 = vld [vmem:[%s0 + $0x24] sm:$0xf]
  %v24 = vld [vmem:[%s0 + $0x28] sm:$0xf]
  %v25 = vld [vmem:[%s0 + $0x2c] sm:$0xf]
  %v26 = vld [vmem:[%s0 + $0x30] sm:$0xf]
  %v27 = vld [vmem:[%s0 + $0x34] sm:$0xf]
  %v28 = vld [vmem:[%s0 + $0x38] sm:$0xf]
  %v29 = vld [vmem:[%s0 + $0x3c] sm:$0xf]
  %v30 = vunpack.c.l.bf16 %v14
  %v31 = vunpack.c.l.bf16 %v15
  %v32 = vunpack.c.l.bf16 %v16
  %v33 = vunpack.c.l.bf16 %v17
  %v34 = vunpack.c.l.bf16 %v18
  %v35 = vunpack.c.l.bf16 %v19
  %v36 = vunpack.c.l.bf16 %v20
  %v37 = vunpack.c.l.bf16 %v21
  %v38 = vunpack.c.l.bf16 %v22
  %v39 = vunpack.c.l.bf16 %v23
  %v40 = vunpack.c.l.bf16 %v24
  %v41 = vunpack.c.l.bf16 %v25
  %v42 = vunpack.c.l.bf16 %v26
  %v43 = vunpack.c.l.bf16 %v27
  %v44 = vunpack.c.l.bf16 %v28
  %v45 = vunpack.c.l.bf16 %v29
  %v46 = vld [vmem:[%s1] sm:$0x1]
  %v48 = vlaneseq
  %v49 = vshrl.u32 %v48, 7
  %v50 = vsub.s32 0, %v49
  %v51 = vrot.slane %v46, %v50
  %v53 = vmul.f32 %v30, %v51
  %v54 = vmul.f32 %v31, %v51
  %v55 = vmul.f32 %v32, %v51
  %v56 = vmul.f32 %v33, %v51
  %v57 = vmul.f32 %v34, %v51
  %v58 = vmul.f32 %v35, %v51
  %v59 = vmul.f32 %v36, %v51
  %v60 = vmul.f32 %v37, %v51
  %v61 = vmul.f32 %v38, %v51
  %v62 = vmul.f32 %v39, %v51
  %v63 = vmul.f32 %v40, %v51
  %v64 = vmul.f32 %v41, %v51
  %v65 = vmul.f32 %v42, %v51
  %v66 = vmul.f32 %v43, %v51
  %v67 = vmul.f32 %v44, %v51
  %v68 = vmul.f32 %v45, %v51
  %v69 = vld [vmem:[%s2] sm:$0x1]
  %v71 = vlaneseq
  %v72 = vshrl.u32 %v71, 7
  %v73 = vsub.s32 0, %v72
  %v74 = vrot.slane %v69, %v73
  %v76 = vadd.f32 %v53, %v74
  %v77 = vadd.f32 %v54, %v74
  %v78 = vadd.f32 %v55, %v74
  %v79 = vadd.f32 %v56, %v74
  %v80 = vadd.f32 %v57, %v74
  %v81 = vadd.f32 %v58, %v74
  %v82 = vadd.f32 %v59, %v74
  %v83 = vadd.f32 %v60, %v74
  %v84 = vadd.f32 %v61, %v74
  %v85 = vadd.f32 %v62, %v74
  %v86 = vadd.f32 %v63, %v74
  %v87 = vadd.f32 %v64, %v74
  %v88 = vadd.f32 %v65, %v74
  %v89 = vadd.f32 %v66, %v74
  %v90 = vadd.f32 %v67, %v74
  %v91 = vadd.f32 %v68, %v74
  %v92 = vpack.c.bf16 %v77, %v76
  %v93 = vpack.c.bf16 %v79, %v78
  %v94 = vpack.c.bf16 %v81, %v80
  %v95 = vpack.c.bf16 %v83, %v82
  %v96 = vpack.c.bf16 %v85, %v84
  %v97 = vpack.c.bf16 %v87, %v86
  %v98 = vpack.c.bf16 %v89, %v88
  %v99 = vpack.c.bf16 %v91, %v90
  %v108 = vunpack.c.l.b16 %v92
  %v109 = vunpack.c.h.b16 %v92
  %v110 = vunpack.c.l.b16 %v93
  %v111 = vunpack.c.h.b16 %v93
  %v112 = vunpack.c.l.b16 %v94
  %v113 = vunpack.c.h.b16 %v94
  %v114 = vunpack.c.l.b16 %v95
  %v115 = vunpack.c.h.b16 %v95
  %v116 = vunpack.c.l.b16 %v96
  %v117 = vunpack.c.h.b16 %v96
  %v118 = vunpack.c.l.b16 %v97
  %v119 = vunpack.c.h.b16 %v97
  %v120 = vunpack.c.l.b16 %v98
  %v121 = vunpack.c.h.b16 %v98
  %v122 = vunpack.c.l.b16 %v99
  %v123 = vunpack.c.h.b16 %v99
  %v124 = vpack.c.b16 %v108, %v108
  %v125 = vpack.c.b16 %v109, %v109
  %v126 = vpack.c.b16 %v110, %v110
  %v127 = vpack.c.b16 %v111, %v111
  %v128 = vpack.c.b16 %v112, %v112
  %v129 = vpack.c.b16 %v113, %v113
  %v130 = vpack.c.b16 %v114, %v114
  %v131 = vpack.c.b16 %v115, %v115
  %v132 = vpack.c.b16 %v116, %v116
  %v133 = vpack.c.b16 %v117, %v117
  %v134 = vpack.c.b16 %v118, %v118
  %v135 = vpack.c.b16 %v119, %v119
  %v136 = vpack.c.b16 %v120, %v120
  %v137 = vpack.c.b16 %v121, %v121
  %v138 = vpack.c.b16 %v122, %v122
  %v139 = vpack.c.b16 %v123, %v123
  %156 = vst [vmem:[%s3] sm:$0xf] %v124
  %157 = vst [vmem:[%s3 + $0x4] sm:$0xf] %v125
  %158 = vst [vmem:[%s3 + $0x8] sm:$0xf] %v126
  %159 = vst [vmem:[%s3 + $0xc] sm:$0xf] %v127
  %160 = vst [vmem:[%s3 + $0x10] sm:$0xf] %v128
  %161 = vst [vmem:[%s3 + $0x14] sm:$0xf] %v129
  %162 = vst [vmem:[%s3 + $0x18] sm:$0xf] %v130
  %163 = vst [vmem:[%s3 + $0x1c] sm:$0xf] %v131
  %164 = vst [vmem:[%s3 + $0x20] sm:$0xf] %v132
  %165 = vst [vmem:[%s3 + $0x24] sm:$0xf] %v133
  %166 = vst [vmem:[%s3 + $0x28] sm:$0xf] %v134
  %167 = vst [vmem:[%s3 + $0x2c] sm:$0xf] %v135
  %168 = vst [vmem:[%s3 + $0x30] sm:$0xf] %v136
  %169 = vst [vmem:[%s3 + $0x34] sm:$0xf] %v137
  %170 = vst [vmem:[%s3 + $0x38] sm:$0xf] %v138
  %171 = vst [vmem:[%s3 + $0x3c] sm:$0xf] %v139
  // Predicated region
  $region14: #{_lambda_.21} parent=0 // pred_check
    _
  $region15: #{_lambda_.21} parent=0 // pred_check_branch
    %173 = sbr.rel (0) target = $region17
  $region16: #{_lambda_.21} parent=0 // pred_region
    _
  $region17: #{_lambda_.21} parent=0 // pred_fallthru
    _
  // Predicated region
  $region18: #{_lambda_.21} parent=0 // pred_check
    _
  $region19: #{_lambda_.21} parent=0 // pred_check_branch
    %175 = sbr.rel (0) target = $region21
  $region20: #{_lambda_.21} parent=0 // pred_region
    _
  $region21: #{_lambda_.21} parent=0 // pred_fallthru
    _

// kernel: _lambda_.23
$region0: #{_lambda_.23}
  #allocation0 [shape = 'u32[]', space=smem, size = 0x4, offset = 0x4, fixed_abs, tag = 'smem constant byte address 0x4 - core index']
  #allocation1 [shape = 'u32[144,128]{1,0:T(1,128)}', space=vmem, size = 0x12000, scoped, tag = 'internal scratch']
  %s0 = inlined_call_operand.vmem [shape: bf16[32,128], index: 0, kind: input, shape index: {}]
  %s1 = inlined_call_operand.vmem [shape: f32[1,128], index: 1, kind: input, shape index: {}]
  %s2 = inlined_call_operand.vmem [shape: f32[1,128], index: 2, kind: input, shape index: {}]
  %s3 = inlined_call_operand.vmem [shape: bf16[32,128], index: 3, kind: output, shape index: {}]
  %s4 = sld [smem:[#allocation0]]
  $region22: #{_lambda_.23} parent=0
    _
  %s6 = ssub.s32 1, %s4
  %s7 = scalar_select 0, %s6, %s4
  // Predicated region
  $region2: #{_lambda_.23} parent=0 // pred_check
    _
  $region3: #{_lambda_.23} parent=0 // pred_check_branch
    %9 = sbr.rel (0) target = $region5
  $region4: #{_lambda_.23} parent=0 // pred_region
    _
  $region5: #{_lambda_.23} parent=0 // pred_fallthru
    _
  // Predicated region
  $region6: #{_lambda_.23} parent=0 // pred_check
    _
  $region7: #{_lambda_.23} parent=0 // pred_check_branch
    %11 = sbr.rel (0) target = $region9
  $region8: #{_lambda_.23} parent=0 // pred_region
    _
  $region9: #{_lambda_.23} parent=0 // pred_fallthru
    _
  // Predicated region
  $region10: #{_lambda_.23} parent=0 // pred_check
    _
  $region11: #{_lambda_.23} parent=0 // pred_check_branch
    %13 = sbr.rel (0) target = $region13
  $region12: #{_lambda_.23} parent=0 // pred_region
    _
  $region13: #{_lambda_.23} parent=0 // pred_fallthru
    _
  %v14 = vld [vmem:[%s0] sm:$0xf]
  %v15 = vld [vmem:[%s0 + $0x4] sm:$0xf]
  %v16 = vld [vmem:[%s0 + $0x8] sm:$0xf]
  %v17 = vld [vmem:[%s0 + $0xc] sm:$0xf]
  %v18 = vunpack.c.l.bf16 %v14
  %v19 = vunpack.c.l.bf16 %v15
  %v20 = vunpack.c.l.bf16 %v16
  %v21 = vunpack.c.l.bf16 %v17
  %v22 = vld [vmem:[%s1] sm:$0x1]
  %v24 = vlaneseq
  %v25 = vshrl.u32 %v24, 7
  %v26 = vsub.s32 0, %v25
  %v27 = vrot.slane %v22, %v26
  %v29 = vmul.f32 %v18, %v27
  %v30 = vmul.f32 %v19, %v27
  %v31 = vmul.f32 %v20, %v27
  %v32 = vmul.f32 %v21, %v27
  %v33 = vld [vmem:[%s2] sm:$0x1]
  %v35 = vlaneseq
  %v36 = vshrl.u32 %v35, 7
  %v37 = vsub.s32 0, %v36
  %v38 = vrot.slane %v33, %v37
  %v40 = vadd.f32 %v29, %v38
  %v41 = vadd.f32 %v30, %v38
  %v42 = vadd.f32 %v31, %v38
  %v43 = vadd.f32 %v32, %v38
  %v44 = vpack.c.bf16 %v41, %v40
  %v45 = vpack.c.bf16 %v43, %v42
  %v48 = vunpack.c.l.b16 %v44
  %v49 = vunpack.c.h.b16 %v44
  %v50 = vunpack.c.l.b16 %v45
  %v51 = vunpack.c.h.b16 %v45
  %v52 = vpack.c.b16 %v48, %v48
  %v53 = vpack.c.b16 %v49, %v49
  %v54 = vpack.c.b16 %v50, %v50
  %v55 = vpack.c.b16 %v51, %v51
  %60 = vst [vmem:[%s3] sm:$0xf] %v52
  %61 = vst [vmem:[%s3 + $0x4] sm:$0xf] %v53
  %62 = vst [vmem:[%s3 + $0x8] sm:$0xf] %v54
  %63 = vst [vmem:[%s3 + $0xc] sm:$0xf] %v55
  // Predicated region
  $region14: #{_lambda_.23} parent=0 // pred_check
    _
  $region15: #{_lambda_.23} parent=0 // pred_check_branch
    %65 = sbr.rel (0) target = $region17
  $region16: #{_lambda_.23} parent=0 // pred_region
    _
  $region17: #{_lambda_.23} parent=0 // pred_fallthru
    _
  // Predicated region
  $region18: #{_lambda_.23} parent=0 // pred_check
    _
  $region19: #{_lambda_.23} parent=0 // pred_check_branch
    %67 = sbr.rel (0) target = $region21
  $region20: #{_lambda_.23} parent=0 // pred_region
    _
  $region21: #{_lambda_.23} parent=0 // pred_fallthru
    _

// kernel: _lambda_.22
$region0: #{_lambda_.22}
  #allocation0 [shape = 'u32[]', space=smem, size = 0x4, offset = 0x4, fixed_abs, tag = 'smem constant byte address 0x4 - core index']
  #allocation1 [shape = 'u32[144,128]{1,0:T(1,128)}', space=vmem, size = 0x12000, scoped, tag = 'internal scratch']
  #allocation2 [shape = 'f32[32,128]{1,0:T(8,128)}', space=vmem, size = 0x4000, scoped, tag = 'scratch operand']
  %s0 = inlined_call_operand.vmem [shape: bf16[32,256], index: 0, kind: input, shape index: {}]
  %s1 = inlined_call_operand.vmem [shape: bf16[256,128], index: 1, kind: input, shape index: {}]
  %s2 = inlined_call_operand.vmem [shape: f32[1,128], index: 2, kind: input, shape index: {}]
  %s3 = inlined_call_operand.vmem [shape: bf16[32,128], index: 3, kind: output, shape index: {0}]
  %s4 = inlined_call_operand.vmem [shape: f32[1,2,128], index: 4, kind: output, shape index: {1}]
  %5 = xla_tuple %s3, %s4
  %s6 = sld [smem:[#allocation0]]
  $region38: #{_lambda_.22} parent=0
    _
  %s8 = ssub.s32 1, %s6
  %s9 = scalar_select 0, %s8, %s6
  // Predicated region
  $region2: #{_lambda_.22} parent=0 // pred_check
    _
  $region3: #{_lambda_.22} parent=0 // pred_check_branch
    %11 = sbr.rel (0) target = $region5
  $region4: #{_lambda_.22} parent=0 // pred_region
    _
  $region5: #{_lambda_.22} parent=0 // pred_fallthru
    _
  // Predicated region
  $region6: #{_lambda_.22} parent=0 // pred_check
    _
  $region7: #{_lambda_.22} parent=0 // pred_check_branch
    %13 = sbr.rel (0) target = $region9
  $region8: #{_lambda_.22} parent=0 // pred_region
    _
  $region9: #{_lambda_.22} parent=0 // pred_fallthru
    _
  // Predicated region
  $region10: #{_lambda_.22} parent=0 // pred_check
    _
  $region11: #{_lambda_.22} parent=0 // pred_check_branch
    %15 = sbr.rel (0) target = $region13
  $region12: #{_lambda_.22} parent=0 // pred_region
    _
  $region13: #{_lambda_.22} parent=0 // pred_fallthru
    _
  %p17 = scmp.eq.s32.totalorder 0, 0
  // Predicated region
  $region14: #{_lambda_.22} parent=0 // pred_check
    %p18 = pneg %p17
  $region15: #{_lambda_.22} parent=0 // pred_check_branch
    %20 = sbr.rel (%p18) target = $region17
  $region16: #{_lambda_.22} parent=0 // pred_region
    %21 = vst [vmem:[#allocation2] sm:$0xff] 0.0
    %22 = vst [vmem:[#allocation2 + $0x8] sm:$0xff] 0.0
    %23 = vst [vmem:[#allocation2 + $0x10] sm:$0xff] 0.0
    %24 = vst [vmem:[#allocation2 + $0x18] sm:$0xff] 0.0
  $region17: #{_lambda_.22} parent=0 // pred_fallthru
    _
  %v25 = vld [vmem:[%s0] sm:$0xff]
  %v26 = vld [vmem:[%s0 + $0x8] sm:$0xff]
  %v27 = vld [vmem:[%s0 + $0x10] sm:$0xff]
  %v28 = vld [vmem:[%s0 + $0x18] sm:$0xff]
  %v29 = vunpack.c.l.bf16 %v25
  %v30 = vunpack.c.h.bf16 %v25
  %v31 = vunpack.c.l.bf16 %v26
  %v32 = vunpack.c.h.bf16 %v26
  %v33 = vunpack.c.l.bf16 %v27
  %v34 = vunpack.c.h.bf16 %v27
  %v35 = vunpack.c.l.bf16 %v28
  %v36 = vunpack.c.h.bf16 %v28
  %vm37 = vcmp.gt.f32.partialorder %v29, 0.0
  %vm38 = vcmp.gt.f32.partialorder %v30, 0.0
  %vm39 = vcmp.gt.f32.partialorder %v31, 0.0
  %vm40 = vcmp.gt.f32.partialorder %v32, 0.0
  %vm41 = vcmp.gt.f32.partialorder %v33, 0.0
  %vm42 = vcmp.gt.f32.partialorder %v34, 0.0
  %vm43 = vcmp.gt.f32.partialorder %v35, 0.0
  %vm44 = vcmp.gt.f32.partialorder %v36, 0.0
  %v45 = vmul.f32 %v29, 0.2
  %v46 = vmul.f32 %v30, 0.2
  %v47 = vmul.f32 %v31, 0.2
  %v48 = vmul.f32 %v32, 0.2
  %v49 = vmul.f32 %v33, 0.2
  %v50 = vmul.f32 %v34, 0.2
  %v51 = vmul.f32 %v35, 0.2
  %v52 = vmul.f32 %v36, 0.2
  %v53 = vsel %vm37, %v29, %v45
  %v54 = vsel %vm38, %v30, %v46
  %v55 = vsel %vm39, %v31, %v47
  %v56 = vsel %vm40, %v32, %v48
  %v57 = vsel %vm41, %v33, %v49
  %v58 = vsel %vm42, %v34, %v50
  %v59 = vsel %vm43, %v35, %v51
  %v60 = vsel %vm44, %v36, %v52
  %v61 = vpack.c.bf16 %v55, %v53
  %v62 = vpack.c.bf16 %v56, %v54
  %v63 = vpack.c.bf16 %v59, %v57
  %v64 = vpack.c.bf16 %v60, %v58
  %v65 = vld [vmem:[#allocation2] sm:$0xff]
  %v66 = vld [vmem:[#allocation2 + $0x8] sm:$0xff]
  %v67 = vld [vmem:[#allocation2 + $0x10] sm:$0xff]
  %v68 = vld [vmem:[#allocation2 + $0x18] sm:$0xff]
  %v69 = vld [vmem:[%s1] sm:$0xf]
  %v70 = vld [vmem:[%s1 + $0x4] sm:$0xf]
  %v71 = vld [vmem:[%s1 + $0x8] sm:$0xf]
  %v72 = vld [vmem:[%s1 + $0xc] sm:$0xf]
  %v73 = vld [vmem:[%s1 + $0x10] sm:$0xf]
  %v74 = vld [vmem:[%s1 + $0x14] sm:$0xf]
  %v75 = vld [vmem:[%s1 + $0x18] sm:$0xf]
  %v76 = vld [vmem:[%s1 + $0x1c] sm:$0xf]
  %v77 = vld [vmem:[%s1 + $0x20] sm:$0xf]
  %v78 = vld [vmem:[%s1 + $0x24] sm:$0xf]
  %v79 = vld [vmem:[%s1 + $0x28] sm:$0xf]
  %v80 = vld [vmem:[%s1 + $0x2c] sm:$0xf]
  %v81 = vld [vmem:[%s1 + $0x30] sm:$0xf]
  %v82 = vld [vmem:[%s1 + $0x34] sm:$0xf]
  %v83 = vld [vmem:[%s1 + $0x38] sm:$0xf]
  %v84 = vld [vmem:[%s1 + $0x3c] sm:$0xf]
  %v85 = vld [vmem:[%s1 + $0x40] sm:$0xf]
  %v86 = vld [vmem:[%s1 + $0x44] sm:$0xf]
  %v87 = vld [vmem:[%s1 + $0x48] sm:$0xf]
  %v88 = vld [vmem:[%s1 + $0x4c] sm:$0xf]
  %v89 = vld [vmem:[%s1 + $0x50] sm:$0xf]
  %v90 = vld [vmem:[%s1 + $0x54] sm:$0xf]
  %v91 = vld [vmem:[%s1 + $0x58] sm:$0xf]
  %v92 = vld [vmem:[%s1 + $0x5c] sm:$0xf]
  %v93 = vld [vmem:[%s1 + $0x60] sm:$0xf]
  %v94 = vld [vmem:[%s1 + $0x64] sm:$0xf]
  %v95 = vld [vmem:[%s1 + $0x68] sm:$0xf]
  %v96 = vld [vmem:[%s1 + $0x6c] sm:$0xf]
  %v97 = vld [vmem:[%s1 + $0x70] sm:$0xf]
  %v98 = vld [vmem:[%s1 + $0x74] sm:$0xf]
  %v99 = vld [vmem:[%s1 + $0x78] sm:$0xf]
  %v100 = vld [vmem:[%s1 + $0x7c] sm:$0xf]
  %v133 = vunpack.c.l.b16 %v69
  %v134 = vunpack.c.l.b16 %v70
  %v135 = vunpack.c.l.b16 %v71
  %v136 = vunpack.c.l.b16 %v72
  %v137 = vunpack.c.l.b16 %v73
  %v138 = vunpack.c.l.b16 %v74
  %v139 = vunpack.c.l.b16 %v75
  %v140 = vunpack.c.l.b16 %v76
  %v141 = vunpack.c.l.b16 %v77
  %v142 = vunpack.c.l.b16 %v78
  %v143 = vunpack.c.l.b16 %v79
  %v144 = vunpack.c.l.b16 %v80
  %v145 = vunpack.c.l.b16 %v81
  %v146 = vunpack.c.l.b16 %v82
  %v147 = vunpack.c.l.b16 %v83
  %v148 = vunpack.c.l.b16 %v84
  %v149 = vunpack.c.l.b16 %v85
  %v150 = vunpack.c.l.b16 %v86
  %v151 = vunpack.c.l.b16 %v87
  %v152 = vunpack.c.l.b16 %v88
  %v153 = vunpack.c.l.b16 %v89
  %v154 = vunpack.c.l.b16 %v90
  %v155 = vunpack.c.l.b16 %v91
  %v156 = vunpack.c.l.b16 %v92
  %v157 = vunpack.c.l.b16 %v93
  %v158 = vunpack.c.l.b16 %v94
  %v159 = vunpack.c.l.b16 %v95
  %v160 = vunpack.c.l.b16 %v96
  %v161 = vunpack.c.l.b16 %v97
  %v162 = vunpack.c.l.b16 %v98
  %v163 = vunpack.c.l.b16 %v99
  %v164 = vunpack.c.l.b16 %v100
  %v165 = vpack.c.b16 %v134, %v133
  %v166 = vpack.c.b16 %v136, %v135
  %v167 = vpack.c.b16 %v138, %v137
  %v168 = vpack.c.b16 %v140, %v139
  %v169 = vpack.c.b16 %v142, %v141
  %v170 = vpack.c.b16 %v144, %v143
  %v171 = vpack.c.b16 %v146, %v145
  %v172 = vpack.c.b16 %v148, %v147
  %v173 = vpack.c.b16 %v150, %v149
  %v174 = vpack.c.b16 %v152, %v151
  %v175 = vpack.c.b16 %v154, %v153
  %v176 = vpack.c.b16 %v156, %v155
  %v177 = vpack.c.b16 %v158, %v157
  %v178 = vpack.c.b16 %v160, %v159
  %v179 = vpack.c.b16 %v162, %v161
  %v180 = vpack.c.b16 %v164, %v163
  %197 = vmatprep.subr.bf16.mxu0 0
  %198 = vmatpush1.bf16.msra.mxu0 %v172
  %199 = vmatprep.subr.bf16.mxu0 0
  %200 = vmatpush1.bf16.msra.mxu0 %v171
  %201 = vmatprep.subr.bf16.mxu0 0
  %202 = vmatpush1.bf16.msra.mxu0 %v170
  %203 = vmatprep.subr.bf16.mxu0 0
  %204 = vmatpush1.bf16.msra.mxu0 %v169
  %205 = vmatprep.subr.bf16.mxu0 0
  %206 = vmatpush1.bf16.msra.mxu0 %v168
  %207 = vmatprep.subr.bf16.mxu0 0
  %208 = vmatpush1.bf16.msra.mxu0 %v167
  %209 = vmatprep.subr.bf16.mxu0 0
  %210 = vmatpush1.bf16.msra.mxu0 %v166
  %211 = vmatprep.subr.bf16.mxu0 0
  %212 = vmatpush1.bf16.msra.mxu0 %v165
  %213 = vmatprep.subr.bf16.mxu0 0
  %214 = vmatpush2.bf16.msra.mxu0 %v180
  %215 = vmatprep.subr.bf16.mxu0 0
  %216 = vmatpush2.bf16.msra.mxu0 %v179
  %217 = vmatprep.subr.bf16.mxu0 0
  %218 = vmatpush2.bf16.msra.mxu0 %v178
  %219 = vmatprep.subr.bf16.mxu0 0
  %220 = vmatpush2.bf16.msra.mxu0 %v177
  %221 = vmatprep.subr.bf16.mxu0 0
  %222 = vmatpush2.bf16.msra.mxu0 %v176
  %223 = vmatprep.subr.bf16.mxu0 0
  %224 = vmatpush2.bf16.msra.mxu0 %v175
  %225 = vmatprep.subr.bf16.mxu0 0
  %226 = vmatpush2.bf16.msra.mxu0 %v174
  %227 = vmatprep.subr.bf16.mxu0 0
  %228 = vmatpush2.bf16.msra.mxu0 %v173
  %229 = vmatprep.mubr.bf16.mxu0 %v62
  %230 = vmatmul.mubr.bf16.gmra.mxu0 %v61
  %v231 = vpop.f32.mrf.mxu0
  %v232 = vadd.f32 0.0, %v231
  %v233 = vpop.f32.mrf.mxu0
  %v234 = vpop.f32.mrf.mxu0
  %v235 = vadd.f32 0.0, %v234
  %v236 = vpop.f32.mrf.mxu0
  %237 = vmatprep.mubr.bf16.mxu0 %v64
  %238 = vmatmul.mubr.bf16.gmra.mxu0 %v63
  %v239 = vpop.f32.mrf.mxu0
  %v240 = vadd.f32 0.0, %v239
  %v241 = vpop.f32.mrf.mxu0
  %v242 = vpop.f32.mrf.mxu0
  %v243 = vadd.f32 0.0, %v242
  %v244 = vpop.f32.mrf.mxu0
  %245 = vdwg.mxu0
  %v246 = vadd.f32 %v65, %v232
  %v247 = vadd.f32 %v66, %v235
  %v248 = vadd.f32 %v67, %v240
  %v249 = vadd.f32 %v68, %v243
  %250 = vst [vmem:[#allocation2] sm:$0xff] %v246
  %251 = vst [vmem:[#allocation2 + $0x8] sm:$0xff] %v247
  %252 = vst [vmem:[#allocation2 + $0x10] sm:$0xff] %v248
  %253 = vst [vmem:[#allocation2 + $0x18] sm:$0xff] %v249
  // Predicated region
  $region18: #{_lambda_.22} parent=0 // pred_check
    %p254 = pneg %p17
  $region19: #{_lambda_.22} parent=0 // pred_check_branch
    %256 = sbr.rel (%p254) target = $region21
  $region20: #{_lambda_.22} parent=0 // pred_region
    %v257 = vld [vmem:[#allocation2] sm:$0xff]
    %v258 = vld [vmem:[#allocation2 + $0x8] sm:$0xff]
    %v259 = vld [vmem:[#allocation2 + $0x10] sm:$0xff]
    %v260 = vld [vmem:[#allocation2 + $0x18] sm:$0xff]
    %v261 = vld [vmem:[%s2] sm:$0x1]
    %v263 = vlaneseq
    %v264 = vshrl.u32 %v263, 7
    %v265 = vsub.s32 0, %v264
    %v266 = vrot.slane %v261, %v265
    %v268 = vadd.f32 %v257, %v266
    %v269 = vadd.f32 %v258, %v266
    %v270 = vadd.f32 %v259, %v266
    %v271 = vadd.f32 %v260, %v266
    %v272 = vpack.c.bf16 %v269, %v268
    %v273 = vpack.c.bf16 %v271, %v270
    %v276 = vunpack.c.l.b16 %v272
    %v277 = vunpack.c.h.b16 %v272
    %v278 = vunpack.c.l.b16 %v273
    %v279 = vunpack.c.h.b16 %v273
    %v280 = vpack.c.b16 %v276, %v276
    %v281 = vpack.c.b16 %v277, %v277
    %v282 = vpack.c.b16 %v278, %v278
    %v283 = vpack.c.b16 %v279, %v279
    %288 = vst [vmem:[%s3] sm:$0xf] %v280
    %289 = vst [vmem:[%s3 + $0x4] sm:$0xf] %v281
    %290 = vst [vmem:[%s3 + $0x8] sm:$0xf] %v282
    %291 = vst [vmem:[%s3 + $0xc] sm:$0xf] %v283
    %v292 = vadd.f32 %v268, %v269
    %v293 = vadd.f32 %v292, %v270
    %v294 = vadd.f32 %v293, %v271
    %v295 = vrot.slane %v294, 4
    %v296 = vadd.f32 %v294, %v295
    %v297 = vrot.slane %v296, 2
    %v298 = vadd.f32 %v296, %v297
    %v299 = vrot.slane %v298, 1
    %v300 = vadd.f32 %v298, %v299
    %v301 = vmul.f32 %v268, %v268
    %v302 = vmul.f32 %v269, %v269
    %v303 = vmul.f32 %v270, %v270
    %v304 = vmul.f32 %v271, %v271
    %v305 = vadd.f32 %v301, %v302
    %v306 = vadd.f32 %v305, %v303
    %v307 = vadd.f32 %v306, %v304
    %v308 = vrot.slane %v307, 4
    %v309 = vadd.f32 %v307, %v308
    %v310 = vrot.slane %v309, 2
    %v311 = vadd.f32 %v309, %v310
    %v312 = vrot.slane %v311, 1
    %v313 = vadd.f32 %v311, %v312
    %vm314 = vcmask 1040384
    %v315 = vsel %vm314, %v300, %v313
    %316 = vst [vmem:[%s4] sm:$0x3] %v315
  $region21: #{_lambda_.22} parent=0 // pred_fallthru
    _
  // Predicated region
  $region22: #{_lambda_.22} parent=0 // pred_check
    _
  $region23: #{_lambda_.22} parent=0 // pred_check_branch
    %318 = sbr.rel (0) target = $region25
  $region24: #{_lambda_.22} parent=0 // pred_region
    _
  $region25: #{_lambda_.22} parent=0 // pred_fallthru
    _
  // Predicated region
  $region26: #{_lambda_.22} parent=0 // pred_check
    _
  $region27: #{_lambda_.22} parent=0 // pred_check_branch
    %320 = sbr.rel (0) target = $region29
  $region28: #{_lambda_.22} parent=0 // pred_region
    _
  $region29: #{_lambda_.22} parent=0 // pred_fallthru
    _
  // Predicated region
  $region30: #{_lambda_.22} parent=0 // pred_check
    _
  $region31: #{_lambda_.22} parent=0 // pred_check_branch
    %322 = sbr.rel (0) target = $region33
  $region32: #{_lambda_.22} parent=0 // pred_region
    _
  $region33: #{_lambda_.22} parent=0 // pred_fallthru
    _
  // Predicated region
  $region34: #{_lambda_.22} parent=0 // pred_check
    _
  $region35: #{_lambda_.22} parent=0 // pred_check_branch
    %324 = sbr.rel (0) target = $region37
  $region36: #{_lambda_.22} parent=0 // pred_region
    _
  $region37: #{_lambda_.22} parent=0 // pred_fallthru
    _

// kernel: _lambda_.25
$region0: #{_lambda_.25}
  #allocation0 [shape = 'u32[]', space=smem, size = 0x4, offset = 0x4, fixed_abs, tag = 'smem constant byte address 0x4 - core index']
  #allocation1 [shape = 'u32[144,128]{1,0:T(1,128)}', space=vmem, size = 0x12000, scoped, tag = 'internal scratch']
  %s0 = inlined_call_operand.vmem [shape: bf16[8,128], index: 0, kind: input, shape index: {}]
  %s1 = inlined_call_operand.vmem [shape: f32[1,128], index: 1, kind: input, shape index: {}]
  %s2 = inlined_call_operand.vmem [shape: f32[1,128], index: 2, kind: input, shape index: {}]
  %s3 = inlined_call_operand.vmem [shape: bf16[8,128], index: 3, kind: output, shape index: {}]
  %s4 = sld [smem:[#allocation0]]
  $region22: #{_lambda_.25} parent=0
    _
  %s6 = ssub.s32 1, %s4
  %s7 = scalar_select 0, %s6, %s4
  // Predicated region
  $region2: #{_lambda_.25} parent=0 // pred_check
    _
  $region3: #{_lambda_.25} parent=0 // pred_check_branch
    %9 = sbr.rel (0) target = $region5
  $region4: #{_lambda_.25} parent=0 // pred_region
    _
  $region5: #{_lambda_.25} parent=0 // pred_fallthru
    _
  // Predicated region
  $region6: #{_lambda_.25} parent=0 // pred_check
    _
  $region7: #{_lambda_.25} parent=0 // pred_check_branch
    %11 = sbr.rel (0) target = $region9
  $region8: #{_lambda_.25} parent=0 // pred_region
    _
  $region9: #{_lambda_.25} parent=0 // pred_fallthru
    _
  // Predicated region
  $region10: #{_lambda_.25} parent=0 // pred_check
    _
  $region11: #{_lambda_.25} parent=0 // pred_check_branch
    %13 = sbr.rel (0) target = $region13
  $region12: #{_lambda_.25} parent=0 // pred_region
    _
  $region13: #{_lambda_.25} parent=0 // pred_fallthru
    _
  %v14 = vld [vmem:[%s0] sm:$0xf]
  %v15 = vunpack.c.l.bf16 %v14
  %v16 = vld [vmem:[%s1] sm:$0x1]
  %v18 = vlaneseq
  %v19 = vshrl.u32 %v18, 7
  %v20 = vsub.s32 0, %v19
  %v21 = vrot.slane %v16, %v20
  %v23 = vmul.f32 %v15, %v21
  %v24 = vld [vmem:[%s2] sm:$0x1]
  %v26 = vlaneseq
  %v27 = vshrl.u32 %v26, 7
  %v28 = vsub.s32 0, %v27
  %v29 = vrot.slane %v24, %v28
  %v31 = vadd.f32 %v23, %v29
  %v32 = vpack.c.bf16 %v31, %v31
  %33 = vst [vmem:[%s3] sm:$0xf] %v32
  // Predicated region
  $region14: #{_lambda_.25} parent=0 // pred_check
    _
  $region15: #{_lambda_.25} parent=0 // pred_check_branch
    %35 = sbr.rel (0) target = $region17
  $region16: #{_lambda_.25} parent=0 // pred_region
    _
  $region17: #{_lambda_.25} parent=0 // pred_fallthru
    _
  // Predicated region
  $region18: #{_lambda_.25} parent=0 // pred_check
    _
  $region19: #{_lambda_.25} parent=0 // pred_check_branch
    %37 = sbr.rel (0) target = $region21
  $region20: #{_lambda_.25} parent=0 // pred_region
    _
  $region21: #{_lambda_.25} parent=0 // pred_fallthru
    _

// kernel: squeeze.9
$region0: #{squeeze.9}
  %s0 = inlined_call_operand.vmem [shape: f32[256], index: 0, kind: input, shape index: {}]
  %s1 = inlined_call_operand.vmem [shape: f32[4,64], index: 1, kind: output, shape index: {}]
  $region1: #{squeeze.9} parent=0
    #allocation0 [shape = 'u8[4096]{0}', space=vmem, size = 0x1000, scoped, tag = 'scoped mem for output reshape']
    #allocation1 [shape = 'u8[4096]{0}', space=vmem, size = 0x1000, scoped, tag = 'scoped mem for input reshape']
    %s3 = sshll.u32 1, 2
    %s4 = ssub.s32 %s3, 1
    %v5 = vld [vmem:[%s0] sm:%s4]
    %6 = vst [vmem:[#allocation1] sm:%s4] %v5
    %v7 = vld [vmem:[#allocation1] sm:$0x3]
    %vm8 = vcmask 523264
    %9 = vst.msk [vmem:[#allocation0] ss:$2 sm:$0x3] %vm8, %v7
    %v10 = vld [vmem:[#allocation1] sm:$0x3]
    %11 = vrot.lane.b32.xlu0 %v10, 64
    %v12 = vpop.permute.xlu0 %11
    %vm13 = vcmask 523264
    %s14 = scalar_lea.vmem [#allocation0], 1
    %15 = vst.msk [vmem:[%s14] ss:$2 sm:$0x3] %vm13, %v12
    %s17 = sshll.u32 1, 4
    %s18 = ssub.s32 %s17, 1
    %v20 = vld [vmem:[#allocation0] sm:%s18]
    %s21 = sshll.u32 1, 4
    %s22 = ssub.s32 %s21, 1
    %23 = vst [vmem:[%s1] sm:%s22] %v20

// kernel: tile.48
$region0: #{tile.48}
  #allocation0 [shape = 's32[1]{0}', space=sflag, size = 0x4, scoped, tag = 'scoped memory for tile.48']
  %s0 = inlined_call_operand.vmem [shape: f32[64], index: 0, kind: input, shape index: {}]
  %s1 = inlined_call_operand.vmem [shape: f32[4,64], index: 1, kind: output, shape index: {}]
  // Predicated region
  $region2: #{tile.48} parent=0 // pred_check
    _
  $region3: #{tile.48} parent=0 // pred_check_branch
    %3 = sbr.rel (0) target = $region5
  $region4: #{tile.48} parent=0 // pred_region
    _
  $region5: #{tile.48} parent=0 // pred_fallthru
    _
  %v4 = vld [vmem:[%s0] ss:$0 sm:$0xff]
  %5 = vst [vmem:[%s1] sm:$0xf] %v4

// kernel: _lambda_.24
$region0: #{_lambda_.24}
  #allocation0 [shape = 'u32[]', space=smem, size = 0x4, offset = 0x4, fixed_abs, tag = 'smem constant byte address 0x4 - core index']
  #allocation1 [shape = 'u32[144,128]{1,0:T(1,128)}', space=vmem, size = 0x12000, scoped, tag = 'internal scratch']
  #allocation2 [shape = 'f32[8,128]{1,0:T(8,128)}', space=vmem, size = 0x1000, scoped, tag = 'scratch operand']
  %s0 = inlined_call_operand.vmem [shape: bf16[8,512], index: 0, kind: input, shape index: {}]
  %s1 = inlined_call_operand.vmem [shape: bf16[512,128], index: 1, kind: input, shape index: {}]
  %s2 = inlined_call_operand.vmem [shape: f32[1,128], index: 2, kind: input, shape index: {}]
  %s3 = inlined_call_operand.vmem [shape: bf16[8,128], index: 3, kind: output, shape index: {0}]
  %s4 = inlined_call_operand.vmem [shape: f32[1,2,128], index: 4, kind: output, shape index: {1}]
  %5 = xla_tuple %s3, %s4
  %s6 = sld [smem:[#allocation0]]
  $region38: #{_lambda_.24} parent=0
    _
  %s8 = ssub.s32 1, %s6
  %s9 = scalar_select 0, %s8, %s6
  // Predicated region
  $region2: #{_lambda_.24} parent=0 // pred_check
    _
  $region3: #{_lambda_.24} parent=0 // pred_check_branch
    %11 = sbr.rel (0) target = $region5
  $region4: #{_lambda_.24} parent=0 // pred_region
    _
  $region5: #{_lambda_.24} parent=0 // pred_fallthru
    _
  // Predicated region
  $region6: #{_lambda_.24} parent=0 // pred_check
    _
  $region7: #{_lambda_.24} parent=0 // pred_check_branch
    %13 = sbr.rel (0) target = $region9
  $region8: #{_lambda_.24} parent=0 // pred_region
    _
  $region9: #{_lambda_.24} parent=0 // pred_fallthru
    _
  // Predicated region
  $region10: #{_lambda_.24} parent=0 // pred_check
    _
  $region11: #{_lambda_.24} parent=0 // pred_check_branch
    %15 = sbr.rel (0) target = $region13
  $region12: #{_lambda_.24} parent=0 // pred_region
    _
  $region13: #{_lambda_.24} parent=0 // pred_fallthru
    _
  %p17 = scmp.eq.s32.totalorder 0, 0
  // Predicated region
  $region14: #{_lambda_.24} parent=0 // pred_check
    %p18 = pneg %p17
  $region15: #{_lambda_.24} parent=0 // pred_check_branch
    %20 = sbr.rel (%p18) target = $region17
  $region16: #{_lambda_.24} parent=0 // pred_region
    %21 = vst [vmem:[#allocation2] sm:$0xff] 0.0
  $region17: #{_lambda_.24} parent=0 // pred_fallthru
    _
  %v22 = vld [vmem:[%s0] sm:$0xff]
  %v23 = vld [vmem:[%s0 + $0x8] sm:$0xff]
  %v24 = vunpack.c.l.bf16 %v22
  %v25 = vunpack.c.h.bf16 %v22
  %v26 = vunpack.c.l.bf16 %v23
  %v27 = vunpack.c.h.bf16 %v23
  %vm28 = vcmp.gt.f32.partialorder %v24, 0.0
  %vm29 = vcmp.gt.f32.partialorder %v25, 0.0
  %vm30 = vcmp.gt.f32.partialorder %v26, 0.0
  %vm31 = vcmp.gt.f32.partialorder %v27, 0.0
  %v32 = vmul.f32 %v24, 0.2
  %v33 = vmul.f32 %v25, 0.2
  %v34 = vmul.f32 %v26, 0.2
  %v35 = vmul.f32 %v27, 0.2
  %v36 = vsel %vm28, %v24, %v32
  %v37 = vsel %vm29, %v25, %v33
  %v38 = vsel %vm30, %v26, %v34
  %v39 = vsel %vm31, %v27, %v35
  %v40 = vpack.c.bf16 %v36, %v36
  %v41 = vpack.c.bf16 %v37, %v37
  %v42 = vpack.c.bf16 %v38, %v38
  %v43 = vpack.c.bf16 %v39, %v39
  %v44 = vld [vmem:[#allocation2] sm:$0xff]
  %v45 = vld [vmem:[%s1] sm:$0xf]
  %v46 = vld [vmem:[%s1 + $0x4] sm:$0xf]
  %v47 = vld [vmem:[%s1 + $0x8] sm:$0xf]
  %v48 = vld [vmem:[%s1 + $0xc] sm:$0xf]
  %v49 = vld [vmem:[%s1 + $0x10] sm:$0xf]
  %v50 = vld [vmem:[%s1 + $0x14] sm:$0xf]
  %v51 = vld [vmem:[%s1 + $0x18] sm:$0xf]
  %v52 = vld [vmem:[%s1 + $0x1c] sm:$0xf]
  %v53 = vld [vmem:[%s1 + $0x20] sm:$0xf]
  %v54 = vld [vmem:[%s1 + $0x24] sm:$0xf]
  %v55 = vld [vmem:[%s1 + $0x28] sm:$0xf]
  %v56 = vld [vmem:[%s1 + $0x2c] sm:$0xf]
  %v57 = vld [vmem:[%s1 + $0x30] sm:$0xf]
  %v58 = vld [vmem:[%s1 + $0x34] sm:$0xf]
  %v59 = vld [vmem:[%s1 + $0x38] sm:$0xf]
  %v60 = vld [vmem:[%s1 + $0x3c] sm:$0xf]
  %v61 = vld [vmem:[%s1 + $0x40] sm:$0xf]
  %v62 = vld [vmem:[%s1 + $0x44] sm:$0xf]
  %v63 = vld [vmem:[%s1 + $0x48] sm:$0xf]
  %v64 = vld [vmem:[%s1 + $0x4c] sm:$0xf]
  %v65 = vld [vmem:[%s1 + $0x50] sm:$0xf]
  %v66 = vld [vmem:[%s1 + $0x54] sm:$0xf]
  %v67 = vld [vmem:[%s1 + $0x58] sm:$0xf]
  %v68 = vld [vmem:[%s1 + $0x5c] sm:$0xf]
  %v69 = vld [vmem:[%s1 + $0x60] sm:$0xf]
  %v70 = vld [vmem:[%s1 + $0x64] sm:$0xf]
  %v71 = vld [vmem:[%s1 + $0x68] sm:$0xf]
  %v72 = vld [vmem:[%s1 + $0x6c] sm:$0xf]
  %v73 = vld [vmem:[%s1 + $0x70] sm:$0xf]
  %v74 = vld [vmem:[%s1 + $0x74] sm:$0xf]
  %v75 = vld [vmem:[%s1 + $0x78] sm:$0xf]
  %v76 = vld [vmem:[%s1 + $0x7c] sm:$0xf]
  %v77 = vld [vmem:[%s1 + $0x80] sm:$0xf]
  %v78 = vld [vmem:[%s1 + $0x84] sm:$0xf]
  %v79 = vld [vmem:[%s1 + $0x88] sm:$0xf]
  %v80 = vld [vmem:[%s1 + $0x8c] sm:$0xf]
  %v81 = vld [vmem:[%s1 + $0x90] sm:$0xf]
  %v82 = vld [vmem:[%s1 + $0x94] sm:$0xf]
  %v83 = vld [vmem:[%s1 + $0x98] sm:$0xf]
  %v84 = vld [vmem:[%s1 + $0x9c] sm:$0xf]
  %v85 = vld [vmem:[%s1 + $0xa0] sm:$0xf]
  %v86 = vld [vmem:[%s1 + $0xa4] sm:$0xf]
  %v87 = vld [vmem:[%s1 + $0xa8] sm:$0xf]
  %v88 = vld [vmem:[%s1 + $0xac] sm:$0xf]
  %v89 = vld [vmem:[%s1 + $0xb0] sm:$0xf]
  %v90 = vld [vmem:[%s1 + $0xb4] sm:$0xf]
  %v91 = vld [vmem:[%s1 + $0xb8] sm:$0xf]
  %v92 = vld [vmem:[%s1 + $0xbc] sm:$0xf]
  %v93 = vld [vmem:[%s1 + $0xc0] sm:$0xf]
  %v94 = vld [vmem:[%s1 + $0xc4] sm:$0xf]
  %v95 = vld [vmem:[%s1 + $0xc8] sm:$0xf]
  %v96 = vld [vmem:[%s1 + $0xcc] sm:$0xf]
  %v97 = vld [vmem:[%s1 + $0xd0] sm:$0xf]
  %v98 = vld [vmem:[%s1 + $0xd4] sm:$0xf]
  %v99 = vld [vmem:[%s1 + $0xd8] sm:$0xf]
  %v100 = vld [vmem:[%s1 + $0xdc] sm:$0xf]
  %v101 = vld [vmem:[%s1 + $0xe0] sm:$0xf]
  %v102 = vld [vmem:[%s1 + $0xe4] sm:$0xf]
  %v103 = vld [vmem:[%s1 + $0xe8] sm:$0xf]
  %v104 = vld [vmem:[%s1 + $0xec] sm:$0xf]
  %v105 = vld [vmem:[%s1 + $0xf0] sm:$0xf]
  %v106 = vld [vmem:[%s1 + $0xf4] sm:$0xf]
  %v107 = vld [vmem:[%s1 + $0xf8] sm:$0xf]
  %v108 = vld [vmem:[%s1 + $0xfc] sm:$0xf]
  %v173 = vunpack.c.l.b16 %v45
  %v174 = vunpack.c.l.b16 %v46
  %v175 = vunpack.c.l.b16 %v47
  %v176 = vunpack.c.l.b16 %v48
  %v177 = vunpack.c.l.b16 %v49
  %v178 = vunpack.c.l.b16 %v50
  %v179 = vunpack.c.l.b16 %v51
  %v180 = vunpack.c.l.b16 %v52
  %v181 = vunpack.c.l.b16 %v53
  %v182 = vunpack.c.l.b16 %v54
  %v183 = vunpack.c.l.b16 %v55
  %v184 = vunpack.c.l.b16 %v56
  %v185 = vunpack.c.l.b16 %v57
  %v186 = vunpack.c.l.b16 %v58
  %v187 = vunpack.c.l.b16 %v59
  %v188 = vunpack.c.l.b16 %v60
  %v189 = vunpack.c.l.b16 %v61
  %v190 = vunpack.c.l.b16 %v62
  %v191 = vunpack.c.l.b16 %v63
  %v192 = vunpack.c.l.b16 %v64
  %v193 = vunpack.c.l.b16 %v65
  %v194 = vunpack.c.l.b16 %v66
  %v195 = vunpack.c.l.b16 %v67
  %v196 = vunpack.c.l.b16 %v68
  %v197 = vunpack.c.l.b16 %v69
  %v198 = vunpack.c.l.b16 %v70
  %v199 = vunpack.c.l.b16 %v71
  %v200 = vunpack.c.l.b16 %v72
  %v201 = vunpack.c.l.b16 %v73
  %v202 = vunpack.c.l.b16 %v74
  %v203 = vunpack.c.l.b16 %v75
  %v204 = vunpack.c.l.b16 %v76
  %v205 = vunpack.c.l.b16 %v77
  %v206 = vunpack.c.l.b16 %v78
  %v207 = vunpack.c.l.b16 %v79
  %v208 = vunpack.c.l.b16 %v80
  %v209 = vunpack.c.l.b16 %v81
  %v210 = vunpack.c.l.b16 %v82
  %v211 = vunpack.c.l.b16 %v83
  %v212 = vunpack.c.l.b16 %v84
  %v213 = vunpack.c.l.b16 %v85
  %v214 = vunpack.c.l.b16 %v86
  %v215 = vunpack.c.l.b16 %v87
  %v216 = vunpack.c.l.b16 %v88
  %v217 = vunpack.c.l.b16 %v89
  %v218 = vunpack.c.l.b16 %v90
  %v219 = vunpack.c.l.b16 %v91
  %v220 = vunpack.c.l.b16 %v92
  %v221 = vunpack.c.l.b16 %v93
  %v222 = vunpack.c.l.b16 %v94
  %v223 = vunpack.c.l.b16 %v95
  %v224 = vunpack.c.l.b16 %v96
  %v225 = vunpack.c.l.b16 %v97
  %v226 = vunpack.c.l.b16 %v98
  %v227 = vunpack.c.l.b16 %v99
  %v228 = vunpack.c.l.b16 %v100
  %v229 = vunpack.c.l.b16 %v101
  %v230 = vunpack.c.l.b16 %v102
  %v231 = vunpack.c.l.b16 %v103
  %v232 = vunpack.c.l.b16 %v104
  %v233 = vunpack.c.l.b16 %v105
  %v234 = vunpack.c.l.b16 %v106
  %v235 = vunpack.c.l.b16 %v107
  %v236 = vunpack.c.l.b16 %v108
  %v237 = vpack.c.b16 %v174, %v173
  %v238 = vpack.c.b16 %v176, %v175
  %v239 = vpack.c.b16 %v178, %v177
  %v240 = vpack.c.b16 %v180, %v179
  %v241 = vpack.c.b16 %v182, %v181
  %v242 = vpack.c.b16 %v184, %v183
  %v243 = vpack.c.b16 %v186, %v185
  %v244 = vpack.c.b16 %v188, %v187
  %v245 = vpack.c.b16 %v190, %v189
  %v246 = vpack.c.b16 %v192, %v191
  %v247 = vpack.c.b16 %v194, %v193
  %v248 = vpack.c.b16 %v196, %v195
  %v249 = vpack.c.b16 %v198, %v197
  %v250 = vpack.c.b16 %v200, %v199
  %v251 = vpack.c.b16 %v202, %v201
  %v252 = vpack.c.b16 %v204, %v203
  %v253 = vpack.c.b16 %v206, %v205
  %v254 = vpack.c.b16 %v208, %v207
  %v255 = vpack.c.b16 %v210, %v209
  %v256 = vpack.c.b16 %v212, %v211
  %v257 = vpack.c.b16 %v214, %v213
  %v258 = vpack.c.b16 %v216, %v215
  %v259 = vpack.c.b16 %v218, %v217
  %v260 = vpack.c.b16 %v220, %v219
  %v261 = vpack.c.b16 %v222, %v221
  %v262 = vpack.c.b16 %v224, %v223
  %v263 = vpack.c.b16 %v226, %v225
  %v264 = vpack.c.b16 %v228, %v227
  %v265 = vpack.c.b16 %v230, %v229
  %v266 = vpack.c.b16 %v232, %v231
  %v267 = vpack.c.b16 %v234, %v233
  %v268 = vpack.c.b16 %v236, %v235
  %301 = vmatprep.subr.bf16.mxu0 0
  %302 = vmatpush1.bf16.msra.mxu0 %v244
  %303 = vmatprep.subr.bf16.mxu0 0
  %304 = vmatpush1.bf16.msra.mxu0 %v243
  %305 = vmatprep.subr.bf16.mxu0 0
  %306 = vmatpush1.bf16.msra.mxu0 %v242
  %307 = vmatprep.subr.bf16.mxu0 0
  %308 = vmatpush1.bf16.msra.mxu0 %v241
  %309 = vmatprep.subr.bf16.mxu0 0
  %310 = vmatpush1.bf16.msra.mxu0 %v240
  %311 = vmatprep.subr.bf16.mxu0 0
  %312 = vmatpush1.bf16.msra.mxu0 %v239
  %313 = vmatprep.subr.bf16.mxu0 0
  %314 = vmatpush1.bf16.msra.mxu0 %v238
  %315 = vmatprep.subr.bf16.mxu0 0
  %316 = vmatpush1.bf16.msra.mxu0 %v237
  %317 = vmatprep.subr.bf16.mxu0 0
  %318 = vmatpush2.bf16.msra.mxu0 %v252
  %319 = vmatprep.subr.bf16.mxu0 0
  %320 = vmatpush2.bf16.msra.mxu0 %v251
  %321 = vmatprep.subr.bf16.mxu0 0
  %322 = vmatpush2.bf16.msra.mxu0 %v250
  %323 = vmatprep.subr.bf16.mxu0 0
  %324 = vmatpush2.bf16.msra.mxu0 %v249
  %325 = vmatprep.subr.bf16.mxu0 0
  %326 = vmatpush2.bf16.msra.mxu0 %v248
  %327 = vmatprep.subr.bf16.mxu0 0
  %328 = vmatpush2.bf16.msra.mxu0 %v247
  %329 = vmatprep.subr.bf16.mxu0 0
  %330 = vmatpush2.bf16.msra.mxu0 %v246
  %331 = vmatprep.subr.bf16.mxu0 0
  %332 = vmatpush2.bf16.msra.mxu0 %v245
  %333 = vmatprep.mubr.bf16.mxu0 %v41
  %334 = vmatmul.mubr.bf16.gmra.mxu0 %v40
  %v335 = vpop.f32.mrf.mxu0
  %v336 = vadd.f32 0.0, %v335
  %v337 = vpop.f32.mrf.mxu0
  %v338 = vpop.f32.mrf.mxu0
  %v339 = vpop.f32.mrf.mxu0
  %340 = vdwg.mxu0
  %341 = vmatprep.subr.bf16.mxu0 0
  %342 = vmatpush1.bf16.msra.mxu0 %v260
  %343 = vmatprep.subr.bf16.mxu0 0
  %344 = vmatpush1.bf16.msra.mxu0 %v259
  %345 = vmatprep.subr.bf16.mxu0 0
  %346 = vmatpush1.bf16.msra.mxu0 %v258
  %347 = vmatprep.subr.bf16.mxu0 0
  %348 = vmatpush1.bf16.msra.mxu0 %v257
  %349 = vmatprep.subr.bf16.mxu0 0
  %350 = vmatpush1.bf16.msra.mxu0 %v256
  %351 = vmatprep.subr.bf16.mxu0 0
  %352 = vmatpush1.bf16.msra.mxu0 %v255
  %353 = vmatprep.subr.bf16.mxu0 0
  %354 = vmatpush1.bf16.msra.mxu0 %v254
  %355 = vmatprep.subr.bf16.mxu0 0
  %356 = vmatpush1.bf16.msra.mxu0 %v253
  %357 = vmatprep.subr.bf16.mxu0 0
  %358 = vmatpush2.bf16.msra.mxu0 %v268
  %359 = vmatprep.subr.bf16.mxu0 0
  %360 = vmatpush2.bf16.msra.mxu0 %v267
  %361 = vmatprep.subr.bf16.mxu0 0
  %362 = vmatpush2.bf16.msra.mxu0 %v266
  %363 = vmatprep.subr.bf16.mxu0 0
  %364 = vmatpush2.bf16.msra.mxu0 %v265
  %365 = vmatprep.subr.bf16.mxu0 0
  %366 = vmatpush2.bf16.msra.mxu0 %v264
  %367 = vmatprep.subr.bf16.mxu0 0
  %368 = vmatpush2.bf16.msra.mxu0 %v263
  %369 = vmatprep.subr.bf16.mxu0 0
  %370 = vmatpush2.bf16.msra.mxu0 %v262
  %371 = vmatprep.subr.bf16.mxu0 0
  %372 = vmatpush2.bf16.msra.mxu0 %v261
  %373 = vmatprep.mubr.bf16.mxu0 %v43
  %374 = vmatmul.mubr.bf16.gmra.mxu0 %v42
  %v375 = vpop.f32.mrf.mxu0
  %v376 = vadd.f32 %v336, %v375
  %v377 = vpop.f32.mrf.mxu0
  %v378 = vpop.f32.mrf.mxu0
  %v379 = vpop.f32.mrf.mxu0
  %380 = vdwg.mxu0
  %v381 = vadd.f32 %v44, %v376
  %382 = vst [vmem:[#allocation2] sm:$0xff] %v381
  // Predicated region
  $region18: #{_lambda_.24} parent=0 // pred_check
    %p383 = pneg %p17
  $region19: #{_lambda_.24} parent=0 // pred_check_branch
    %385 = sbr.rel (%p383) target = $region21
  $region20: #{_lambda_.24} parent=0 // pred_region
    %v386 = vld [vmem:[#allocation2] sm:$0xff]
    %v387 = vld [vmem:[%s2] sm:$0x1]
    %v389 = vlaneseq
    %v390 = vshrl.u32 %v389, 7
    %v391 = vsub.s32 0, %v390
    %v392 = vrot.slane %v387, %v391
    %v394 = vadd.f32 %v386, %v392
    %v395 = vpack.c.bf16 %v394, %v394
    %396 = vst [vmem:[%s3] sm:$0xf] %v395
    %v397 = vrot.slane %v394, 4
    %v398 = vadd.f32 %v394, %v397
    %v399 = vrot.slane %v398, 2
    %v400 = vadd.f32 %v398, %v399
    %v401 = vrot.slane %v400, 1
    %v402 = vadd.f32 %v400, %v401
    %v403 = vmul.f32 %v394, %v394
    %v404 = vrot.slane %v403, 4
    %v405 = vadd.f32 %v403, %v404
    %v406 = vrot.slane %v405, 2
    %v407 = vadd.f32 %v405, %v406
    %v408 = vrot.slane %v407, 1
    %v409 = vadd.f32 %v407, %v408
    %vm410 = vcmask 1040384
    %v411 = vsel %vm410, %v402, %v409
    %412 = vst [vmem:[%s4] sm:$0x3] %v411
  $region21: #{_lambda_.24} parent=0 // pred_fallthru
    _
  // Predicated region
  $region22: #{_lambda_.24} parent=0 // pred_check
    _
  $region23: #{_lambda_.24} parent=0 // pred_check_branch
    %414 = sbr.rel (0) target = $region25
  $region24: #{_lambda_.24} parent=0 // pred_region
    _
  $region25: #{_lambda_.24} parent=0 // pred_fallthru
    _
  // Predicated region
  $region26: #{_lambda_.24} parent=0 // pred_check
    _
  $region27: #{_lambda_.24} parent=0 // pred_check_branch
    %416 = sbr.rel (0) target = $region29
  $region28: #{_lambda_.24} parent=0 // pred_region
    _
  $region29: #{_lambda_.24} parent=0 // pred_fallthru
    _
  // Predicated region
  $region30: #{_lambda_.24} parent=0 // pred_check
    _
  $region31: #{_lambda_.24} parent=0 // pred_check_branch
    %418 = sbr.rel (0) target = $region33
  $region32: #{_lambda_.24} parent=0 // pred_region
    _
  $region33: #{_lambda_.24} parent=0 // pred_fallthru
    _
  // Predicated region
  $region34: #{_lambda_.24} parent=0 // pred_check
    _
  $region35: #{_lambda_.24} parent=0 // pred_check_branch
    %420 = sbr.rel (0) target = $region37
  $region36: #{_lambda_.24} parent=0 // pred_region
    _
  $region37: #{_lambda_.24} parent=0 // pred_fallthru
    _

// kernel: _lambda_.27
$region0: #{_lambda_.27}
  #allocation0 [shape = 'u32[]', space=smem, size = 0x4, offset = 0x4, fixed_abs, tag = 'smem constant byte address 0x4 - core index']
  #allocation1 [shape = 'u32[144,128]{1,0:T(1,128)}', space=vmem, size = 0x12000, scoped, tag = 'internal scratch']
  #allocation2 [shape = 'f32[8,256]{1,0:T(8,128)}', space=vmem, size = 0x2000, scoped, tag = 'scratch operand']
  %s0 = inlined_call_operand.vmem [shape: bf16[8,640], index: 0, kind: input, shape index: {}]
  %s1 = inlined_call_operand.vmem [shape: bf16[640,256], index: 1, kind: input, shape index: {}]
  %s2 = inlined_call_operand.vmem [shape: f32[1,256], index: 2, kind: input, shape index: {}]
  %s3 = inlined_call_operand.vmem [shape: bf16[8,256], index: 3, kind: output, shape index: {0}]
  %s4 = inlined_call_operand.vmem [shape: f32[1,2,256], index: 4, kind: output, shape index: {1}]
  %5 = xla_tuple %s3, %s4
  %s6 = sld [smem:[#allocation0]]
  $region38: #{_lambda_.27} parent=0
    _
  %s8 = ssub.s32 1, %s6
  %s9 = scalar_select 0, %s8, %s6
  // Predicated region
  $region2: #{_lambda_.27} parent=0 // pred_check
    _
  $region3: #{_lambda_.27} parent=0 // pred_check_branch
    %11 = sbr.rel (0) target = $region5
  $region4: #{_lambda_.27} parent=0 // pred_region
    _
  $region5: #{_lambda_.27} parent=0 // pred_fallthru
    _
  // Predicated region
  $region6: #{_lambda_.27} parent=0 // pred_check
    _
  $region7: #{_lambda_.27} parent=0 // pred_check_branch
    %13 = sbr.rel (0) target = $region9
  $region8: #{_lambda_.27} parent=0 // pred_region
    _
  $region9: #{_lambda_.27} parent=0 // pred_fallthru
    _
  // Predicated region
  $region10: #{_lambda_.27} parent=0 // pred_check
    _
  $region11: #{_lambda_.27} parent=0 // pred_check_branch
    %15 = sbr.rel (0) target = $region13
  $region12: #{_lambda_.27} parent=0 // pred_region
    _
  $region13: #{_lambda_.27} parent=0 // pred_fallthru
    _
  %p17 = scmp.eq.s32.totalorder 0, 0
  // Predicated region
  $region14: #{_lambda_.27} parent=0 // pred_check
    %p18 = pneg %p17
  $region15: #{_lambda_.27} parent=0 // pred_check_branch
    %20 = sbr.rel (%p18) target = $region17
  $region16: #{_lambda_.27} parent=0 // pred_region
    %21 = vst [vmem:[#allocation2] sm:$0xff] 0.0
    %22 = vst [vmem:[#allocation2 + $0x8] sm:$0xff] 0.0
  $region17: #{_lambda_.27} parent=0 // pred_fallthru
    _
  %v23 = vld [vmem:[%s0] sm:$0xff]
  %v24 = vld [vmem:[%s0 + $0x8] sm:$0xff]
  %v25 = vld [vmem:[%s0 + $0x10] sm:$0xf]
  %v26 = vunpack.c.l.bf16 %v23
  %v27 = vunpack.c.h.bf16 %v23
  %v28 = vunpack.c.l.bf16 %v24
  %v29 = vunpack.c.h.bf16 %v24
  %v30 = vunpack.c.l.bf16 %v25
  %v31 = vmax.f32 %v26, 0.0
  %v32 = vmax.f32 %v27, 0.0
  %v33 = vmax.f32 %v28, 0.0
  %v34 = vmax.f32 %v29, 0.0
  %v35 = vmax.f32 %v30, 0.0
  %v36 = vpack.c.bf16 %v31, %v31
  %v37 = vpack.c.bf16 %v32, %v32
  %v38 = vpack.c.bf16 %v33, %v33
  %v39 = vpack.c.bf16 %v34, %v34
  %v40 = vpack.c.bf16 %v35, %v35
  %v41 = vld [vmem:[#allocation2] sm:$0xff]
  %v42 = vld [vmem:[#allocation2 + $0x8] sm:$0xff]
  %v43 = vld [vmem:[%s1] sm:$0xff]
  %v44 = vld [vmem:[%s1 + $0x8] sm:$0xff]
  %v45 = vld [vmem:[%s1 + $0x10] sm:$0xff]
  %v46 = vld [vmem:[%s1 + $0x18] sm:$0xff]
  %v47 = vld [vmem:[%s1 + $0x20] sm:$0xff]
  %v48 = vld [vmem:[%s1 + $0x28] sm:$0xff]
  %v49 = vld [vmem:[%s1 + $0x30] sm:$0xff]
  %v50 = vld [vmem:[%s1 + $0x38] sm:$0xff]
  %v51 = vld [vmem:[%s1 + $0x40] sm:$0xff]
  %v52 = vld [vmem:[%s1 + $0x48] sm:$0xff]
  %v53 = vld [vmem:[%s1 + $0x50] sm:$0xff]
  %v54 = vld [vmem:[%s1 + $0x58] sm:$0xff]
  %v55 = vld [vmem:[%s1 + $0x60] sm:$0xff]
  %v56 = vld [vmem:[%s1 + $0x68] sm:$0xff]
  %v57 = vld [vmem:[%s1 + $0x70] sm:$0xff]
  %v58 = vld [vmem:[%s1 + $0x78] sm:$0xff]
  %v59 = vld [vmem:[%s1 + $0x80] sm:$0xff]
  %v60 = vld [vmem:[%s1 + $0x88] sm:$0xff]
  %v61 = vld [vmem:[%s1 + $0x90] sm:$0xff]
  %v62 = vld [vmem:[%s1 + $0x98] sm:$0xff]
  %v63 = vld [vmem:[%s1 + $0xa0] sm:$0xff]
  %v64 = vld [vmem:[%s1 + $0xa8] sm:$0xff]
  %v65 = vld [vmem:[%s1 + $0xb0] sm:$0xff]
  %v66 = vld [vmem:[%s1 + $0xb8] sm:$0xff]
  %v67 = vld [vmem:[%s1 + $0xc0] sm:$0xff]
  %v68 = vld [vmem:[%s1 + $0xc8] sm:$0xff]
  %v69 = vld [vmem:[%s1 + $0xd0] sm:$0xff]
  %v70 = vld [vmem:[%s1 + $0xd8] sm:$0xff]
  %v71 = vld [vmem:[%s1 + $0xe0] sm:$0xff]
  %v72 = vld [vmem:[%s1 + $0xe8] sm:$0xff]
  %v73 = vld [vmem:[%s1 + $0xf0] sm:$0xff]
  %v74 = vld [vmem:[%s1 + $0xf8] sm:$0xff]
  %v75 = vld [vmem:[%s1 + $0x100] sm:$0xff]
  %v76 = vld [vmem:[%s1 + $0x108] sm:$0xff]
  %v77 = vld [vmem:[%s1 + $0x110] sm:$0xff]
  %v78 = vld [vmem:[%s1 + $0x118] sm:$0xff]
  %v79 = vld [vmem:[%s1 + $0x120] sm:$0xff]
  %v80 = vld [vmem:[%s1 + $0x128] sm:$0xff]
  %v81 = vld [vmem:[%s1 + $0x130] sm:$0xff]
  %v82 = vld [vmem:[%s1 + $0x138] sm:$0xff]
  %v83 = vld [vmem:[%s1 + $0x140] sm:$0xff]
  %v84 = vld [vmem:[%s1 + $0x148] sm:$0xff]
  %v85 = vld [vmem:[%s1 + $0x150] sm:$0xff]
  %v86 = vld [vmem:[%s1 + $0x158] sm:$0xff]
  %v87 = vld [vmem:[%s1 + $0x160] sm:$0xff]
  %v88 = vld [vmem:[%s1 + $0x168] sm:$0xff]
  %v89 = vld [vmem:[%s1 + $0x170] sm:$0xff]
  %v90 = vld [vmem:[%s1 + $0x178] sm:$0xff]
  %v91 = vld [vmem:[%s1 + $0x180] sm:$0xff]
  %v92 = vld [vmem:[%s1 + $0x188] sm:$0xff]
  %v93 = vld [vmem:[%s1 + $0x190] sm:$0xff]
  %v94 = vld [vmem:[%s1 + $0x198] sm:$0xff]
  %v95 = vld [vmem:[%s1 + $0x1a0] sm:$0xff]
  %v96 = vld [vmem:[%s1 + $0x1a8] sm:$0xff]
  %v97 = vld [vmem:[%s1 + $0x1b0] sm:$0xff]
  %v98 = vld [vmem:[%s1 + $0x1b8] sm:$0xff]
  %v99 = vld [vmem:[%s1 + $0x1c0] sm:$0xff]
  %v100 = vld [vmem:[%s1 + $0x1c8] sm:$0xff]
  %v101 = vld [vmem:[%s1 + $0x1d0] sm:$0xff]
  %v102 = vld [vmem:[%s1 + $0x1d8] sm:$0xff]
  %v103 = vld [vmem:[%s1 + $0x1e0] sm:$0xff]
  %v104 = vld [vmem:[%s1 + $0x1e8] sm:$0xff]
  %v105 = vld [vmem:[%s1 + $0x1f0] sm:$0xff]
  %v106 = vld [vmem:[%s1 + $0x1f8] sm:$0xff]
  %v107 = vld [vmem:[%s1 + $0x200] sm:$0xff]
  %v108 = vld [vmem:[%s1 + $0x208] sm:$0xff]
  %v109 = vld [vmem:[%s1 + $0x210] sm:$0xff]
  %v110 = vld [vmem:[%s1 + $0x218] sm:$0xff]
  %v111 = vld [vmem:[%s1 + $0x220] sm:$0xff]
  %v112 = vld [vmem:[%s1 + $0x228] sm:$0xff]
  %v113 = vld [vmem:[%s1 + $0x230] sm:$0xff]
  %v114 = vld [vmem:[%s1 + $0x238] sm:$0xff]
  %v115 = vld [vmem:[%s1 + $0x240] sm:$0xff]
  %v116 = vld [vmem:[%s1 + $0x248] sm:$0xff]
  %v117 = vld [vmem:[%s1 + $0x250] sm:$0xff]
  %v118 = vld [vmem:[%s1 + $0x258] sm:$0xff]
  %v119 = vld [vmem:[%s1 + $0x260] sm:$0xff]
  %v120 = vld [vmem:[%s1 + $0x268] sm:$0xff]
  %v121 = vld [vmem:[%s1 + $0x270] sm:$0xff]
  %v122 = vld [vmem:[%s1 + $0x278] sm:$0xff]
  %v203 = vunpack.c.l.b16 %v43
  %v204 = vunpack.c.h.b16 %v43
  %v205 = vunpack.c.l.b16 %v44
  %v206 = vunpack.c.h.b16 %v44
  %v207 = vunpack.c.l.b16 %v45
  %v208 = vunpack.c.h.b16 %v45
  %v209 = vunpack.c.l.b16 %v46
  %v210 = vunpack.c.h.b16 %v46
  %v211 = vunpack.c.l.b16 %v47
  %v212 = vunpack.c.h.b16 %v47
  %v213 = vunpack.c.l.b16 %v48
  %v214 = vunpack.c.h.b16 %v48
  %v215 = vunpack.c.l.b16 %v49
  %v216 = vunpack.c.h.b16 %v49
  %v217 = vunpack.c.l.b16 %v50
  %v218 = vunpack.c.h.b16 %v50
  %v219 = vunpack.c.l.b16 %v51
  %v220 = vunpack.c.h.b16 %v51
  %v221 = vunpack.c.l.b16 %v52
  %v222 = vunpack.c.h.b16 %v52
  %v223 = vunpack.c.l.b16 %v53
  %v224 = vunpack.c.h.b16 %v53
  %v225 = vunpack.c.l.b16 %v54
  %v226 = vunpack.c.h.b16 %v54
  %v227 = vunpack.c.l.b16 %v55
  %v228 = vunpack.c.h.b16 %v55
  %v229 = vunpack.c.l.b16 %v56
  %v230 = vunpack.c.h.b16 %v56
  %v231 = vunpack.c.l.b16 %v57
  %v232 = vunpack.c.h.b16 %v57
  %v233 = vunpack.c.l.b16 %v58
  %v234 = vunpack.c.h.b16 %v58
  %v235 = vunpack.c.l.b16 %v59
  %v236 = vunpack.c.h.b16 %v59
  %v237 = vunpack.c.l.b16 %v60
  %v238 = vunpack.c.h.b16 %v60
  %v239 = vunpack.c.l.b16 %v61
  %v240 = vunpack.c.h.b16 %v61
  %v241 = vunpack.c.l.b16 %v62
  %v242 = vunpack.c.h.b16 %v62
  %v243 = vunpack.c.l.b16 %v63
  %v244 = vunpack.c.h.b16 %v63
  %v245 = vunpack.c.l.b16 %v64
  %v246 = vunpack.c.h.b16 %v64
  %v247 = vunpack.c.l.b16 %v65
  %v248 = vunpack.c.h.b16 %v65
  %v249 = vunpack.c.l.b16 %v66
  %v250 = vunpack.c.h.b16 %v66
  %v251 = vunpack.c.l.b16 %v67
  %v252 = vunpack.c.h.b16 %v67
  %v253 = vunpack.c.l.b16 %v68
  %v254 = vunpack.c.h.b16 %v68
  %v255 = vunpack.c.l.b16 %v69
  %v256 = vunpack.c.h.b16 %v69
  %v257 = vunpack.c.l.b16 %v70
  %v258 = vunpack.c.h.b16 %v70
  %v259 = vunpack.c.l.b16 %v71
  %v260 = vunpack.c.h.b16 %v71
  %v261 = vunpack.c.l.b16 %v72
  %v262 = vunpack.c.h.b16 %v72
  %v263 = vunpack.c.l.b16 %v73
  %v264 = vunpack.c.h.b16 %v73
  %v265 = vunpack.c.l.b16 %v74
  %v266 = vunpack.c.h.b16 %v74
  %v267 = vunpack.c.l.b16 %v75
  %v268 = vunpack.c.h.b16 %v75
  %v269 = vunpack.c.l.b16 %v76
  %v270 = vunpack.c.h.b16 %v76
  %v271 = vunpack.c.l.b16 %v77
  %v272 = vunpack.c.h.b16 %v77
  %v273 = vunpack.c.l.b16 %v78
  %v274 = vunpack.c.h.b16 %v78
  %v275 = vunpack.c.l.b16 %v79
  %v276 = vunpack.c.h.b16 %v79
  %v277 = vunpack.c.l.b16 %v80
  %v278 = vunpack.c.h.b16 %v80
  %v279 = vunpack.c.l.b16 %v81
  %v280 = vunpack.c.h.b16 %v81
  %v281 = vunpack.c.l.b16 %v82
  %v282 = vunpack.c.h.b16 %v82
  %v283 = vunpack.c.l.b16 %v83
  %v284 = vunpack.c.h.b16 %v83
  %v285 = vunpack.c.l.b16 %v84
  %v286 = vunpack.c.h.b16 %v84
  %v287 = vunpack.c.l.b16 %v85
  %v288 = vunpack.c.h.b16 %v85
  %v289 = vunpack.c.l.b16 %v86
  %v290 = vunpack.c.h.b16 %v86
  %v291 = vunpack.c.l.b16 %v87
  %v292 = vunpack.c.h.b16 %v87
  %v293 = vunpack.c.l.b16 %v88
  %v294 = vunpack.c.h.b16 %v88
  %v295 = vunpack.c.l.b16 %v89
  %v296 = vunpack.c.h.b16 %v89
  %v297 = vunpack.c.l.b16 %v90
  %v298 = vunpack.c.h.b16 %v90
  %v299 = vunpack.c.l.b16 %v91
  %v300 = vunpack.c.h.b16 %v91
  %v301 = vunpack.c.l.b16 %v92
  %v302 = vunpack.c.h.b16 %v92
  %v303 = vunpack.c.l.b16 %v93
  %v304 = vunpack.c.h.b16 %v93
  %v305 = vunpack.c.l.b16 %v94
  %v306 = vunpack.c.h.b16 %v94
  %v307 = vunpack.c.l.b16 %v95
  %v308 = vunpack.c.h.b16 %v95
  %v309 = vunpack.c.l.b16 %v96
  %v310 = vunpack.c.h.b16 %v96
  %v311 = vunpack.c.l.b16 %v97
  %v312 = vunpack.c.h.b16 %v97
  %v313 = vunpack.c.l.b16 %v98
  %v314 = vunpack.c.h.b16 %v98
  %v315 = vunpack.c.l.b16 %v99
  %v316 = vunpack.c.h.b16 %v99
  %v317 = vunpack.c.l.b16 %v100
  %v318 = vunpack.c.h.b16 %v100
  %v319 = vunpack.c.l.b16 %v101
  %v320 = vunpack.c.h.b16 %v101
  %v321 = vunpack.c.l.b16 %v102
  %v322 = vunpack.c.h.b16 %v102
  %v323 = vunpack.c.l.b16 %v103
  %v324 = vunpack.c.h.b16 %v103
  %v325 = vunpack.c.l.b16 %v104
  %v326 = vunpack.c.h.b16 %v104
  %v327 = vunpack.c.l.b16 %v105
  %v328 = vunpack.c.h.b16 %v105
  %v329 = vunpack.c.l.b16 %v106
  %v330 = vunpack.c.h.b16 %v106
  %v331 = vunpack.c.l.b16 %v107
  %v332 = vunpack.c.h.b16 %v107
  %v333 = vunpack.c.l.b16 %v108
  %v334 = vunpack.c.h.b16 %v108
  %v335 = vunpack.c.l.b16 %v109
  %v336 = vunpack.c.h.b16 %v109
  %v337 = vunpack.c.l.b16 %v110
  %v338 = vunpack.c.h.b16 %v110
  %v339 = vunpack.c.l.b16 %v111
  %v340 = vunpack.c.h.b16 %v111
  %v341 = vunpack.c.l.b16 %v112
  %v342 = vunpack.c.h.b16 %v112
  %v343 = vunpack.c.l.b16 %v113
  %v344 = vunpack.c.h.b16 %v113
  %v345 = vunpack.c.l.b16 %v114
  %v346 = vunpack.c.h.b16 %v114
  %v347 = vunpack.c.l.b16 %v115
  %v348 = vunpack.c.h.b16 %v115
  %v349 = vunpack.c.l.b16 %v116
  %v350 = vunpack.c.h.b16 %v116
  %v351 = vunpack.c.l.b16 %v117
  %v352 = vunpack.c.h.b16 %v117
  %v353 = vunpack.c.l.b16 %v118
  %v354 = vunpack.c.h.b16 %v118
  %v355 = vunpack.c.l.b16 %v119
  %v356 = vunpack.c.h.b16 %v119
  %v357 = vunpack.c.l.b16 %v120
  %v358 = vunpack.c.h.b16 %v120
  %v359 = vunpack.c.l.b16 %v121
  %v360 = vunpack.c.h.b16 %v121
  %v361 = vunpack.c.l.b16 %v122
  %v362 = vunpack.c.h.b16 %v122
  %v363 = vpack.c.b16 %v205, %v203
  %v364 = vpack.c.b16 %v206, %v204
  %v365 = vpack.c.b16 %v209, %v207
  %v366 = vpack.c.b16 %v210, %v208
  %v367 = vpack.c.b16 %v213, %v211
  %v368 = vpack.c.b16 %v214, %v212
  %v369 = vpack.c.b16 %v217, %v215
  %v370 = vpack.c.b16 %v218, %v216
  %v371 = vpack.c.b16 %v221, %v219
  %v372 = vpack.c.b16 %v222, %v220
  %v373 = vpack.c.b16 %v225, %v223
  %v374 = vpack.c.b16 %v226, %v224
  %v375 = vpack.c.b16 %v229, %v227
  %v376 = vpack.c.b16 %v230, %v228
  %v377 = vpack.c.b16 %v233, %v231
  %v378 = vpack.c.b16 %v234, %v232
  %v379 = vpack.c.b16 %v237, %v235
  %v380 = vpack.c.b16 %v238, %v236
  %v381 = vpack.c.b16 %v241, %v239
  %v382 = vpack.c.b16 %v242, %v240
  %v383 = vpack.c.b16 %v245, %v243
  %v384 = vpack.c.b16 %v246, %v244
  %v385 = vpack.c.b16 %v249, %v247
  %v386 = vpack.c.b16 %v250, %v248
  %v387 = vpack.c.b16 %v253, %v251
  %v388 = vpack.c.b16 %v254, %v252
  %v389 = vpack.c.b16 %v257, %v255
  %v390 = vpack.c.b16 %v258, %v256
  %v391 = vpack.c.b16 %v261, %v259
  %v392 = vpack.c.b16 %v262, %v260
  %v393 = vpack.c.b16 %v265, %v263
  %v394 = vpack.c.b16 %v266, %v264
  %v395 = vpack.c.b16 %v269, %v267
  %v396 = vpack.c.b16 %v270, %v268
  %v397 = vpack.c.b16 %v273, %v271
  %v398 = vpack.c.b16 %v274, %v272
  %v399 = vpack.c.b16 %v277, %v275
  %v400 = vpack.c.b16 %v278, %v276
  %v401 = vpack.c.b16 %v281, %v279
  %v402 = vpack.c.b16 %v282, %v280
  %v403 = vpack.c.b16 %v285, %v283
  %v404 = vpack.c.b16 %v286, %v284
  %v405 = vpack.c.b16 %v289, %v287
  %v406 = vpack.c.b16 %v290, %v288
  %v407 = vpack.c.b16 %v293, %v291
  %v408 = vpack.c.b16 %v294, %v292
  %v409 = vpack.c.b16 %v297, %v295
  %v410 = vpack.c.b16 %v298, %v296
  %v411 = vpack.c.b16 %v301, %v299
  %v412 = vpack.c.b16 %v302, %v300
  %v413 = vpack.c.b16 %v305, %v303
  %v414 = vpack.c.b16 %v306, %v304
  %v415 = vpack.c.b16 %v309, %v307
  %v416 = vpack.c.b16 %v310, %v308
  %v417 = vpack.c.b16 %v313, %v311
  %v418 = vpack.c.b16 %v314, %v312
  %v419 = vpack.c.b16 %v317, %v315
  %v420 = vpack.c.b16 %v318, %v316
  %v421 = vpack.c.b16 %v321, %v319
  %v422 = vpack.c.b16 %v322, %v320
  %v423 = vpack.c.b16 %v325, %v323
  %v424 = vpack.c.b16 %v326, %v324
  %v425 = vpack.c.b16 %v329, %v327
  %v426 = vpack.c.b16 %v330, %v328
  %v427 = vpack.c.b16 %v333, %v331
  %v428 = vpack.c.b16 %v334, %v332
  %v429 = vpack.c.b16 %v337, %v335
  %v430 = vpack.c.b16 %v338, %v336
  %v431 = vpack.c.b16 %v341, %v339
  %v432 = vpack.c.b16 %v342, %v340
  %v433 = vpack.c.b16 %v345, %v343
  %v434 = vpack.c.b16 %v346, %v344
  %v435 = vpack.c.b16 %v349, %v347
  %v436 = vpack.c.b16 %v350, %v348
  %v437 = vpack.c.b16 %v353, %v351
  %v438 = vpack.c.b16 %v354, %v352
  %v439 = vpack.c.b16 %v357, %v355
  %v440 = vpack.c.b16 %v358, %v356
  %v441 = vpack.c.b16 %v361, %v359
  %v442 = vpack.c.b16 %v362, %v360
  %523 = vmatprep.subr.bf16.mxu0 %v378
  %524 = vmatpush1.bf16.msra.mxu0 %v377
  %525 = vmatprep.subr.bf16.mxu0 %v376
  %526 = vmatpush1.bf16.msra.mxu0 %v375
  %527 = vmatprep.subr.bf16.mxu0 %v374
  %528 = vmatpush1.bf16.msra.mxu0 %v373
  %529 = vmatprep.subr.bf16.mxu0 %v372
  %530 = vmatpush1.bf16.msra.mxu0 %v371
  %531 = vmatprep.subr.bf16.mxu0 %v370
  %532 = vmatpush1.bf16.msra.mxu0 %v369
  %533 = vmatprep.subr.bf16.mxu0 %v368
  %534 = vmatpush1.bf16.msra.mxu0 %v367
  %535 = vmatprep.subr.bf16.mxu0 %v366
  %536 = vmatpush1.bf16.msra.mxu0 %v365
  %537 = vmatprep.subr.bf16.mxu0 %v364
  %538 = vmatpush1.bf16.msra.mxu0 %v363
  %539 = vmatprep.subr.bf16.mxu0 %v394
  %540 = vmatpush2.bf16.msra.mxu0 %v393
  %541 = vmatprep.subr.bf16.mxu0 %v392
  %542 = vmatpush2.bf16.msra.mxu0 %v391
  %543 = vmatprep.subr.bf16.mxu0 %v390
  %544 = vmatpush2.bf16.msra.mxu0 %v389
  %545 = vmatprep.subr.bf16.mxu0 %v388
  %546 = vmatpush2.bf16.msra.mxu0 %v387
  %547 = vmatprep.subr.bf16.mxu0 %v386
  %548 = vmatpush2.bf16.msra.mxu0 %v385
  %549 = vmatprep.subr.bf16.mxu0 %v384
  %550 = vmatpush2.bf16.msra.mxu0 %v383
  %551 = vmatprep.subr.bf16.mxu0 %v382
  %552 = vmatpush2.bf16.msra.mxu0 %v381
  %553 = vmatprep.subr.bf16.mxu0 %v380
  %554 = vmatpush2.bf16.msra.mxu0 %v379
  %555 = vmatprep.mubr.bf16.mxu0 %v37
  %556 = vmatmul.mubr.bf16.gmra.mxu0 %v36
  %v557 = vpop.f32.mrf.mxu0
  %v558 = vadd.f32 0.0, %v557
  %v559 = vpop.f32.mrf.mxu0
  %v560 = vadd.f32 0.0, %v559
  %v561 = vpop.f32.mrf.mxu0
  %v562 = vpop.f32.mrf.mxu0
  %563 = vdwg.mxu0
  %564 = vmatprep.subr.bf16.mxu0 %v410
  %565 = vmatpush1.bf16.msra.mxu0 %v409
  %566 = vmatprep.subr.bf16.mxu0 %v408
  %567 = vmatpush1.bf16.msra.mxu0 %v407
  %568 = vmatprep.subr.bf16.mxu0 %v406
  %569 = vmatpush1.bf16.msra.mxu0 %v405
  %570 = vmatprep.subr.bf16.mxu0 %v404
  %571 = vmatpush1.bf16.msra.mxu0 %v403
  %572 = vmatprep.subr.bf16.mxu0 %v402
  %573 = vmatpush1.bf16.msra.mxu0 %v401
  %574 = vmatprep.subr.bf16.mxu0 %v400
  %575 = vmatpush1.bf16.msra.mxu0 %v399
  %576 = vmatprep.subr.bf16.mxu0 %v398
  %577 = vmatpush1.bf16.msra.mxu0 %v397
  %578 = vmatprep.subr.bf16.mxu0 %v396
  %579 = vmatpush1.bf16.msra.mxu0 %v395
  %580 = vmatprep.subr.bf16.mxu0 %v426
  %581 = vmatpush2.bf16.msra.mxu0 %v425
  %582 = vmatprep.subr.bf16.mxu0 %v424
  %583 = vmatpush2.bf16.msra.mxu0 %v423
  %584 = vmatprep.subr.bf16.mxu0 %v422
  %585 = vmatpush2.bf16.msra.mxu0 %v421
  %586 = vmatprep.subr.bf16.mxu0 %v420
  %587 = vmatpush2.bf16.msra.mxu0 %v419
  %588 = vmatprep.subr.bf16.mxu0 %v418
  %589 = vmatpush2.bf16.msra.mxu0 %v417
  %590 = vmatprep.subr.bf16.mxu0 %v416
  %591 = vmatpush2.bf16.msra.mxu0 %v415
  %592 = vmatprep.subr.bf16.mxu0 %v414
  %593 = vmatpush2.bf16.msra.mxu0 %v413
  %594 = vmatprep.subr.bf16.mxu0 %v412
  %595 = vmatpush2.bf16.msra.mxu0 %v411
  %596 = vmatprep.mubr.bf16.mxu0 %v39
  %597 = vmatmul.mubr.bf16.gmra.mxu0 %v38
  %v598 = vpop.f32.mrf.mxu0
  %v599 = vadd.f32 %v558, %v598
  %v600 = vpop.f32.mrf.mxu0
  %v601 = vadd.f32 %v560, %v600
  %v602 = vpop.f32.mrf.mxu0
  %v603 = vpop.f32.mrf.mxu0
  %604 = vdwg.mxu0
  %605 = vmatprep.subr.bf16.mxu0 %v442
  %606 = vmatpush1.bf16.msra.mxu0 %v441
  %607 = vmatprep.subr.bf16.mxu0 %v440
  %608 = vmatpush1.bf16.msra.mxu0 %v439
  %609 = vmatprep.subr.bf16.mxu0 %v438
  %610 = vmatpush1.bf16.msra.mxu0 %v437
  %611 = vmatprep.subr.bf16.mxu0 %v436
  %612 = vmatpush1.bf16.msra.mxu0 %v435
  %613 = vmatprep.subr.bf16.mxu0 %v434
  %614 = vmatpush1.bf16.msra.mxu0 %v433
  %615 = vmatprep.subr.bf16.mxu0 %v432
  %616 = vmatpush1.bf16.msra.mxu0 %v431
  %617 = vmatprep.subr.bf16.mxu0 %v430
  %618 = vmatpush1.bf16.msra.mxu0 %v429
  %619 = vmatprep.subr.bf16.mxu0 %v428
  %620 = vmatpush1.bf16.msra.mxu0 %v427
  %621 = vmatprep.subr.bf16.mxu0 0
  %622 = vmatpush2.bf16.msra.mxu0 0
  %623 = vmatprep.subr.bf16.mxu0 0
  %624 = vmatpush2.bf16.msra.mxu0 0
  %625 = vmatprep.subr.bf16.mxu0 0
  %626 = vmatpush2.bf16.msra.mxu0 0
  %627 = vmatprep.subr.bf16.mxu0 0
  %628 = vmatpush2.bf16.msra.mxu0 0
  %629 = vmatprep.subr.bf16.mxu0 0
  %630 = vmatpush2.bf16.msra.mxu0 0
  %631 = vmatprep.subr.bf16.mxu0 0
  %632 = vmatpush2.bf16.msra.mxu0 0
  %633 = vmatprep.subr.bf16.mxu0 0
  %634 = vmatpush2.bf16.msra.mxu0 0
  %635 = vmatprep.subr.bf16.mxu0 0
  %636 = vmatpush2.bf16.msra.mxu0 0
  %637 = vmatprep.mubr.bf16.mxu0 0
  %638 = vmatmul.mubr.bf16.gmra.mxu0 %v40
  %v639 = vpop.f32.mrf.mxu0
  %v640 = vadd.f32 %v599, %v639
  %v641 = vpop.f32.mrf.mxu0
  %v642 = vadd.f32 %v601, %v641
  %v643 = vpop.f32.mrf.mxu0
  %v644 = vpop.f32.mrf.mxu0
  %645 = vdwg.mxu0
  %v646 = vadd.f32 %v41, %v640
  %v647 = vadd.f32 %v42, %v642
  %648 = vst [vmem:[#allocation2] sm:$0xff] %v646
  %649 = vst [vmem:[#allocation2 + $0x8] sm:$0xff] %v647
  // Predicated region
  $region18: #{_lambda_.27} parent=0 // pred_check
    %p650 = pneg %p17
  $region19: #{_lambda_.27} parent=0 // pred_check_branch
    %652 = sbr.rel (%p650) target = $region21
  $region20: #{_lambda_.27} parent=0 // pred_region
    %v653 = vld [vmem:[#allocation2] sm:$0xff]
    %v654 = vld [vmem:[#allocation2 + $0x8] sm:$0xff]
    %v655 = vld [vmem:[%s2] sm:$0x3]
    %v657 = vlaneseq
    %v658 = vshrl.u32 %v657, 7
    %v659 = vsub.s32 0, %v658
    %v660 = vrot.slane %v655, %v659
    %v661 = vlaneseq
    %v662 = vshrl.u32 %v661, 7
    %v663 = vsub.s32 1, %v662
    %v664 = vrot.slane %v655, %v663
    %v667 = vadd.f32 %v653, %v660
    %v668 = vadd.f32 %v654, %v664
    %v669 = vpack.c.bf16 %v667, %v667
    %v670 = vpack.c.bf16 %v668, %v668
    %v673 = vunpack.c.l.b16 %v669
    %v674 = vunpack.c.l.b16 %v670
    %v675 = vpack.c.b16 %v674, %v673
    %677 = vst [vmem:[%s3] sm:$0xff] %v675
    %v678 = vrot.slane %v667, 4
    %v679 = vadd.f32 %v667, %v678
    %v680 = vrot.slane %v679, 2
    %v681 = vadd.f32 %v679, %v680
    %v682 = vrot.slane %v681, 1
    %v683 = vadd.f32 %v681, %v682
    %v684 = vrot.slane %v668, 4
    %v685 = vadd.f32 %v668, %v684
    %v686 = vrot.slane %v685, 2
    %v687 = vadd.f32 %v685, %v686
    %v688 = vrot.slane %v687, 1
    %v689 = vadd.f32 %v687, %v688
    %v690 = vmul.f32 %v667, %v667
    %v691 = vmul.f32 %v668, %v668
    %v692 = vrot.slane %v690, 4
    %v693 = vadd.f32 %v690, %v692
    %v694 = vrot.slane %v693, 2
    %v695 = vadd.f32 %v693, %v694
    %v696 = vrot.slane %v695, 1
    %v697 = vadd.f32 %v695, %v696
    %v698 = vrot.slane %v691, 4
    %v699 = vadd.f32 %v691, %v698
    %v700 = vrot.slane %v699, 2
    %v701 = vadd.f32 %v699, %v700
    %v702 = vrot.slane %v701, 1
    %v703 = vadd.f32 %v701, %v702
    %vm704 = vcmask 1040384
    %v705 = vsel %vm704, %v683, %v697
    %v706 = vsel %vm704, %v689, %v703
    %v709 = vcombine.low %v705, %v706
    %v711 = vunpack.c.l.s4 1983009808
    %v712 = vunpack.c.0.s8 %v711
    %v713 = vlaneseq
    %v714 = vshrl.u32 %v713, 7
    %v715 = vsub.s32 %v712, %v714
    %v716 = vrot.slane %v709, %v715
    %718 = vst [vmem:[%s4] sm:$0xf] %v716
  $region21: #{_lambda_.27} parent=0 // pred_fallthru
    _
  // Predicated region
  $region22: #{_lambda_.27} parent=0 // pred_check
    _
  $region23: #{_lambda_.27} parent=0 // pred_check_branch
    %720 = sbr.rel (0) target = $region25
  $region24: #{_lambda_.27} parent=0 // pred_region
    _
  $region25: #{_lambda_.27} parent=0 // pred_fallthru
    _
  // Predicated region
  $region26: #{_lambda_.27} parent=0 // pred_check
    _
  $region27: #{_lambda_.27} parent=0 // pred_check_branch
    %722 = sbr.rel (0) target = $region29
  $region28: #{_lambda_.27} parent=0 // pred_region
    _
  $region29: #{_lambda_.27} parent=0 // pred_fallthru
    _
  // Predicated region
  $region30: #{_lambda_.27} parent=0 // pred_check
    _
  $region31: #{_lambda_.27} parent=0 // pred_check_branch
    %724 = sbr.rel (0) target = $region33
  $region32: #{_lambda_.27} parent=0 // pred_region
    _
  $region33: #{_lambda_.27} parent=0 // pred_fallthru
    _
  // Predicated region
  $region34: #{_lambda_.27} parent=0 // pred_check
    _
  $region35: #{_lambda_.27} parent=0 // pred_check_branch
    %726 = sbr.rel (0) target = $region37
  $region36: #{_lambda_.27} parent=0 // pred_region
    _
  $region37: #{_lambda_.27} parent=0 // pred_fallthru
    _

// kernel: _lambda_.28
$region0: #{_lambda_.28}
  #allocation0 [shape = 'u32[]', space=smem, size = 0x4, offset = 0x4, fixed_abs, tag = 'smem constant byte address 0x4 - core index']
  #allocation1 [shape = 'u32[144,128]{1,0:T(1,128)}', space=vmem, size = 0x12000, scoped, tag = 'internal scratch']
  %s0 = inlined_call_operand.vmem [shape: bf16[8,256], index: 0, kind: input, shape index: {}]
  %s1 = inlined_call_operand.vmem [shape: f32[1,256], index: 1, kind: input, shape index: {}]
  %s2 = inlined_call_operand.vmem [shape: f32[1,256], index: 2, kind: input, shape index: {}]
  %s3 = inlined_call_operand.vmem [shape: bf16[8,256], index: 3, kind: output, shape index: {}]
  %s4 = sld [smem:[#allocation0]]
  $region22: #{_lambda_.28} parent=0
    _
  %s6 = ssub.s32 1, %s4
  %s7 = scalar_select 0, %s6, %s4
  // Predicated region
  $region2: #{_lambda_.28} parent=0 // pred_check
    _
  $region3: #{_lambda_.28} parent=0 // pred_check_branch
    %9 = sbr.rel (0) target = $region5
  $region4: #{_lambda_.28} parent=0 // pred_region
    _
  $region5: #{_lambda_.28} parent=0 // pred_fallthru
    _
  // Predicated region
  $region6: #{_lambda_.28} parent=0 // pred_check
    _
  $region7: #{_lambda_.28} parent=0 // pred_check_branch
    %11 = sbr.rel (0) target = $region9
  $region8: #{_lambda_.28} parent=0 // pred_region
    _
  $region9: #{_lambda_.28} parent=0 // pred_fallthru
    _
  // Predicated region
  $region10: #{_lambda_.28} parent=0 // pred_check
    _
  $region11: #{_lambda_.28} parent=0 // pred_check_branch
    %13 = sbr.rel (0) target = $region13
  $region12: #{_lambda_.28} parent=0 // pred_region
    _
  $region13: #{_lambda_.28} parent=0 // pred_fallthru
    _
  %v14 = vld [vmem:[%s0] sm:$0xff]
  %v15 = vunpack.c.l.bf16 %v14
  %v16 = vunpack.c.h.bf16 %v14
  %v17 = vld [vmem:[%s1] sm:$0x3]
  %v19 = vlaneseq
  %v20 = vshrl.u32 %v19, 7
  %v21 = vsub.s32 0, %v20
  %v22 = vrot.slane %v17, %v21
  %v23 = vlaneseq
  %v24 = vshrl.u32 %v23, 7
  %v25 = vsub.s32 1, %v24
  %v26 = vrot.slane %v17, %v25
  %v29 = vmul.f32 %v15, %v22
  %v30 = vmul.f32 %v16, %v26
  %v31 = vld [vmem:[%s2] sm:$0x3]
  %v33 = vlaneseq
  %v34 = vshrl.u32 %v33, 7
  %v35 = vsub.s32 0, %v34
  %v36 = vrot.slane %v31, %v35
  %v37 = vlaneseq
  %v38 = vshrl.u32 %v37, 7
  %v39 = vsub.s32 1, %v38
  %v40 = vrot.slane %v31, %v39
  %v43 = vadd.f32 %v29, %v36
  %v44 = vadd.f32 %v30, %v40
  %v45 = vpack.c.bf16 %v43, %v43
  %v46 = vpack.c.bf16 %v44, %v44
  %v49 = vunpack.c.l.b16 %v45
  %v50 = vunpack.c.l.b16 %v46
  %v51 = vpack.c.b16 %v50, %v49
  %53 = vst [vmem:[%s3] sm:$0xff] %v51
  // Predicated region
  $region14: #{_lambda_.28} parent=0 // pred_check
    _
  $region15: #{_lambda_.28} parent=0 // pred_check_branch
    %55 = sbr.rel (0) target = $region17
  $region16: #{_lambda_.28} parent=0 // pred_region
    _
  $region17: #{_lambda_.28} parent=0 // pred_fallthru
    _
  // Predicated region
  $region18: #{_lambda_.28} parent=0 // pred_check
    _
  $region19: #{_lambda_.28} parent=0 // pred_check_branch
    %57 = sbr.rel (0) target = $region21
  $region20: #{_lambda_.28} parent=0 // pred_region
    _
  $region21: #{_lambda_.28} parent=0 // pred_fallthru
    _

// kernel: _lambda_.26
$region0: #{_lambda_.26}
  #allocation0 [shape = 'u32[]', space=smem, size = 0x4, offset = 0x4, fixed_abs, tag = 'smem constant byte address 0x4 - core index']
  #allocation1 [shape = 'u32[144,128]{1,0:T(1,128)}', space=vmem, size = 0x12000, scoped, tag = 'internal scratch']
  #allocation2 [shape = 'f32[8,128]{1,0:T(8,128)}', space=vmem, size = 0x1000, scoped, tag = 'scratch operand']
  %s0 = inlined_call_operand.vmem [shape: bf16[8,1024], index: 0, kind: input, shape index: {}]
  %s1 = inlined_call_operand.vmem [shape: bf16[1024,128], index: 1, kind: input, shape index: {}]
  %s2 = inlined_call_operand.vmem [shape: f32[1,128], index: 2, kind: input, shape index: {}]
  %s3 = inlined_call_operand.vmem [shape: bf16[8,128], index: 3, kind: output, shape index: {}]
  %s4 = sld [smem:[#allocation0]]
  $region30: #{_lambda_.26} parent=0
    _
  %s6 = ssub.s32 1, %s4
  %s7 = scalar_select 0, %s6, %s4
  // Predicated region
  $region2: #{_lambda_.26} parent=0 // pred_check
    _
  $region3: #{_lambda_.26} parent=0 // pred_check_branch
    %9 = sbr.rel (0) target = $region5
  $region4: #{_lambda_.26} parent=0 // pred_region
    _
  $region5: #{_lambda_.26} parent=0 // pred_fallthru
    _
  // Predicated region
  $region6: #{_lambda_.26} parent=0 // pred_check
    _
  $region7: #{_lambda_.26} parent=0 // pred_check_branch
    %11 = sbr.rel (0) target = $region9
  $region8: #{_lambda_.26} parent=0 // pred_region
    _
  $region9: #{_lambda_.26} parent=0 // pred_fallthru
    _
  // Predicated region
  $region10: #{_lambda_.26} parent=0 // pred_check
    _
  $region11: #{_lambda_.26} parent=0 // pred_check_branch
    %13 = sbr.rel (0) target = $region13
  $region12: #{_lambda_.26} parent=0 // pred_region
    _
  $region13: #{_lambda_.26} parent=0 // pred_fallthru
    _
  %p15 = scmp.eq.s32.totalorder 0, 0
  // Predicated region
  $region14: #{_lambda_.26} parent=0 // pred_check
    %p16 = pneg %p15
  $region15: #{_lambda_.26} parent=0 // pred_check_branch
    %18 = sbr.rel (%p16) target = $region17
  $region16: #{_lambda_.26} parent=0 // pred_region
    %19 = vst [vmem:[#allocation2] sm:$0xff] 0.0
  $region17: #{_lambda_.26} parent=0 // pred_fallthru
    _
  %v20 = vld [vmem:[%s0] sm:$0xff]
  %v21 = vld [vmem:[%s0 + $0x8] sm:$0xff]
  %v22 = vld [vmem:[%s0 + $0x10] sm:$0xff]
  %v23 = vld [vmem:[%s0 + $0x18] sm:$0xff]
  %v24 = vunpack.c.l.bf16 %v20
  %v25 = vunpack.c.h.bf16 %v20
  %v26 = vunpack.c.l.bf16 %v21
  %v27 = vunpack.c.h.bf16 %v21
  %v28 = vunpack.c.l.bf16 %v22
  %v29 = vunpack.c.h.bf16 %v22
  %v30 = vunpack.c.l.bf16 %v23
  %v31 = vunpack.c.h.bf16 %v23
  %vm32 = vcmp.gt.f32.partialorder %v24, 0.0
  %vm33 = vcmp.gt.f32.partialorder %v25, 0.0
  %vm34 = vcmp.gt.f32.partialorder %v26, 0.0
  %vm35 = vcmp.gt.f32.partialorder %v27, 0.0
  %vm36 = vcmp.gt.f32.partialorder %v28, 0.0
  %vm37 = vcmp.gt.f32.partialorder %v29, 0.0
  %vm38 = vcmp.gt.f32.partialorder %v30, 0.0
  %vm39 = vcmp.gt.f32.partialorder %v31, 0.0
  %v40 = vmul.f32 %v24, 0.2
  %v41 = vmul.f32 %v25, 0.2
  %v42 = vmul.f32 %v26, 0.2
  %v43 = vmul.f32 %v27, 0.2
  %v44 = vmul.f32 %v28, 0.2
  %v45 = vmul.f32 %v29, 0.2
  %v46 = vmul.f32 %v30, 0.2
  %v47 = vmul.f32 %v31, 0.2
  %v48 = vsel %vm32, %v24, %v40
  %v49 = vsel %vm33, %v25, %v41
  %v50 = vsel %vm34, %v26, %v42
  %v51 = vsel %vm35, %v27, %v43
  %v52 = vsel %vm36, %v28, %v44
  %v53 = vsel %vm37, %v29, %v45
  %v54 = vsel %vm38, %v30, %v46
  %v55 = vsel %vm39, %v31, %v47
  %v56 = vpack.c.bf16 %v48, %v48
  %v57 = vpack.c.bf16 %v49, %v49
  %v58 = vpack.c.bf16 %v50, %v50
  %v59 = vpack.c.bf16 %v51, %v51
  %v60 = vpack.c.bf16 %v52, %v52
  %v61 = vpack.c.bf16 %v53, %v53
  %v62 = vpack.c.bf16 %v54, %v54
  %v63 = vpack.c.bf16 %v55, %v55
  %v64 = vld [vmem:[#allocation2] sm:$0xff]
  %v65 = vld [vmem:[%s1] sm:$0xf]
  %v66 = vld [vmem:[%s1 + $0x4] sm:$0xf]
  %v67 = vld [vmem:[%s1 + $0x8] sm:$0xf]
  %v68 = vld [vmem:[%s1 + $0xc] sm:$0xf]
  %v69 = vld [vmem:[%s1 + $0x10] sm:$0xf]
  %v70 = vld [vmem:[%s1 + $0x14] sm:$0xf]
  %v71 = vld [vmem:[%s1 + $0x18] sm:$0xf]
  %v72 = vld [vmem:[%s1 + $0x1c] sm:$0xf]
  %v73 = vld [vmem:[%s1 + $0x20] sm:$0xf]
  %v74 = vld [vmem:[%s1 + $0x24] sm:$0xf]
  %v75 = vld [vmem:[%s1 + $0x28] sm:$0xf]
  %v76 = vld [vmem:[%s1 + $0x2c] sm:$0xf]
  %v77 = vld [vmem:[%s1 + $0x30] sm:$0xf]
  %v78 = vld [vmem:[%s1 + $0x34] sm:$0xf]
  %v79 = vld [vmem:[%s1 + $0x38] sm:$0xf]
  %v80 = vld [vmem:[%s1 + $0x3c] sm:$0xf]
  %v81 = vld [vmem:[%s1 + $0x40] sm:$0xf]
  %v82 = vld [vmem:[%s1 + $0x44] sm:$0xf]
  %v83 = vld [vmem:[%s1 + $0x48] sm:$0xf]
  %v84 = vld [vmem:[%s1 + $0x4c] sm:$0xf]
  %v85 = vld [vmem:[%s1 + $0x50] sm:$0xf]
  %v86 = vld [vmem:[%s1 + $0x54] sm:$0xf]
  %v87 = vld [vmem:[%s1 + $0x58] sm:$0xf]
  %v88 = vld [vmem:[%s1 + $0x5c] sm:$0xf]
  %v89 = vld [vmem:[%s1 + $0x60] sm:$0xf]
  %v90 = vld [vmem:[%s1 + $0x64] sm:$0xf]
  %v91 = vld [vmem:[%s1 + $0x68] sm:$0xf]
  %v92 = vld [vmem:[%s1 + $0x6c] sm:$0xf]
  %v93 = vld [vmem:[%s1 + $0x70] sm:$0xf]
  %v94 = vld [vmem:[%s1 + $0x74] sm:$0xf]
  %v95 = vld [vmem:[%s1 + $0x78] sm:$0xf]
  %v96 = vld [vmem:[%s1 + $0x7c] sm:$0xf]
  %v97 = vld [vmem:[%s1 + $0x80] sm:$0xf]
  %v98 = vld [vmem:[%s1 + $0x84] sm:$0xf]
  %v99 = vld [vmem:[%s1 + $0x88] sm:$0xf]
  %v100 = vld [vmem:[%s1 + $0x8c] sm:$0xf]
  %v101 = vld [vmem:[%s1 + $0x90] sm:$0xf]
  %v102 = vld [vmem:[%s1 + $0x94] sm:$0xf]
  %v103 = vld [vmem:[%s1 + $0x98] sm:$0xf]
  %v104 = vld [vmem:[%s1 + $0x9c] sm:$0xf]
  %v105 = vld [vmem:[%s1 + $0xa0] sm:$0xf]
  %v106 = vld [vmem:[%s1 + $0xa4] sm:$0xf]
  %v107 = vld [vmem:[%s1 + $0xa8] sm:$0xf]
  %v108 = vld [vmem:[%s1 + $0xac] sm:$0xf]
  %v109 = vld [vmem:[%s1 + $0xb0] sm:$0xf]
  %v110 = vld [vmem:[%s1 + $0xb4] sm:$0xf]
  %v111 = vld [vmem:[%s1 + $0xb8] sm:$0xf]
  %v112 = vld [vmem:[%s1 + $0xbc] sm:$0xf]
  %v113 = vld [vmem:[%s1 + $0xc0] sm:$0xf]
  %v114 = vld [vmem:[%s1 + $0xc4] sm:$0xf]
  %v115 = vld [vmem:[%s1 + $0xc8] sm:$0xf]
  %v116 = vld [vmem:[%s1 + $0xcc] sm:$0xf]
  %v117 = vld [vmem:[%s1 + $0xd0] sm:$0xf]
  %v118 = vld [vmem:[%s1 + $0xd4] sm:$0xf]
  %v119 = vld [vmem:[%s1 + $0xd8] sm:$0xf]
  %v120 = vld [vmem:[%s1 + $0xdc] sm:$0xf]
  %v121 = vld [vmem:[%s1 + $0xe0] sm:$0xf]
  %v122 = vld [vmem:[%s1 + $0xe4] sm:$0xf]
  %v123 = vld [vmem:[%s1 + $0xe8] sm:$0xf]
  %v124 = vld [vmem:[%s1 + $0xec] sm:$0xf]
  %v125 = vld [vmem:[%s1 + $0xf0] sm:$0xf]
  %v126 = vld [vmem:[%s1 + $0xf4] sm:$0xf]
  %v127 = vld [vmem:[%s1 + $0xf8] sm:$0xf]
  %v128 = vld [vmem:[%s1 + $0xfc] sm:$0xf]
  %v129 = vld [vmem:[%s1 + $0x100] sm:$0xf]
  %v130 = vld [vmem:[%s1 + $0x104] sm:$0xf]
  %v131 = vld [vmem:[%s1 + $0x108] sm:$0xf]
  %v132 = vld [vmem:[%s1 + $0x10c] sm:$0xf]
  %v133 = vld [vmem:[%s1 + $0x110] sm:$0xf]
  %v134 = vld [vmem:[%s1 + $0x114] sm:$0xf]
  %v135 = vld [vmem:[%s1 + $0x118] sm:$0xf]
  %v136 = vld [vmem:[%s1 + $0x11c] sm:$0xf]
  %v137 = vld [vmem:[%s1 + $0x120] sm:$0xf]
  %v138 = vld [vmem:[%s1 + $0x124] sm:$0xf]
  %v139 = vld [vmem:[%s1 + $0x128] sm:$0xf]
  %v140 = vld [vmem:[%s1 + $0x12c] sm:$0xf]
  %v141 = vld [vmem:[%s1 + $0x130] sm:$0xf]
  %v142 = vld [vmem:[%s1 + $0x134] sm:$0xf]
  %v143 = vld [vmem:[%s1 + $0x138] sm:$0xf]
  %v144 = vld [vmem:[%s1 + $0x13c] sm:$0xf]
  %v145 = vld [vmem:[%s1 + $0x140] sm:$0xf]
  %v146 = vld [vmem:[%s1 + $0x144] sm:$0xf]
  %v147 = vld [vmem:[%s1 + $0x148] sm:$0xf]
  %v148 = vld [vmem:[%s1 + $0x14c] sm:$0xf]
  %v149 = vld [vmem:[%s1 + $0x150] sm:$0xf]
  %v150 = vld [vmem:[%s1 + $0x154] sm:$0xf]
  %v151 = vld [vmem:[%s1 + $0x158] sm:$0xf]
  %v152 = vld [vmem:[%s1 + $0x15c] sm:$0xf]
  %v153 = vld [vmem:[%s1 + $0x160] sm:$0xf]
  %v154 = vld [vmem:[%s1 + $0x164] sm:$0xf]
  %v155 = vld [vmem:[%s1 + $0x168] sm:$0xf]
  %v156 = vld [vmem:[%s1 + $0x16c] sm:$0xf]
  %v157 = vld [vmem:[%s1 + $0x170] sm:$0xf]
  %v158 = vld [vmem:[%s1 + $0x174] sm:$0xf]
  %v159 = vld [vmem:[%s1 + $0x178] sm:$0xf]
  %v160 = vld [vmem:[%s1 + $0x17c] sm:$0xf]
  %v161 = vld [vmem:[%s1 + $0x180] sm:$0xf]
  %v162 = vld [vmem:[%s1 + $0x184] sm:$0xf]
  %v163 = vld [vmem:[%s1 + $0x188] sm:$0xf]
  %v164 = vld [vmem:[%s1 + $0x18c] sm:$0xf]
  %v165 = vld [vmem:[%s1 + $0x190] sm:$0xf]
  %v166 = vld [vmem:[%s1 + $0x194] sm:$0xf]
  %v167 = vld [vmem:[%s1 + $0x198] sm:$0xf]
  %v168 = vld [vmem:[%s1 + $0x19c] sm:$0xf]
  %v169 = vld [vmem:[%s1 + $0x1a0] sm:$0xf]
  %v170 = vld [vmem:[%s1 + $0x1a4] sm:$0xf]
  %v171 = vld [vmem:[%s1 + $0x1a8] sm:$0xf]
  %v172 = vld [vmem:[%s1 + $0x1ac] sm:$0xf]
  %v173 = vld [vmem:[%s1 + $0x1b0] sm:$0xf]
  %v174 = vld [vmem:[%s1 + $0x1b4] sm:$0xf]
  %v175 = vld [vmem:[%s1 + $0x1b8] sm:$0xf]
  %v176 = vld [vmem:[%s1 + $0x1bc] sm:$0xf]
  %v177 = vld [vmem:[%s1 + $0x1c0] sm:$0xf]
  %v178 = vld [vmem:[%s1 + $0x1c4] sm:$0xf]
  %v179 = vld [vmem:[%s1 + $0x1c8] sm:$0xf]
  %v180 = vld [vmem:[%s1 + $0x1cc] sm:$0xf]
  %v181 = vld [vmem:[%s1 + $0x1d0] sm:$0xf]
  %v182 = vld [vmem:[%s1 + $0x1d4] sm:$0xf]
  %v183 = vld [vmem:[%s1 + $0x1d8] sm:$0xf]
  %v184 = vld [vmem:[%s1 + $0x1dc] sm:$0xf]
  %v185 = vld [vmem:[%s1 + $0x1e0] sm:$0xf]
  %v186 = vld [vmem:[%s1 + $0x1e4] sm:$0xf]
  %v187 = vld [vmem:[%s1 + $0x1e8] sm:$0xf]
  %v188 = vld [vmem:[%s1 + $0x1ec] sm:$0xf]
  %v189 = vld [vmem:[%s1 + $0x1f0] sm:$0xf]
  %v190 = vld [vmem:[%s1 + $0x1f4] sm:$0xf]
  %v191 = vld [vmem:[%s1 + $0x1f8] sm:$0xf]
  %v192 = vld [vmem:[%s1 + $0x1fc] sm:$0xf]
  %v321 = vunpack.c.l.b16 %v65
  %v322 = vunpack.c.l.b16 %v66
  %v323 = vunpack.c.l.b16 %v67
  %v324 = vunpack.c.l.b16 %v68
  %v325 = vunpack.c.l.b16 %v69
  %v326 = vunpack.c.l.b16 %v70
  %v327 = vunpack.c.l.b16 %v71
  %v328 = vunpack.c.l.b16 %v72
  %v329 = vunpack.c.l.b16 %v73
  %v330 = vunpack.c.l.b16 %v74
  %v331 = vunpack.c.l.b16 %v75
  %v332 = vunpack.c.l.b16 %v76
  %v333 = vunpack.c.l.b16 %v77
  %v334 = vunpack.c.l.b16 %v78
  %v335 = vunpack.c.l.b16 %v79
  %v336 = vunpack.c.l.b16 %v80
  %v337 = vunpack.c.l.b16 %v81
  %v338 = vunpack.c.l.b16 %v82
  %v339 = vunpack.c.l.b16 %v83
  %v340 = vunpack.c.l.b16 %v84
  %v341 = vunpack.c.l.b16 %v85
  %v342 = vunpack.c.l.b16 %v86
  %v343 = vunpack.c.l.b16 %v87
  %v344 = vunpack.c.l.b16 %v88
  %v345 = vunpack.c.l.b16 %v89
  %v346 = vunpack.c.l.b16 %v90
  %v347 = vunpack.c.l.b16 %v91
  %v348 = vunpack.c.l.b16 %v92
  %v349 = vunpack.c.l.b16 %v93
  %v350 = vunpack.c.l.b16 %v94
  %v351 = vunpack.c.l.b16 %v95
  %v352 = vunpack.c.l.b16 %v96
  %v353 = vunpack.c.l.b16 %v97
  %v354 = vunpack.c.l.b16 %v98
  %v355 = vunpack.c.l.b16 %v99
  %v356 = vunpack.c.l.b16 %v100
  %v357 = vunpack.c.l.b16 %v101
  %v358 = vunpack.c.l.b16 %v102
  %v359 = vunpack.c.l.b16 %v103
  %v360 = vunpack.c.l.b16 %v104
  %v361 = vunpack.c.l.b16 %v105
  %v362 = vunpack.c.l.b16 %v106
  %v363 = vunpack.c.l.b16 %v107
  %v364 = vunpack.c.l.b16 %v108
  %v365 = vunpack.c.l.b16 %v109
  %v366 = vunpack.c.l.b16 %v110
  %v367 = vunpack.c.l.b16 %v111
  %v368 = vunpack.c.l.b16 %v112
  %v369 = vunpack.c.l.b16 %v113
  %v370 = vunpack.c.l.b16 %v114
  %v371 = vunpack.c.l.b16 %v115
  %v372 = vunpack.c.l.b16 %v116
  %v373 = vunpack.c.l.b16 %v117
  %v374 = vunpack.c.l.b16 %v118
  %v375 = vunpack.c.l.b16 %v119
  %v376 = vunpack.c.l.b16 %v120
  %v377 = vunpack.c.l.b16 %v121
  %v378 = vunpack.c.l.b16 %v122
  %v379 = vunpack.c.l.b16 %v123
  %v380 = vunpack.c.l.b16 %v124
  %v381 = vunpack.c.l.b16 %v125
  %v382 = vunpack.c.l.b16 %v126
  %v383 = vunpack.c.l.b16 %v127
  %v384 = vunpack.c.l.b16 %v128
  %v385 = vunpack.c.l.b16 %v129
  %v386 = vunpack.c.l.b16 %v130
  %v387 = vunpack.c.l.b16 %v131
  %v388 = vunpack.c.l.b16 %v132
  %v389 = vunpack.c.l.b16 %v133
  %v390 = vunpack.c.l.b16 %v134
  %v391 = vunpack.c.l.b16 %v135
  %v392 = vunpack.c.l.b16 %v136
  %v393 = vunpack.c.l.b16 %v137
  %v394 = vunpack.c.l.b16 %v138
  %v395 = vunpack.c.l.b16 %v139
  %v396 = vunpack.c.l.b16 %v140
  %v397 = vunpack.c.l.b16 %v141
  %v398 = vunpack.c.l.b16 %v142
  %v399 = vunpack.c.l.b16 %v143
  %v400 = vunpack.c.l.b16 %v144
  %v401 = vunpack.c.l.b16 %v145
  %v402 = vunpack.c.l.b16 %v146
  %v403 = vunpack.c.l.b16 %v147
  %v404 = vunpack.c.l.b16 %v148
  %v405 = vunpack.c.l.b16 %v149
  %v406 = vunpack.c.l.b16 %v150
  %v407 = vunpack.c.l.b16 %v151
  %v408 = vunpack.c.l.b16 %v152
  %v409 = vunpack.c.l.b16 %v153
  %v410 = vunpack.c.l.b16 %v154
  %v411 = vunpack.c.l.b16 %v155
  %v412 = vunpack.c.l.b16 %v156
  %v413 = vunpack.c.l.b16 %v157
  %v414 = vunpack.c.l.b16 %v158
  %v415 = vunpack.c.l.b16 %v159
  %v416 = vunpack.c.l.b16 %v160
  %v417 = vunpack.c.l.b16 %v161
  %v418 = vunpack.c.l.b16 %v162
  %v419 = vunpack.c.l.b16 %v163
  %v420 = vunpack.c.l.b16 %v164
  %v421 = vunpack.c.l.b16 %v165
  %v422 = vunpack.c.l.b16 %v166
  %v423 = vunpack.c.l.b16 %v167
  %v424 = vunpack.c.l.b16 %v168
  %v425 = vunpack.c.l.b16 %v169
  %v426 = vunpack.c.l.b16 %v170
  %v427 = vunpack.c.l.b16 %v171
  %v428 = vunpack.c.l.b16 %v172
  %v429 = vunpack.c.l.b16 %v173
  %v430 = vunpack.c.l.b16 %v174
  %v431 = vunpack.c.l.b16 %v175
  %v432 = vunpack.c.l.b16 %v176
  %v433 = vunpack.c.l.b16 %v177
  %v434 = vunpack.c.l.b16 %v178
  %v435 = vunpack.c.l.b16 %v179
  %v436 = vunpack.c.l.b16 %v180
  %v437 = vunpack.c.l.b16 %v181
  %v438 = vunpack.c.l.b16 %v182
  %v439 = vunpack.c.l.b16 %v183
  %v440 = vunpack.c.l.b16 %v184
  %v441 = vunpack.c.l.b16 %v185
  %v442 = vunpack.c.l.b16 %v186
  %v443 = vunpack.c.l.b16 %v187
  %v444 = vunpack.c.l.b16 %v188
  %v445 = vunpack.c.l.b16 %v189
  %v446 = vunpack.c.l.b16 %v190
  %v447 = vunpack.c.l.b16 %v191
  %v448 = vunpack.c.l.b16 %v192
  %v449 = vpack.c.b16 %v322, %v321
  %v450 = vpack.c.b16 %v324, %v323
  %v451 = vpack.c.b16 %v326, %v325
  %v452 = vpack.c.b16 %v328, %v327
  %v453 = vpack.c.b16 %v330, %v329
  %v454 = vpack.c.b16 %v332, %v331
  %v455 = vpack.c.b16 %v334, %v333
  %v456 = vpack.c.b16 %v336, %v335
  %v457 = vpack.c.b16 %v338, %v337
  %v458 = vpack.c.b16 %v340, %v339
  %v459 = vpack.c.b16 %v342, %v341
  %v460 = vpack.c.b16 %v344, %v343
  %v461 = vpack.c.b16 %v346, %v345
  %v462 = vpack.c.b16 %v348, %v347
  %v463 = vpack.c.b16 %v350, %v349
  %v464 = vpack.c.b16 %v352, %v351
  %v465 = vpack.c.b16 %v354, %v353
  %v466 = vpack.c.b16 %v356, %v355
  %v467 = vpack.c.b16 %v358, %v357
  %v468 = vpack.c.b16 %v360, %v359
  %v469 = vpack.c.b16 %v362, %v361
  %v470 = vpack.c.b16 %v364, %v363
  %v471 = vpack.c.b16 %v366, %v365
  %v472 = vpack.c.b16 %v368, %v367
  %v473 = vpack.c.b16 %v370, %v369
  %v474 = vpack.c.b16 %v372, %v371
  %v475 = vpack.c.b16 %v374, %v373
  %v476 = vpack.c.b16 %v376, %v375
  %v477 = vpack.c.b16 %v378, %v377
  %v478 = vpack.c.b16 %v380, %v379
  %v479 = vpack.c.b16 %v382, %v381
  %v480 = vpack.c.b16 %v384, %v383
  %v481 = vpack.c.b16 %v386, %v385
  %v482 = vpack.c.b16 %v388, %v387
  %v483 = vpack.c.b16 %v390, %v389
  %v484 = vpack.c.b16 %v392, %v391
  %v485 = vpack.c.b16 %v394, %v393
  %v486 = vpack.c.b16 %v396, %v395
  %v487 = vpack.c.b16 %v398, %v397
  %v488 = vpack.c.b16 %v400, %v399
  %v489 = vpack.c.b16 %v402, %v401
  %v490 = vpack.c.b16 %v404, %v403
  %v491 = vpack.c.b16 %v406, %v405
  %v492 = vpack.c.b16 %v408, %v407
  %v493 = vpack.c.b16 %v410, %v409
  %v494 = vpack.c.b16 %v412, %v411
  %v495 = vpack.c.b16 %v414, %v413
  %v496 = vpack.c.b16 %v416, %v415
  %v497 = vpack.c.b16 %v418, %v417
  %v498 = vpack.c.b16 %v420, %v419
  %v499 = vpack.c.b16 %v422, %v421
  %v500 = vpack.c.b16 %v424, %v423
  %v501 = vpack.c.b16 %v426, %v425
  %v502 = vpack.c.b16 %v428, %v427
  %v503 = vpack.c.b16 %v430, %v429
  %v504 = vpack.c.b16 %v432, %v431
  %v505 = vpack.c.b16 %v434, %v433
  %v506 = vpack.c.b16 %v436, %v435
  %v507 = vpack.c.b16 %v438, %v437
  %v508 = vpack.c.b16 %v440, %v439
  %v509 = vpack.c.b16 %v442, %v441
  %v510 = vpack.c.b16 %v444, %v443
  %v511 = vpack.c.b16 %v446, %v445
  %v512 = vpack.c.b16 %v448, %v447
  %577 = vmatprep.subr.bf16.mxu0 0
  %578 = vmatpush1.bf16.msra.mxu0 %v456
  %579 = vmatprep.subr.bf16.mxu0 0
  %580 = vmatpush1.bf16.msra.mxu0 %v455
  %581 = vmatprep.subr.bf16.mxu0 0
  %582 = vmatpush1.bf16.msra.mxu0 %v454
  %583 = vmatprep.subr.bf16.mxu0 0
  %584 = vmatpush1.bf16.msra.mxu0 %v453
  %585 = vmatprep.subr.bf16.mxu0 0
  %586 = vmatpush1.bf16.msra.mxu0 %v452
  %587 = vmatprep.subr.bf16.mxu0 0
  %588 = vmatpush1.bf16.msra.mxu0 %v451
  %589 = vmatprep.subr.bf16.mxu0 0
  %590 = vmatpush1.bf16.msra.mxu0 %v450
  %591 = vmatprep.subr.bf16.mxu0 0
  %592 = vmatpush1.bf16.msra.mxu0 %v449
  %593 = vmatprep.subr.bf16.mxu0 0
  %594 = vmatpush2.bf16.msra.mxu0 %v464
  %595 = vmatprep.subr.bf16.mxu0 0
  %596 = vmatpush2.bf16.msra.mxu0 %v463
  %597 = vmatprep.subr.bf16.mxu0 0
  %598 = vmatpush2.bf16.msra.mxu0 %v462
  %599 = vmatprep.subr.bf16.mxu0 0
  %600 = vmatpush2.bf16.msra.mxu0 %v461
  %601 = vmatprep.subr.bf16.mxu0 0
  %602 = vmatpush2.bf16.msra.mxu0 %v460
  %603 = vmatprep.subr.bf16.mxu0 0
  %604 = vmatpush2.bf16.msra.mxu0 %v459
  %605 = vmatprep.subr.bf16.mxu0 0
  %606 = vmatpush2.bf16.msra.mxu0 %v458
  %607 = vmatprep.subr.bf16.mxu0 0
  %608 = vmatpush2.bf16.msra.mxu0 %v457
  %609 = vmatprep.mubr.bf16.mxu0 %v57
  %610 = vmatmul.mubr.bf16.gmra.mxu0 %v56
  %v611 = vpop.f32.mrf.mxu0
  %v612 = vadd.f32 0.0, %v611
  %v613 = vpop.f32.mrf.mxu0
  %v614 = vpop.f32.mrf.mxu0
  %v615 = vpop.f32.mrf.mxu0
  %616 = vdwg.mxu0
  %617 = vmatprep.subr.bf16.mxu0 0
  %618 = vmatpush1.bf16.msra.mxu0 %v472
  %619 = vmatprep.subr.bf16.mxu0 0
  %620 = vmatpush1.bf16.msra.mxu0 %v471
  %621 = vmatprep.subr.bf16.mxu0 0
  %622 = vmatpush1.bf16.msra.mxu0 %v470
  %623 = vmatprep.subr.bf16.mxu0 0
  %624 = vmatpush1.bf16.msra.mxu0 %v469
  %625 = vmatprep.subr.bf16.mxu0 0
  %626 = vmatpush1.bf16.msra.mxu0 %v468
  %627 = vmatprep.subr.bf16.mxu0 0
  %628 = vmatpush1.bf16.msra.mxu0 %v467
  %629 = vmatprep.subr.bf16.mxu0 0
  %630 = vmatpush1.bf16.msra.mxu0 %v466
  %631 = vmatprep.subr.bf16.mxu0 0
  %632 = vmatpush1.bf16.msra.mxu0 %v465
  %633 = vmatprep.subr.bf16.mxu0 0
  %634 = vmatpush2.bf16.msra.mxu0 %v480
  %635 = vmatprep.subr.bf16.mxu0 0
  %636 = vmatpush2.bf16.msra.mxu0 %v479
  %637 = vmatprep.subr.bf16.mxu0 0
  %638 = vmatpush2.bf16.msra.mxu0 %v478
  %639 = vmatprep.subr.bf16.mxu0 0
  %640 = vmatpush2.bf16.msra.mxu0 %v477
  %641 = vmatprep.subr.bf16.mxu0 0
  %642 = vmatpush2.bf16.msra.mxu0 %v476
  %643 = vmatprep.subr.bf16.mxu0 0
  %644 = vmatpush2.bf16.msra.mxu0 %v475
  %645 = vmatprep.subr.bf16.mxu0 0
  %646 = vmatpush2.bf16.msra.mxu0 %v474
  %647 = vmatprep.subr.bf16.mxu0 0
  %648 = vmatpush2.bf16.msra.mxu0 %v473
  %649 = vmatprep.mubr.bf16.mxu0 %v59
  %650 = vmatmul.mubr.bf16.gmra.mxu0 %v58
  %v651 = vpop.f32.mrf.mxu0
  %v652 = vadd.f32 %v612, %v651
  %v653 = vpop.f32.mrf.mxu0
  %v654 = vpop.f32.mrf.mxu0
  %v655 = vpop.f32.mrf.mxu0
  %656 = vdwg.mxu0
  %657 = vmatprep.subr.bf16.mxu0 0
  %658 = vmatpush1.bf16.msra.mxu0 %v488
  %659 = vmatprep.subr.bf16.mxu0 0
  %660 = vmatpush1.bf16.msra.mxu0 %v487
  %661 = vmatprep.subr.bf16.mxu0 0
  %662 = vmatpush1.bf16.msra.mxu0 %v486
  %663 = vmatprep.subr.bf16.mxu0 0
  %664 = vmatpush1.bf16.msra.mxu0 %v485
  %665 = vmatprep.subr.bf16.mxu0 0
  %666 = vmatpush1.bf16.msra.mxu0 %v484
  %667 = vmatprep.subr.bf16.mxu0 0
  %668 = vmatpush1.bf16.msra.mxu0 %v483
  %669 = vmatprep.subr.bf16.mxu0 0
  %670 = vmatpush1.bf16.msra.mxu0 %v482
  %671 = vmatprep.subr.bf16.mxu0 0
  %672 = vmatpush1.bf16.msra.mxu0 %v481
  %673 = vmatprep.subr.bf16.mxu0 0
  %674 = vmatpush2.bf16.msra.mxu0 %v496
  %675 = vmatprep.subr.bf16.mxu0 0
  %676 = vmatpush2.bf16.msra.mxu0 %v495
  %677 = vmatprep.subr.bf16.mxu0 0
  %678 = vmatpush2.bf16.msra.mxu0 %v494
  %679 = vmatprep.subr.bf16.mxu0 0
  %680 = vmatpush2.bf16.msra.mxu0 %v493
  %681 = vmatprep.subr.bf16.mxu0 0
  %682 = vmatpush2.bf16.msra.mxu0 %v492
  %683 = vmatprep.subr.bf16.mxu0 0
  %684 = vmatpush2.bf16.msra.mxu0 %v491
  %685 = vmatprep.subr.bf16.mxu0 0
  %686 = vmatpush2.bf16.msra.mxu0 %v490
  %687 = vmatprep.subr.bf16.mxu0 0
  %688 = vmatpush2.bf16.msra.mxu0 %v489
  %689 = vmatprep.mubr.bf16.mxu0 %v61
  %690 = vmatmul.mubr.bf16.gmra.mxu0 %v60
  %v691 = vpop.f32.mrf.mxu0
  %v692 = vadd.f32 %v652, %v691
  %v693 = vpop.f32.mrf.mxu0
  %v694 = vpop.f32.mrf.mxu0
  %v695 = vpop.f32.mrf.mxu0
  %696 = vdwg.mxu0
  %697 = vmatprep.subr.bf16.mxu0 0
  %698 = vmatpush1.bf16.msra.mxu0 %v504
  %699 = vmatprep.subr.bf16.mxu0 0
  %700 = vmatpush1.bf16.msra.mxu0 %v503
  %701 = vmatprep.subr.bf16.mxu0 0
  %702 = vmatpush1.bf16.msra.mxu0 %v502
  %703 = vmatprep.subr.bf16.mxu0 0
  %704 = vmatpush1.bf16.msra.mxu0 %v501
  %705 = vmatprep.subr.bf16.mxu0 0
  %706 = vmatpush1.bf16.msra.mxu0 %v500
  %707 = vmatprep.subr.bf16.mxu0 0
  %708 = vmatpush1.bf16.msra.mxu0 %v499
  %709 = vmatprep.subr.bf16.mxu0 0
  %710 = vmatpush1.bf16.msra.mxu0 %v498
  %711 = vmatprep.subr.bf16.mxu0 0
  %712 = vmatpush1.bf16.msra.mxu0 %v497
  %713 = vmatprep.subr.bf16.mxu0 0
  %714 = vmatpush2.bf16.msra.mxu0 %v512
  %715 = vmatprep.subr.bf16.mxu0 0
  %716 = vmatpush2.bf16.msra.mxu0 %v511
  %717 = vmatprep.subr.bf16.mxu0 0
  %718 = vmatpush2.bf16.msra.mxu0 %v510
  %719 = vmatprep.subr.bf16.mxu0 0
  %720 = vmatpush2.bf16.msra.mxu0 %v509
  %721 = vmatprep.subr.bf16.mxu0 0
  %722 = vmatpush2.bf16.msra.mxu0 %v508
  %723 = vmatprep.subr.bf16.mxu0 0
  %724 = vmatpush2.bf16.msra.mxu0 %v507
  %725 = vmatprep.subr.bf16.mxu0 0
  %726 = vmatpush2.bf16.msra.mxu0 %v506
  %727 = vmatprep.subr.bf16.mxu0 0
  %728 = vmatpush2.bf16.msra.mxu0 %v505
  %729 = vmatprep.mubr.bf16.mxu0 %v63
  %730 = vmatmul.mubr.bf16.gmra.mxu0 %v62
  %v731 = vpop.f32.mrf.mxu0
  %v732 = vadd.f32 %v692, %v731
  %v733 = vpop.f32.mrf.mxu0
  %v734 = vpop.f32.mrf.mxu0
  %v735 = vpop.f32.mrf.mxu0
  %736 = vdwg.mxu0
  %v737 = vadd.f32 %v64, %v732
  %738 = vst [vmem:[#allocation2] sm:$0xff] %v737
  // Predicated region
  $region18: #{_lambda_.26} parent=0 // pred_check
    %p739 = pneg %p15
  $region19: #{_lambda_.26} parent=0 // pred_check_branch
    %741 = sbr.rel (%p739) target = $region21
  $region20: #{_lambda_.26} parent=0 // pred_region
    %v742 = vld [vmem:[#allocation2] sm:$0xff]
    %v743 = vld [vmem:[%s2] sm:$0x1]
    %v745 = vlaneseq
    %v746 = vshrl.u32 %v745, 7
    %v747 = vsub.s32 0, %v746
    %v748 = vrot.slane %v743, %v747
    %v750 = vadd.f32 %v742, %v748
    %v751 = vpack.c.bf16 %v750, %v750
    %752 = vst [vmem:[%s3] sm:$0xf] %v751
  $region21: #{_lambda_.26} parent=0 // pred_fallthru
    _
  // Predicated region
  $region22: #{_lambda_.26} parent=0 // pred_check
    _
  $region23: #{_lambda_.26} parent=0 // pred_check_branch
    %754 = sbr.rel (0) target = $region25
  $region24: #{_lambda_.26} parent=0 // pred_region
    _
  $region25: #{_lambda_.26} parent=0 // pred_fallthru
    _
  // Predicated region
  $region26: #{_lambda_.26} parent=0 // pred_check
    _
  $region27: #{_lambda_.26} parent=0 // pred_check_branch
    %756 = sbr.rel (0) target = $region29
  $region28: #{_lambda_.26} parent=0 // pred_region
    _
  $region29: #{_lambda_.26} parent=0 // pred_fallthru
    _

// kernel: squeeze.10
$region0: #{squeeze.10}
  %s0 = inlined_call_operand.vmem [shape: f32[128], index: 0, kind: input, shape index: {}]
  %s1 = inlined_call_operand.vmem [shape: f32[4,32], index: 1, kind: output, shape index: {}]
  $region1: #{squeeze.10} parent=0
    #allocation0 [shape = 'u8[4096]{0}', space=vmem, size = 0x1000, scoped, tag = 'scoped mem for output reshape']
    #allocation1 [shape = 'u8[4096]{0}', space=vmem, size = 0x1000, scoped, tag = 'scoped mem for input reshape']
    %s3 = sshll.u32 1, 1
    %s4 = ssub.s32 %s3, 1
    %v5 = vld [vmem:[%s0] sm:%s4]
    %6 = vst [vmem:[#allocation1] sm:%s4] %v5
    %v7 = vld [vmem:[#allocation1] sm:$0x1]
    %vm8 = vcmask 261120
    %9 = vst.msk [vmem:[#allocation0] sm:$0x1] %vm8, %v7
    %v10 = vld [vmem:[#allocation1] sm:$0x1]
    %11 = vrot.lane.b32.xlu0 %v10, 96
    %v12 = vpop.permute.xlu0 %11
    %vm13 = vcmask 261120
    %s14 = scalar_lea.vmem [#allocation0], 1
    %15 = vst.msk [vmem:[%s14] sm:$0x1] %vm13, %v12
    %v16 = vld [vmem:[#allocation1] sm:$0x1]
    %17 = vrot.lane.b32.xlu0 %v16, 64
    %v18 = vpop.permute.xlu0 %17
    %vm19 = vcmask 261120
    %s20 = scalar_lea.vmem [#allocation0], 2
    %21 = vst.msk [vmem:[%s20] sm:$0x1] %vm19, %v18
    %v22 = vld [vmem:[#allocation1] sm:$0x1]
    %23 = vrot.lane.b32.xlu0 %v22, 32
    %v24 = vpop.permute.xlu0 %23
    %vm25 = vcmask 261120
    %s26 = scalar_lea.vmem [#allocation0], 3
    %27 = vst.msk [vmem:[%s26] sm:$0x1] %vm25, %v24
    %s29 = sshll.u32 1, 4
    %s30 = ssub.s32 %s29, 1
    %v32 = vld [vmem:[#allocation0] sm:%s30]
    %s33 = sshll.u32 1, 4
    %s34 = ssub.s32 %s33, 1
    %35 = vst [vmem:[%s1] sm:%s34] %v32

// kernel: tile.58
$region0: #{tile.58}
  #allocation0 [shape = 's32[1]{0}', space=sflag, size = 0x4, scoped, tag = 'scoped memory for tile.58']
  %s0 = inlined_call_operand.vmem [shape: f32[32], index: 0, kind: input, shape index: {}]
  %s1 = inlined_call_operand.vmem [shape: f32[4,32], index: 1, kind: output, shape index: {}]
  // Predicated region
  $region2: #{tile.58} parent=0 // pred_check
    _
  $region3: #{tile.58} parent=0 // pred_check_branch
    %3 = sbr.rel (0) target = $region5
  $region4: #{tile.58} parent=0 // pred_region
    _
  $region5: #{tile.58} parent=0 // pred_fallthru
    _
  %v4 = vld [vmem:[%s0] ss:$0 sm:$0xff]
  %5 = vst [vmem:[%s1] sm:$0xf] %v4

// kernel: squeeze.12
$region0: #{squeeze.12}
  %s0 = inlined_call_operand.vmem [shape: f32[64], index: 0, kind: input, shape index: {}]
  %s1 = inlined_call_operand.vmem [shape: f32[4,16], index: 1, kind: output, shape index: {}]
  $region1: #{squeeze.12} parent=0
    #allocation0 [shape = 'u8[4096]{0}', space=vmem, size = 0x1000, scoped, tag = 'scoped mem for output reshape']
    #allocation1 [shape = 'u8[4096]{0}', space=vmem, size = 0x1000, scoped, tag = 'scoped mem for input reshape']
    %s3 = sshll.u32 1, 1
    %s4 = ssub.s32 %s3, 1
    %v5 = vld [vmem:[%s0] sm:%s4]
    %6 = vst [vmem:[#allocation1] sm:%s4] %v5
    %v7 = vld [vmem:[#allocation1] sm:$0x1]
    %vm8 = vcmask 130048
    %9 = vst.msk [vmem:[#allocation0] sm:$0x1] %vm8, %v7
    %v10 = vld [vmem:[#allocation1] sm:$0x1]
    %11 = vrot.lane.b32.xlu0 %v10, 112
    %v12 = vpop.permute.xlu0 %11
    %vm13 = vcmask 130048
    %s14 = scalar_lea.vmem [#allocation0], 1
    %15 = vst.msk [vmem:[%s14] sm:$0x1] %vm13, %v12
    %v16 = vld [vmem:[#allocation1] sm:$0x1]
    %17 = vrot.lane.b32.xlu0 %v16, 96
    %v18 = vpop.permute.xlu0 %17
    %vm19 = vcmask 130048
    %s20 = scalar_lea.vmem [#allocation0], 2
    %21 = vst.msk [vmem:[%s20] sm:$0x1] %vm19, %v18
    %v22 = vld [vmem:[#allocation1] sm:$0x1]
    %23 = vrot.lane.b32.xlu0 %v22, 80
    %v24 = vpop.permute.xlu0 %23
    %vm25 = vcmask 130048
    %s26 = scalar_lea.vmem [#allocation0], 3
    %27 = vst.msk [vmem:[%s26] sm:$0x1] %vm25, %v24
    %s29 = sshll.u32 1, 4
    %s30 = ssub.s32 %s29, 1
    %v32 = vld [vmem:[#allocation0] sm:%s30]
    %s33 = sshll.u32 1, 4
    %s34 = ssub.s32 %s33, 1
    %35 = vst [vmem:[%s1] sm:%s34] %v32

// kernel: tile.68
$region0: #{tile.68}
  #allocation0 [shape = 's32[1]{0}', space=sflag, size = 0x4, scoped, tag = 'scoped memory for tile.68']
  %s0 = inlined_call_operand.vmem [shape: f32[16], index: 0, kind: input, shape index: {}]
  %s1 = inlined_call_operand.vmem [shape: f32[4,16], index: 1, kind: output, shape index: {}]
  // Predicated region
  $region2: #{tile.68} parent=0 // pred_check
    _
  $region3: #{tile.68} parent=0 // pred_check_branch
    %3 = sbr.rel (0) target = $region5
  $region4: #{tile.68} parent=0 // pred_region
    _
  $region5: #{tile.68} parent=0 // pred_fallthru
    _
  %v4 = vld [vmem:[%s0] ss:$0 sm:$0xff]
  %5 = vst [vmem:[%s1] sm:$0xf] %v4

// kernel: tile.69
$region0: #{tile.69}
  %s0 = inlined_call_operand.vmem [shape: f32[4,16], index: 0, kind: input, shape index: {}]
  %s1 = inlined_call_operand.vmem [shape: f32[64], index: 1, kind: output, shape index: {}]
  $region1: #{tile.69} parent=0
    #allocation0 [shape = 'u8[4096]{0}', space=vmem, size = 0x1000, scoped, tag = 'scoped mem for output reshape']
    #allocation1 [shape = 'u8[4096]{0}', space=vmem, size = 0x1000, scoped, tag = 'scoped mem for input reshape']
    %s3 = sshll.u32 1, 4
    %s4 = ssub.s32 %s3, 1
    %v5 = vld [vmem:[%s0] sm:%s4]
    %6 = vst [vmem:[#allocation1] sm:%s4] %v5
    %v7 = vld [vmem:[#allocation1] sm:$0x1]
    %vm8 = vcmask 130048
    %9 = vst.msk [vmem:[#allocation0] sm:$0x1] %vm8, %v7
    %s10 = scalar_lea.vmem [#allocation1], 3
    %v11 = vld [vmem:[%s10] sm:$0x1]
    %12 = vrot.lane.b32.xlu0 %v11, 48
    %v13 = vpop.permute.xlu0 %12
    %vm14 = vcmask 523648
    %15 = vst.msk [vmem:[#allocation0] sm:$0x1] %vm14, %v13
    %s16 = scalar_lea.vmem [#allocation1], 2
    %v17 = vld [vmem:[%s16] sm:$0x1]
    %18 = vrot.lane.b32.xlu0 %v17, 32
    %v19 = vpop.permute.xlu0 %18
    %vm20 = vcmask 392448
    %21 = vst.msk [vmem:[#allocation0] sm:$0x1] %vm20, %v19
    %s22 = scalar_lea.vmem [#allocation1], 1
    %v23 = vld [vmem:[%s22] sm:$0x1]
    %24 = vrot.lane.b32.xlu0 %v23, 16
    %v25 = vpop.permute.xlu0 %24
    %vm26 = vcmask 261248
    %27 = vst.msk [vmem:[#allocation0] sm:$0x1] %vm26, %v25
    %s29 = sshll.u32 1, 1
    %s30 = ssub.s32 %s29, 1
    %v32 = vld [vmem:[#allocation0] sm:%s30]
    %s33 = sshll.u32 1, 1
    %s34 = ssub.s32 %s33, 1
    %35 = vst [vmem:[%s1] sm:%s34] %v32

// kernel: _lambda_.29
$region0: #{_lambda_.29}
  #allocation0 [shape = 'u32[]', space=smem, size = 0x4, offset = 0x4, fixed_abs, tag = 'smem constant byte address 0x4 - core index']
  #allocation1 [shape = 'u32[144,128]{1,0:T(1,128)}', space=vmem, size = 0x12000, scoped, tag = 'internal scratch']
  #allocation2 [shape = 'f32[8,128]{1,0:T(8,128)}', space=vmem, size = 0x1000, scoped, tag = 'scratch operand']
  %s0 = inlined_call_operand.vmem [shape: bf16[8,1152], index: 0, kind: input, shape index: {}]
  %s1 = inlined_call_operand.vmem [shape: bf16[1152,128], index: 1, kind: input, shape index: {}]
  %s2 = inlined_call_operand.vmem [shape: f32[1,128], index: 2, kind: input, shape index: {}]
  %s3 = inlined_call_operand.vmem [shape: bf16[8,128], index: 3, kind: output, shape index: {0}]
  %s4 = inlined_call_operand.vmem [shape: f32[1,2,128], index: 4, kind: output, shape index: {1}]
  %5 = xla_tuple %s3, %s4
  %s6 = sld [smem:[#allocation0]]
  $region38: #{_lambda_.29} parent=0
    _
  %s8 = ssub.s32 1, %s6
  %s9 = scalar_select 0, %s8, %s6
  // Predicated region
  $region2: #{_lambda_.29} parent=0 // pred_check
    _
  $region3: #{_lambda_.29} parent=0 // pred_check_branch
    %11 = sbr.rel (0) target = $region5
  $region4: #{_lambda_.29} parent=0 // pred_region
    _
  $region5: #{_lambda_.29} parent=0 // pred_fallthru
    _
  // Predicated region
  $region6: #{_lambda_.29} parent=0 // pred_check
    _
  $region7: #{_lambda_.29} parent=0 // pred_check_branch
    %13 = sbr.rel (0) target = $region9
  $region8: #{_lambda_.29} parent=0 // pred_region
    _
  $region9: #{_lambda_.29} parent=0 // pred_fallthru
    _
  // Predicated region
  $region10: #{_lambda_.29} parent=0 // pred_check
    _
  $region11: #{_lambda_.29} parent=0 // pred_check_branch
    %15 = sbr.rel (0) target = $region13
  $region12: #{_lambda_.29} parent=0 // pred_region
    _
  $region13: #{_lambda_.29} parent=0 // pred_fallthru
    _
  %p17 = scmp.eq.s32.totalorder 0, 0
  // Predicated region
  $region14: #{_lambda_.29} parent=0 // pred_check
    %p18 = pneg %p17
  $region15: #{_lambda_.29} parent=0 // pred_check_branch
    %20 = sbr.rel (%p18) target = $region17
  $region16: #{_lambda_.29} parent=0 // pred_region
    %21 = vst [vmem:[#allocation2] sm:$0xff] 0.0
  $region17: #{_lambda_.29} parent=0 // pred_fallthru
    _
  %v22 = vld [vmem:[%s0] sm:$0xff]
  %v23 = vld [vmem:[%s0 + $0x8] sm:$0xff]
  %v24 = vld [vmem:[%s0 + $0x10] sm:$0xff]
  %v25 = vld [vmem:[%s0 + $0x18] sm:$0xff]
  %v26 = vld [vmem:[%s0 + $0x20] sm:$0xf]
  %v27 = vunpack.c.l.bf16 %v22
  %v28 = vunpack.c.h.bf16 %v22
  %v29 = vunpack.c.l.bf16 %v23
  %v30 = vunpack.c.h.bf16 %v23
  %v31 = vunpack.c.l.bf16 %v24
  %v32 = vunpack.c.h.bf16 %v24
  %v33 = vunpack.c.l.bf16 %v25
  %v34 = vunpack.c.h.bf16 %v25
  %v35 = vunpack.c.l.bf16 %v26
  %v36 = vmax.f32 %v27, 0.0
  %v37 = vmax.f32 %v28, 0.0
  %v38 = vmax.f32 %v29, 0.0
  %v39 = vmax.f32 %v30, 0.0
  %v40 = vmax.f32 %v31, 0.0
  %v41 = vmax.f32 %v32, 0.0
  %v42 = vmax.f32 %v33, 0.0
  %v43 = vmax.f32 %v34, 0.0
  %v44 = vmax.f32 %v35, 0.0
  %v45 = vpack.c.bf16 %v36, %v36
  %v46 = vpack.c.bf16 %v37, %v37
  %v47 = vpack.c.bf16 %v38, %v38
  %v48 = vpack.c.bf16 %v39, %v39
  %v49 = vpack.c.bf16 %v40, %v40
  %v50 = vpack.c.bf16 %v41, %v41
  %v51 = vpack.c.bf16 %v42, %v42
  %v52 = vpack.c.bf16 %v43, %v43
  %v53 = vpack.c.bf16 %v44, %v44
  %v54 = vld [vmem:[#allocation2] sm:$0xff]
  %v55 = vld [vmem:[%s1] sm:$0xf]
  %v56 = vld [vmem:[%s1 + $0x4] sm:$0xf]
  %v57 = vld [vmem:[%s1 + $0x8] sm:$0xf]
  %v58 = vld [vmem:[%s1 + $0xc] sm:$0xf]
  %v59 = vld [vmem:[%s1 + $0x10] sm:$0xf]
  %v60 = vld [vmem:[%s1 + $0x14] sm:$0xf]
  %v61 = vld [vmem:[%s1 + $0x18] sm:$0xf]
  %v62 = vld [vmem:[%s1 + $0x1c] sm:$0xf]
  %v63 = vld [vmem:[%s1 + $0x20] sm:$0xf]
  %v64 = vld [vmem:[%s1 + $0x24] sm:$0xf]
  %v65 = vld [vmem:[%s1 + $0x28] sm:$0xf]
  %v66 = vld [vmem:[%s1 + $0x2c] sm:$0xf]
  %v67 = vld [vmem:[%s1 + $0x30] sm:$0xf]
  %v68 = vld [vmem:[%s1 + $0x34] sm:$0xf]
  %v69 = vld [vmem:[%s1 + $0x38] sm:$0xf]
  %v70 = vld [vmem:[%s1 + $0x3c] sm:$0xf]
  %v71 = vld [vmem:[%s1 + $0x40] sm:$0xf]
  %v72 = vld [vmem:[%s1 + $0x44] sm:$0xf]
  %v73 = vld [vmem:[%s1 + $0x48] sm:$0xf]
  %v74 = vld [vmem:[%s1 + $0x4c] sm:$0xf]
  %v75 = vld [vmem:[%s1 + $0x50] sm:$0xf]
  %v76 = vld [vmem:[%s1 + $0x54] sm:$0xf]
  %v77 = vld [vmem:[%s1 + $0x58] sm:$0xf]
  %v78 = vld [vmem:[%s1 + $0x5c] sm:$0xf]
  %v79 = vld [vmem:[%s1 + $0x60] sm:$0xf]
  %v80 = vld [vmem:[%s1 + $0x64] sm:$0xf]
  %v81 = vld [vmem:[%s1 + $0x68] sm:$0xf]
  %v82 = vld [vmem:[%s1 + $0x6c] sm:$0xf]
  %v83 = vld [vmem:[%s1 + $0x70] sm:$0xf]
  %v84 = vld [vmem:[%s1 + $0x74] sm:$0xf]
  %v85 = vld [vmem:[%s1 + $0x78] sm:$0xf]
  %v86 = vld [vmem:[%s1 + $0x7c] sm:$0xf]
  %v87 = vld [vmem:[%s1 + $0x80] sm:$0xf]
  %v88 = vld [vmem:[%s1 + $0x84] sm:$0xf]
  %v89 = vld [vmem:[%s1 + $0x88] sm:$0xf]
  %v90 = vld [vmem:[%s1 + $0x8c] sm:$0xf]
  %v91 = vld [vmem:[%s1 + $0x90] sm:$0xf]
  %v92 = vld [vmem:[%s1 + $0x94] sm:$0xf]
  %v93 = vld [vmem:[%s1 + $0x98] sm:$0xf]
  %v94 = vld [vmem:[%s1 + $0x9c] sm:$0xf]
  %v95 = vld [vmem:[%s1 + $0xa0] sm:$0xf]
  %v96 = vld [vmem:[%s1 + $0xa4] sm:$0xf]
  %v97 = vld [vmem:[%s1 + $0xa8] sm:$0xf]
  %v98 = vld [vmem:[%s1 + $0xac] sm:$0xf]
  %v99 = vld [vmem:[%s1 + $0xb0] sm:$0xf]
  %v100 = vld [vmem:[%s1 + $0xb4] sm:$0xf]
  %v101 = vld [vmem:[%s1 + $0xb8] sm:$0xf]
  %v102 = vld [vmem:[%s1 + $0xbc] sm:$0xf]
  %v103 = vld [vmem:[%s1 + $0xc0] sm:$0xf]
  %v104 = vld [vmem:[%s1 + $0xc4] sm:$0xf]
  %v105 = vld [vmem:[%s1 + $0xc8] sm:$0xf]
  %v106 = vld [vmem:[%s1 + $0xcc] sm:$0xf]
  %v107 = vld [vmem:[%s1 + $0xd0] sm:$0xf]
  %v108 = vld [vmem:[%s1 + $0xd4] sm:$0xf]
  %v109 = vld [vmem:[%s1 + $0xd8] sm:$0xf]
  %v110 = vld [vmem:[%s1 + $0xdc] sm:$0xf]
  %v111 = vld [vmem:[%s1 + $0xe0] sm:$0xf]
  %v112 = vld [vmem:[%s1 + $0xe4] sm:$0xf]
  %v113 = vld [vmem:[%s1 + $0xe8] sm:$0xf]
  %v114 = vld [vmem:[%s1 + $0xec] sm:$0xf]
  %v115 = vld [vmem:[%s1 + $0xf0] sm:$0xf]
  %v116 = vld [vmem:[%s1 + $0xf4] sm:$0xf]
  %v117 = vld [vmem:[%s1 + $0xf8] sm:$0xf]
  %v118 = vld [vmem:[%s1 + $0xfc] sm:$0xf]
  %v119 = vld [vmem:[%s1 + $0x100] sm:$0xf]
  %v120 = vld [vmem:[%s1 + $0x104] sm:$0xf]
  %v121 = vld [vmem:[%s1 + $0x108] sm:$0xf]
  %v122 = vld [vmem:[%s1 + $0x10c] sm:$0xf]
  %v123 = vld [vmem:[%s1 + $0x110] sm:$0xf]
  %v124 = vld [vmem:[%s1 + $0x114] sm:$0xf]
  %v125 = vld [vmem:[%s1 + $0x118] sm:$0xf]
  %v126 = vld [vmem:[%s1 + $0x11c] sm:$0xf]
  %v127 = vld [vmem:[%s1 + $0x120] sm:$0xf]
  %v128 = vld [vmem:[%s1 + $0x124] sm:$0xf]
  %v129 = vld [vmem:[%s1 + $0x128] sm:$0xf]
  %v130 = vld [vmem:[%s1 + $0x12c] sm:$0xf]
  %v131 = vld [vmem:[%s1 + $0x130] sm:$0xf]
  %v132 = vld [vmem:[%s1 + $0x134] sm:$0xf]
  %v133 = vld [vmem:[%s1 + $0x138] sm:$0xf]
  %v134 = vld [vmem:[%s1 + $0x13c] sm:$0xf]
  %v135 = vld [vmem:[%s1 + $0x140] sm:$0xf]
  %v136 = vld [vmem:[%s1 + $0x144] sm:$0xf]
  %v137 = vld [vmem:[%s1 + $0x148] sm:$0xf]
  %v138 = vld [vmem:[%s1 + $0x14c] sm:$0xf]
  %v139 = vld [vmem:[%s1 + $0x150] sm:$0xf]
  %v140 = vld [vmem:[%s1 + $0x154] sm:$0xf]
  %v141 = vld [vmem:[%s1 + $0x158] sm:$0xf]
  %v142 = vld [vmem:[%s1 + $0x15c] sm:$0xf]
  %v143 = vld [vmem:[%s1 + $0x160] sm:$0xf]
  %v144 = vld [vmem:[%s1 + $0x164] sm:$0xf]
  %v145 = vld [vmem:[%s1 + $0x168] sm:$0xf]
  %v146 = vld [vmem:[%s1 + $0x16c] sm:$0xf]
  %v147 = vld [vmem:[%s1 + $0x170] sm:$0xf]
  %v148 = vld [vmem:[%s1 + $0x174] sm:$0xf]
  %v149 = vld [vmem:[%s1 + $0x178] sm:$0xf]
  %v150 = vld [vmem:[%s1 + $0x17c] sm:$0xf]
  %v151 = vld [vmem:[%s1 + $0x180] sm:$0xf]
  %v152 = vld [vmem:[%s1 + $0x184] sm:$0xf]
  %v153 = vld [vmem:[%s1 + $0x188] sm:$0xf]
  %v154 = vld [vmem:[%s1 + $0x18c] sm:$0xf]
  %v155 = vld [vmem:[%s1 + $0x190] sm:$0xf]
  %v156 = vld [vmem:[%s1 + $0x194] sm:$0xf]
  %v157 = vld [vmem:[%s1 + $0x198] sm:$0xf]
  %v158 = vld [vmem:[%s1 + $0x19c] sm:$0xf]
  %v159 = vld [vmem:[%s1 + $0x1a0] sm:$0xf]
  %v160 = vld [vmem:[%s1 + $0x1a4] sm:$0xf]
  %v161 = vld [vmem:[%s1 + $0x1a8] sm:$0xf]
  %v162 = vld [vmem:[%s1 + $0x1ac] sm:$0xf]
  %v163 = vld [vmem:[%s1 + $0x1b0] sm:$0xf]
  %v164 = vld [vmem:[%s1 + $0x1b4] sm:$0xf]
  %v165 = vld [vmem:[%s1 + $0x1b8] sm:$0xf]
  %v166 = vld [vmem:[%s1 + $0x1bc] sm:$0xf]
  %v167 = vld [vmem:[%s1 + $0x1c0] sm:$0xf]
  %v168 = vld [vmem:[%s1 + $0x1c4] sm:$0xf]
  %v169 = vld [vmem:[%s1 + $0x1c8] sm:$0xf]
  %v170 = vld [vmem:[%s1 + $0x1cc] sm:$0xf]
  %v171 = vld [vmem:[%s1 + $0x1d0] sm:$0xf]
  %v172 = vld [vmem:[%s1 + $0x1d4] sm:$0xf]
  %v173 = vld [vmem:[%s1 + $0x1d8] sm:$0xf]
  %v174 = vld [vmem:[%s1 + $0x1dc] sm:$0xf]
  %v175 = vld [vmem:[%s1 + $0x1e0] sm:$0xf]
  %v176 = vld [vmem:[%s1 + $0x1e4] sm:$0xf]
  %v177 = vld [vmem:[%s1 + $0x1e8] sm:$0xf]
  %v178 = vld [vmem:[%s1 + $0x1ec] sm:$0xf]
  %v179 = vld [vmem:[%s1 + $0x1f0] sm:$0xf]
  %v180 = vld [vmem:[%s1 + $0x1f4] sm:$0xf]
  %v181 = vld [vmem:[%s1 + $0x1f8] sm:$0xf]
  %v182 = vld [vmem:[%s1 + $0x1fc] sm:$0xf]
  %v183 = vld [vmem:[%s1 + $0x200] sm:$0xf]
  %v184 = vld [vmem:[%s1 + $0x204] sm:$0xf]
  %v185 = vld [vmem:[%s1 + $0x208] sm:$0xf]
  %v186 = vld [vmem:[%s1 + $0x20c] sm:$0xf]
  %v187 = vld [vmem:[%s1 + $0x210] sm:$0xf]
  %v188 = vld [vmem:[%s1 + $0x214] sm:$0xf]
  %v189 = vld [vmem:[%s1 + $0x218] sm:$0xf]
  %v190 = vld [vmem:[%s1 + $0x21c] sm:$0xf]
  %v191 = vld [vmem:[%s1 + $0x220] sm:$0xf]
  %v192 = vld [vmem:[%s1 + $0x224] sm:$0xf]
  %v193 = vld [vmem:[%s1 + $0x228] sm:$0xf]
  %v194 = vld [vmem:[%s1 + $0x22c] sm:$0xf]
  %v195 = vld [vmem:[%s1 + $0x230] sm:$0xf]
  %v196 = vld [vmem:[%s1 + $0x234] sm:$0xf]
  %v197 = vld [vmem:[%s1 + $0x238] sm:$0xf]
  %v198 = vld [vmem:[%s1 + $0x23c] sm:$0xf]
  %v343 = vunpack.c.l.b16 %v55
  %v344 = vunpack.c.l.b16 %v56
  %v345 = vunpack.c.l.b16 %v57
  %v346 = vunpack.c.l.b16 %v58
  %v347 = vunpack.c.l.b16 %v59
  %v348 = vunpack.c.l.b16 %v60
  %v349 = vunpack.c.l.b16 %v61
  %v350 = vunpack.c.l.b16 %v62
  %v351 = vunpack.c.l.b16 %v63
  %v352 = vunpack.c.l.b16 %v64
  %v353 = vunpack.c.l.b16 %v65
  %v354 = vunpack.c.l.b16 %v66
  %v355 = vunpack.c.l.b16 %v67
  %v356 = vunpack.c.l.b16 %v68
  %v357 = vunpack.c.l.b16 %v69
  %v358 = vunpack.c.l.b16 %v70
  %v359 = vunpack.c.l.b16 %v71
  %v360 = vunpack.c.l.b16 %v72
  %v361 = vunpack.c.l.b16 %v73
  %v362 = vunpack.c.l.b16 %v74
  %v363 = vunpack.c.l.b16 %v75
  %v364 = vunpack.c.l.b16 %v76
  %v365 = vunpack.c.l.b16 %v77
  %v366 = vunpack.c.l.b16 %v78
  %v367 = vunpack.c.l.b16 %v79
  %v368 = vunpack.c.l.b16 %v80
  %v369 = vunpack.c.l.b16 %v81
  %v370 = vunpack.c.l.b16 %v82
  %v371 = vunpack.c.l.b16 %v83
  %v372 = vunpack.c.l.b16 %v84
  %v373 = vunpack.c.l.b16 %v85
  %v374 = vunpack.c.l.b16 %v86
  %v375 = vunpack.c.l.b16 %v87
  %v376 = vunpack.c.l.b16 %v88
  %v377 = vunpack.c.l.b16 %v89
  %v378 = vunpack.c.l.b16 %v90
  %v379 = vunpack.c.l.b16 %v91
  %v380 = vunpack.c.l.b16 %v92
  %v381 = vunpack.c.l.b16 %v93
  %v382 = vunpack.c.l.b16 %v94
  %v383 = vunpack.c.l.b16 %v95
  %v384 = vunpack.c.l.b16 %v96
  %v385 = vunpack.c.l.b16 %v97
  %v386 = vunpack.c.l.b16 %v98
  %v387 = vunpack.c.l.b16 %v99
  %v388 = vunpack.c.l.b16 %v100
  %v389 = vunpack.c.l.b16 %v101
  %v390 = vunpack.c.l.b16 %v102
  %v391 = vunpack.c.l.b16 %v103
  %v392 = vunpack.c.l.b16 %v104
  %v393 = vunpack.c.l.b16 %v105
  %v394 = vunpack.c.l.b16 %v106
  %v395 = vunpack.c.l.b16 %v107
  %v396 = vunpack.c.l.b16 %v108
  %v397 = vunpack.c.l.b16 %v109
  %v398 = vunpack.c.l.b16 %v110
  %v399 = vunpack.c.l.b16 %v111
  %v400 = vunpack.c.l.b16 %v112
  %v401 = vunpack.c.l.b16 %v113
  %v402 = vunpack.c.l.b16 %v114
  %v403 = vunpack.c.l.b16 %v115
  %v404 = vunpack.c.l.b16 %v116
  %v405 = vunpack.c.l.b16 %v117
  %v406 = vunpack.c.l.b16 %v118
  %v407 = vunpack.c.l.b16 %v119
  %v408 = vunpack.c.l.b16 %v120
  %v409 = vunpack.c.l.b16 %v121
  %v410 = vunpack.c.l.b16 %v122
  %v411 = vunpack.c.l.b16 %v123
  %v412 = vunpack.c.l.b16 %v124
  %v413 = vunpack.c.l.b16 %v125
  %v414 = vunpack.c.l.b16 %v126
  %v415 = vunpack.c.l.b16 %v127
  %v416 = vunpack.c.l.b16 %v128
  %v417 = vunpack.c.l.b16 %v129
  %v418 = vunpack.c.l.b16 %v130
  %v419 = vunpack.c.l.b16 %v131
  %v420 = vunpack.c.l.b16 %v132
  %v421 = vunpack.c.l.b16 %v133
  %v422 = vunpack.c.l.b16 %v134
  %v423 = vunpack.c.l.b16 %v135
  %v424 = vunpack.c.l.b16 %v136
  %v425 = vunpack.c.l.b16 %v137
  %v426 = vunpack.c.l.b16 %v138
  %v427 = vunpack.c.l.b16 %v139
  %v428 = vunpack.c.l.b16 %v140
  %v429 = vunpack.c.l.b16 %v141
  %v430 = vunpack.c.l.b16 %v142
  %v431 = vunpack.c.l.b16 %v143
  %v432 = vunpack.c.l.b16 %v144
  %v433 = vunpack.c.l.b16 %v145
  %v434 = vunpack.c.l.b16 %v146
  %v435 = vunpack.c.l.b16 %v147
  %v436 = vunpack.c.l.b16 %v148
  %v437 = vunpack.c.l.b16 %v149
  %v438 = vunpack.c.l.b16 %v150
  %v439 = vunpack.c.l.b16 %v151
  %v440 = vunpack.c.l.b16 %v152
  %v441 = vunpack.c.l.b16 %v153
  %v442 = vunpack.c.l.b16 %v154
  %v443 = vunpack.c.l.b16 %v155
  %v444 = vunpack.c.l.b16 %v156
  %v445 = vunpack.c.l.b16 %v157
  %v446 = vunpack.c.l.b16 %v158
  %v447 = vunpack.c.l.b16 %v159
  %v448 = vunpack.c.l.b16 %v160
  %v449 = vunpack.c.l.b16 %v161
  %v450 = vunpack.c.l.b16 %v162
  %v451 = vunpack.c.l.b16 %v163
  %v452 = vunpack.c.l.b16 %v164
  %v453 = vunpack.c.l.b16 %v165
  %v454 = vunpack.c.l.b16 %v166
  %v455 = vunpack.c.l.b16 %v167
  %v456 = vunpack.c.l.b16 %v168
  %v457 = vunpack.c.l.b16 %v169
  %v458 = vunpack.c.l.b16 %v170
  %v459 = vunpack.c.l.b16 %v171
  %v460 = vunpack.c.l.b16 %v172
  %v461 = vunpack.c.l.b16 %v173
  %v462 = vunpack.c.l.b16 %v174
  %v463 = vunpack.c.l.b16 %v175
  %v464 = vunpack.c.l.b16 %v176
  %v465 = vunpack.c.l.b16 %v177
  %v466 = vunpack.c.l.b16 %v178
  %v467 = vunpack.c.l.b16 %v179
  %v468 = vunpack.c.l.b16 %v180
  %v469 = vunpack.c.l.b16 %v181
  %v470 = vunpack.c.l.b16 %v182
  %v471 = vunpack.c.l.b16 %v183
  %v472 = vunpack.c.l.b16 %v184
  %v473 = vunpack.c.l.b16 %v185
  %v474 = vunpack.c.l.b16 %v186
  %v475 = vunpack.c.l.b16 %v187
  %v476 = vunpack.c.l.b16 %v188
  %v477 = vunpack.c.l.b16 %v189
  %v478 = vunpack.c.l.b16 %v190
  %v479 = vunpack.c.l.b16 %v191
  %v480 = vunpack.c.l.b16 %v192
  %v481 = vunpack.c.l.b16 %v193
  %v482 = vunpack.c.l.b16 %v194
  %v483 = vunpack.c.l.b16 %v195
  %v484 = vunpack.c.l.b16 %v196
  %v485 = vunpack.c.l.b16 %v197
  %v486 = vunpack.c.l.b16 %v198
  %v487 = vpack.c.b16 %v344, %v343
  %v488 = vpack.c.b16 %v346, %v345
  %v489 = vpack.c.b16 %v348, %v347
  %v490 = vpack.c.b16 %v350, %v349
  %v491 = vpack.c.b16 %v352, %v351
  %v492 = vpack.c.b16 %v354, %v353
  %v493 = vpack.c.b16 %v356, %v355
  %v494 = vpack.c.b16 %v358, %v357
  %v495 = vpack.c.b16 %v360, %v359
  %v496 = vpack.c.b16 %v362, %v361
  %v497 = vpack.c.b16 %v364, %v363
  %v498 = vpack.c.b16 %v366, %v365
  %v499 = vpack.c.b16 %v368, %v367
  %v500 = vpack.c.b16 %v370, %v369
  %v501 = vpack.c.b16 %v372, %v371
  %v502 = vpack.c.b16 %v374, %v373
  %v503 = vpack.c.b16 %v376, %v375
  %v504 = vpack.c.b16 %v378, %v377
  %v505 = vpack.c.b16 %v380, %v379
  %v506 = vpack.c.b16 %v382, %v381
  %v507 = vpack.c.b16 %v384, %v383
  %v508 = vpack.c.b16 %v386, %v385
  %v509 = vpack.c.b16 %v388, %v387
  %v510 = vpack.c.b16 %v390, %v389
  %v511 = vpack.c.b16 %v392, %v391
  %v512 = vpack.c.b16 %v394, %v393
  %v513 = vpack.c.b16 %v396, %v395
  %v514 = vpack.c.b16 %v398, %v397
  %v515 = vpack.c.b16 %v400, %v399
  %v516 = vpack.c.b16 %v402, %v401
  %v517 = vpack.c.b16 %v404, %v403
  %v518 = vpack.c.b16 %v406, %v405
  %v519 = vpack.c.b16 %v408, %v407
  %v520 = vpack.c.b16 %v410, %v409
  %v521 = vpack.c.b16 %v412, %v411
  %v522 = vpack.c.b16 %v414, %v413
  %v523 = vpack.c.b16 %v416, %v415
  %v524 = vpack.c.b16 %v418, %v417
  %v525 = vpack.c.b16 %v420, %v419
  %v526 = vpack.c.b16 %v422, %v421
  %v527 = vpack.c.b16 %v424, %v423
  %v528 = vpack.c.b16 %v426, %v425
  %v529 = vpack.c.b16 %v428, %v427
  %v530 = vpack.c.b16 %v430, %v429
  %v531 = vpack.c.b16 %v432, %v431
  %v532 = vpack.c.b16 %v434, %v433
  %v533 = vpack.c.b16 %v436, %v435
  %v534 = vpack.c.b16 %v438, %v437
  %v535 = vpack.c.b16 %v440, %v439
  %v536 = vpack.c.b16 %v442, %v441
  %v537 = vpack.c.b16 %v444, %v443
  %v538 = vpack.c.b16 %v446, %v445
  %v539 = vpack.c.b16 %v448, %v447
  %v540 = vpack.c.b16 %v450, %v449
  %v541 = vpack.c.b16 %v452, %v451
  %v542 = vpack.c.b16 %v454, %v453
  %v543 = vpack.c.b16 %v456, %v455
  %v544 = vpack.c.b16 %v458, %v457
  %v545 = vpack.c.b16 %v460, %v459
  %v546 = vpack.c.b16 %v462, %v461
  %v547 = vpack.c.b16 %v464, %v463
  %v548 = vpack.c.b16 %v466, %v465
  %v549 = vpack.c.b16 %v468, %v467
  %v550 = vpack.c.b16 %v470, %v469
  %v551 = vpack.c.b16 %v472, %v471
  %v552 = vpack.c.b16 %v474, %v473
  %v553 = vpack.c.b16 %v476, %v475
  %v554 = vpack.c.b16 %v478, %v477
  %v555 = vpack.c.b16 %v480, %v479
  %v556 = vpack.c.b16 %v482, %v481
  %v557 = vpack.c.b16 %v484, %v483
  %v558 = vpack.c.b16 %v486, %v485
  %631 = vmatprep.subr.bf16.mxu0 0
  %632 = vmatpush1.bf16.msra.mxu0 %v494
  %633 = vmatprep.subr.bf16.mxu0 0
  %634 = vmatpush1.bf16.msra.mxu0 %v493
  %635 = vmatprep.subr.bf16.mxu0 0
  %636 = vmatpush1.bf16.msra.mxu0 %v492
  %637 = vmatprep.subr.bf16.mxu0 0
  %638 = vmatpush1.bf16.msra.mxu0 %v491
  %639 = vmatprep.subr.bf16.mxu0 0
  %640 = vmatpush1.bf16.msra.mxu0 %v490
  %641 = vmatprep.subr.bf16.mxu0 0
  %642 = vmatpush1.bf16.msra.mxu0 %v489
  %643 = vmatprep.subr.bf16.mxu0 0
  %644 = vmatpush1.bf16.msra.mxu0 %v488
  %645 = vmatprep.subr.bf16.mxu0 0
  %646 = vmatpush1.bf16.msra.mxu0 %v487
  %647 = vmatprep.subr.bf16.mxu0 0
  %648 = vmatpush2.bf16.msra.mxu0 %v502
  %649 = vmatprep.subr.bf16.mxu0 0
  %650 = vmatpush2.bf16.msra.mxu0 %v501
  %651 = vmatprep.subr.bf16.mxu0 0
  %652 = vmatpush2.bf16.msra.mxu0 %v500
  %653 = vmatprep.subr.bf16.mxu0 0
  %654 = vmatpush2.bf16.msra.mxu0 %v499
  %655 = vmatprep.subr.bf16.mxu0 0
  %656 = vmatpush2.bf16.msra.mxu0 %v498
  %657 = vmatprep.subr.bf16.mxu0 0
  %658 = vmatpush2.bf16.msra.mxu0 %v497
  %659 = vmatprep.subr.bf16.mxu0 0
  %660 = vmatpush2.bf16.msra.mxu0 %v496
  %661 = vmatprep.subr.bf16.mxu0 0
  %662 = vmatpush2.bf16.msra.mxu0 %v495
  %663 = vmatprep.mubr.bf16.mxu0 %v46
  %664 = vmatmul.mubr.bf16.gmra.mxu0 %v45
  %v665 = vpop.f32.mrf.mxu0
  %v666 = vadd.f32 0.0, %v665
  %v667 = vpop.f32.mrf.mxu0
  %v668 = vpop.f32.mrf.mxu0
  %v669 = vpop.f32.mrf.mxu0
  %670 = vdwg.mxu0
  %671 = vmatprep.subr.bf16.mxu0 0
  %672 = vmatpush1.bf16.msra.mxu0 %v510
  %673 = vmatprep.subr.bf16.mxu0 0
  %674 = vmatpush1.bf16.msra.mxu0 %v509
  %675 = vmatprep.subr.bf16.mxu0 0
  %676 = vmatpush1.bf16.msra.mxu0 %v508
  %677 = vmatprep.subr.bf16.mxu0 0
  %678 = vmatpush1.bf16.msra.mxu0 %v507
  %679 = vmatprep.subr.bf16.mxu0 0
  %680 = vmatpush1.bf16.msra.mxu0 %v506
  %681 = vmatprep.subr.bf16.mxu0 0
  %682 = vmatpush1.bf16.msra.mxu0 %v505
  %683 = vmatprep.subr.bf16.mxu0 0
  %684 = vmatpush1.bf16.msra.mxu0 %v504
  %685 = vmatprep.subr.bf16.mxu0 0
  %686 = vmatpush1.bf16.msra.mxu0 %v503
  %687 = vmatprep.subr.bf16.mxu0 0
  %688 = vmatpush2.bf16.msra.mxu0 %v518
  %689 = vmatprep.subr.bf16.mxu0 0
  %690 = vmatpush2.bf16.msra.mxu0 %v517
  %691 = vmatprep.subr.bf16.mxu0 0
  %692 = vmatpush2.bf16.msra.mxu0 %v516
  %693 = vmatprep.subr.bf16.mxu0 0
  %694 = vmatpush2.bf16.msra.mxu0 %v515
  %695 = vmatprep.subr.bf16.mxu0 0
  %696 = vmatpush2.bf16.msra.mxu0 %v514
  %697 = vmatprep.subr.bf16.mxu0 0
  %698 = vmatpush2.bf16.msra.mxu0 %v513
  %699 = vmatprep.subr.bf16.mxu0 0
  %700 = vmatpush2.bf16.msra.mxu0 %v512
  %701 = vmatprep.subr.bf16.mxu0 0
  %702 = vmatpush2.bf16.msra.mxu0 %v511
  %703 = vmatprep.mubr.bf16.mxu0 %v48
  %704 = vmatmul.mubr.bf16.gmra.mxu0 %v47
  %v705 = vpop.f32.mrf.mxu0
  %v706 = vadd.f32 %v666, %v705
  %v707 = vpop.f32.mrf.mxu0
  %v708 = vpop.f32.mrf.mxu0
  %v709 = vpop.f32.mrf.mxu0
  %710 = vdwg.mxu0
  %711 = vmatprep.subr.bf16.mxu0 0
  %712 = vmatpush1.bf16.msra.mxu0 %v526
  %713 = vmatprep.subr.bf16.mxu0 0
  %714 = vmatpush1.bf16.msra.mxu0 %v525
  %715 = vmatprep.subr.bf16.mxu0 0
  %716 = vmatpush1.bf16.msra.mxu0 %v524
  %717 = vmatprep.subr.bf16.mxu0 0
  %718 = vmatpush1.bf16.msra.mxu0 %v523
  %719 = vmatprep.subr.bf16.mxu0 0
  %720 = vmatpush1.bf16.msra.mxu0 %v522
  %721 = vmatprep.subr.bf16.mxu0 0
  %722 = vmatpush1.bf16.msra.mxu0 %v521
  %723 = vmatprep.subr.bf16.mxu0 0
  %724 = vmatpush1.bf16.msra.mxu0 %v520
  %725 = vmatprep.subr.bf16.mxu0 0
  %726 = vmatpush1.bf16.msra.mxu0 %v519
  %727 = vmatprep.subr.bf16.mxu0 0
  %728 = vmatpush2.bf16.msra.mxu0 %v534
  %729 = vmatprep.subr.bf16.mxu0 0
  %730 = vmatpush2.bf16.msra.mxu0 %v533
  %731 = vmatprep.subr.bf16.mxu0 0
  %732 = vmatpush2.bf16.msra.mxu0 %v532
  %733 = vmatprep.subr.bf16.mxu0 0
  %734 = vmatpush2.bf16.msra.mxu0 %v531
  %735 = vmatprep.subr.bf16.mxu0 0
  %736 = vmatpush2.bf16.msra.mxu0 %v530
  %737 = vmatprep.subr.bf16.mxu0 0
  %738 = vmatpush2.bf16.msra.mxu0 %v529
  %739 = vmatprep.subr.bf16.mxu0 0
  %740 = vmatpush2.bf16.msra.mxu0 %v528
  %741 = vmatprep.subr.bf16.mxu0 0
  %742 = vmatpush2.bf16.msra.mxu0 %v527
  %743 = vmatprep.mubr.bf16.mxu0 %v50
  %744 = vmatmul.mubr.bf16.gmra.mxu0 %v49
  %v745 = vpop.f32.mrf.mxu0
  %v746 = vadd.f32 %v706, %v745
  %v747 = vpop.f32.mrf.mxu0
  %v748 = vpop.f32.mrf.mxu0
  %v749 = vpop.f32.mrf.mxu0
  %750 = vdwg.mxu0
  %751 = vmatprep.subr.bf16.mxu0 0
  %752 = vmatpush1.bf16.msra.mxu0 %v542
  %753 = vmatprep.subr.bf16.mxu0 0
  %754 = vmatpush1.bf16.msra.mxu0 %v541
  %755 = vmatprep.subr.bf16.mxu0 0
  %756 = vmatpush1.bf16.msra.mxu0 %v540
  %757 = vmatprep.subr.bf16.mxu0 0
  %758 = vmatpush1.bf16.msra.mxu0 %v539
  %759 = vmatprep.subr.bf16.mxu0 0
  %760 = vmatpush1.bf16.msra.mxu0 %v538
  %761 = vmatprep.subr.bf16.mxu0 0
  %762 = vmatpush1.bf16.msra.mxu0 %v537
  %763 = vmatprep.subr.bf16.mxu0 0
  %764 = vmatpush1.bf16.msra.mxu0 %v536
  %765 = vmatprep.subr.bf16.mxu0 0
  %766 = vmatpush1.bf16.msra.mxu0 %v535
  %767 = vmatprep.subr.bf16.mxu0 0
  %768 = vmatpush2.bf16.msra.mxu0 %v550
  %769 = vmatprep.subr.bf16.mxu0 0
  %770 = vmatpush2.bf16.msra.mxu0 %v549
  %771 = vmatprep.subr.bf16.mxu0 0
  %772 = vmatpush2.bf16.msra.mxu0 %v548
  %773 = vmatprep.subr.bf16.mxu0 0
  %774 = vmatpush2.bf16.msra.mxu0 %v547
  %775 = vmatprep.subr.bf16.mxu0 0
  %776 = vmatpush2.bf16.msra.mxu0 %v546
  %777 = vmatprep.subr.bf16.mxu0 0
  %778 = vmatpush2.bf16.msra.mxu0 %v545
  %779 = vmatprep.subr.bf16.mxu0 0
  %780 = vmatpush2.bf16.msra.mxu0 %v544
  %781 = vmatprep.subr.bf16.mxu0 0
  %782 = vmatpush2.bf16.msra.mxu0 %v543
  %783 = vmatprep.mubr.bf16.mxu0 %v52
  %784 = vmatmul.mubr.bf16.gmra.mxu0 %v51
  %v785 = vpop.f32.mrf.mxu0
  %v786 = vadd.f32 %v746, %v785
  %v787 = vpop.f32.mrf.mxu0
  %v788 = vpop.f32.mrf.mxu0
  %v789 = vpop.f32.mrf.mxu0
  %790 = vdwg.mxu0
  %791 = vmatprep.subr.bf16.mxu0 0
  %792 = vmatpush1.bf16.msra.mxu0 %v558
  %793 = vmatprep.subr.bf16.mxu0 0
  %794 = vmatpush1.bf16.msra.mxu0 %v557
  %795 = vmatprep.subr.bf16.mxu0 0
  %796 = vmatpush1.bf16.msra.mxu0 %v556
  %797 = vmatprep.subr.bf16.mxu0 0
  %798 = vmatpush1.bf16.msra.mxu0 %v555
  %799 = vmatprep.subr.bf16.mxu0 0
  %800 = vmatpush1.bf16.msra.mxu0 %v554
  %801 = vmatprep.subr.bf16.mxu0 0
  %802 = vmatpush1.bf16.msra.mxu0 %v553
  %803 = vmatprep.subr.bf16.mxu0 0
  %804 = vmatpush1.bf16.msra.mxu0 %v552
  %805 = vmatprep.subr.bf16.mxu0 0
  %806 = vmatpush1.bf16.msra.mxu0 %v551
  %807 = vmatprep.subr.bf16.mxu0 0
  %808 = vmatpush2.bf16.msra.mxu0 0
  %809 = vmatprep.subr.bf16.mxu0 0
  %810 = vmatpush2.bf16.msra.mxu0 0
  %811 = vmatprep.subr.bf16.mxu0 0
  %812 = vmatpush2.bf16.msra.mxu0 0
  %813 = vmatprep.subr.bf16.mxu0 0
  %814 = vmatpush2.bf16.msra.mxu0 0
  %815 = vmatprep.subr.bf16.mxu0 0
  %816 = vmatpush2.bf16.msra.mxu0 0
  %817 = vmatprep.subr.bf16.mxu0 0
  %818 = vmatpush2.bf16.msra.mxu0 0
  %819 = vmatprep.subr.bf16.mxu0 0
  %820 = vmatpush2.bf16.msra.mxu0 0
  %821 = vmatprep.subr.bf16.mxu0 0
  %822 = vmatpush2.bf16.msra.mxu0 0
  %823 = vmatprep.mubr.bf16.mxu0 0
  %824 = vmatmul.mubr.bf16.gmra.mxu0 %v53
  %v825 = vpop.f32.mrf.mxu0
  %v826 = vadd.f32 %v786, %v825
  %v827 = vpop.f32.mrf.mxu0
  %v828 = vpop.f32.mrf.mxu0
  %v829 = vpop.f32.mrf.mxu0
  %830 = vdwg.mxu0
  %v831 = vadd.f32 %v54, %v826
  %832 = vst [vmem:[#allocation2] sm:$0xff] %v831
  // Predicated region
  $region18: #{_lambda_.29} parent=0 // pred_check
    %p833 = pneg %p17
  $region19: #{_lambda_.29} parent=0 // pred_check_branch
    %835 = sbr.rel (%p833) target = $region21
  $region20: #{_lambda_.29} parent=0 // pred_region
    %v836 = vld [vmem:[#allocation2] sm:$0xff]
    %v837 = vld [vmem:[%s2] sm:$0x1]
    %v839 = vlaneseq
    %v840 = vshrl.u32 %v839, 7
    %v841 = vsub.s32 0, %v840
    %v842 = vrot.slane %v837, %v841
    %v844 = vadd.f32 %v836, %v842
    %v845 = vpack.c.bf16 %v844, %v844
    %846 = vst [vmem:[%s3] sm:$0xf] %v845
    %v847 = vrot.slane %v844, 4
    %v848 = vadd.f32 %v844, %v847
    %v849 = vrot.slane %v848, 2
    %v850 = vadd.f32 %v848, %v849
    %v851 = vrot.slane %v850, 1
    %v852 = vadd.f32 %v850, %v851
    %v853 = vmul.f32 %v844, %v844
    %v854 = vrot.slane %v853, 4
    %v855 = vadd.f32 %v853, %v854
    %v856 = vrot.slane %v855, 2
    %v857 = vadd.f32 %v855, %v856
    %v858 = vrot.slane %v857, 1
    %v859 = vadd.f32 %v857, %v858
    %vm860 = vcmask 1040384
    %v861 = vsel %vm860, %v852, %v859
    %862 = vst [vmem:[%s4] sm:$0x3] %v861
  $region21: #{_lambda_.29} parent=0 // pred_fallthru
    _
  // Predicated region
  $region22: #{_lambda_.29} parent=0 // pred_check
    _
  $region23: #{_lambda_.29} parent=0 // pred_check_branch
    %864 = sbr.rel (0) target = $region25
  $region24: #{_lambda_.29} parent=0 // pred_region
    _
  $region25: #{_lambda_.29} parent=0 // pred_fallthru
    _
  // Predicated region
  $region26: #{_lambda_.29} parent=0 // pred_check
    _
  $region27: #{_lambda_.29} parent=0 // pred_check_branch
    %866 = sbr.rel (0) target = $region29
  $region28: #{_lambda_.29} parent=0 // pred_region
    _
  $region29: #{_lambda_.29} parent=0 // pred_fallthru
    _
  // Predicated region
  $region30: #{_lambda_.29} parent=0 // pred_check
    _
  $region31: #{_lambda_.29} parent=0 // pred_check_branch
    %868 = sbr.rel (0) target = $region33
  $region32: #{_lambda_.29} parent=0 // pred_region
    _
  $region33: #{_lambda_.29} parent=0 // pred_fallthru
    _
  // Predicated region
  $region34: #{_lambda_.29} parent=0 // pred_check
    _
  $region35: #{_lambda_.29} parent=0 // pred_check_branch
    %870 = sbr.rel (0) target = $region37
  $region36: #{_lambda_.29} parent=0 // pred_region
    _
  $region37: #{_lambda_.29} parent=0 // pred_fallthru
    _

// kernel: _lambda_.31
$region0: #{_lambda_.31}
  #allocation0 [shape = 'u32[]', space=smem, size = 0x4, offset = 0x4, fixed_abs, tag = 'smem constant byte address 0x4 - core index']
  #allocation1 [shape = 'u32[144,128]{1,0:T(1,128)}', space=vmem, size = 0x12000, scoped, tag = 'internal scratch']
  #allocation2 [shape = 'f32[32,128]{1,0:T(8,128)}', space=vmem, size = 0x4000, scoped, tag = 'scratch operand']
  %s0 = inlined_call_operand.vmem [shape: bf16[32,640], index: 0, kind: input, shape index: {}]
  %s1 = inlined_call_operand.vmem [shape: bf16[640,128], index: 1, kind: input, shape index: {}]
  %s2 = inlined_call_operand.vmem [shape: f32[1,128], index: 2, kind: input, shape index: {}]
  %s3 = inlined_call_operand.vmem [shape: bf16[32,128], index: 3, kind: output, shape index: {0}]
  %s4 = inlined_call_operand.vmem [shape: f32[1,2,128], index: 4, kind: output, shape index: {1}]
  %5 = xla_tuple %s3, %s4
  %s6 = sld [smem:[#allocation0]]
  $region38: #{_lambda_.31} parent=0
    _
  %s8 = ssub.s32 1, %s6
  %s9 = scalar_select 0, %s8, %s6
  // Predicated region
  $region2: #{_lambda_.31} parent=0 // pred_check
    _
  $region3: #{_lambda_.31} parent=0 // pred_check_branch
    %11 = sbr.rel (0) target = $region5
  $region4: #{_lambda_.31} parent=0 // pred_region
    _
  $region5: #{_lambda_.31} parent=0 // pred_fallthru
    _
  // Predicated region
  $region6: #{_lambda_.31} parent=0 // pred_check
    _
  $region7: #{_lambda_.31} parent=0 // pred_check_branch
    %13 = sbr.rel (0) target = $region9
  $region8: #{_lambda_.31} parent=0 // pred_region
    _
  $region9: #{_lambda_.31} parent=0 // pred_fallthru
    _
  // Predicated region
  $region10: #{_lambda_.31} parent=0 // pred_check
    _
  $region11: #{_lambda_.31} parent=0 // pred_check_branch
    %15 = sbr.rel (0) target = $region13
  $region12: #{_lambda_.31} parent=0 // pred_region
    _
  $region13: #{_lambda_.31} parent=0 // pred_fallthru
    _
  %p17 = scmp.eq.s32.totalorder 0, 0
  // Predicated region
  $region14: #{_lambda_.31} parent=0 // pred_check
    %p18 = pneg %p17
  $region15: #{_lambda_.31} parent=0 // pred_check_branch
    %20 = sbr.rel (%p18) target = $region17
  $region16: #{_lambda_.31} parent=0 // pred_region
    %21 = vst [vmem:[#allocation2] sm:$0xff] 0.0
    %22 = vst [vmem:[#allocation2 + $0x8] sm:$0xff] 0.0
    %23 = vst [vmem:[#allocation2 + $0x10] sm:$0xff] 0.0
    %24 = vst [vmem:[#allocation2 + $0x18] sm:$0xff] 0.0
  $region17: #{_lambda_.31} parent=0 // pred_fallthru
    _
  %v25 = vld [vmem:[%s0] sm:$0xff]
  %v26 = vld [vmem:[%s0 + $0x8] sm:$0xff]
  %v27 = vld [vmem:[%s0 + $0x10] sm:$0xf]
  %v28 = vld [vmem:[%s0 + $0x14] sm:$0xff]
  %v29 = vld [vmem:[%s0 + $0x1c] sm:$0xff]
  %v30 = vld [vmem:[%s0 + $0x24] sm:$0xf]
  %v31 = vld [vmem:[%s0 + $0x28] sm:$0xff]
  %v32 = vld [vmem:[%s0 + $0x30] sm:$0xff]
  %v33 = vld [vmem:[%s0 + $0x38] sm:$0xf]
  %v34 = vld [vmem:[%s0 + $0x3c] sm:$0xff]
  %v35 = vld [vmem:[%s0 + $0x44] sm:$0xff]
  %v36 = vld [vmem:[%s0 + $0x4c] sm:$0xf]
  %v37 = vunpack.c.l.bf16 %v25
  %v38 = vunpack.c.h.bf16 %v25
  %v39 = vunpack.c.l.bf16 %v26
  %v40 = vunpack.c.h.bf16 %v26
  %v41 = vunpack.c.l.bf16 %v27
  %v42 = vunpack.c.l.bf16 %v28
  %v43 = vunpack.c.h.bf16 %v28
  %v44 = vunpack.c.l.bf16 %v29
  %v45 = vunpack.c.h.bf16 %v29
  %v46 = vunpack.c.l.bf16 %v30
  %v47 = vunpack.c.l.bf16 %v31
  %v48 = vunpack.c.h.bf16 %v31
  %v49 = vunpack.c.l.bf16 %v32
  %v50 = vunpack.c.h.bf16 %v32
  %v51 = vunpack.c.l.bf16 %v33
  %v52 = vunpack.c.l.bf16 %v34
  %v53 = vunpack.c.h.bf16 %v34
  %v54 = vunpack.c.l.bf16 %v35
  %v55 = vunpack.c.h.bf16 %v35
  %v56 = vunpack.c.l.bf16 %v36
  %v57 = vmax.f32 %v37, 0.0
  %v58 = vmax.f32 %v38, 0.0
  %v59 = vmax.f32 %v39, 0.0
  %v60 = vmax.f32 %v40, 0.0
  %v61 = vmax.f32 %v41, 0.0
  %v62 = vmax.f32 %v42, 0.0
  %v63 = vmax.f32 %v43, 0.0
  %v64 = vmax.f32 %v44, 0.0
  %v65 = vmax.f32 %v45, 0.0
  %v66 = vmax.f32 %v46, 0.0
  %v67 = vmax.f32 %v47, 0.0
  %v68 = vmax.f32 %v48, 0.0
  %v69 = vmax.f32 %v49, 0.0
  %v70 = vmax.f32 %v50, 0.0
  %v71 = vmax.f32 %v51, 0.0
  %v72 = vmax.f32 %v52, 0.0
  %v73 = vmax.f32 %v53, 0.0
  %v74 = vmax.f32 %v54, 0.0
  %v75 = vmax.f32 %v55, 0.0
  %v76 = vmax.f32 %v56, 0.0
  %v77 = vpack.c.bf16 %v62, %v57
  %v78 = vpack.c.bf16 %v63, %v58
  %v79 = vpack.c.bf16 %v64, %v59
  %v80 = vpack.c.bf16 %v65, %v60
  %v81 = vpack.c.bf16 %v66, %v61
  %v82 = vpack.c.bf16 %v72, %v67
  %v83 = vpack.c.bf16 %v73, %v68
  %v84 = vpack.c.bf16 %v74, %v69
  %v85 = vpack.c.bf16 %v75, %v70
  %v86 = vpack.c.bf16 %v76, %v71
  %v87 = vld [vmem:[#allocation2] sm:$0xff]
  %v88 = vld [vmem:[#allocation2 + $0x8] sm:$0xff]
  %v89 = vld [vmem:[#allocation2 + $0x10] sm:$0xff]
  %v90 = vld [vmem:[#allocation2 + $0x18] sm:$0xff]
  %v91 = vld [vmem:[%s1] sm:$0xf]
  %v92 = vld [vmem:[%s1 + $0x4] sm:$0xf]
  %v93 = vld [vmem:[%s1 + $0x8] sm:$0xf]
  %v94 = vld [vmem:[%s1 + $0xc] sm:$0xf]
  %v95 = vld [vmem:[%s1 + $0x10] sm:$0xf]
  %v96 = vld [vmem:[%s1 + $0x14] sm:$0xf]
  %v97 = vld [vmem:[%s1 + $0x18] sm:$0xf]
  %v98 = vld [vmem:[%s1 + $0x1c] sm:$0xf]
  %v99 = vld [vmem:[%s1 + $0x20] sm:$0xf]
  %v100 = vld [vmem:[%s1 + $0x24] sm:$0xf]
  %v101 = vld [vmem:[%s1 + $0x28] sm:$0xf]
  %v102 = vld [vmem:[%s1 + $0x2c] sm:$0xf]
  %v103 = vld [vmem:[%s1 + $0x30] sm:$0xf]
  %v104 = vld [vmem:[%s1 + $0x34] sm:$0xf]
  %v105 = vld [vmem:[%s1 + $0x38] sm:$0xf]
  %v106 = vld [vmem:[%s1 + $0x3c] sm:$0xf]
  %v107 = vld [vmem:[%s1 + $0x40] sm:$0xf]
  %v108 = vld [vmem:[%s1 + $0x44] sm:$0xf]
  %v109 = vld [vmem:[%s1 + $0x48] sm:$0xf]
  %v110 = vld [vmem:[%s1 + $0x4c] sm:$0xf]
  %v111 = vld [vmem:[%s1 + $0x50] sm:$0xf]
  %v112 = vld [vmem:[%s1 + $0x54] sm:$0xf]
  %v113 = vld [vmem:[%s1 + $0x58] sm:$0xf]
  %v114 = vld [vmem:[%s1 + $0x5c] sm:$0xf]
  %v115 = vld [vmem:[%s1 + $0x60] sm:$0xf]
  %v116 = vld [vmem:[%s1 + $0x64] sm:$0xf]
  %v117 = vld [vmem:[%s1 + $0x68] sm:$0xf]
  %v118 = vld [vmem:[%s1 + $0x6c] sm:$0xf]
  %v119 = vld [vmem:[%s1 + $0x70] sm:$0xf]
  %v120 = vld [vmem:[%s1 + $0x74] sm:$0xf]
  %v121 = vld [vmem:[%s1 + $0x78] sm:$0xf]
  %v122 = vld [vmem:[%s1 + $0x7c] sm:$0xf]
  %v123 = vld [vmem:[%s1 + $0x80] sm:$0xf]
  %v124 = vld [vmem:[%s1 + $0x84] sm:$0xf]
  %v125 = vld [vmem:[%s1 + $0x88] sm:$0xf]
  %v126 = vld [vmem:[%s1 + $0x8c] sm:$0xf]
  %v127 = vld [vmem:[%s1 + $0x90] sm:$0xf]
  %v128 = vld [vmem:[%s1 + $0x94] sm:$0xf]
  %v129 = vld [vmem:[%s1 + $0x98] sm:$0xf]
  %v130 = vld [vmem:[%s1 + $0x9c] sm:$0xf]
  %v131 = vld [vmem:[%s1 + $0xa0] sm:$0xf]
  %v132 = vld [vmem:[%s1 + $0xa4] sm:$0xf]
  %v133 = vld [vmem:[%s1 + $0xa8] sm:$0xf]
  %v134 = vld [vmem:[%s1 + $0xac] sm:$0xf]
  %v135 = vld [vmem:[%s1 + $0xb0] sm:$0xf]
  %v136 = vld [vmem:[%s1 + $0xb4] sm:$0xf]
  %v137 = vld [vmem:[%s1 + $0xb8] sm:$0xf]
  %v138 = vld [vmem:[%s1 + $0xbc] sm:$0xf]
  %v139 = vld [vmem:[%s1 + $0xc0] sm:$0xf]
  %v140 = vld [vmem:[%s1 + $0xc4] sm:$0xf]
  %v141 = vld [vmem:[%s1 + $0xc8] sm:$0xf]
  %v142 = vld [vmem:[%s1 + $0xcc] sm:$0xf]
  %v143 = vld [vmem:[%s1 + $0xd0] sm:$0xf]
  %v144 = vld [vmem:[%s1 + $0xd4] sm:$0xf]
  %v145 = vld [vmem:[%s1 + $0xd8] sm:$0xf]
  %v146 = vld [vmem:[%s1 + $0xdc] sm:$0xf]
  %v147 = vld [vmem:[%s1 + $0xe0] sm:$0xf]
  %v148 = vld [vmem:[%s1 + $0xe4] sm:$0xf]
  %v149 = vld [vmem:[%s1 + $0xe8] sm:$0xf]
  %v150 = vld [vmem:[%s1 + $0xec] sm:$0xf]
  %v151 = vld [vmem:[%s1 + $0xf0] sm:$0xf]
  %v152 = vld [vmem:[%s1 + $0xf4] sm:$0xf]
  %v153 = vld [vmem:[%s1 + $0xf8] sm:$0xf]
  %v154 = vld [vmem:[%s1 + $0xfc] sm:$0xf]
  %v155 = vld [vmem:[%s1 + $0x100] sm:$0xf]
  %v156 = vld [vmem:[%s1 + $0x104] sm:$0xf]
  %v157 = vld [vmem:[%s1 + $0x108] sm:$0xf]
  %v158 = vld [vmem:[%s1 + $0x10c] sm:$0xf]
  %v159 = vld [vmem:[%s1 + $0x110] sm:$0xf]
  %v160 = vld [vmem:[%s1 + $0x114] sm:$0xf]
  %v161 = vld [vmem:[%s1 + $0x118] sm:$0xf]
  %v162 = vld [vmem:[%s1 + $0x11c] sm:$0xf]
  %v163 = vld [vmem:[%s1 + $0x120] sm:$0xf]
  %v164 = vld [vmem:[%s1 + $0x124] sm:$0xf]
  %v165 = vld [vmem:[%s1 + $0x128] sm:$0xf]
  %v166 = vld [vmem:[%s1 + $0x12c] sm:$0xf]
  %v167 = vld [vmem:[%s1 + $0x130] sm:$0xf]
  %v168 = vld [vmem:[%s1 + $0x134] sm:$0xf]
  %v169 = vld [vmem:[%s1 + $0x138] sm:$0xf]
  %v170 = vld [vmem:[%s1 + $0x13c] sm:$0xf]
  %v251 = vunpack.c.l.b16 %v91
  %v252 = vunpack.c.l.b16 %v92
  %v253 = vunpack.c.l.b16 %v93
  %v254 = vunpack.c.l.b16 %v94
  %v255 = vunpack.c.l.b16 %v95
  %v256 = vunpack.c.l.b16 %v96
  %v257 = vunpack.c.l.b16 %v97
  %v258 = vunpack.c.l.b16 %v98
  %v259 = vunpack.c.l.b16 %v99
  %v260 = vunpack.c.l.b16 %v100
  %v261 = vunpack.c.l.b16 %v101
  %v262 = vunpack.c.l.b16 %v102
  %v263 = vunpack.c.l.b16 %v103
  %v264 = vunpack.c.l.b16 %v104
  %v265 = vunpack.c.l.b16 %v105
  %v266 = vunpack.c.l.b16 %v106
  %v267 = vunpack.c.l.b16 %v107
  %v268 = vunpack.c.l.b16 %v108
  %v269 = vunpack.c.l.b16 %v109
  %v270 = vunpack.c.l.b16 %v110
  %v271 = vunpack.c.l.b16 %v111
  %v272 = vunpack.c.l.b16 %v112
  %v273 = vunpack.c.l.b16 %v113
  %v274 = vunpack.c.l.b16 %v114
  %v275 = vunpack.c.l.b16 %v115
  %v276 = vunpack.c.l.b16 %v116
  %v277 = vunpack.c.l.b16 %v117
  %v278 = vunpack.c.l.b16 %v118
  %v279 = vunpack.c.l.b16 %v119
  %v280 = vunpack.c.l.b16 %v120
  %v281 = vunpack.c.l.b16 %v121
  %v282 = vunpack.c.l.b16 %v122
  %v283 = vunpack.c.l.b16 %v123
  %v284 = vunpack.c.l.b16 %v124
  %v285 = vunpack.c.l.b16 %v125
  %v286 = vunpack.c.l.b16 %v126
  %v287 = vunpack.c.l.b16 %v127
  %v288 = vunpack.c.l.b16 %v128
  %v289 = vunpack.c.l.b16 %v129
  %v290 = vunpack.c.l.b16 %v130
  %v291 = vunpack.c.l.b16 %v131
  %v292 = vunpack.c.l.b16 %v132
  %v293 = vunpack.c.l.b16 %v133
  %v294 = vunpack.c.l.b16 %v134
  %v295 = vunpack.c.l.b16 %v135
  %v296 = vunpack.c.l.b16 %v136
  %v297 = vunpack.c.l.b16 %v137
  %v298 = vunpack.c.l.b16 %v138
  %v299 = vunpack.c.l.b16 %v139
  %v300 = vunpack.c.l.b16 %v140
  %v301 = vunpack.c.l.b16 %v141
  %v302 = vunpack.c.l.b16 %v142
  %v303 = vunpack.c.l.b16 %v143
  %v304 = vunpack.c.l.b16 %v144
  %v305 = vunpack.c.l.b16 %v145
  %v306 = vunpack.c.l.b16 %v146
  %v307 = vunpack.c.l.b16 %v147
  %v308 = vunpack.c.l.b16 %v148
  %v309 = vunpack.c.l.b16 %v149
  %v310 = vunpack.c.l.b16 %v150
  %v311 = vunpack.c.l.b16 %v151
  %v312 = vunpack.c.l.b16 %v152
  %v313 = vunpack.c.l.b16 %v153
  %v314 = vunpack.c.l.b16 %v154
  %v315 = vunpack.c.l.b16 %v155
  %v316 = vunpack.c.l.b16 %v156
  %v317 = vunpack.c.l.b16 %v157
  %v318 = vunpack.c.l.b16 %v158
  %v319 = vunpack.c.l.b16 %v159
  %v320 = vunpack.c.l.b16 %v160
  %v321 = vunpack.c.l.b16 %v161
  %v322 = vunpack.c.l.b16 %v162
  %v323 = vunpack.c.l.b16 %v163
  %v324 = vunpack.c.l.b16 %v164
  %v325 = vunpack.c.l.b16 %v165
  %v326 = vunpack.c.l.b16 %v166
  %v327 = vunpack.c.l.b16 %v167
  %v328 = vunpack.c.l.b16 %v168
  %v329 = vunpack.c.l.b16 %v169
  %v330 = vunpack.c.l.b16 %v170
  %v331 = vpack.c.b16 %v252, %v251
  %v332 = vpack.c.b16 %v254, %v253
  %v333 = vpack.c.b16 %v256, %v255
  %v334 = vpack.c.b16 %v258, %v257
  %v335 = vpack.c.b16 %v260, %v259
  %v336 = vpack.c.b16 %v262, %v261
  %v337 = vpack.c.b16 %v264, %v263
  %v338 = vpack.c.b16 %v266, %v265
  %v339 = vpack.c.b16 %v268, %v267
  %v340 = vpack.c.b16 %v270, %v269
  %v341 = vpack.c.b16 %v272, %v271
  %v342 = vpack.c.b16 %v274, %v273
  %v343 = vpack.c.b16 %v276, %v275
  %v344 = vpack.c.b16 %v278, %v277
  %v345 = vpack.c.b16 %v280, %v279
  %v346 = vpack.c.b16 %v282, %v281
  %v347 = vpack.c.b16 %v284, %v283
  %v348 = vpack.c.b16 %v286, %v285
  %v349 = vpack.c.b16 %v288, %v287
  %v350 = vpack.c.b16 %v290, %v289
  %v351 = vpack.c.b16 %v292, %v291
  %v352 = vpack.c.b16 %v294, %v293
  %v353 = vpack.c.b16 %v296, %v295
  %v354 = vpack.c.b16 %v298, %v297
  %v355 = vpack.c.b16 %v300, %v299
  %v356 = vpack.c.b16 %v302, %v301
  %v357 = vpack.c.b16 %v304, %v303
  %v358 = vpack.c.b16 %v306, %v305
  %v359 = vpack.c.b16 %v308, %v307
  %v360 = vpack.c.b16 %v310, %v309
  %v361 = vpack.c.b16 %v312, %v311
  %v362 = vpack.c.b16 %v314, %v313
  %v363 = vpack.c.b16 %v316, %v315
  %v364 = vpack.c.b16 %v318, %v317
  %v365 = vpack.c.b16 %v320, %v319
  %v366 = vpack.c.b16 %v322, %v321
  %v367 = vpack.c.b16 %v324, %v323
  %v368 = vpack.c.b16 %v326, %v325
  %v369 = vpack.c.b16 %v328, %v327
  %v370 = vpack.c.b16 %v330, %v329
  %411 = vmatprep.subr.bf16.mxu0 0
  %412 = vmatpush1.bf16.msra.mxu0 %v338
  %413 = vmatprep.subr.bf16.mxu0 0
  %414 = vmatpush1.bf16.msra.mxu0 %v337
  %415 = vmatprep.subr.bf16.mxu0 0
  %416 = vmatpush1.bf16.msra.mxu0 %v336
  %417 = vmatprep.subr.bf16.mxu0 0
  %418 = vmatpush1.bf16.msra.mxu0 %v335
  %419 = vmatprep.subr.bf16.mxu0 0
  %420 = vmatpush1.bf16.msra.mxu0 %v334
  %421 = vmatprep.subr.bf16.mxu0 0
  %422 = vmatpush1.bf16.msra.mxu0 %v333
  %423 = vmatprep.subr.bf16.mxu0 0
  %424 = vmatpush1.bf16.msra.mxu0 %v332
  %425 = vmatprep.subr.bf16.mxu0 0
  %426 = vmatpush1.bf16.msra.mxu0 %v331
  %427 = vmatprep.subr.bf16.mxu0 0
  %428 = vmatpush2.bf16.msra.mxu0 %v346
  %429 = vmatprep.subr.bf16.mxu0 0
  %430 = vmatpush2.bf16.msra.mxu0 %v345
  %431 = vmatprep.subr.bf16.mxu0 0
  %432 = vmatpush2.bf16.msra.mxu0 %v344
  %433 = vmatprep.subr.bf16.mxu0 0
  %434 = vmatpush2.bf16.msra.mxu0 %v343
  %435 = vmatprep.subr.bf16.mxu0 0
  %436 = vmatpush2.bf16.msra.mxu0 %v342
  %437 = vmatprep.subr.bf16.mxu0 0
  %438 = vmatpush2.bf16.msra.mxu0 %v341
  %439 = vmatprep.subr.bf16.mxu0 0
  %440 = vmatpush2.bf16.msra.mxu0 %v340
  %441 = vmatprep.subr.bf16.mxu0 0
  %442 = vmatpush2.bf16.msra.mxu0 %v339
  %443 = vmatprep.mubr.bf16.mxu0 %v78
  %444 = vmatmul.mubr.bf16.gmra.mxu0 %v77
  %v445 = vpop.f32.mrf.mxu0
  %v446 = vadd.f32 0.0, %v445
  %v447 = vpop.f32.mrf.mxu0
  %v448 = vpop.f32.mrf.mxu0
  %v449 = vadd.f32 0.0, %v448
  %v450 = vpop.f32.mrf.mxu0
  %451 = vmatprep.mubr.bf16.mxu0 %v83
  %452 = vmatmul.mubr.bf16.gmra.mxu0 %v82
  %v453 = vpop.f32.mrf.mxu0
  %v454 = vadd.f32 0.0, %v453
  %v455 = vpop.f32.mrf.mxu0
  %v456 = vpop.f32.mrf.mxu0
  %v457 = vadd.f32 0.0, %v456
  %v458 = vpop.f32.mrf.mxu0
  %459 = vdwg.mxu0
  %460 = vmatprep.subr.bf16.mxu0 0
  %461 = vmatpush1.bf16.msra.mxu0 %v354
  %462 = vmatprep.subr.bf16.mxu0 0
  %463 = vmatpush1.bf16.msra.mxu0 %v353
  %464 = vmatprep.subr.bf16.mxu0 0
  %465 = vmatpush1.bf16.msra.mxu0 %v352
  %466 = vmatprep.subr.bf16.mxu0 0
  %467 = vmatpush1.bf16.msra.mxu0 %v351
  %468 = vmatprep.subr.bf16.mxu0 0
  %469 = vmatpush1.bf16.msra.mxu0 %v350
  %470 = vmatprep.subr.bf16.mxu0 0
  %471 = vmatpush1.bf16.msra.mxu0 %v349
  %472 = vmatprep.subr.bf16.mxu0 0
  %473 = vmatpush1.bf16.msra.mxu0 %v348
  %474 = vmatprep.subr.bf16.mxu0 0
  %475 = vmatpush1.bf16.msra.mxu0 %v347
  %476 = vmatprep.subr.bf16.mxu0 0
  %477 = vmatpush2.bf16.msra.mxu0 %v362
  %478 = vmatprep.subr.bf16.mxu0 0
  %479 = vmatpush2.bf16.msra.mxu0 %v361
  %480 = vmatprep.subr.bf16.mxu0 0
  %481 = vmatpush2.bf16.msra.mxu0 %v360
  %482 = vmatprep.subr.bf16.mxu0 0
  %483 = vmatpush2.bf16.msra.mxu0 %v359
  %484 = vmatprep.subr.bf16.mxu0 0
  %485 = vmatpush2.bf16.msra.mxu0 %v358
  %486 = vmatprep.subr.bf16.mxu0 0
  %487 = vmatpush2.bf16.msra.mxu0 %v357
  %488 = vmatprep.subr.bf16.mxu0 0
  %489 = vmatpush2.bf16.msra.mxu0 %v356
  %490 = vmatprep.subr.bf16.mxu0 0
  %491 = vmatpush2.bf16.msra.mxu0 %v355
  %492 = vmatprep.mubr.bf16.mxu0 %v80
  %493 = vmatmul.mubr.bf16.gmra.mxu0 %v79
  %v494 = vpop.f32.mrf.mxu0
  %v495 = vadd.f32 %v446, %v494
  %v496 = vpop.f32.mrf.mxu0
  %v497 = vpop.f32.mrf.mxu0
  %v498 = vadd.f32 %v449, %v497
  %v499 = vpop.f32.mrf.mxu0
  %500 = vmatprep.mubr.bf16.mxu0 %v85
  %501 = vmatmul.mubr.bf16.gmra.mxu0 %v84
  %v502 = vpop.f32.mrf.mxu0
  %v503 = vadd.f32 %v454, %v502
  %v504 = vpop.f32.mrf.mxu0
  %v505 = vpop.f32.mrf.mxu0
  %v506 = vadd.f32 %v457, %v505
  %v507 = vpop.f32.mrf.mxu0
  %508 = vdwg.mxu0
  %509 = vmatprep.subr.bf16.mxu0 0
  %510 = vmatpush1.bf16.msra.mxu0 %v370
  %511 = vmatprep.subr.bf16.mxu0 0
  %512 = vmatpush1.bf16.msra.mxu0 %v369
  %513 = vmatprep.subr.bf16.mxu0 0
  %514 = vmatpush1.bf16.msra.mxu0 %v368
  %515 = vmatprep.subr.bf16.mxu0 0
  %516 = vmatpush1.bf16.msra.mxu0 %v367
  %517 = vmatprep.subr.bf16.mxu0 0
  %518 = vmatpush1.bf16.msra.mxu0 %v366
  %519 = vmatprep.subr.bf16.mxu0 0
  %520 = vmatpush1.bf16.msra.mxu0 %v365
  %521 = vmatprep.subr.bf16.mxu0 0
  %522 = vmatpush1.bf16.msra.mxu0 %v364
  %523 = vmatprep.subr.bf16.mxu0 0
  %524 = vmatpush1.bf16.msra.mxu0 %v363
  %525 = vmatprep.subr.bf16.mxu0 0
  %526 = vmatpush2.bf16.msra.mxu0 0
  %527 = vmatprep.subr.bf16.mxu0 0
  %528 = vmatpush2.bf16.msra.mxu0 0
  %529 = vmatprep.subr.bf16.mxu0 0
  %530 = vmatpush2.bf16.msra.mxu0 0
  %531 = vmatprep.subr.bf16.mxu0 0
  %532 = vmatpush2.bf16.msra.mxu0 0
  %533 = vmatprep.subr.bf16.mxu0 0
  %534 = vmatpush2.bf16.msra.mxu0 0
  %535 = vmatprep.subr.bf16.mxu0 0
  %536 = vmatpush2.bf16.msra.mxu0 0
  %537 = vmatprep.subr.bf16.mxu0 0
  %538 = vmatpush2.bf16.msra.mxu0 0
  %539 = vmatprep.subr.bf16.mxu0 0
  %540 = vmatpush2.bf16.msra.mxu0 0
  %541 = vmatprep.mubr.bf16.mxu0 0
  %542 = vmatmul.mubr.bf16.gmra.mxu0 %v81
  %v543 = vpop.f32.mrf.mxu0
  %v544 = vadd.f32 %v495, %v543
  %v545 = vpop.f32.mrf.mxu0
  %v546 = vpop.f32.mrf.mxu0
  %v547 = vadd.f32 %v498, %v546
  %v548 = vpop.f32.mrf.mxu0
  %549 = vmatprep.mubr.bf16.mxu0 0
  %550 = vmatmul.mubr.bf16.gmra.mxu0 %v86
  %v551 = vpop.f32.mrf.mxu0
  %v552 = vadd.f32 %v503, %v551
  %v553 = vpop.f32.mrf.mxu0
  %v554 = vpop.f32.mrf.mxu0
  %v555 = vadd.f32 %v506, %v554
  %v556 = vpop.f32.mrf.mxu0
  %557 = vdwg.mxu0
  %v558 = vadd.f32 %v87, %v544
  %v559 = vadd.f32 %v88, %v547
  %v560 = vadd.f32 %v89, %v552
  %v561 = vadd.f32 %v90, %v555
  %562 = vst [vmem:[#allocation2] sm:$0xff] %v558
  %563 = vst [vmem:[#allocation2 + $0x8] sm:$0xff] %v559
  %564 = vst [vmem:[#allocation2 + $0x10] sm:$0xff] %v560
  %565 = vst [vmem:[#allocation2 + $0x18] sm:$0xff] %v561
  // Predicated region
  $region18: #{_lambda_.31} parent=0 // pred_check
    %p566 = pneg %p17
  $region19: #{_lambda_.31} parent=0 // pred_check_branch
    %568 = sbr.rel (%p566) target = $region21
  $region20: #{_lambda_.31} parent=0 // pred_region
    %v569 = vld [vmem:[#allocation2] sm:$0xff]
    %v570 = vld [vmem:[#allocation2 + $0x8] sm:$0xff]
    %v571 = vld [vmem:[#allocation2 + $0x10] sm:$0xff]
    %v572 = vld [vmem:[#allocation2 + $0x18] sm:$0xff]
    %v573 = vld [vmem:[%s2] sm:$0x1]
    %v575 = vlaneseq
    %v576 = vshrl.u32 %v575, 7
    %v577 = vsub.s32 0, %v576
    %v578 = vrot.slane %v573, %v577
    %v580 = vadd.f32 %v569, %v578
    %v581 = vadd.f32 %v570, %v578
    %v582 = vadd.f32 %v571, %v578
    %v583 = vadd.f32 %v572, %v578
    %v584 = vpack.c.bf16 %v581, %v580
    %v585 = vpack.c.bf16 %v583, %v582
    %v588 = vunpack.c.l.b16 %v584
    %v589 = vunpack.c.h.b16 %v584
    %v590 = vunpack.c.l.b16 %v585
    %v591 = vunpack.c.h.b16 %v585
    %v592 = vpack.c.b16 %v588, %v588
    %v593 = vpack.c.b16 %v589, %v589
    %v594 = vpack.c.b16 %v590, %v590
    %v595 = vpack.c.b16 %v591, %v591
    %600 = vst [vmem:[%s3] sm:$0xf] %v592
    %601 = vst [vmem:[%s3 + $0x4] sm:$0xf] %v593
    %602 = vst [vmem:[%s3 + $0x8] sm:$0xf] %v594
    %603 = vst [vmem:[%s3 + $0xc] sm:$0xf] %v595
    %v604 = vadd.f32 %v580, %v581
    %v605 = vadd.f32 %v604, %v582
    %v606 = vadd.f32 %v605, %v583
    %v607 = vrot.slane %v606, 4
    %v608 = vadd.f32 %v606, %v607
    %v609 = vrot.slane %v608, 2
    %v610 = vadd.f32 %v608, %v609
    %v611 = vrot.slane %v610, 1
    %v612 = vadd.f32 %v610, %v611
    %v613 = vmul.f32 %v580, %v580
    %v614 = vmul.f32 %v581, %v581
    %v615 = vmul.f32 %v582, %v582
    %v616 = vmul.f32 %v583, %v583
    %v617 = vadd.f32 %v613, %v614
    %v618 = vadd.f32 %v617, %v615
    %v619 = vadd.f32 %v618, %v616
    %v620 = vrot.slane %v619, 4
    %v621 = vadd.f32 %v619, %v620
    %v622 = vrot.slane %v621, 2
    %v623 = vadd.f32 %v621, %v622
    %v624 = vrot.slane %v623, 1
    %v625 = vadd.f32 %v623, %v624
    %vm626 = vcmask 1040384
    %v627 = vsel %vm626, %v612, %v625
    %628 = vst [vmem:[%s4] sm:$0x3] %v627
  $region21: #{_lambda_.31} parent=0 // pred_fallthru
    _
  // Predicated region
  $region22: #{_lambda_.31} parent=0 // pred_check
    _
  $region23: #{_lambda_.31} parent=0 // pred_check_branch
    %630 = sbr.rel (0) target = $region25
  $region24: #{_lambda_.31} parent=0 // pred_region
    _
  $region25: #{_lambda_.31} parent=0 // pred_fallthru
    _
  // Predicated region
  $region26: #{_lambda_.31} parent=0 // pred_check
    _
  $region27: #{_lambda_.31} parent=0 // pred_check_branch
    %632 = sbr.rel (0) target = $region29
  $region28: #{_lambda_.31} parent=0 // pred_region
    _
  $region29: #{_lambda_.31} parent=0 // pred_fallthru
    _
  // Predicated region
  $region30: #{_lambda_.31} parent=0 // pred_check
    _
  $region31: #{_lambda_.31} parent=0 // pred_check_branch
    %634 = sbr.rel (0) target = $region33
  $region32: #{_lambda_.31} parent=0 // pred_region
    _
  $region33: #{_lambda_.31} parent=0 // pred_fallthru
    _
  // Predicated region
  $region34: #{_lambda_.31} parent=0 // pred_check
    _
  $region35: #{_lambda_.31} parent=0 // pred_check_branch
    %636 = sbr.rel (0) target = $region37
  $region36: #{_lambda_.31} parent=0 // pred_region
    _
  $region37: #{_lambda_.31} parent=0 // pred_fallthru
    _

// kernel: squeeze.14
$region0: #{squeeze.14}
  %s0 = inlined_call_operand.vmem [shape: f32[32], index: 0, kind: input, shape index: {}]
  %s1 = inlined_call_operand.vmem [shape: f32[4,8], index: 1, kind: output, shape index: {}]
  $region1: #{squeeze.14} parent=0
    #allocation0 [shape = 'u8[4096]{0}', space=vmem, size = 0x1000, scoped, tag = 'scoped mem for output reshape']
    #allocation1 [shape = 'u8[4096]{0}', space=vmem, size = 0x1000, scoped, tag = 'scoped mem for input reshape']
    %s3 = sshll.u32 1, 1
    %s4 = ssub.s32 %s3, 1
    %v5 = vld [vmem:[%s0] sm:%s4]
    %6 = vst [vmem:[#allocation1] sm:%s4] %v5
    %v7 = vld [vmem:[#allocation1] sm:$0x1]
    %vm8 = vcmask 64512
    %9 = vst.msk [vmem:[#allocation0] sm:$0x1] %vm8, %v7
    %v10 = vld [vmem:[#allocation1] sm:$0x1]
    %11 = vrot.lane.b32.xlu0 %v10, 120
    %v12 = vpop.permute.xlu0 %11
    %vm13 = vcmask 64512
    %s14 = scalar_lea.vmem [#allocation0], 1
    %15 = vst.msk [vmem:[%s14] sm:$0x1] %vm13, %v12
    %v16 = vld [vmem:[#allocation1] sm:$0x1]
    %17 = vrot.lane.b32.xlu0 %v16, 112
    %v18 = vpop.permute.xlu0 %17
    %vm19 = vcmask 64512
    %s20 = scalar_lea.vmem [#allocation0], 2
    %21 = vst.msk [vmem:[%s20] sm:$0x1] %vm19, %v18
    %v22 = vld [vmem:[#allocation1] sm:$0x1]
    %23 = vrot.lane.b32.xlu0 %v22, 104
    %v24 = vpop.permute.xlu0 %23
    %vm25 = vcmask 64512
    %s26 = scalar_lea.vmem [#allocation0], 3
    %27 = vst.msk [vmem:[%s26] sm:$0x1] %vm25, %v24
    %s29 = sshll.u32 1, 4
    %s30 = ssub.s32 %s29, 1
    %v32 = vld [vmem:[#allocation0] sm:%s30]
    %s33 = sshll.u32 1, 4
    %s34 = ssub.s32 %s33, 1
    %35 = vst [vmem:[%s1] sm:%s34] %v32

// kernel: tile.78
$region0: #{tile.78}
  #allocation0 [shape = 's32[1]{0}', space=sflag, size = 0x4, scoped, tag = 'scoped memory for tile.78']
  %s0 = inlined_call_operand.vmem [shape: f32[8], index: 0, kind: input, shape index: {}]
  %s1 = inlined_call_operand.vmem [shape: f32[4,8], index: 1, kind: output, shape index: {}]
  // Predicated region
  $region2: #{tile.78} parent=0 // pred_check
    _
  $region3: #{tile.78} parent=0 // pred_check_branch
    %3 = sbr.rel (0) target = $region5
  $region4: #{tile.78} parent=0 // pred_region
    _
  $region5: #{tile.78} parent=0 // pred_fallthru
    _
  %v4 = vld [vmem:[%s0] ss:$0 sm:$0xff]
  %5 = vst [vmem:[%s1] sm:$0xf] %v4

// kernel: tile.79
$region0: #{tile.79}
  %s0 = inlined_call_operand.vmem [shape: f32[4,8], index: 0, kind: input, shape index: {}]
  %s1 = inlined_call_operand.vmem [shape: f32[32], index: 1, kind: output, shape index: {}]
  $region1: #{tile.79} parent=0
    #allocation0 [shape = 'u8[4096]{0}', space=vmem, size = 0x1000, scoped, tag = 'scoped mem for output reshape']
    #allocation1 [shape = 'u8[4096]{0}', space=vmem, size = 0x1000, scoped, tag = 'scoped mem for input reshape']
    %s3 = sshll.u32 1, 4
    %s4 = ssub.s32 %s3, 1
    %v5 = vld [vmem:[%s0] sm:%s4]
    %6 = vst [vmem:[#allocation1] sm:%s4] %v5
    %v7 = vld [vmem:[#allocation1] sm:$0x1]
    %vm8 = vcmask 64512
    %9 = vst.msk [vmem:[#allocation0] sm:$0x1] %vm8, %v7
    %s10 = scalar_lea.vmem [#allocation1], 3
    %v11 = vld [vmem:[%s10] sm:$0x1]
    %12 = vrot.lane.b32.xlu0 %v11, 24
    %v13 = vpop.permute.xlu0 %12
    %vm14 = vcmask 261312
    %15 = vst.msk [vmem:[#allocation0] sm:$0x1] %vm14, %v13
    %s16 = scalar_lea.vmem [#allocation1], 2
    %v17 = vld [vmem:[%s16] sm:$0x1]
    %18 = vrot.lane.b32.xlu0 %v17, 16
    %v19 = vpop.permute.xlu0 %18
    %vm20 = vcmask 195712
    %21 = vst.msk [vmem:[#allocation0] sm:$0x1] %vm20, %v19
    %s22 = scalar_lea.vmem [#allocation1], 1
    %v23 = vld [vmem:[%s22] sm:$0x1]
    %24 = vrot.lane.b32.xlu0 %v23, 8
    %v25 = vpop.permute.xlu0 %24
    %vm26 = vcmask 130112
    %27 = vst.msk [vmem:[#allocation0] sm:$0x1] %vm26, %v25
    %s29 = sshll.u32 1, 1
    %s30 = ssub.s32 %s29, 1
    %v32 = vld [vmem:[#allocation0] sm:%s30]
    %s33 = sshll.u32 1, 1
    %s34 = ssub.s32 %s33, 1
    %35 = vst [vmem:[%s1] sm:%s34] %v32

// kernel: _lambda_.33
$region0: #{_lambda_.33}
  #allocation0 [shape = 'u32[]', space=smem, size = 0x4, offset = 0x4, fixed_abs, tag = 'smem constant byte address 0x4 - core index']
  #allocation1 [shape = 'u32[144,128]{1,0:T(1,128)}', space=vmem, size = 0x12000, scoped, tag = 'internal scratch']
  #allocation2 [shape = 'f32[128,128]{1,0:T(8,128)}', space=vmem, size = 0x10000, scoped, tag = 'scratch operand']
  %s0 = inlined_call_operand.vmem [shape: bf16[128,384], index: 0, kind: input, shape index: {}]
  %s1 = inlined_call_operand.vmem [shape: bf16[384,128], index: 1, kind: input, shape index: {}]
  %s2 = inlined_call_operand.vmem [shape: f32[1,128], index: 2, kind: input, shape index: {}]
  %s3 = inlined_call_operand.vmem [shape: bf16[128,128], index: 3, kind: output, shape index: {0}]
  %s4 = inlined_call_operand.vmem [shape: f32[1,2,128], index: 4, kind: output, shape index: {1}]
  %5 = xla_tuple %s3, %s4
  %s6 = sld [smem:[#allocation0]]
  $region38: #{_lambda_.33} parent=0
    _
  %s8 = ssub.s32 1, %s6
  %s9 = scalar_select 0, %s8, %s6
  // Predicated region
  $region2: #{_lambda_.33} parent=0 // pred_check
    _
  $region3: #{_lambda_.33} parent=0 // pred_check_branch
    %11 = sbr.rel (0) target = $region5
  $region4: #{_lambda_.33} parent=0 // pred_region
    _
  $region5: #{_lambda_.33} parent=0 // pred_fallthru
    _
  // Predicated region
  $region6: #{_lambda_.33} parent=0 // pred_check
    _
  $region7: #{_lambda_.33} parent=0 // pred_check_branch
    %13 = sbr.rel (0) target = $region9
  $region8: #{_lambda_.33} parent=0 // pred_region
    _
  $region9: #{_lambda_.33} parent=0 // pred_fallthru
    _
  // Predicated region
  $region10: #{_lambda_.33} parent=0 // pred_check
    _
  $region11: #{_lambda_.33} parent=0 // pred_check_branch
    %15 = sbr.rel (0) target = $region13
  $region12: #{_lambda_.33} parent=0 // pred_region
    _
  $region13: #{_lambda_.33} parent=0 // pred_fallthru
    _
  %p17 = scmp.eq.s32.totalorder 0, 0
  // Predicated region
  $region14: #{_lambda_.33} parent=0 // pred_check
    %p18 = pneg %p17
  $region15: #{_lambda_.33} parent=0 // pred_check_branch
    %20 = sbr.rel (%p18) target = $region17
  $region16: #{_lambda_.33} parent=0 // pred_region
    %21 = vst [vmem:[#allocation2] sm:$0xff] 0.0
    %22 = vst [vmem:[#allocation2 + $0x8] sm:$0xff] 0.0
    %23 = vst [vmem:[#allocation2 + $0x10] sm:$0xff] 0.0
    %24 = vst [vmem:[#allocation2 + $0x18] sm:$0xff] 0.0
    %25 = vst [vmem:[#allocation2 + $0x20] sm:$0xff] 0.0
    %26 = vst [vmem:[#allocation2 + $0x28] sm:$0xff] 0.0
    %27 = vst [vmem:[#allocation2 + $0x30] sm:$0xff] 0.0
    %28 = vst [vmem:[#allocation2 + $0x38] sm:$0xff] 0.0
    %29 = vst [vmem:[#allocation2 + $0x40] sm:$0xff] 0.0
    %30 = vst [vmem:[#allocation2 + $0x48] sm:$0xff] 0.0
    %31 = vst [vmem:[#allocation2 + $0x50] sm:$0xff] 0.0
    %32 = vst [vmem:[#allocation2 + $0x58] sm:$0xff] 0.0
    %33 = vst [vmem:[#allocation2 + $0x60] sm:$0xff] 0.0
    %34 = vst [vmem:[#allocation2 + $0x68] sm:$0xff] 0.0
    %35 = vst [vmem:[#allocation2 + $0x70] sm:$0xff] 0.0
    %36 = vst [vmem:[#allocation2 + $0x78] sm:$0xff] 0.0
  $region17: #{_lambda_.33} parent=0 // pred_fallthru
    _
  %v37 = vld [vmem:[%s0] sm:$0xff]
  %v38 = vld [vmem:[%s0 + $0x8] sm:$0xf]
  %v39 = vld [vmem:[%s0 + $0xc] sm:$0xff]
  %v40 = vld [vmem:[%s0 + $0x14] sm:$0xf]
  %v41 = vld [vmem:[%s0 + $0x18] sm:$0xff]
  %v42 = vld [vmem:[%s0 + $0x20] sm:$0xf]
  %v43 = vld [vmem:[%s0 + $0x24] sm:$0xff]
  %v44 = vld [vmem:[%s0 + $0x2c] sm:$0xf]
  %v45 = vld [vmem:[%s0 + $0x30] sm:$0xff]
  %v46 = vld [vmem:[%s0 + $0x38] sm:$0xf]
  %v47 = vld [vmem:[%s0 + $0x3c] sm:$0xff]
  %v48 = vld [vmem:[%s0 + $0x44] sm:$0xf]
  %v49 = vld [vmem:[%s0 + $0x48] sm:$0xff]
  %v50 = vld [vmem:[%s0 + $0x50] sm:$0xf]
  %v51 = vld [vmem:[%s0 + $0x54] sm:$0xff]
  %v52 = vld [vmem:[%s0 + $0x5c] sm:$0xf]
  %v53 = vld [vmem:[%s0 + $0x60] sm:$0xff]
  %v54 = vld [vmem:[%s0 + $0x68] sm:$0xf]
  %v55 = vld [vmem:[%s0 + $0x6c] sm:$0xff]
  %v56 = vld [vmem:[%s0 + $0x74] sm:$0xf]
  %v57 = vld [vmem:[%s0 + $0x78] sm:$0xff]
  %v58 = vld [vmem:[%s0 + $0x80] sm:$0xf]
  %v59 = vld [vmem:[%s0 + $0x84] sm:$0xff]
  %v60 = vld [vmem:[%s0 + $0x8c] sm:$0xf]
  %v61 = vld [vmem:[%s0 + $0x90] sm:$0xff]
  %v62 = vld [vmem:[%s0 + $0x98] sm:$0xf]
  %v63 = vld [vmem:[%s0 + $0x9c] sm:$0xff]
  %v64 = vld [vmem:[%s0 + $0xa4] sm:$0xf]
  %v65 = vld [vmem:[%s0 + $0xa8] sm:$0xff]
  %v66 = vld [vmem:[%s0 + $0xb0] sm:$0xf]
  %v67 = vld [vmem:[%s0 + $0xb4] sm:$0xff]
  %v68 = vld [vmem:[%s0 + $0xbc] sm:$0xf]
  %v69 = vunpack.c.l.bf16 %v37
  %v70 = vunpack.c.h.bf16 %v37
  %v71 = vunpack.c.l.bf16 %v38
  %v72 = vunpack.c.l.bf16 %v39
  %v73 = vunpack.c.h.bf16 %v39
  %v74 = vunpack.c.l.bf16 %v40
  %v75 = vunpack.c.l.bf16 %v41
  %v76 = vunpack.c.h.bf16 %v41
  %v77 = vunpack.c.l.bf16 %v42
  %v78 = vunpack.c.l.bf16 %v43
  %v79 = vunpack.c.h.bf16 %v43
  %v80 = vunpack.c.l.bf16 %v44
  %v81 = vunpack.c.l.bf16 %v45
  %v82 = vunpack.c.h.bf16 %v45
  %v83 = vunpack.c.l.bf16 %v46
  %v84 = vunpack.c.l.bf16 %v47
  %v85 = vunpack.c.h.bf16 %v47
  %v86 = vunpack.c.l.bf16 %v48
  %v87 = vunpack.c.l.bf16 %v49
  %v88 = vunpack.c.h.bf16 %v49
  %v89 = vunpack.c.l.bf16 %v50
  %v90 = vunpack.c.l.bf16 %v51
  %v91 = vunpack.c.h.bf16 %v51
  %v92 = vunpack.c.l.bf16 %v52
  %v93 = vunpack.c.l.bf16 %v53
  %v94 = vunpack.c.h.bf16 %v53
  %v95 = vunpack.c.l.bf16 %v54
  %v96 = vunpack.c.l.bf16 %v55
  %v97 = vunpack.c.h.bf16 %v55
  %v98 = vunpack.c.l.bf16 %v56
  %v99 = vunpack.c.l.bf16 %v57
  %v100 = vunpack.c.h.bf16 %v57
  %v101 = vunpack.c.l.bf16 %v58
  %v102 = vunpack.c.l.bf16 %v59
  %v103 = vunpack.c.h.bf16 %v59
  %v104 = vunpack.c.l.bf16 %v60
  %v105 = vunpack.c.l.bf16 %v61
  %v106 = vunpack.c.h.bf16 %v61
  %v107 = vunpack.c.l.bf16 %v62
  %v108 = vunpack.c.l.bf16 %v63
  %v109 = vunpack.c.h.bf16 %v63
  %v110 = vunpack.c.l.bf16 %v64
  %v111 = vunpack.c.l.bf16 %v65
  %v112 = vunpack.c.h.bf16 %v65
  %v113 = vunpack.c.l.bf16 %v66
  %v114 = vunpack.c.l.bf16 %v67
  %v115 = vunpack.c.h.bf16 %v67
  %v116 = vunpack.c.l.bf16 %v68
  %v117 = vmax.f32 %v69, 0.0
  %v118 = vmax.f32 %v70, 0.0
  %v119 = vmax.f32 %v71, 0.0
  %v120 = vmax.f32 %v72, 0.0
  %v121 = vmax.f32 %v73, 0.0
  %v122 = vmax.f32 %v74, 0.0
  %v123 = vmax.f32 %v75, 0.0
  %v124 = vmax.f32 %v76, 0.0
  %v125 = vmax.f32 %v77, 0.0
  %v126 = vmax.f32 %v78, 0.0
  %v127 = vmax.f32 %v79, 0.0
  %v128 = vmax.f32 %v80, 0.0
  %v129 = vmax.f32 %v81, 0.0
  %v130 = vmax.f32 %v82, 0.0
  %v131 = vmax.f32 %v83, 0.0
  %v132 = vmax.f32 %v84, 0.0
  %v133 = vmax.f32 %v85, 0.0
  %v134 = vmax.f32 %v86, 0.0
  %v135 = vmax.f32 %v87, 0.0
  %v136 = vmax.f32 %v88, 0.0
  %v137 = vmax.f32 %v89, 0.0
  %v138 = vmax.f32 %v90, 0.0
  %v139 = vmax.f32 %v91, 0.0
  %v140 = vmax.f32 %v92, 0.0
  %v141 = vmax.f32 %v93, 0.0
  %v142 = vmax.f32 %v94, 0.0
  %v143 = vmax.f32 %v95, 0.0
  %v144 = vmax.f32 %v96, 0.0
  %v145 = vmax.f32 %v97, 0.0
  %v146 = vmax.f32 %v98, 0.0
  %v147 = vmax.f32 %v99, 0.0
  %v148 = vmax.f32 %v100, 0.0
  %v149 = vmax.f32 %v101, 0.0
  %v150 = vmax.f32 %v102, 0.0
  %v151 = vmax.f32 %v103, 0.0
  %v152 = vmax.f32 %v104, 0.0
  %v153 = vmax.f32 %v105, 0.0
  %v154 = vmax.f32 %v106, 0.0
  %v155 = vmax.f32 %v107, 0.0
  %v156 = vmax.f32 %v108, 0.0
  %v157 = vmax.f32 %v109, 0.0
  %v158 = vmax.f32 %v110, 0.0
  %v159 = vmax.f32 %v111, 0.0
  %v160 = vmax.f32 %v112, 0.0
  %v161 = vmax.f32 %v113, 0.0
  %v162 = vmax.f32 %v114, 0.0
  %v163 = vmax.f32 %v115, 0.0
  %v164 = vmax.f32 %v116, 0.0
  %v165 = vpack.c.bf16 %v120, %v117
  %v166 = vpack.c.bf16 %v121, %v118
  %v167 = vpack.c.bf16 %v122, %v119
  %v168 = vpack.c.bf16 %v126, %v123
  %v169 = vpack.c.bf16 %v127, %v124
  %v170 = vpack.c.bf16 %v128, %v125
  %v171 = vpack.c.bf16 %v132, %v129
  %v172 = vpack.c.bf16 %v133, %v130
  %v173 = vpack.c.bf16 %v134, %v131
  %v174 = vpack.c.bf16 %v138, %v135
  %v175 = vpack.c.bf16 %v139, %v136
  %v176 = vpack.c.bf16 %v140, %v137
  %v177 = vpack.c.bf16 %v144, %v141
  %v178 = vpack.c.bf16 %v145, %v142
  %v179 = vpack.c.bf16 %v146, %v143
  %v180 = vpack.c.bf16 %v150, %v147
  %v181 = vpack.c.bf16 %v151, %v148
  %v182 = vpack.c.bf16 %v152, %v149
  %v183 = vpack.c.bf16 %v156, %v153
  %v184 = vpack.c.bf16 %v157, %v154
  %v185 = vpack.c.bf16 %v158, %v155
  %v186 = vpack.c.bf16 %v162, %v159
  %v187 = vpack.c.bf16 %v163, %v160
  %v188 = vpack.c.bf16 %v164, %v161
  %v189 = vld [vmem:[#allocation2] sm:$0xff]
  %v190 = vld [vmem:[#allocation2 + $0x8] sm:$0xff]
  %v191 = vld [vmem:[#allocation2 + $0x10] sm:$0xff]
  %v192 = vld [vmem:[#allocation2 + $0x18] sm:$0xff]
  %v193 = vld [vmem:[#allocation2 + $0x20] sm:$0xff]
  %v194 = vld [vmem:[#allocation2 + $0x28] sm:$0xff]
  %v195 = vld [vmem:[#allocation2 + $0x30] sm:$0xff]
  %v196 = vld [vmem:[#allocation2 + $0x38] sm:$0xff]
  %v197 = vld [vmem:[#allocation2 + $0x40] sm:$0xff]
  %v198 = vld [vmem:[#allocation2 + $0x48] sm:$0xff]
  %v199 = vld [vmem:[#allocation2 + $0x50] sm:$0xff]
  %v200 = vld [vmem:[#allocation2 + $0x58] sm:$0xff]
  %v201 = vld [vmem:[#allocation2 + $0x60] sm:$0xff]
  %v202 = vld [vmem:[#allocation2 + $0x68] sm:$0xff]
  %v203 = vld [vmem:[#allocation2 + $0x70] sm:$0xff]
  %v204 = vld [vmem:[#allocation2 + $0x78] sm:$0xff]
  %v205 = vld [vmem:[%s1] sm:$0xf]
  %v206 = vld [vmem:[%s1 + $0x4] sm:$0xf]
  %v207 = vld [vmem:[%s1 + $0x8] sm:$0xf]
  %v208 = vld [vmem:[%s1 + $0xc] sm:$0xf]
  %v209 = vld [vmem:[%s1 + $0x10] sm:$0xf]
  %v210 = vld [vmem:[%s1 + $0x14] sm:$0xf]
  %v211 = vld [vmem:[%s1 + $0x18] sm:$0xf]
  %v212 = vld [vmem:[%s1 + $0x1c] sm:$0xf]
  %v213 = vld [vmem:[%s1 + $0x20] sm:$0xf]
  %v214 = vld [vmem:[%s1 + $0x24] sm:$0xf]
  %v215 = vld [vmem:[%s1 + $0x28] sm:$0xf]
  %v216 = vld [vmem:[%s1 + $0x2c] sm:$0xf]
  %v217 = vld [vmem:[%s1 + $0x30] sm:$0xf]
  %v218 = vld [vmem:[%s1 + $0x34] sm:$0xf]
  %v219 = vld [vmem:[%s1 + $0x38] sm:$0xf]
  %v220 = vld [vmem:[%s1 + $0x3c] sm:$0xf]
  %v221 = vld [vmem:[%s1 + $0x40] sm:$0xf]
  %v222 = vld [vmem:[%s1 + $0x44] sm:$0xf]
  %v223 = vld [vmem:[%s1 + $0x48] sm:$0xf]
  %v224 = vld [vmem:[%s1 + $0x4c] sm:$0xf]
  %v225 = vld [vmem:[%s1 + $0x50] sm:$0xf]
  %v226 = vld [vmem:[%s1 + $0x54] sm:$0xf]
  %v227 = vld [vmem:[%s1 + $0x58] sm:$0xf]
  %v228 = vld [vmem:[%s1 + $0x5c] sm:$0xf]
  %v229 = vld [vmem:[%s1 + $0x60] sm:$0xf]
  %v230 = vld [vmem:[%s1 + $0x64] sm:$0xf]
  %v231 = vld [vmem:[%s1 + $0x68] sm:$0xf]
  %v232 = vld [vmem:[%s1 + $0x6c] sm:$0xf]
  %v233 = vld [vmem:[%s1 + $0x70] sm:$0xf]
  %v234 = vld [vmem:[%s1 + $0x74] sm:$0xf]
  %v235 = vld [vmem:[%s1 + $0x78] sm:$0xf]
  %v236 = vld [vmem:[%s1 + $0x7c] sm:$0xf]
  %v237 = vld [vmem:[%s1 + $0x80] sm:$0xf]
  %v238 = vld [vmem:[%s1 + $0x84] sm:$0xf]
  %v239 = vld [vmem:[%s1 + $0x88] sm:$0xf]
  %v240 = vld [vmem:[%s1 + $0x8c] sm:$0xf]
  %v241 = vld [vmem:[%s1 + $0x90] sm:$0xf]
  %v242 = vld [vmem:[%s1 + $0x94] sm:$0xf]
  %v243 = vld [vmem:[%s1 + $0x98] sm:$0xf]
  %v244 = vld [vmem:[%s1 + $0x9c] sm:$0xf]
  %v245 = vld [vmem:[%s1 + $0xa0] sm:$0xf]
  %v246 = vld [vmem:[%s1 + $0xa4] sm:$0xf]
  %v247 = vld [vmem:[%s1 + $0xa8] sm:$0xf]
  %v248 = vld [vmem:[%s1 + $0xac] sm:$0xf]
  %v249 = vld [vmem:[%s1 + $0xb0] sm:$0xf]
  %v250 = vld [vmem:[%s1 + $0xb4] sm:$0xf]
  %v251 = vld [vmem:[%s1 + $0xb8] sm:$0xf]
  %v252 = vld [vmem:[%s1 + $0xbc] sm:$0xf]
  %v301 = vunpack.c.l.b16 %v205
  %v302 = vunpack.c.l.b16 %v206
  %v303 = vunpack.c.l.b16 %v207
  %v304 = vunpack.c.l.b16 %v208
  %v305 = vunpack.c.l.b16 %v209
  %v306 = vunpack.c.l.b16 %v210
  %v307 = vunpack.c.l.b16 %v211
  %v308 = vunpack.c.l.b16 %v212
  %v309 = vunpack.c.l.b16 %v213
  %v310 = vunpack.c.l.b16 %v214
  %v311 = vunpack.c.l.b16 %v215
  %v312 = vunpack.c.l.b16 %v216
  %v313 = vunpack.c.l.b16 %v217
  %v314 = vunpack.c.l.b16 %v218
  %v315 = vunpack.c.l.b16 %v219
  %v316 = vunpack.c.l.b16 %v220
  %v317 = vunpack.c.l.b16 %v221
  %v318 = vunpack.c.l.b16 %v222
  %v319 = vunpack.c.l.b16 %v223
  %v320 = vunpack.c.l.b16 %v224
  %v321 = vunpack.c.l.b16 %v225
  %v322 = vunpack.c.l.b16 %v226
  %v323 = vunpack.c.l.b16 %v227
  %v324 = vunpack.c.l.b16 %v228
  %v325 = vunpack.c.l.b16 %v229
  %v326 = vunpack.c.l.b16 %v230
  %v327 = vunpack.c.l.b16 %v231
  %v328 = vunpack.c.l.b16 %v232
  %v329 = vunpack.c.l.b16 %v233
  %v330 = vunpack.c.l.b16 %v234
  %v331 = vunpack.c.l.b16 %v235
  %v332 = vunpack.c.l.b16 %v236
  %v333 = vunpack.c.l.b16 %v237
  %v334 = vunpack.c.l.b16 %v238
  %v335 = vunpack.c.l.b16 %v239
  %v336 = vunpack.c.l.b16 %v240
  %v337 = vunpack.c.l.b16 %v241
  %v338 = vunpack.c.l.b16 %v242
  %v339 = vunpack.c.l.b16 %v243
  %v340 = vunpack.c.l.b16 %v244
  %v341 = vunpack.c.l.b16 %v245
  %v342 = vunpack.c.l.b16 %v246
  %v343 = vunpack.c.l.b16 %v247
  %v344 = vunpack.c.l.b16 %v248
  %v345 = vunpack.c.l.b16 %v249
  %v346 = vunpack.c.l.b16 %v250
  %v347 = vunpack.c.l.b16 %v251
  %v348 = vunpack.c.l.b16 %v252
  %v349 = vpack.c.b16 %v302, %v301
  %v350 = vpack.c.b16 %v304, %v303
  %v351 = vpack.c.b16 %v306, %v305
  %v352 = vpack.c.b16 %v308, %v307
  %v353 = vpack.c.b16 %v310, %v309
  %v354 = vpack.c.b16 %v312, %v311
  %v355 = vpack.c.b16 %v314, %v313
  %v356 = vpack.c.b16 %v316, %v315
  %v357 = vpack.c.b16 %v318, %v317
  %v358 = vpack.c.b16 %v320, %v319
  %v359 = vpack.c.b16 %v322, %v321
  %v360 = vpack.c.b16 %v324, %v323
  %v361 = vpack.c.b16 %v326, %v325
  %v362 = vpack.c.b16 %v328, %v327
  %v363 = vpack.c.b16 %v330, %v329
  %v364 = vpack.c.b16 %v332, %v331
  %v365 = vpack.c.b16 %v334, %v333
  %v366 = vpack.c.b16 %v336, %v335
  %v367 = vpack.c.b16 %v338, %v337
  %v368 = vpack.c.b16 %v340, %v339
  %v369 = vpack.c.b16 %v342, %v341
  %v370 = vpack.c.b16 %v344, %v343
  %v371 = vpack.c.b16 %v346, %v345
  %v372 = vpack.c.b16 %v348, %v347
  %397 = vmatprep.subr.bf16.mxu0 0
  %398 = vmatpush1.bf16.msra.mxu0 %v356
  %399 = vmatprep.subr.bf16.mxu0 0
  %400 = vmatpush1.bf16.msra.mxu0 %v355
  %401 = vmatprep.subr.bf16.mxu0 0
  %402 = vmatpush1.bf16.msra.mxu0 %v354
  %403 = vmatprep.subr.bf16.mxu0 0
  %404 = vmatpush1.bf16.msra.mxu0 %v353
  %405 = vmatprep.subr.bf16.mxu0 0
  %406 = vmatpush1.bf16.msra.mxu0 %v352
  %407 = vmatprep.subr.bf16.mxu0 0
  %408 = vmatpush1.bf16.msra.mxu0 %v351
  %409 = vmatprep.subr.bf16.mxu0 0
  %410 = vmatpush1.bf16.msra.mxu0 %v350
  %411 = vmatprep.subr.bf16.mxu0 0
  %412 = vmatpush1.bf16.msra.mxu0 %v349
  %413 = vmatprep.subr.bf16.mxu0 0
  %414 = vmatpush2.bf16.msra.mxu0 %v364
  %415 = vmatprep.subr.bf16.mxu0 0
  %416 = vmatpush2.bf16.msra.mxu0 %v363
  %417 = vmatprep.subr.bf16.mxu0 0
  %418 = vmatpush2.bf16.msra.mxu0 %v362
  %419 = vmatprep.subr.bf16.mxu0 0
  %420 = vmatpush2.bf16.msra.mxu0 %v361
  %421 = vmatprep.subr.bf16.mxu0 0
  %422 = vmatpush2.bf16.msra.mxu0 %v360
  %423 = vmatprep.subr.bf16.mxu0 0
  %424 = vmatpush2.bf16.msra.mxu0 %v359
  %425 = vmatprep.subr.bf16.mxu0 0
  %426 = vmatpush2.bf16.msra.mxu0 %v358
  %427 = vmatprep.subr.bf16.mxu0 0
  %428 = vmatpush2.bf16.msra.mxu0 %v357
  %429 = vmatprep.mubr.bf16.mxu0 %v166
  %430 = vmatmul.mubr.bf16.gmra.mxu0 %v165
  %v431 = vpop.f32.mrf.mxu0
  %v432 = vadd.f32 0.0, %v431
  %v433 = vpop.f32.mrf.mxu0
  %v434 = vpop.f32.mrf.mxu0
  %v435 = vadd.f32 0.0, %v434
  %v436 = vpop.f32.mrf.mxu0
  %437 = vmatprep.mubr.bf16.mxu0 %v169
  %438 = vmatmul.mubr.bf16.gmra.mxu0 %v168
  %v439 = vpop.f32.mrf.mxu0
  %v440 = vadd.f32 0.0, %v439
  %v441 = vpop.f32.mrf.mxu0
  %v442 = vpop.f32.mrf.mxu0
  %v443 = vadd.f32 0.0, %v442
  %v444 = vpop.f32.mrf.mxu0
  %445 = vmatprep.mubr.bf16.mxu0 %v172
  %446 = vmatmul.mubr.bf16.gmra.mxu0 %v171
  %v447 = vpop.f32.mrf.mxu0
  %v448 = vadd.f32 0.0, %v447
  %v449 = vpop.f32.mrf.mxu0
  %v450 = vpop.f32.mrf.mxu0
  %v451 = vadd.f32 0.0, %v450
  %v452 = vpop.f32.mrf.mxu0
  %453 = vmatprep.mubr.bf16.mxu0 %v175
  %454 = vmatmul.mubr.bf16.gmra.mxu0 %v174
  %v455 = vpop.f32.mrf.mxu0
  %v456 = vadd.f32 0.0, %v455
  %v457 = vpop.f32.mrf.mxu0
  %v458 = vpop.f32.mrf.mxu0
  %v459 = vadd.f32 0.0, %v458
  %v460 = vpop.f32.mrf.mxu0
  %461 = vmatprep.mubr.bf16.mxu0 %v178
  %462 = vmatmul.mubr.bf16.gmra.mxu0 %v177
  %v463 = vpop.f32.mrf.mxu0
  %v464 = vadd.f32 0.0, %v463
  %v465 = vpop.f32.mrf.mxu0
  %v466 = vpop.f32.mrf.mxu0
  %v467 = vadd.f32 0.0, %v466
  %v468 = vpop.f32.mrf.mxu0
  %469 = vmatprep.mubr.bf16.mxu0 %v181
  %470 = vmatmul.mubr.bf16.gmra.mxu0 %v180
  %v471 = vpop.f32.mrf.mxu0
  %v472 = vadd.f32 0.0, %v471
  %v473 = vpop.f32.mrf.mxu0
  %v474 = vpop.f32.mrf.mxu0
  %v475 = vadd.f32 0.0, %v474
  %v476 = vpop.f32.mrf.mxu0
  %477 = vmatprep.mubr.bf16.mxu0 %v184
  %478 = vmatmul.mubr.bf16.gmra.mxu0 %v183
  %v479 = vpop.f32.mrf.mxu0
  %v480 = vadd.f32 0.0, %v479
  %v481 = vpop.f32.mrf.mxu0
  %v482 = vpop.f32.mrf.mxu0
  %v483 = vadd.f32 0.0, %v482
  %v484 = vpop.f32.mrf.mxu0
  %485 = vmatprep.mubr.bf16.mxu0 %v187
  %486 = vmatmul.mubr.bf16.gmra.mxu0 %v186
  %v487 = vpop.f32.mrf.mxu0
  %v488 = vadd.f32 0.0, %v487
  %v489 = vpop.f32.mrf.mxu0
  %v490 = vpop.f32.mrf.mxu0
  %v491 = vadd.f32 0.0, %v490
  %v492 = vpop.f32.mrf.mxu0
  %493 = vdwg.mxu0
  %494 = vmatprep.subr.bf16.mxu0 0
  %495 = vmatpush1.bf16.msra.mxu0 %v372
  %496 = vmatprep.subr.bf16.mxu0 0
  %497 = vmatpush1.bf16.msra.mxu0 %v371
  %498 = vmatprep.subr.bf16.mxu0 0
  %499 = vmatpush1.bf16.msra.mxu0 %v370
  %500 = vmatprep.subr.bf16.mxu0 0
  %501 = vmatpush1.bf16.msra.mxu0 %v369
  %502 = vmatprep.subr.bf16.mxu0 0
  %503 = vmatpush1.bf16.msra.mxu0 %v368
  %504 = vmatprep.subr.bf16.mxu0 0
  %505 = vmatpush1.bf16.msra.mxu0 %v367
  %506 = vmatprep.subr.bf16.mxu0 0
  %507 = vmatpush1.bf16.msra.mxu0 %v366
  %508 = vmatprep.subr.bf16.mxu0 0
  %509 = vmatpush1.bf16.msra.mxu0 %v365
  %510 = vmatprep.subr.bf16.mxu0 0
  %511 = vmatpush2.bf16.msra.mxu0 0
  %512 = vmatprep.subr.bf16.mxu0 0
  %513 = vmatpush2.bf16.msra.mxu0 0
  %514 = vmatprep.subr.bf16.mxu0 0
  %515 = vmatpush2.bf16.msra.mxu0 0
  %516 = vmatprep.subr.bf16.mxu0 0
  %517 = vmatpush2.bf16.msra.mxu0 0
  %518 = vmatprep.subr.bf16.mxu0 0
  %519 = vmatpush2.bf16.msra.mxu0 0
  %520 = vmatprep.subr.bf16.mxu0 0
  %521 = vmatpush2.bf16.msra.mxu0 0
  %522 = vmatprep.subr.bf16.mxu0 0
  %523 = vmatpush2.bf16.msra.mxu0 0
  %524 = vmatprep.subr.bf16.mxu0 0
  %525 = vmatpush2.bf16.msra.mxu0 0
  %526 = vmatprep.mubr.bf16.mxu0 0
  %527 = vmatmul.mubr.bf16.gmra.mxu0 %v167
  %v528 = vpop.f32.mrf.mxu0
  %v529 = vadd.f32 %v432, %v528
  %v530 = vpop.f32.mrf.mxu0
  %v531 = vpop.f32.mrf.mxu0
  %v532 = vadd.f32 %v435, %v531
  %v533 = vpop.f32.mrf.mxu0
  %534 = vmatprep.mubr.bf16.mxu0 0
  %535 = vmatmul.mubr.bf16.gmra.mxu0 %v170
  %v536 = vpop.f32.mrf.mxu0
  %v537 = vadd.f32 %v440, %v536
  %v538 = vpop.f32.mrf.mxu0
  %v539 = vpop.f32.mrf.mxu0
  %v540 = vadd.f32 %v443, %v539
  %v541 = vpop.f32.mrf.mxu0
  %542 = vmatprep.mubr.bf16.mxu0 0
  %543 = vmatmul.mubr.bf16.gmra.mxu0 %v173
  %v544 = vpop.f32.mrf.mxu0
  %v545 = vadd.f32 %v448, %v544
  %v546 = vpop.f32.mrf.mxu0
  %v547 = vpop.f32.mrf.mxu0
  %v548 = vadd.f32 %v451, %v547
  %v549 = vpop.f32.mrf.mxu0
  %550 = vmatprep.mubr.bf16.mxu0 0
  %551 = vmatmul.mubr.bf16.gmra.mxu0 %v176
  %v552 = vpop.f32.mrf.mxu0
  %v553 = vadd.f32 %v456, %v552
  %v554 = vpop.f32.mrf.mxu0
  %v555 = vpop.f32.mrf.mxu0
  %v556 = vadd.f32 %v459, %v555
  %v557 = vpop.f32.mrf.mxu0
  %558 = vmatprep.mubr.bf16.mxu0 0
  %559 = vmatmul.mubr.bf16.gmra.mxu0 %v179
  %v560 = vpop.f32.mrf.mxu0
  %v561 = vadd.f32 %v464, %v560
  %v562 = vpop.f32.mrf.mxu0
  %v563 = vpop.f32.mrf.mxu0
  %v564 = vadd.f32 %v467, %v563
  %v565 = vpop.f32.mrf.mxu0
  %566 = vmatprep.mubr.bf16.mxu0 0
  %567 = vmatmul.mubr.bf16.gmra.mxu0 %v182
  %v568 = vpop.f32.mrf.mxu0
  %v569 = vadd.f32 %v472, %v568
  %v570 = vpop.f32.mrf.mxu0
  %v571 = vpop.f32.mrf.mxu0
  %v572 = vadd.f32 %v475, %v571
  %v573 = vpop.f32.mrf.mxu0
  %574 = vmatprep.mubr.bf16.mxu0 0
  %575 = vmatmul.mubr.bf16.gmra.mxu0 %v185
  %v576 = vpop.f32.mrf.mxu0
  %v577 = vadd.f32 %v480, %v576
  %v578 = vpop.f32.mrf.mxu0
  %v579 = vpop.f32.mrf.mxu0
  %v580 = vadd.f32 %v483, %v579
  %v581 = vpop.f32.mrf.mxu0
  %582 = vmatprep.mubr.bf16.mxu0 0
  %583 = vmatmul.mubr.bf16.gmra.mxu0 %v188
  %v584 = vpop.f32.mrf.mxu0
  %v585 = vadd.f32 %v488, %v584
  %v586 = vpop.f32.mrf.mxu0
  %v587 = vpop.f32.mrf.mxu0
  %v588 = vadd.f32 %v491, %v587
  %v589 = vpop.f32.mrf.mxu0
  %590 = vdwg.mxu0
  %v591 = vadd.f32 %v189, %v529
  %v592 = vadd.f32 %v190, %v532
  %v593 = vadd.f32 %v191, %v537
  %v594 = vadd.f32 %v192, %v540
  %v595 = vadd.f32 %v193, %v545
  %v596 = vadd.f32 %v194, %v548
  %v597 = vadd.f32 %v195, %v553
  %v598 = vadd.f32 %v196, %v556
  %v599 = vadd.f32 %v197, %v561
  %v600 = vadd.f32 %v198, %v564
  %v601 = vadd.f32 %v199, %v569
  %v602 = vadd.f32 %v200, %v572
  %v603 = vadd.f32 %v201, %v577
  %v604 = vadd.f32 %v202, %v580
  %v605 = vadd.f32 %v203, %v585
  %v606 = vadd.f32 %v204, %v588
  %607 = vst [vmem:[#allocation2] sm:$0xff] %v591
  %608 = vst [vmem:[#allocation2 + $0x8] sm:$0xff] %v592
  %609 = vst [vmem:[#allocation2 + $0x10] sm:$0xff] %v593
  %610 = vst [vmem:[#allocation2 + $0x18] sm:$0xff] %v594
  %611 = vst [vmem:[#allocation2 + $0x20] sm:$0xff] %v595
  %612 = vst [vmem:[#allocation2 + $0x28] sm:$0xff] %v596
  %613 = vst [vmem:[#allocation2 + $0x30] sm:$0xff] %v597
  %614 = vst [vmem:[#allocation2 + $0x38] sm:$0xff] %v598
  %615 = vst [vmem:[#allocation2 + $0x40] sm:$0xff] %v599
  %616 = vst [vmem:[#allocation2 + $0x48] sm:$0xff] %v600
  %617 = vst [vmem:[#allocation2 + $0x50] sm:$0xff] %v601
  %618 = vst [vmem:[#allocation2 + $0x58] sm:$0xff] %v602
  %619 = vst [vmem:[#allocation2 + $0x60] sm:$0xff] %v603
  %620 = vst [vmem:[#allocation2 + $0x68] sm:$0xff] %v604
  %621 = vst [vmem:[#allocation2 + $0x70] sm:$0xff] %v605
  %622 = vst [vmem:[#allocation2 + $0x78] sm:$0xff] %v606
  // Predicated region
  $region18: #{_lambda_.33} parent=0 // pred_check
    %p623 = pneg %p17
  $region19: #{_lambda_.33} parent=0 // pred_check_branch
    %625 = sbr.rel (%p623) target = $region21
  $region20: #{_lambda_.33} parent=0 // pred_region
    %v626 = vld [vmem:[#allocation2] sm:$0xff]
    %v627 = vld [vmem:[#allocation2 + $0x8] sm:$0xff]
    %v628 = vld [vmem:[#allocation2 + $0x10] sm:$0xff]
    %v629 = vld [vmem:[#allocation2 + $0x18] sm:$0xff]
    %v630 = vld [vmem:[#allocation2 + $0x20] sm:$0xff]
    %v631 = vld [vmem:[#allocation2 + $0x28] sm:$0xff]
    %v632 = vld [vmem:[#allocation2 + $0x30] sm:$0xff]
    %v633 = vld [vmem:[#allocation2 + $0x38] sm:$0xff]
    %v634 = vld [vmem:[#allocation2 + $0x40] sm:$0xff]
    %v635 = vld [vmem:[#allocation2 + $0x48] sm:$0xff]
    %v636 = vld [vmem:[#allocation2 + $0x50] sm:$0xff]
    %v637 = vld [vmem:[#allocation2 + $0x58] sm:$0xff]
    %v638 = vld [vmem:[#allocation2 + $0x60] sm:$0xff]
    %v639 = vld [vmem:[#allocation2 + $0x68] sm:$0xff]
    %v640 = vld [vmem:[#allocation2 + $0x70] sm:$0xff]
    %v641 = vld [vmem:[#allocation2 + $0x78] sm:$0xff]
    %v642 = vld [vmem:[%s2] sm:$0x1]
    %v644 = vlaneseq
    %v645 = vshrl.u32 %v644, 7
    %v646 = vsub.s32 0, %v645
    %v647 = vrot.slane %v642, %v646
    %v649 = vadd.f32 %v626, %v647
    %v650 = vadd.f32 %v627, %v647
    %v651 = vadd.f32 %v628, %v647
    %v652 = vadd.f32 %v629, %v647
    %v653 = vadd.f32 %v630, %v647
    %v654 = vadd.f32 %v631, %v647
    %v655 = vadd.f32 %v632, %v647
    %v656 = vadd.f32 %v633, %v647
    %v657 = vadd.f32 %v634, %v647
    %v658 = vadd.f32 %v635, %v647
    %v659 = vadd.f32 %v636, %v647
    %v660 = vadd.f32 %v637, %v647
    %v661 = vadd.f32 %v638, %v647
    %v662 = vadd.f32 %v639, %v647
    %v663 = vadd.f32 %v640, %v647
    %v664 = vadd.f32 %v641, %v647
    %v665 = vpack.c.bf16 %v650, %v649
    %v666 = vpack.c.bf16 %v652, %v651
    %v667 = vpack.c.bf16 %v654, %v653
    %v668 = vpack.c.bf16 %v656, %v655
    %v669 = vpack.c.bf16 %v658, %v657
    %v670 = vpack.c.bf16 %v660, %v659
    %v671 = vpack.c.bf16 %v662, %v661
    %v672 = vpack.c.bf16 %v664, %v663
    %v681 = vunpack.c.l.b16 %v665
    %v682 = vunpack.c.h.b16 %v665
    %v683 = vunpack.c.l.b16 %v666
    %v684 = vunpack.c.h.b16 %v666
    %v685 = vunpack.c.l.b16 %v667
    %v686 = vunpack.c.h.b16 %v667
    %v687 = vunpack.c.l.b16 %v668
    %v688 = vunpack.c.h.b16 %v668
    %v689 = vunpack.c.l.b16 %v669
    %v690 = vunpack.c.h.b16 %v669
    %v691 = vunpack.c.l.b16 %v670
    %v692 = vunpack.c.h.b16 %v670
    %v693 = vunpack.c.l.b16 %v671
    %v694 = vunpack.c.h.b16 %v671
    %v695 = vunpack.c.l.b16 %v672
    %v696 = vunpack.c.h.b16 %v672
    %v697 = vpack.c.b16 %v681, %v681
    %v698 = vpack.c.b16 %v682, %v682
    %v699 = vpack.c.b16 %v683, %v683
    %v700 = vpack.c.b16 %v684, %v684
    %v701 = vpack.c.b16 %v685, %v685
    %v702 = vpack.c.b16 %v686, %v686
    %v703 = vpack.c.b16 %v687, %v687
    %v704 = vpack.c.b16 %v688, %v688
    %v705 = vpack.c.b16 %v689, %v689
    %v706 = vpack.c.b16 %v690, %v690
    %v707 = vpack.c.b16 %v691, %v691
    %v708 = vpack.c.b16 %v692, %v692
    %v709 = vpack.c.b16 %v693, %v693
    %v710 = vpack.c.b16 %v694, %v694
    %v711 = vpack.c.b16 %v695, %v695
    %v712 = vpack.c.b16 %v696, %v696
    %729 = vst [vmem:[%s3] sm:$0xf] %v697
    %730 = vst [vmem:[%s3 + $0x4] sm:$0xf] %v698
    %731 = vst [vmem:[%s3 + $0x8] sm:$0xf] %v699
    %732 = vst [vmem:[%s3 + $0xc] sm:$0xf] %v700
    %733 = vst [vmem:[%s3 + $0x10] sm:$0xf] %v701
    %734 = vst [vmem:[%s3 + $0x14] sm:$0xf] %v702
    %735 = vst [vmem:[%s3 + $0x18] sm:$0xf] %v703
    %736 = vst [vmem:[%s3 + $0x1c] sm:$0xf] %v704
    %737 = vst [vmem:[%s3 + $0x20] sm:$0xf] %v705
    %738 = vst [vmem:[%s3 + $0x24] sm:$0xf] %v706
    %739 = vst [vmem:[%s3 + $0x28] sm:$0xf] %v707
    %740 = vst [vmem:[%s3 + $0x2c] sm:$0xf] %v708
    %741 = vst [vmem:[%s3 + $0x30] sm:$0xf] %v709
    %742 = vst [vmem:[%s3 + $0x34] sm:$0xf] %v710
    %743 = vst [vmem:[%s3 + $0x38] sm:$0xf] %v711
    %744 = vst [vmem:[%s3 + $0x3c] sm:$0xf] %v712
    %v745 = vadd.f32 %v649, %v650
    %v746 = vadd.f32 %v745, %v651
    %v747 = vadd.f32 %v746, %v652
    %v748 = vadd.f32 %v747, %v653
    %v749 = vadd.f32 %v748, %v654
    %v750 = vadd.f32 %v749, %v655
    %v751 = vadd.f32 %v750, %v656
    %v752 = vadd.f32 %v751, %v657
    %v753 = vadd.f32 %v752, %v658
    %v754 = vadd.f32 %v753, %v659
    %v755 = vadd.f32 %v754, %v660
    %v756 = vadd.f32 %v755, %v661
    %v757 = vadd.f32 %v756, %v662
    %v758 = vadd.f32 %v757, %v663
    %v759 = vadd.f32 %v758, %v664
    %v760 = vrot.slane %v759, 4
    %v761 = vadd.f32 %v759, %v760
    %v762 = vrot.slane %v761, 2
    %v763 = vadd.f32 %v761, %v762
    %v764 = vrot.slane %v763, 1
    %v765 = vadd.f32 %v763, %v764
    %v766 = vmul.f32 %v649, %v649
    %v767 = vmul.f32 %v650, %v650
    %v768 = vmul.f32 %v651, %v651
    %v769 = vmul.f32 %v652, %v652
    %v770 = vmul.f32 %v653, %v653
    %v771 = vmul.f32 %v654, %v654
    %v772 = vmul.f32 %v655, %v655
    %v773 = vmul.f32 %v656, %v656
    %v774 = vmul.f32 %v657, %v657
    %v775 = vmul.f32 %v658, %v658
    %v776 = vmul.f32 %v659, %v659
    %v777 = vmul.f32 %v660, %v660
    %v778 = vmul.f32 %v661, %v661
    %v779 = vmul.f32 %v662, %v662
    %v780 = vmul.f32 %v663, %v663
    %v781 = vmul.f32 %v664, %v664
    %v782 = vadd.f32 %v766, %v767
    %v783 = vadd.f32 %v782, %v768
    %v784 = vadd.f32 %v783, %v769
    %v785 = vadd.f32 %v784, %v770
    %v786 = vadd.f32 %v785, %v771
    %v787 = vadd.f32 %v786, %v772
    %v788 = vadd.f32 %v787, %v773
    %v789 = vadd.f32 %v788, %v774
    %v790 = vadd.f32 %v789, %v775
    %v791 = vadd.f32 %v790, %v776
    %v792 = vadd.f32 %v791, %v777
    %v793 = vadd.f32 %v792, %v778
    %v794 = vadd.f32 %v793, %v779
    %v795 = vadd.f32 %v794, %v780
    %v796 = vadd.f32 %v795, %v781
    %v797 = vrot.slane %v796, 4
    %v798 = vadd.f32 %v796, %v797
    %v799 = vrot.slane %v798, 2
    %v800 = vadd.f32 %v798, %v799
    %v801 = vrot.slane %v800, 1
    %v802 = vadd.f32 %v800, %v801
    %vm803 = vcmask 1040384
    %v804 = vsel %vm803, %v765, %v802
    %805 = vst [vmem:[%s4] sm:$0x3] %v804
  $region21: #{_lambda_.33} parent=0 // pred_fallthru
    _
  // Predicated region
  $region22: #{_lambda_.33} parent=0 // pred_check
    _
  $region23: #{_lambda_.33} parent=0 // pred_check_branch
    %807 = sbr.rel (0) target = $region25
  $region24: #{_lambda_.33} parent=0 // pred_region
    _
  $region25: #{_lambda_.33} parent=0 // pred_fallthru
    _
  // Predicated region
  $region26: #{_lambda_.33} parent=0 // pred_check
    _
  $region27: #{_lambda_.33} parent=0 // pred_check_branch
    %809 = sbr.rel (0) target = $region29
  $region28: #{_lambda_.33} parent=0 // pred_region
    _
  $region29: #{_lambda_.33} parent=0 // pred_fallthru
    _
  // Predicated region
  $region30: #{_lambda_.33} parent=0 // pred_check
    _
  $region31: #{_lambda_.33} parent=0 // pred_check_branch
    %811 = sbr.rel (0) target = $region33
  $region32: #{_lambda_.33} parent=0 // pred_region
    _
  $region33: #{_lambda_.33} parent=0 // pred_fallthru
    _
  // Predicated region
  $region34: #{_lambda_.33} parent=0 // pred_check
    _
  $region35: #{_lambda_.33} parent=0 // pred_check_branch
    %813 = sbr.rel (0) target = $region37
  $region36: #{_lambda_.33} parent=0 // pred_region
    _
  $region37: #{_lambda_.33} parent=0 // pred_fallthru
    _

// kernel: _lambda_.35
$region0: #{_lambda_.35}
  #allocation0 [shape = 'u32[]', space=smem, size = 0x4, offset = 0x4, fixed_abs, tag = 'smem constant byte address 0x4 - core index']
  #allocation1 [shape = 'u32[144,128]{1,0:T(1,128)}', space=vmem, size = 0x12000, scoped, tag = 'internal scratch']
  #allocation2 [shape = 'f32[512,128]{1,0:T(8,128)}', space=vmem, size = 0x40000, scoped, tag = 'scratch operand']
  %s0 = inlined_call_operand.vmem [shape: bf16[512,256], index: 0, kind: input, shape index: {}]
  %s1 = inlined_call_operand.vmem [shape: bf16[256,128], index: 1, kind: input, shape index: {}]
  %s2 = inlined_call_operand.vmem [shape: f32[1,128], index: 2, kind: input, shape index: {}]
  %s3 = inlined_call_operand.vmem [shape: bf16[512,128], index: 3, kind: output, shape index: {}]
  %s4 = sld [smem:[#allocation0]]
  $region30: #{_lambda_.35} parent=0
    _
  %s6 = ssub.s32 1, %s4
  %s7 = scalar_select 0, %s6, %s4
  // Predicated region
  $region2: #{_lambda_.35} parent=0 // pred_check
    _
  $region3: #{_lambda_.35} parent=0 // pred_check_branch
    %9 = sbr.rel (0) target = $region5
  $region4: #{_lambda_.35} parent=0 // pred_region
    _
  $region5: #{_lambda_.35} parent=0 // pred_fallthru
    _
  // Predicated region
  $region6: #{_lambda_.35} parent=0 // pred_check
    _
  $region7: #{_lambda_.35} parent=0 // pred_check_branch
    %11 = sbr.rel (0) target = $region9
  $region8: #{_lambda_.35} parent=0 // pred_region
    _
  $region9: #{_lambda_.35} parent=0 // pred_fallthru
    _
  // Predicated region
  $region10: #{_lambda_.35} parent=0 // pred_check
    _
  $region11: #{_lambda_.35} parent=0 // pred_check_branch
    %13 = sbr.rel (0) target = $region13
  $region12: #{_lambda_.35} parent=0 // pred_region
    _
  $region13: #{_lambda_.35} parent=0 // pred_fallthru
    _
  %p15 = scmp.eq.s32.totalorder 0, 0
  // Predicated region
  $region14: #{_lambda_.35} parent=0 // pred_check
    %p16 = pneg %p15
  $region15: #{_lambda_.35} parent=0 // pred_check_branch
    %18 = sbr.rel (%p16) target = $region17
  $region16: #{_lambda_.35} parent=0 // pred_region
    %19 = vst [vmem:[#allocation2] sm:$0xff] 0.0
    %20 = vst [vmem:[#allocation2 + $0x8] sm:$0xff] 0.0
    %21 = vst [vmem:[#allocation2 + $0x10] sm:$0xff] 0.0
    %22 = vst [vmem:[#allocation2 + $0x18] sm:$0xff] 0.0
    %23 = vst [vmem:[#allocation2 + $0x20] sm:$0xff] 0.0
    %24 = vst [vmem:[#allocation2 + $0x28] sm:$0xff] 0.0
    %25 = vst [vmem:[#allocation2 + $0x30] sm:$0xff] 0.0
    %26 = vst [vmem:[#allocation2 + $0x38] sm:$0xff] 0.0
    %27 = vst [vmem:[#allocation2 + $0x40] sm:$0xff] 0.0
    %28 = vst [vmem:[#allocation2 + $0x48] sm:$0xff] 0.0
    %29 = vst [vmem:[#allocation2 + $0x50] sm:$0xff] 0.0
    %30 = vst [vmem:[#allocation2 + $0x58] sm:$0xff] 0.0
    %31 = vst [vmem:[#allocation2 + $0x60] sm:$0xff] 0.0
    %32 = vst [vmem:[#allocation2 + $0x68] sm:$0xff] 0.0
    %33 = vst [vmem:[#allocation2 + $0x70] sm:$0xff] 0.0
    %34 = vst [vmem:[#allocation2 + $0x78] sm:$0xff] 0.0
    %35 = vst [vmem:[#allocation2 + $0x80] sm:$0xff] 0.0
    %36 = vst [vmem:[#allocation2 + $0x88] sm:$0xff] 0.0
    %37 = vst [vmem:[#allocation2 + $0x90] sm:$0xff] 0.0
    %38 = vst [vmem:[#allocation2 + $0x98] sm:$0xff] 0.0
    %39 = vst [vmem:[#allocation2 + $0xa0] sm:$0xff] 0.0
    %40 = vst [vmem:[#allocation2 + $0xa8] sm:$0xff] 0.0
    %41 = vst [vmem:[#allocation2 + $0xb0] sm:$0xff] 0.0
    %42 = vst [vmem:[#allocation2 + $0xb8] sm:$0xff] 0.0
    %43 = vst [vmem:[#allocation2 + $0xc0] sm:$0xff] 0.0
    %44 = vst [vmem:[#allocation2 + $0xc8] sm:$0xff] 0.0
    %45 = vst [vmem:[#allocation2 + $0xd0] sm:$0xff] 0.0
    %46 = vst [vmem:[#allocation2 + $0xd8] sm:$0xff] 0.0
    %47 = vst [vmem:[#allocation2 + $0xe0] sm:$0xff] 0.0
    %48 = vst [vmem:[#allocation2 + $0xe8] sm:$0xff] 0.0
    %49 = vst [vmem:[#allocation2 + $0xf0] sm:$0xff] 0.0
    %50 = vst [vmem:[#allocation2 + $0xf8] sm:$0xff] 0.0
    %51 = vst [vmem:[#allocation2 + $0x100] sm:$0xff] 0.0
    %52 = vst [vmem:[#allocation2 + $0x108] sm:$0xff] 0.0
    %53 = vst [vmem:[#allocation2 + $0x110] sm:$0xff] 0.0
    %54 = vst [vmem:[#allocation2 + $0x118] sm:$0xff] 0.0
    %55 = vst [vmem:[#allocation2 + $0x120] sm:$0xff] 0.0
    %56 = vst [vmem:[#allocation2 + $0x128] sm:$0xff] 0.0
    %57 = vst [vmem:[#allocation2 + $0x130] sm:$0xff] 0.0
    %58 = vst [vmem:[#allocation2 + $0x138] sm:$0xff] 0.0
    %59 = vst [vmem:[#allocation2 + $0x140] sm:$0xff] 0.0
    %60 = vst [vmem:[#allocation2 + $0x148] sm:$0xff] 0.0
    %61 = vst [vmem:[#allocation2 + $0x150] sm:$0xff] 0.0
    %62 = vst [vmem:[#allocation2 + $0x158] sm:$0xff] 0.0
    %63 = vst [vmem:[#allocation2 + $0x160] sm:$0xff] 0.0
    %64 = vst [vmem:[#allocation2 + $0x168] sm:$0xff] 0.0
    %65 = vst [vmem:[#allocation2 + $0x170] sm:$0xff] 0.0
    %66 = vst [vmem:[#allocation2 + $0x178] sm:$0xff] 0.0
    %67 = vst [vmem:[#allocation2 + $0x180] sm:$0xff] 0.0
    %68 = vst [vmem:[#allocation2 + $0x188] sm:$0xff] 0.0
    %69 = vst [vmem:[#allocation2 + $0x190] sm:$0xff] 0.0
    %70 = vst [vmem:[#allocation2 + $0x198] sm:$0xff] 0.0
    %71 = vst [vmem:[#allocation2 + $0x1a0] sm:$0xff] 0.0
    %72 = vst [vmem:[#allocation2 + $0x1a8] sm:$0xff] 0.0
    %73 = vst [vmem:[#allocation2 + $0x1b0] sm:$0xff] 0.0
    %74 = vst [vmem:[#allocation2 + $0x1b8] sm:$0xff] 0.0
    %75 = vst [vmem:[#allocation2 + $0x1c0] sm:$0xff] 0.0
    %76 = vst [vmem:[#allocation2 + $0x1c8] sm:$0xff] 0.0
    %77 = vst [vmem:[#allocation2 + $0x1d0] sm:$0xff] 0.0
    %78 = vst [vmem:[#allocation2 + $0x1d8] sm:$0xff] 0.0
    %79 = vst [vmem:[#allocation2 + $0x1e0] sm:$0xff] 0.0
    %80 = vst [vmem:[#allocation2 + $0x1e8] sm:$0xff] 0.0
    %81 = vst [vmem:[#allocation2 + $0x1f0] sm:$0xff] 0.0
    %82 = vst [vmem:[#allocation2 + $0x1f8] sm:$0xff] 0.0
  $region17: #{_lambda_.35} parent=0 // pred_fallthru
    _
  %v83 = vld [vmem:[%s0] sm:$0xff]
  %v84 = vld [vmem:[%s0 + $0x8] sm:$0xff]
  %v85 = vld [vmem:[%s0 + $0x10] sm:$0xff]
  %v86 = vld [vmem:[%s0 + $0x18] sm:$0xff]
  %v87 = vld [vmem:[%s0 + $0x20] sm:$0xff]
  %v88 = vld [vmem:[%s0 + $0x28] sm:$0xff]
  %v89 = vld [vmem:[%s0 + $0x30] sm:$0xff]
  %v90 = vld [vmem:[%s0 + $0x38] sm:$0xff]
  %v91 = vld [vmem:[%s0 + $0x40] sm:$0xff]
  %v92 = vld [vmem:[%s0 + $0x48] sm:$0xff]
  %v93 = vld [vmem:[%s0 + $0x50] sm:$0xff]
  %v94 = vld [vmem:[%s0 + $0x58] sm:$0xff]
  %v95 = vld [vmem:[%s0 + $0x60] sm:$0xff]
  %v96 = vld [vmem:[%s0 + $0x68] sm:$0xff]
  %v97 = vld [vmem:[%s0 + $0x70] sm:$0xff]
  %v98 = vld [vmem:[%s0 + $0x78] sm:$0xff]
  %v99 = vld [vmem:[%s0 + $0x80] sm:$0xff]
  %v100 = vld [vmem:[%s0 + $0x88] sm:$0xff]
  %v101 = vld [vmem:[%s0 + $0x90] sm:$0xff]
  %v102 = vld [vmem:[%s0 + $0x98] sm:$0xff]
  %v103 = vld [vmem:[%s0 + $0xa0] sm:$0xff]
  %v104 = vld [vmem:[%s0 + $0xa8] sm:$0xff]
  %v105 = vld [vmem:[%s0 + $0xb0] sm:$0xff]
  %v106 = vld [vmem:[%s0 + $0xb8] sm:$0xff]
  %v107 = vld [vmem:[%s0 + $0xc0] sm:$0xff]
  %v108 = vld [vmem:[%s0 + $0xc8] sm:$0xff]
  %v109 = vld [vmem:[%s0 + $0xd0] sm:$0xff]
  %v110 = vld [vmem:[%s0 + $0xd8] sm:$0xff]
  %v111 = vld [vmem:[%s0 + $0xe0] sm:$0xff]
  %v112 = vld [vmem:[%s0 + $0xe8] sm:$0xff]
  %v113 = vld [vmem:[%s0 + $0xf0] sm:$0xff]
  %v114 = vld [vmem:[%s0 + $0xf8] sm:$0xff]
  %v115 = vld [vmem:[%s0 + $0x100] sm:$0xff]
  %v116 = vld [vmem:[%s0 + $0x108] sm:$0xff]
  %v117 = vld [vmem:[%s0 + $0x110] sm:$0xff]
  %v118 = vld [vmem:[%s0 + $0x118] sm:$0xff]
  %v119 = vld [vmem:[%s0 + $0x120] sm:$0xff]
  %v120 = vld [vmem:[%s0 + $0x128] sm:$0xff]
  %v121 = vld [vmem:[%s0 + $0x130] sm:$0xff]
  %v122 = vld [vmem:[%s0 + $0x138] sm:$0xff]
  %v123 = vld [vmem:[%s0 + $0x140] sm:$0xff]
  %v124 = vld [vmem:[%s0 + $0x148] sm:$0xff]
  %v125 = vld [vmem:[%s0 + $0x150] sm:$0xff]
  %v126 = vld [vmem:[%s0 + $0x158] sm:$0xff]
  %v127 = vld [vmem:[%s0 + $0x160] sm:$0xff]
  %v128 = vld [vmem:[%s0 + $0x168] sm:$0xff]
  %v129 = vld [vmem:[%s0 + $0x170] sm:$0xff]
  %v130 = vld [vmem:[%s0 + $0x178] sm:$0xff]
  %v131 = vld [vmem:[%s0 + $0x180] sm:$0xff]
  %v132 = vld [vmem:[%s0 + $0x188] sm:$0xff]
  %v133 = vld [vmem:[%s0 + $0x190] sm:$0xff]
  %v134 = vld [vmem:[%s0 + $0x198] sm:$0xff]
  %v135 = vld [vmem:[%s0 + $0x1a0] sm:$0xff]
  %v136 = vld [vmem:[%s0 + $0x1a8] sm:$0xff]
  %v137 = vld [vmem:[%s0 + $0x1b0] sm:$0xff]
  %v138 = vld [vmem:[%s0 + $0x1b8] sm:$0xff]
  %v139 = vld [vmem:[%s0 + $0x1c0] sm:$0xff]
  %v140 = vld [vmem:[%s0 + $0x1c8] sm:$0xff]
  %v141 = vld [vmem:[%s0 + $0x1d0] sm:$0xff]
  %v142 = vld [vmem:[%s0 + $0x1d8] sm:$0xff]
  %v143 = vld [vmem:[%s0 + $0x1e0] sm:$0xff]
  %v144 = vld [vmem:[%s0 + $0x1e8] sm:$0xff]
  %v145 = vld [vmem:[%s0 + $0x1f0] sm:$0xff]
  %v146 = vld [vmem:[%s0 + $0x1f8] sm:$0xff]
  %v147 = vunpack.c.l.bf16 %v83
  %v148 = vunpack.c.h.bf16 %v83
  %v149 = vunpack.c.l.bf16 %v84
  %v150 = vunpack.c.h.bf16 %v84
  %v151 = vunpack.c.l.bf16 %v85
  %v152 = vunpack.c.h.bf16 %v85
  %v153 = vunpack.c.l.bf16 %v86
  %v154 = vunpack.c.h.bf16 %v86
  %v155 = vunpack.c.l.bf16 %v87
  %v156 = vunpack.c.h.bf16 %v87
  %v157 = vunpack.c.l.bf16 %v88
  %v158 = vunpack.c.h.bf16 %v88
  %v159 = vunpack.c.l.bf16 %v89
  %v160 = vunpack.c.h.bf16 %v89
  %v161 = vunpack.c.l.bf16 %v90
  %v162 = vunpack.c.h.bf16 %v90
  %v163 = vunpack.c.l.bf16 %v91
  %v164 = vunpack.c.h.bf16 %v91
  %v165 = vunpack.c.l.bf16 %v92
  %v166 = vunpack.c.h.bf16 %v92
  %v167 = vunpack.c.l.bf16 %v93
  %v168 = vunpack.c.h.bf16 %v93
  %v169 = vunpack.c.l.bf16 %v94
  %v170 = vunpack.c.h.bf16 %v94
  %v171 = vunpack.c.l.bf16 %v95
  %v172 = vunpack.c.h.bf16 %v95
  %v173 = vunpack.c.l.bf16 %v96
  %v174 = vunpack.c.h.bf16 %v96
  %v175 = vunpack.c.l.bf16 %v97
  %v176 = vunpack.c.h.bf16 %v97
  %v177 = vunpack.c.l.bf16 %v98
  %v178 = vunpack.c.h.bf16 %v98
  %v179 = vunpack.c.l.bf16 %v99
  %v180 = vunpack.c.h.bf16 %v99
  %v181 = vunpack.c.l.bf16 %v100
  %v182 = vunpack.c.h.bf16 %v100
  %v183 = vunpack.c.l.bf16 %v101
  %v184 = vunpack.c.h.bf16 %v101
  %v185 = vunpack.c.l.bf16 %v102
  %v186 = vunpack.c.h.bf16 %v102
  %v187 = vunpack.c.l.bf16 %v103
  %v188 = vunpack.c.h.bf16 %v103
  %v189 = vunpack.c.l.bf16 %v104
  %v190 = vunpack.c.h.bf16 %v104
  %v191 = vunpack.c.l.bf16 %v105
  %v192 = vunpack.c.h.bf16 %v105
  %v193 = vunpack.c.l.bf16 %v106
  %v194 = vunpack.c.h.bf16 %v106
  %v195 = vunpack.c.l.bf16 %v107
  %v196 = vunpack.c.h.bf16 %v107
  %v197 = vunpack.c.l.bf16 %v108
  %v198 = vunpack.c.h.bf16 %v108
  %v199 = vunpack.c.l.bf16 %v109
  %v200 = vunpack.c.h.bf16 %v109
  %v201 = vunpack.c.l.bf16 %v110
  %v202 = vunpack.c.h.bf16 %v110
  %v203 = vunpack.c.l.bf16 %v111
  %v204 = vunpack.c.h.bf16 %v111
  %v205 = vunpack.c.l.bf16 %v112
  %v206 = vunpack.c.h.bf16 %v112
  %v207 = vunpack.c.l.bf16 %v113
  %v208 = vunpack.c.h.bf16 %v113
  %v209 = vunpack.c.l.bf16 %v114
  %v210 = vunpack.c.h.bf16 %v114
  %v211 = vunpack.c.l.bf16 %v115
  %v212 = vunpack.c.h.bf16 %v115
  %v213 = vunpack.c.l.bf16 %v116
  %v214 = vunpack.c.h.bf16 %v116
  %v215 = vunpack.c.l.bf16 %v117
  %v216 = vunpack.c.h.bf16 %v117
  %v217 = vunpack.c.l.bf16 %v118
  %v218 = vunpack.c.h.bf16 %v118
  %v219 = vunpack.c.l.bf16 %v119
  %v220 = vunpack.c.h.bf16 %v119
  %v221 = vunpack.c.l.bf16 %v120
  %v222 = vunpack.c.h.bf16 %v120
  %v223 = vunpack.c.l.bf16 %v121
  %v224 = vunpack.c.h.bf16 %v121
  %v225 = vunpack.c.l.bf16 %v122
  %v226 = vunpack.c.h.bf16 %v122
  %v227 = vunpack.c.l.bf16 %v123
  %v228 = vunpack.c.h.bf16 %v123
  %v229 = vunpack.c.l.bf16 %v124
  %v230 = vunpack.c.h.bf16 %v124
  %v231 = vunpack.c.l.bf16 %v125
  %v232 = vunpack.c.h.bf16 %v125
  %v233 = vunpack.c.l.bf16 %v126
  %v234 = vunpack.c.h.bf16 %v126
  %v235 = vunpack.c.l.bf16 %v127
  %v236 = vunpack.c.h.bf16 %v127
  %v237 = vunpack.c.l.bf16 %v128
  %v238 = vunpack.c.h.bf16 %v128
  %v239 = vunpack.c.l.bf16 %v129
  %v240 = vunpack.c.h.bf16 %v129
  %v241 = vunpack.c.l.bf16 %v130
  %v242 = vunpack.c.h.bf16 %v130
  %v243 = vunpack.c.l.bf16 %v131
  %v244 = vunpack.c.h.bf16 %v131
  %v245 = vunpack.c.l.bf16 %v132
  %v246 = vunpack.c.h.bf16 %v132
  %v247 = vunpack.c.l.bf16 %v133
  %v248 = vunpack.c.h.bf16 %v133
  %v249 = vunpack.c.l.bf16 %v134
  %v250 = vunpack.c.h.bf16 %v134
  %v251 = vunpack.c.l.bf16 %v135
  %v252 = vunpack.c.h.bf16 %v135
  %v253 = vunpack.c.l.bf16 %v136
  %v254 = vunpack.c.h.bf16 %v136
  %v255 = vunpack.c.l.bf16 %v137
  %v256 = vunpack.c.h.bf16 %v137
  %v257 = vunpack.c.l.bf16 %v138
  %v258 = vunpack.c.h.bf16 %v138
  %v259 = vunpack.c.l.bf16 %v139
  %v260 = vunpack.c.h.bf16 %v139
  %v261 = vunpack.c.l.bf16 %v140
  %v262 = vunpack.c.h.bf16 %v140
  %v263 = vunpack.c.l.bf16 %v141
  %v264 = vunpack.c.h.bf16 %v141
  %v265 = vunpack.c.l.bf16 %v142
  %v266 = vunpack.c.h.bf16 %v142
  %v267 = vunpack.c.l.bf16 %v143
  %v268 = vunpack.c.h.bf16 %v143
  %v269 = vunpack.c.l.bf16 %v144
  %v270 = vunpack.c.h.bf16 %v144
  %v271 = vunpack.c.l.bf16 %v145
  %v272 = vunpack.c.h.bf16 %v145
  %v273 = vunpack.c.l.bf16 %v146
  %v274 = vunpack.c.h.bf16 %v146
  %v275 = vmax.f32 %v147, 0.0
  %v276 = vmax.f32 %v148, 0.0
  %v277 = vmax.f32 %v149, 0.0
  %v278 = vmax.f32 %v150, 0.0
  %v279 = vmax.f32 %v151, 0.0
  %v280 = vmax.f32 %v152, 0.0
  %v281 = vmax.f32 %v153, 0.0
  %v282 = vmax.f32 %v154, 0.0
  %v283 = vmax.f32 %v155, 0.0
  %v284 = vmax.f32 %v156, 0.0
  %v285 = vmax.f32 %v157, 0.0
  %v286 = vmax.f32 %v158, 0.0
  %v287 = vmax.f32 %v159, 0.0
  %v288 = vmax.f32 %v160, 0.0
  %v289 = vmax.f32 %v161, 0.0
  %v290 = vmax.f32 %v162, 0.0
  %v291 = vmax.f32 %v163, 0.0
  %v292 = vmax.f32 %v164, 0.0
  %v293 = vmax.f32 %v165, 0.0
  %v294 = vmax.f32 %v166, 0.0
  %v295 = vmax.f32 %v167, 0.0
  %v296 = vmax.f32 %v168, 0.0
  %v297 = vmax.f32 %v169, 0.0
  %v298 = vmax.f32 %v170, 0.0
  %v299 = vmax.f32 %v171, 0.0
  %v300 = vmax.f32 %v172, 0.0
  %v301 = vmax.f32 %v173, 0.0
  %v302 = vmax.f32 %v174, 0.0
  %v303 = vmax.f32 %v175, 0.0
  %v304 = vmax.f32 %v176, 0.0
  %v305 = vmax.f32 %v177, 0.0
  %v306 = vmax.f32 %v178, 0.0
  %v307 = vmax.f32 %v179, 0.0
  %v308 = vmax.f32 %v180, 0.0
  %v309 = vmax.f32 %v181, 0.0
  %v310 = vmax.f32 %v182, 0.0
  %v311 = vmax.f32 %v183, 0.0
  %v312 = vmax.f32 %v184, 0.0
  %v313 = vmax.f32 %v185, 0.0
  %v314 = vmax.f32 %v186, 0.0
  %v315 = vmax.f32 %v187, 0.0
  %v316 = vmax.f32 %v188, 0.0
  %v317 = vmax.f32 %v189, 0.0
  %v318 = vmax.f32 %v190, 0.0
  %v319 = vmax.f32 %v191, 0.0
  %v320 = vmax.f32 %v192, 0.0
  %v321 = vmax.f32 %v193, 0.0
  %v322 = vmax.f32 %v194, 0.0
  %v323 = vmax.f32 %v195, 0.0
  %v324 = vmax.f32 %v196, 0.0
  %v325 = vmax.f32 %v197, 0.0
  %v326 = vmax.f32 %v198, 0.0
  %v327 = vmax.f32 %v199, 0.0
  %v328 = vmax.f32 %v200, 0.0
  %v329 = vmax.f32 %v201, 0.0
  %v330 = vmax.f32 %v202, 0.0
  %v331 = vmax.f32 %v203, 0.0
  %v332 = vmax.f32 %v204, 0.0
  %v333 = vmax.f32 %v205, 0.0
  %v334 = vmax.f32 %v206, 0.0
  %v335 = vmax.f32 %v207, 0.0
  %v336 = vmax.f32 %v208, 0.0
  %v337 = vmax.f32 %v209, 0.0
  %v338 = vmax.f32 %v210, 0.0
  %v339 = vmax.f32 %v211, 0.0
  %v340 = vmax.f32 %v212, 0.0
  %v341 = vmax.f32 %v213, 0.0
  %v342 = vmax.f32 %v214, 0.0
  %v343 = vmax.f32 %v215, 0.0
  %v344 = vmax.f32 %v216, 0.0
  %v345 = vmax.f32 %v217, 0.0
  %v346 = vmax.f32 %v218, 0.0
  %v347 = vmax.f32 %v219, 0.0
  %v348 = vmax.f32 %v220, 0.0
  %v349 = vmax.f32 %v221, 0.0
  %v350 = vmax.f32 %v222, 0.0
  %v351 = vmax.f32 %v223, 0.0
  %v352 = vmax.f32 %v224, 0.0
  %v353 = vmax.f32 %v225, 0.0
  %v354 = vmax.f32 %v226, 0.0
  %v355 = vmax.f32 %v227, 0.0
  %v356 = vmax.f32 %v228, 0.0
  %v357 = vmax.f32 %v229, 0.0
  %v358 = vmax.f32 %v230, 0.0
  %v359 = vmax.f32 %v231, 0.0
  %v360 = vmax.f32 %v232, 0.0
  %v361 = vmax.f32 %v233, 0.0
  %v362 = vmax.f32 %v234, 0.0
  %v363 = vmax.f32 %v235, 0.0
  %v364 = vmax.f32 %v236, 0.0
  %v365 = vmax.f32 %v237, 0.0
  %v366 = vmax.f32 %v238, 0.0
  %v367 = vmax.f32 %v239, 0.0
  %v368 = vmax.f32 %v240, 0.0
  %v369 = vmax.f32 %v241, 0.0
  %v370 = vmax.f32 %v242, 0.0
  %v371 = vmax.f32 %v243, 0.0
  %v372 = vmax.f32 %v244, 0.0
  %v373 = vmax.f32 %v245, 0.0
  %v374 = vmax.f32 %v246, 0.0
  %v375 = vmax.f32 %v247, 0.0
  %v376 = vmax.f32 %v248, 0.0
  %v377 = vmax.f32 %v249, 0.0
  %v378 = vmax.f32 %v250, 0.0
  %v379 = vmax.f32 %v251, 0.0
  %v380 = vmax.f32 %v252, 0.0
  %v381 = vmax.f32 %v253, 0.0
  %v382 = vmax.f32 %v254, 0.0
  %v383 = vmax.f32 %v255, 0.0
  %v384 = vmax.f32 %v256, 0.0
  %v385 = vmax.f32 %v257, 0.0
  %v386 = vmax.f32 %v258, 0.0
  %v387 = vmax.f32 %v259, 0.0
  %v388 = vmax.f32 %v260, 0.0
  %v389 = vmax.f32 %v261, 0.0
  %v390 = vmax.f32 %v262, 0.0
  %v391 = vmax.f32 %v263, 0.0
  %v392 = vmax.f32 %v264, 0.0
  %v393 = vmax.f32 %v265, 0.0
  %v394 = vmax.f32 %v266, 0.0
  %v395 = vmax.f32 %v267, 0.0
  %v396 = vmax.f32 %v268, 0.0
  %v397 = vmax.f32 %v269, 0.0
  %v398 = vmax.f32 %v270, 0.0
  %v399 = vmax.f32 %v271, 0.0
  %v400 = vmax.f32 %v272, 0.0
  %v401 = vmax.f32 %v273, 0.0
  %v402 = vmax.f32 %v274, 0.0
  %v403 = vpack.c.bf16 %v277, %v275
  %v404 = vpack.c.bf16 %v278, %v276
  %v405 = vpack.c.bf16 %v281, %v279
  %v406 = vpack.c.bf16 %v282, %v280
  %v407 = vpack.c.bf16 %v285, %v283
  %v408 = vpack.c.bf16 %v286, %v284
  %v409 = vpack.c.bf16 %v289, %v287
  %v410 = vpack.c.bf16 %v290, %v288
  %v411 = vpack.c.bf16 %v293, %v291
  %v412 = vpack.c.bf16 %v294, %v292
  %v413 = vpack.c.bf16 %v297, %v295
  %v414 = vpack.c.bf16 %v298, %v296
  %v415 = vpack.c.bf16 %v301, %v299
  %v416 = vpack.c.bf16 %v302, %v300
  %v417 = vpack.c.bf16 %v305, %v303
  %v418 = vpack.c.bf16 %v306, %v304
  %v419 = vpack.c.bf16 %v309, %v307
  %v420 = vpack.c.bf16 %v310, %v308
  %v421 = vpack.c.bf16 %v313, %v311
  %v422 = vpack.c.bf16 %v314, %v312
  %v423 = vpack.c.bf16 %v317, %v315
  %v424 = vpack.c.bf16 %v318, %v316
  %v425 = vpack.c.bf16 %v321, %v319
  %v426 = vpack.c.bf16 %v322, %v320
  %v427 = vpack.c.bf16 %v325, %v323
  %v428 = vpack.c.bf16 %v326, %v324
  %v429 = vpack.c.bf16 %v329, %v327
  %v430 = vpack.c.bf16 %v330, %v328
  %v431 = vpack.c.bf16 %v333, %v331
  %v432 = vpack.c.bf16 %v334, %v332
  %v433 = vpack.c.bf16 %v337, %v335
  %v434 = vpack.c.bf16 %v338, %v336
  %v435 = vpack.c.bf16 %v341, %v339
  %v436 = vpack.c.bf16 %v342, %v340
  %v437 = vpack.c.bf16 %v345, %v343
  %v438 = vpack.c.bf16 %v346, %v344
  %v439 = vpack.c.bf16 %v349, %v347
  %v440 = vpack.c.bf16 %v350, %v348
  %v441 = vpack.c.bf16 %v353, %v351
  %v442 = vpack.c.bf16 %v354, %v352
  %v443 = vpack.c.bf16 %v357, %v355
  %v444 = vpack.c.bf16 %v358, %v356
  %v445 = vpack.c.bf16 %v361, %v359
  %v446 = vpack.c.bf16 %v362, %v360
  %v447 = vpack.c.bf16 %v365, %v363
  %v448 = vpack.c.bf16 %v366, %v364
  %v449 = vpack.c.bf16 %v369, %v367
  %v450 = vpack.c.bf16 %v370, %v368
  %v451 = vpack.c.bf16 %v373, %v371
  %v452 = vpack.c.bf16 %v374, %v372
  %v453 = vpack.c.bf16 %v377, %v375
  %v454 = vpack.c.bf16 %v378, %v376
  %v455 = vpack.c.bf16 %v381, %v379
  %v456 = vpack.c.bf16 %v382, %v380
  %v457 = vpack.c.bf16 %v385, %v383
  %v458 = vpack.c.bf16 %v386, %v384
  %v459 = vpack.c.bf16 %v389, %v387
  %v460 = vpack.c.bf16 %v390, %v388
  %v461 = vpack.c.bf16 %v393, %v391
  %v462 = vpack.c.bf16 %v394, %v392
  %v463 = vpack.c.bf16 %v397, %v395
  %v464 = vpack.c.bf16 %v398, %v396
  %v465 = vpack.c.bf16 %v401, %v399
  %v466 = vpack.c.bf16 %v402, %v400
  %v467 = vld [vmem:[#allocation2] sm:$0xff]
  %v468 = vld [vmem:[#allocation2 + $0x8] sm:$0xff]
  %v469 = vld [vmem:[#allocation2 + $0x10] sm:$0xff]
  %v470 = vld [vmem:[#allocation2 + $0x18] sm:$0xff]
  %v471 = vld [vmem:[#allocation2 + $0x20] sm:$0xff]
  %v472 = vld [vmem:[#allocation2 + $0x28] sm:$0xff]
  %v473 = vld [vmem:[#allocation2 + $0x30] sm:$0xff]
  %v474 = vld [vmem:[#allocation2 + $0x38] sm:$0xff]
  %v475 = vld [vmem:[#allocation2 + $0x40] sm:$0xff]
  %v476 = vld [vmem:[#allocation2 + $0x48] sm:$0xff]
  %v477 = vld [vmem:[#allocation2 + $0x50] sm:$0xff]
  %v478 = vld [vmem:[#allocation2 + $0x58] sm:$0xff]
  %v479 = vld [vmem:[#allocation2 + $0x60] sm:$0xff]
  %v480 = vld [vmem:[#allocation2 + $0x68] sm:$0xff]
  %v481 = vld [vmem:[#allocation2 + $0x70] sm:$0xff]
  %v482 = vld [vmem:[#allocation2 + $0x78] sm:$0xff]
  %v483 = vld [vmem:[#allocation2 + $0x80] sm:$0xff]
  %v484 = vld [vmem:[#allocation2 + $0x88] sm:$0xff]
  %v485 = vld [vmem:[#allocation2 + $0x90] sm:$0xff]
  %v486 = vld [vmem:[#allocation2 + $0x98] sm:$0xff]
  %v487 = vld [vmem:[#allocation2 + $0xa0] sm:$0xff]
  %v488 = vld [vmem:[#allocation2 + $0xa8] sm:$0xff]
  %v489 = vld [vmem:[#allocation2 + $0xb0] sm:$0xff]
  %v490 = vld [vmem:[#allocation2 + $0xb8] sm:$0xff]
  %v491 = vld [vmem:[#allocation2 + $0xc0] sm:$0xff]
  %v492 = vld [vmem:[#allocation2 + $0xc8] sm:$0xff]
  %v493 = vld [vmem:[#allocation2 + $0xd0] sm:$0xff]
  %v494 = vld [vmem:[#allocation2 + $0xd8] sm:$0xff]
  %v495 = vld [vmem:[#allocation2 + $0xe0] sm:$0xff]
  %v496 = vld [vmem:[#allocation2 + $0xe8] sm:$0xff]
  %v497 = vld [vmem:[#allocation2 + $0xf0] sm:$0xff]
  %v498 = vld [vmem:[#allocation2 + $0xf8] sm:$0xff]
  %v499 = vld [vmem:[#allocation2 + $0x100] sm:$0xff]
  %v500 = vld [vmem:[#allocation2 + $0x108] sm:$0xff]
  %v501 = vld [vmem:[#allocation2 + $0x110] sm:$0xff]
  %v502 = vld [vmem:[#allocation2 + $0x118] sm:$0xff]
  %v503 = vld [vmem:[#allocation2 + $0x120] sm:$0xff]
  %v504 = vld [vmem:[#allocation2 + $0x128] sm:$0xff]
  %v505 = vld [vmem:[#allocation2 + $0x130] sm:$0xff]
  %v506 = vld [vmem:[#allocation2 + $0x138] sm:$0xff]
  %v507 = vld [vmem:[#allocation2 + $0x140] sm:$0xff]
  %v508 = vld [vmem:[#allocation2 + $0x148] sm:$0xff]
  %v509 = vld [vmem:[#allocation2 + $0x150] sm:$0xff]
  %v510 = vld [vmem:[#allocation2 + $0x158] sm:$0xff]
  %v511 = vld [vmem:[#allocation2 + $0x160] sm:$0xff]
  %v512 = vld [vmem:[#allocation2 + $0x168] sm:$0xff]
  %v513 = vld [vmem:[#allocation2 + $0x170] sm:$0xff]
  %v514 = vld [vmem:[#allocation2 + $0x178] sm:$0xff]
  %v515 = vld [vmem:[#allocation2 + $0x180] sm:$0xff]
  %v516 = vld [vmem:[#allocation2 + $0x188] sm:$0xff]
  %v517 = vld [vmem:[#allocation2 + $0x190] sm:$0xff]
  %v518 = vld [vmem:[#allocation2 + $0x198] sm:$0xff]
  %v519 = vld [vmem:[#allocation2 + $0x1a0] sm:$0xff]
  %v520 = vld [vmem:[#allocation2 + $0x1a8] sm:$0xff]
  %v521 = vld [vmem:[#allocation2 + $0x1b0] sm:$0xff]
  %v522 = vld [vmem:[#allocation2 + $0x1b8] sm:$0xff]
  %v523 = vld [vmem:[#allocation2 + $0x1c0] sm:$0xff]
  %v524 = vld [vmem:[#allocation2 + $0x1c8] sm:$0xff]
  %v525 = vld [vmem:[#allocation2 + $0x1d0] sm:$0xff]
  %v526 = vld [vmem:[#allocation2 + $0x1d8] sm:$0xff]
  %v527 = vld [vmem:[#allocation2 + $0x1e0] sm:$0xff]
  %v528 = vld [vmem:[#allocation2 + $0x1e8] sm:$0xff]
  %v529 = vld [vmem:[#allocation2 + $0x1f0] sm:$0xff]
  %v530 = vld [vmem:[#allocation2 + $0x1f8] sm:$0xff]
  %v531 = vld [vmem:[%s1] sm:$0xf]
  %v532 = vld [vmem:[%s1 + $0x4] sm:$0xf]
  %v533 = vld [vmem:[%s1 + $0x8] sm:$0xf]
  %v534 = vld [vmem:[%s1 + $0xc] sm:$0xf]
  %v535 = vld [vmem:[%s1 + $0x10] sm:$0xf]
  %v536 = vld [vmem:[%s1 + $0x14] sm:$0xf]
  %v537 = vld [vmem:[%s1 + $0x18] sm:$0xf]
  %v538 = vld [vmem:[%s1 + $0x1c] sm:$0xf]
  %v539 = vld [vmem:[%s1 + $0x20] sm:$0xf]
  %v540 = vld [vmem:[%s1 + $0x24] sm:$0xf]
  %v541 = vld [vmem:[%s1 + $0x28] sm:$0xf]
  %v542 = vld [vmem:[%s1 + $0x2c] sm:$0xf]
  %v543 = vld [vmem:[%s1 + $0x30] sm:$0xf]
  %v544 = vld [vmem:[%s1 + $0x34] sm:$0xf]
  %v545 = vld [vmem:[%s1 + $0x38] sm:$0xf]
  %v546 = vld [vmem:[%s1 + $0x3c] sm:$0xf]
  %v547 = vld [vmem:[%s1 + $0x40] sm:$0xf]
  %v548 = vld [vmem:[%s1 + $0x44] sm:$0xf]
  %v549 = vld [vmem:[%s1 + $0x48] sm:$0xf]
  %v550 = vld [vmem:[%s1 + $0x4c] sm:$0xf]
  %v551 = vld [vmem:[%s1 + $0x50] sm:$0xf]
  %v552 = vld [vmem:[%s1 + $0x54] sm:$0xf]
  %v553 = vld [vmem:[%s1 + $0x58] sm:$0xf]
  %v554 = vld [vmem:[%s1 + $0x5c] sm:$0xf]
  %v555 = vld [vmem:[%s1 + $0x60] sm:$0xf]
  %v556 = vld [vmem:[%s1 + $0x64] sm:$0xf]
  %v557 = vld [vmem:[%s1 + $0x68] sm:$0xf]
  %v558 = vld [vmem:[%s1 + $0x6c] sm:$0xf]
  %v559 = vld [vmem:[%s1 + $0x70] sm:$0xf]
  %v560 = vld [vmem:[%s1 + $0x74] sm:$0xf]
  %v561 = vld [vmem:[%s1 + $0x78] sm:$0xf]
  %v562 = vld [vmem:[%s1 + $0x7c] sm:$0xf]
  %v595 = vunpack.c.l.b16 %v531
  %v596 = vunpack.c.l.b16 %v532
  %v597 = vunpack.c.l.b16 %v533
  %v598 = vunpack.c.l.b16 %v534
  %v599 = vunpack.c.l.b16 %v535
  %v600 = vunpack.c.l.b16 %v536
  %v601 = vunpack.c.l.b16 %v537
  %v602 = vunpack.c.l.b16 %v538
  %v603 = vunpack.c.l.b16 %v539
  %v604 = vunpack.c.l.b16 %v540
  %v605 = vunpack.c.l.b16 %v541
  %v606 = vunpack.c.l.b16 %v542
  %v607 = vunpack.c.l.b16 %v543
  %v608 = vunpack.c.l.b16 %v544
  %v609 = vunpack.c.l.b16 %v545
  %v610 = vunpack.c.l.b16 %v546
  %v611 = vunpack.c.l.b16 %v547
  %v612 = vunpack.c.l.b16 %v548
  %v613 = vunpack.c.l.b16 %v549
  %v614 = vunpack.c.l.b16 %v550
  %v615 = vunpack.c.l.b16 %v551
  %v616 = vunpack.c.l.b16 %v552
  %v617 = vunpack.c.l.b16 %v553
  %v618 = vunpack.c.l.b16 %v554
  %v619 = vunpack.c.l.b16 %v555
  %v620 = vunpack.c.l.b16 %v556
  %v621 = vunpack.c.l.b16 %v557
  %v622 = vunpack.c.l.b16 %v558
  %v623 = vunpack.c.l.b16 %v559
  %v624 = vunpack.c.l.b16 %v560
  %v625 = vunpack.c.l.b16 %v561
  %v626 = vunpack.c.l.b16 %v562
  %v627 = vpack.c.b16 %v596, %v595
  %v628 = vpack.c.b16 %v598, %v597
  %v629 = vpack.c.b16 %v600, %v599
  %v630 = vpack.c.b16 %v602, %v601
  %v631 = vpack.c.b16 %v604, %v603
  %v632 = vpack.c.b16 %v606, %v605
  %v633 = vpack.c.b16 %v608, %v607
  %v634 = vpack.c.b16 %v610, %v609
  %v635 = vpack.c.b16 %v612, %v611
  %v636 = vpack.c.b16 %v614, %v613
  %v637 = vpack.c.b16 %v616, %v615
  %v638 = vpack.c.b16 %v618, %v617
  %v639 = vpack.c.b16 %v620, %v619
  %v640 = vpack.c.b16 %v622, %v621
  %v641 = vpack.c.b16 %v624, %v623
  %v642 = vpack.c.b16 %v626, %v625
  %659 = vmatprep.subr.bf16.mxu0 0
  %660 = vmatpush1.bf16.msra.mxu0 %v634
  %661 = vmatprep.subr.bf16.mxu0 0
  %662 = vmatpush1.bf16.msra.mxu0 %v633
  %663 = vmatprep.subr.bf16.mxu0 0
  %664 = vmatpush1.bf16.msra.mxu0 %v632
  %665 = vmatprep.subr.bf16.mxu0 0
  %666 = vmatpush1.bf16.msra.mxu0 %v631
  %667 = vmatprep.subr.bf16.mxu0 0
  %668 = vmatpush1.bf16.msra.mxu0 %v630
  %669 = vmatprep.subr.bf16.mxu0 0
  %670 = vmatpush1.bf16.msra.mxu0 %v629
  %671 = vmatprep.subr.bf16.mxu0 0
  %672 = vmatpush1.bf16.msra.mxu0 %v628
  %673 = vmatprep.subr.bf16.mxu0 0
  %674 = vmatpush1.bf16.msra.mxu0 %v627
  %675 = vmatprep.subr.bf16.mxu0 0
  %676 = vmatpush2.bf16.msra.mxu0 %v642
  %677 = vmatprep.subr.bf16.mxu0 0
  %678 = vmatpush2.bf16.msra.mxu0 %v641
  %679 = vmatprep.subr.bf16.mxu0 0
  %680 = vmatpush2.bf16.msra.mxu0 %v640
  %681 = vmatprep.subr.bf16.mxu0 0
  %682 = vmatpush2.bf16.msra.mxu0 %v639
  %683 = vmatprep.subr.bf16.mxu0 0
  %684 = vmatpush2.bf16.msra.mxu0 %v638
  %685 = vmatprep.subr.bf16.mxu0 0
  %686 = vmatpush2.bf16.msra.mxu0 %v637
  %687 = vmatprep.subr.bf16.mxu0 0
  %688 = vmatpush2.bf16.msra.mxu0 %v636
  %689 = vmatprep.subr.bf16.mxu0 0
  %690 = vmatpush2.bf16.msra.mxu0 %v635
  %691 = vmatprep.mubr.bf16.mxu0 %v404
  %692 = vmatmul.mubr.bf16.gmra.mxu0 %v403
  %v693 = vpop.f32.mrf.mxu0
  %v694 = vadd.f32 0.0, %v693
  %v695 = vpop.f32.mrf.mxu0
  %v696 = vpop.f32.mrf.mxu0
  %v697 = vadd.f32 0.0, %v696
  %v698 = vpop.f32.mrf.mxu0
  %699 = vmatprep.mubr.bf16.mxu0 %v406
  %700 = vmatmul.mubr.bf16.gmra.mxu0 %v405
  %v701 = vpop.f32.mrf.mxu0
  %v702 = vadd.f32 0.0, %v701
  %v703 = vpop.f32.mrf.mxu0
  %v704 = vpop.f32.mrf.mxu0
  %v705 = vadd.f32 0.0, %v704
  %v706 = vpop.f32.mrf.mxu0
  %707 = vmatprep.mubr.bf16.mxu0 %v408
  %708 = vmatmul.mubr.bf16.gmra.mxu0 %v407
  %v709 = vpop.f32.mrf.mxu0
  %v710 = vadd.f32 0.0, %v709
  %v711 = vpop.f32.mrf.mxu0
  %v712 = vpop.f32.mrf.mxu0
  %v713 = vadd.f32 0.0, %v712
  %v714 = vpop.f32.mrf.mxu0
  %715 = vmatprep.mubr.bf16.mxu0 %v410
  %716 = vmatmul.mubr.bf16.gmra.mxu0 %v409
  %v717 = vpop.f32.mrf.mxu0
  %v718 = vadd.f32 0.0, %v717
  %v719 = vpop.f32.mrf.mxu0
  %v720 = vpop.f32.mrf.mxu0
  %v721 = vadd.f32 0.0, %v720
  %v722 = vpop.f32.mrf.mxu0
  %723 = vmatprep.mubr.bf16.mxu0 %v412
  %724 = vmatmul.mubr.bf16.gmra.mxu0 %v411
  %v725 = vpop.f32.mrf.mxu0
  %v726 = vadd.f32 0.0, %v725
  %v727 = vpop.f32.mrf.mxu0
  %v728 = vpop.f32.mrf.mxu0
  %v729 = vadd.f32 0.0, %v728
  %v730 = vpop.f32.mrf.mxu0
  %731 = vmatprep.mubr.bf16.mxu0 %v414
  %732 = vmatmul.mubr.bf16.gmra.mxu0 %v413
  %v733 = vpop.f32.mrf.mxu0
  %v734 = vadd.f32 0.0, %v733
  %v735 = vpop.f32.mrf.mxu0
  %v736 = vpop.f32.mrf.mxu0
  %v737 = vadd.f32 0.0, %v736
  %v738 = vpop.f32.mrf.mxu0
  %739 = vmatprep.mubr.bf16.mxu0 %v416
  %740 = vmatmul.mubr.bf16.gmra.mxu0 %v415
  %v741 = vpop.f32.mrf.mxu0
  %v742 = vadd.f32 0.0, %v741
  %v743 = vpop.f32.mrf.mxu0
  %v744 = vpop.f32.mrf.mxu0
  %v745 = vadd.f32 0.0, %v744
  %v746 = vpop.f32.mrf.mxu0
  %747 = vmatprep.mubr.bf16.mxu0 %v418
  %748 = vmatmul.mubr.bf16.gmra.mxu0 %v417
  %v749 = vpop.f32.mrf.mxu0
  %v750 = vadd.f32 0.0, %v749
  %v751 = vpop.f32.mrf.mxu0
  %v752 = vpop.f32.mrf.mxu0
  %v753 = vadd.f32 0.0, %v752
  %v754 = vpop.f32.mrf.mxu0
  %755 = vmatprep.mubr.bf16.mxu0 %v420
  %756 = vmatmul.mubr.bf16.gmra.mxu0 %v419
  %v757 = vpop.f32.mrf.mxu0
  %v758 = vadd.f32 0.0, %v757
  %v759 = vpop.f32.mrf.mxu0
  %v760 = vpop.f32.mrf.mxu0
  %v761 = vadd.f32 0.0, %v760
  %v762 = vpop.f32.mrf.mxu0
  %763 = vmatprep.mubr.bf16.mxu0 %v422
  %764 = vmatmul.mubr.bf16.gmra.mxu0 %v421
  %v765 = vpop.f32.mrf.mxu0
  %v766 = vadd.f32 0.0, %v765
  %v767 = vpop.f32.mrf.mxu0
  %v768 = vpop.f32.mrf.mxu0
  %v769 = vadd.f32 0.0, %v768
  %v770 = vpop.f32.mrf.mxu0
  %771 = vmatprep.mubr.bf16.mxu0 %v424
  %772 = vmatmul.mubr.bf16.gmra.mxu0 %v423
  %v773 = vpop.f32.mrf.mxu0
  %v774 = vadd.f32 0.0, %v773
  %v775 = vpop.f32.mrf.mxu0
  %v776 = vpop.f32.mrf.mxu0
  %v777 = vadd.f32 0.0, %v776
  %v778 = vpop.f32.mrf.mxu0
  %779 = vmatprep.mubr.bf16.mxu0 %v426
  %780 = vmatmul.mubr.bf16.gmra.mxu0 %v425
  %v781 = vpop.f32.mrf.mxu0
  %v782 = vadd.f32 0.0, %v781
  %v783 = vpop.f32.mrf.mxu0
  %v784 = vpop.f32.mrf.mxu0
  %v785 = vadd.f32 0.0, %v784
  %v786 = vpop.f32.mrf.mxu0
  %787 = vmatprep.mubr.bf16.mxu0 %v428
  %788 = vmatmul.mubr.bf16.gmra.mxu0 %v427
  %v789 = vpop.f32.mrf.mxu0
  %v790 = vadd.f32 0.0, %v789
  %v791 = vpop.f32.mrf.mxu0
  %v792 = vpop.f32.mrf.mxu0
  %v793 = vadd.f32 0.0, %v792
  %v794 = vpop.f32.mrf.mxu0
  %795 = vmatprep.mubr.bf16.mxu0 %v430
  %796 = vmatmul.mubr.bf16.gmra.mxu0 %v429
  %v797 = vpop.f32.mrf.mxu0
  %v798 = vadd.f32 0.0, %v797
  %v799 = vpop.f32.mrf.mxu0
  %v800 = vpop.f32.mrf.mxu0
  %v801 = vadd.f32 0.0, %v800
  %v802 = vpop.f32.mrf.mxu0
  %803 = vmatprep.mubr.bf16.mxu0 %v432
  %804 = vmatmul.mubr.bf16.gmra.mxu0 %v431
  %v805 = vpop.f32.mrf.mxu0
  %v806 = vadd.f32 0.0, %v805
  %v807 = vpop.f32.mrf.mxu0
  %v808 = vpop.f32.mrf.mxu0
  %v809 = vadd.f32 0.0, %v808
  %v810 = vpop.f32.mrf.mxu0
  %811 = vmatprep.mubr.bf16.mxu0 %v434
  %812 = vmatmul.mubr.bf16.gmra.mxu0 %v433
  %v813 = vpop.f32.mrf.mxu0
  %v814 = vadd.f32 0.0, %v813
  %v815 = vpop.f32.mrf.mxu0
  %v816 = vpop.f32.mrf.mxu0
  %v817 = vadd.f32 0.0, %v816
  %v818 = vpop.f32.mrf.mxu0
  %819 = vmatprep.mubr.bf16.mxu0 %v436
  %820 = vmatmul.mubr.bf16.gmra.mxu0 %v435
  %v821 = vpop.f32.mrf.mxu0
  %v822 = vadd.f32 0.0, %v821
  %v823 = vpop.f32.mrf.mxu0
  %v824 = vpop.f32.mrf.mxu0
  %v825 = vadd.f32 0.0, %v824
  %v826 = vpop.f32.mrf.mxu0
  %827 = vmatprep.mubr.bf16.mxu0 %v438
  %828 = vmatmul.mubr.bf16.gmra.mxu0 %v437
  %v829 = vpop.f32.mrf.mxu0
  %v830 = vadd.f32 0.0, %v829
  %v831 = vpop.f32.mrf.mxu0
  %v832 = vpop.f32.mrf.mxu0
  %v833 = vadd.f32 0.0, %v832
  %v834 = vpop.f32.mrf.mxu0
  %835 = vmatprep.mubr.bf16.mxu0 %v440
  %836 = vmatmul.mubr.bf16.gmra.mxu0 %v439
  %v837 = vpop.f32.mrf.mxu0
  %v838 = vadd.f32 0.0, %v837
  %v839 = vpop.f32.mrf.mxu0
  %v840 = vpop.f32.mrf.mxu0
  %v841 = vadd.f32 0.0, %v840
  %v842 = vpop.f32.mrf.mxu0
  %843 = vmatprep.mubr.bf16.mxu0 %v442
  %844 = vmatmul.mubr.bf16.gmra.mxu0 %v441
  %v845 = vpop.f32.mrf.mxu0
  %v846 = vadd.f32 0.0, %v845
  %v847 = vpop.f32.mrf.mxu0
  %v848 = vpop.f32.mrf.mxu0
  %v849 = vadd.f32 0.0, %v848
  %v850 = vpop.f32.mrf.mxu0
  %851 = vmatprep.mubr.bf16.mxu0 %v444
  %852 = vmatmul.mubr.bf16.gmra.mxu0 %v443
  %v853 = vpop.f32.mrf.mxu0
  %v854 = vadd.f32 0.0, %v853
  %v855 = vpop.f32.mrf.mxu0
  %v856 = vpop.f32.mrf.mxu0
  %v857 = vadd.f32 0.0, %v856
  %v858 = vpop.f32.mrf.mxu0
  %859 = vmatprep.mubr.bf16.mxu0 %v446
  %860 = vmatmul.mubr.bf16.gmra.mxu0 %v445
  %v861 = vpop.f32.mrf.mxu0
  %v862 = vadd.f32 0.0, %v861
  %v863 = vpop.f32.mrf.mxu0
  %v864 = vpop.f32.mrf.mxu0
  %v865 = vadd.f32 0.0, %v864
  %v866 = vpop.f32.mrf.mxu0
  %867 = vmatprep.mubr.bf16.mxu0 %v448
  %868 = vmatmul.mubr.bf16.gmra.mxu0 %v447
  %v869 = vpop.f32.mrf.mxu0
  %v870 = vadd.f32 0.0, %v869
  %v871 = vpop.f32.mrf.mxu0
  %v872 = vpop.f32.mrf.mxu0
  %v873 = vadd.f32 0.0, %v872
  %v874 = vpop.f32.mrf.mxu0
  %875 = vmatprep.mubr.bf16.mxu0 %v450
  %876 = vmatmul.mubr.bf16.gmra.mxu0 %v449
  %v877 = vpop.f32.mrf.mxu0
  %v878 = vadd.f32 0.0, %v877
  %v879 = vpop.f32.mrf.mxu0
  %v880 = vpop.f32.mrf.mxu0
  %v881 = vadd.f32 0.0, %v880
  %v882 = vpop.f32.mrf.mxu0
  %883 = vmatprep.mubr.bf16.mxu0 %v452
  %884 = vmatmul.mubr.bf16.gmra.mxu0 %v451
  %v885 = vpop.f32.mrf.mxu0
  %v886 = vadd.f32 0.0, %v885
  %v887 = vpop.f32.mrf.mxu0
  %v888 = vpop.f32.mrf.mxu0
  %v889 = vadd.f32 0.0, %v888
  %v890 = vpop.f32.mrf.mxu0
  %891 = vmatprep.mubr.bf16.mxu0 %v454
  %892 = vmatmul.mubr.bf16.gmra.mxu0 %v453
  %v893 = vpop.f32.mrf.mxu0
  %v894 = vadd.f32 0.0, %v893
  %v895 = vpop.f32.mrf.mxu0
  %v896 = vpop.f32.mrf.mxu0
  %v897 = vadd.f32 0.0, %v896
  %v898 = vpop.f32.mrf.mxu0
  %899 = vmatprep.mubr.bf16.mxu0 %v456
  %900 = vmatmul.mubr.bf16.gmra.mxu0 %v455
  %v901 = vpop.f32.mrf.mxu0
  %v902 = vadd.f32 0.0, %v901
  %v903 = vpop.f32.mrf.mxu0
  %v904 = vpop.f32.mrf.mxu0
  %v905 = vadd.f32 0.0, %v904
  %v906 = vpop.f32.mrf.mxu0
  %907 = vmatprep.mubr.bf16.mxu0 %v458
  %908 = vmatmul.mubr.bf16.gmra.mxu0 %v457
  %v909 = vpop.f32.mrf.mxu0
  %v910 = vadd.f32 0.0, %v909
  %v911 = vpop.f32.mrf.mxu0
  %v912 = vpop.f32.mrf.mxu0
  %v913 = vadd.f32 0.0, %v912
  %v914 = vpop.f32.mrf.mxu0
  %915 = vmatprep.mubr.bf16.mxu0 %v460
  %916 = vmatmul.mubr.bf16.gmra.mxu0 %v459
  %v917 = vpop.f32.mrf.mxu0
  %v918 = vadd.f32 0.0, %v917
  %v919 = vpop.f32.mrf.mxu0
  %v920 = vpop.f32.mrf.mxu0
  %v921 = vadd.f32 0.0, %v920
  %v922 = vpop.f32.mrf.mxu0
  %923 = vmatprep.mubr.bf16.mxu0 %v462
  %924 = vmatmul.mubr.bf16.gmra.mxu0 %v461
  %v925 = vpop.f32.mrf.mxu0
  %v926 = vadd.f32 0.0, %v925
  %v927 = vpop.f32.mrf.mxu0
  %v928 = vpop.f32.mrf.mxu0
  %v929 = vadd.f32 0.0, %v928
  %v930 = vpop.f32.mrf.mxu0
  %931 = vmatprep.mubr.bf16.mxu0 %v464
  %932 = vmatmul.mubr.bf16.gmra.mxu0 %v463
  %v933 = vpop.f32.mrf.mxu0
  %v934 = vadd.f32 0.0, %v933
  %v935 = vpop.f32.mrf.mxu0
  %v936 = vpop.f32.mrf.mxu0
  %v937 = vadd.f32 0.0, %v936
  %v938 = vpop.f32.mrf.mxu0
  %939 = vmatprep.mubr.bf16.mxu0 %v466
  %940 = vmatmul.mubr.bf16.gmra.mxu0 %v465
  %v941 = vpop.f32.mrf.mxu0
  %v942 = vadd.f32 0.0, %v941
  %v943 = vpop.f32.mrf.mxu0
  %v944 = vpop.f32.mrf.mxu0
  %v945 = vadd.f32 0.0, %v944
  %v946 = vpop.f32.mrf.mxu0
  %947 = vdwg.mxu0
  %v948 = vadd.f32 %v467, %v694
  %v949 = vadd.f32 %v468, %v697
  %v950 = vadd.f32 %v469, %v702
  %v951 = vadd.f32 %v470, %v705
  %v952 = vadd.f32 %v471, %v710
  %v953 = vadd.f32 %v472, %v713
  %v954 = vadd.f32 %v473, %v718
  %v955 = vadd.f32 %v474, %v721
  %v956 = vadd.f32 %v475, %v726
  %v957 = vadd.f32 %v476, %v729
  %v958 = vadd.f32 %v477, %v734
  %v959 = vadd.f32 %v478, %v737
  %v960 = vadd.f32 %v479, %v742
  %v961 = vadd.f32 %v480, %v745
  %v962 = vadd.f32 %v481, %v750
  %v963 = vadd.f32 %v482, %v753
  %v964 = vadd.f32 %v483, %v758
  %v965 = vadd.f32 %v484, %v761
  %v966 = vadd.f32 %v485, %v766
  %v967 = vadd.f32 %v486, %v769
  %v968 = vadd.f32 %v487, %v774
  %v969 = vadd.f32 %v488, %v777
  %v970 = vadd.f32 %v489, %v782
  %v971 = vadd.f32 %v490, %v785
  %v972 = vadd.f32 %v491, %v790
  %v973 = vadd.f32 %v492, %v793
  %v974 = vadd.f32 %v493, %v798
  %v975 = vadd.f32 %v494, %v801
  %v976 = vadd.f32 %v495, %v806
  %v977 = vadd.f32 %v496, %v809
  %v978 = vadd.f32 %v497, %v814
  %v979 = vadd.f32 %v498, %v817
  %v980 = vadd.f32 %v499, %v822
  %v981 = vadd.f32 %v500, %v825
  %v982 = vadd.f32 %v501, %v830
  %v983 = vadd.f32 %v502, %v833
  %v984 = vadd.f32 %v503, %v838
  %v985 = vadd.f32 %v504, %v841
  %v986 = vadd.f32 %v505, %v846
  %v987 = vadd.f32 %v506, %v849
  %v988 = vadd.f32 %v507, %v854
  %v989 = vadd.f32 %v508, %v857
  %v990 = vadd.f32 %v509, %v862
  %v991 = vadd.f32 %v510, %v865
  %v992 = vadd.f32 %v511, %v870
  %v993 = vadd.f32 %v512, %v873
  %v994 = vadd.f32 %v513, %v878
  %v995 = vadd.f32 %v514, %v881
  %v996 = vadd.f32 %v515, %v886
  %v997 = vadd.f32 %v516, %v889
  %v998 = vadd.f32 %v517, %v894
  %v999 = vadd.f32 %v518, %v897
  %v1000 = vadd.f32 %v519, %v902
  %v1001 = vadd.f32 %v520, %v905
  %v1002 = vadd.f32 %v521, %v910
  %v1003 = vadd.f32 %v522, %v913
  %v1004 = vadd.f32 %v523, %v918
  %v1005 = vadd.f32 %v524, %v921
  %v1006 = vadd.f32 %v525, %v926
  %v1007 = vadd.f32 %v526, %v929
  %v1008 = vadd.f32 %v527, %v934
  %v1009 = vadd.f32 %v528, %v937
  %v1010 = vadd.f32 %v529, %v942
  %v1011 = vadd.f32 %v530, %v945
  %1012 = vst [vmem:[#allocation2] sm:$0xff] %v948
  %1013 = vst [vmem:[#allocation2 + $0x8] sm:$0xff] %v949
  %1014 = vst [vmem:[#allocation2 + $0x10] sm:$0xff] %v950
  %1015 = vst [vmem:[#allocation2 + $0x18] sm:$0xff] %v951
  %1016 = vst [vmem:[#allocation2 + $0x20] sm:$0xff] %v952
  %1017 = vst [vmem:[#allocation2 + $0x28] sm:$0xff] %v953
  %1018 = vst [vmem:[#allocation2 + $0x30] sm:$0xff] %v954
  %1019 = vst [vmem:[#allocation2 + $0x38] sm:$0xff] %v955
  %1020 = vst [vmem:[#allocation2 + $0x40] sm:$0xff] %v956
  %1021 = vst [vmem:[#allocation2 + $0x48] sm:$0xff] %v957
  %1022 = vst [vmem:[#allocation2 + $0x50] sm:$0xff] %v958
  %1023 = vst [vmem:[#allocation2 + $0x58] sm:$0xff] %v959
  %1024 = vst [vmem:[#allocation2 + $0x60] sm:$0xff] %v960
  %1025 = vst [vmem:[#allocation2 + $0x68] sm:$0xff] %v961
  %1026 = vst [vmem:[#allocation2 + $0x70] sm:$0xff] %v962
  %1027 = vst [vmem:[#allocation2 + $0x78] sm:$0xff] %v963
  %1028 = vst [vmem:[#allocation2 + $0x80] sm:$0xff] %v964
  %1029 = vst [vmem:[#allocation2 + $0x88] sm:$0xff] %v965
  %1030 = vst [vmem:[#allocation2 + $0x90] sm:$0xff] %v966
  %1031 = vst [vmem:[#allocation2 + $0x98] sm:$0xff] %v967
  %1032 = vst [vmem:[#allocation2 + $0xa0] sm:$0xff] %v968
  %1033 = vst [vmem:[#allocation2 + $0xa8] sm:$0xff] %v969
  %1034 = vst [vmem:[#allocation2 + $0xb0] sm:$0xff] %v970
  %1035 = vst [vmem:[#allocation2 + $0xb8] sm:$0xff] %v971
  %1036 = vst [vmem:[#allocation2 + $0xc0] sm:$0xff] %v972
  %1037 = vst [vmem:[#allocation2 + $0xc8] sm:$0xff] %v973
  %1038 = vst [vmem:[#allocation2 + $0xd0] sm:$0xff] %v974
  %1039 = vst [vmem:[#allocation2 + $0xd8] sm:$0xff] %v975
  %1040 = vst [vmem:[#allocation2 + $0xe0] sm:$0xff] %v976
  %1041 = vst [vmem:[#allocation2 + $0xe8] sm:$0xff] %v977
  %1042 = vst [vmem:[#allocation2 + $0xf0] sm:$0xff] %v978
  %1043 = vst [vmem:[#allocation2 + $0xf8] sm:$0xff] %v979
  %1044 = vst [vmem:[#allocation2 + $0x100] sm:$0xff] %v980
  %1045 = vst [vmem:[#allocation2 + $0x108] sm:$0xff] %v981
  %1046 = vst [vmem:[#allocation2 + $0x110] sm:$0xff] %v982
  %1047 = vst [vmem:[#allocation2 + $0x118] sm:$0xff] %v983
  %1048 = vst [vmem:[#allocation2 + $0x120] sm:$0xff] %v984
  %1049 = vst [vmem:[#allocation2 + $0x128] sm:$0xff] %v985
  %1050 = vst [vmem:[#allocation2 + $0x130] sm:$0xff] %v986
  %1051 = vst [vmem:[#allocation2 + $0x138] sm:$0xff] %v987
  %1052 = vst [vmem:[#allocation2 + $0x140] sm:$0xff] %v988
  %1053 = vst [vmem:[#allocation2 + $0x148] sm:$0xff] %v989
  %1054 = vst [vmem:[#allocation2 + $0x150] sm:$0xff] %v990
  %1055 = vst [vmem:[#allocation2 + $0x158] sm:$0xff] %v991
  %1056 = vst [vmem:[#allocation2 + $0x160] sm:$0xff] %v992
  %1057 = vst [vmem:[#allocation2 + $0x168] sm:$0xff] %v993
  %1058 = vst [vmem:[#allocation2 + $0x170] sm:$0xff] %v994
  %1059 = vst [vmem:[#allocation2 + $0x178] sm:$0xff] %v995
  %1060 = vst [vmem:[#allocation2 + $0x180] sm:$0xff] %v996
  %1061 = vst [vmem:[#allocation2 + $0x188] sm:$0xff] %v997
  %1062 = vst [vmem:[#allocation2 + $0x190] sm:$0xff] %v998
  %1063 = vst [vmem:[#allocation2 + $0x198] sm:$0xff] %v999
  %1064 = vst [vmem:[#allocation2 + $0x1a0] sm:$0xff] %v1000
  %1065 = vst [vmem:[#allocation2 + $0x1a8] sm:$0xff] %v1001
  %1066 = vst [vmem:[#allocation2 + $0x1b0] sm:$0xff] %v1002
  %1067 = vst [vmem:[#allocation2 + $0x1b8] sm:$0xff] %v1003
  %1068 = vst [vmem:[#allocation2 + $0x1c0] sm:$0xff] %v1004
  %1069 = vst [vmem:[#allocation2 + $0x1c8] sm:$0xff] %v1005
  %1070 = vst [vmem:[#allocation2 + $0x1d0] sm:$0xff] %v1006
  %1071 = vst [vmem:[#allocation2 + $0x1d8] sm:$0xff] %v1007
  %1072 = vst [vmem:[#allocation2 + $0x1e0] sm:$0xff] %v1008
  %1073 = vst [vmem:[#allocation2 + $0x1e8] sm:$0xff] %v1009
  %1074 = vst [vmem:[#allocation2 + $0x1f0] sm:$0xff] %v1010
  %1075 = vst [vmem:[#allocation2 + $0x1f8] sm:$0xff] %v1011
  // Predicated region
  $region18: #{_lambda_.35} parent=0 // pred_check
    %p1076 = pneg %p15
  $region19: #{_lambda_.35} parent=0 // pred_check_branch
    %1078 = sbr.rel (%p1076) target = $region21
  $region20: #{_lambda_.35} parent=0 // pred_region
    %v1079 = vld [vmem:[#allocation2] sm:$0xff]
    %v1080 = vld [vmem:[#allocation2 + $0x8] sm:$0xff]
    %v1081 = vld [vmem:[#allocation2 + $0x10] sm:$0xff]
    %v1082 = vld [vmem:[#allocation2 + $0x18] sm:$0xff]
    %v1083 = vld [vmem:[#allocation2 + $0x20] sm:$0xff]
    %v1084 = vld [vmem:[#allocation2 + $0x28] sm:$0xff]
    %v1085 = vld [vmem:[#allocation2 + $0x30] sm:$0xff]
    %v1086 = vld [vmem:[#allocation2 + $0x38] sm:$0xff]
    %v1087 = vld [vmem:[#allocation2 + $0x40] sm:$0xff]
    %v1088 = vld [vmem:[#allocation2 + $0x48] sm:$0xff]
    %v1089 = vld [vmem:[#allocation2 + $0x50] sm:$0xff]
    %v1090 = vld [vmem:[#allocation2 + $0x58] sm:$0xff]
    %v1091 = vld [vmem:[#allocation2 + $0x60] sm:$0xff]
    %v1092 = vld [vmem:[#allocation2 + $0x68] sm:$0xff]
    %v1093 = vld [vmem:[#allocation2 + $0x70] sm:$0xff]
    %v1094 = vld [vmem:[#allocation2 + $0x78] sm:$0xff]
    %v1095 = vld [vmem:[#allocation2 + $0x80] sm:$0xff]
    %v1096 = vld [vmem:[#allocation2 + $0x88] sm:$0xff]
    %v1097 = vld [vmem:[#allocation2 + $0x90] sm:$0xff]
    %v1098 = vld [vmem:[#allocation2 + $0x98] sm:$0xff]
    %v1099 = vld [vmem:[#allocation2 + $0xa0] sm:$0xff]
    %v1100 = vld [vmem:[#allocation2 + $0xa8] sm:$0xff]
    %v1101 = vld [vmem:[#allocation2 + $0xb0] sm:$0xff]
    %v1102 = vld [vmem:[#allocation2 + $0xb8] sm:$0xff]
    %v1103 = vld [vmem:[#allocation2 + $0xc0] sm:$0xff]
    %v1104 = vld [vmem:[#allocation2 + $0xc8] sm:$0xff]
    %v1105 = vld [vmem:[#allocation2 + $0xd0] sm:$0xff]
    %v1106 = vld [vmem:[#allocation2 + $0xd8] sm:$0xff]
    %v1107 = vld [vmem:[#allocation2 + $0xe0] sm:$0xff]
    %v1108 = vld [vmem:[#allocation2 + $0xe8] sm:$0xff]
    %v1109 = vld [vmem:[#allocation2 + $0xf0] sm:$0xff]
    %v1110 = vld [vmem:[#allocation2 + $0xf8] sm:$0xff]
    %v1111 = vld [vmem:[#allocation2 + $0x100] sm:$0xff]
    %v1112 = vld [vmem:[#allocation2 + $0x108] sm:$0xff]
    %v1113 = vld [vmem:[#allocation2 + $0x110] sm:$0xff]
    %v1114 = vld [vmem:[#allocation2 + $0x118] sm:$0xff]
    %v1115 = vld [vmem:[#allocation2 + $0x120] sm:$0xff]
    %v1116 = vld [vmem:[#allocation2 + $0x128] sm:$0xff]
    %v1117 = vld [vmem:[#allocation2 + $0x130] sm:$0xff]
    %v1118 = vld [vmem:[#allocation2 + $0x138] sm:$0xff]
    %v1119 = vld [vmem:[#allocation2 + $0x140] sm:$0xff]
    %v1120 = vld [vmem:[#allocation2 + $0x148] sm:$0xff]
    %v1121 = vld [vmem:[#allocation2 + $0x150] sm:$0xff]
    %v1122 = vld [vmem:[#allocation2 + $0x158] sm:$0xff]
    %v1123 = vld [vmem:[#allocation2 + $0x160] sm:$0xff]
    %v1124 = vld [vmem:[#allocation2 + $0x168] sm:$0xff]
    %v1125 = vld [vmem:[#allocation2 + $0x170] sm:$0xff]
    %v1126 = vld [vmem:[#allocation2 + $0x178] sm:$0xff]
    %v1127 = vld [vmem:[#allocation2 + $0x180] sm:$0xff]
    %v1128 = vld [vmem:[#allocation2 + $0x188] sm:$0xff]
    %v1129 = vld [vmem:[#allocation2 + $0x190] sm:$0xff]
    %v1130 = vld [vmem:[#allocation2 + $0x198] sm:$0xff]
    %v1131 = vld [vmem:[#allocation2 + $0x1a0] sm:$0xff]
    %v1132 = vld [vmem:[#allocation2 + $0x1a8] sm:$0xff]
    %v1133 = vld [vmem:[#allocation2 + $0x1b0] sm:$0xff]
    %v1134 = vld [vmem:[#allocation2 + $0x1b8] sm:$0xff]
    %v1135 = vld [vmem:[#allocation2 + $0x1c0] sm:$0xff]
    %v1136 = vld [vmem:[#allocation2 + $0x1c8] sm:$0xff]
    %v1137 = vld [vmem:[#allocation2 + $0x1d0] sm:$0xff]
    %v1138 = vld [vmem:[#allocation2 + $0x1d8] sm:$0xff]
    %v1139 = vld [vmem:[#allocation2 + $0x1e0] sm:$0xff]
    %v1140 = vld [vmem:[#allocation2 + $0x1e8] sm:$0xff]
    %v1141 = vld [vmem:[#allocation2 + $0x1f0] sm:$0xff]
    %v1142 = vld [vmem:[#allocation2 + $0x1f8] sm:$0xff]
    %v1143 = vld [vmem:[%s2] sm:$0x1]
    %v1145 = vlaneseq
    %v1146 = vshrl.u32 %v1145, 7
    %v1147 = vsub.s32 0, %v1146
    %v1148 = vrot.slane %v1143, %v1147
    %v1150 = vadd.f32 %v1079, %v1148
    %v1151 = vadd.f32 %v1080, %v1148
    %v1152 = vadd.f32 %v1081, %v1148
    %v1153 = vadd.f32 %v1082, %v1148
    %v1154 = vadd.f32 %v1083, %v1148
    %v1155 = vadd.f32 %v1084, %v1148
    %v1156 = vadd.f32 %v1085, %v1148
    %v1157 = vadd.f32 %v1086, %v1148
    %v1158 = vadd.f32 %v1087, %v1148
    %v1159 = vadd.f32 %v1088, %v1148
    %v1160 = vadd.f32 %v1089, %v1148
    %v1161 = vadd.f32 %v1090, %v1148
    %v1162 = vadd.f32 %v1091, %v1148
    %v1163 = vadd.f32 %v1092, %v1148
    %v1164 = vadd.f32 %v1093, %v1148
    %v1165 = vadd.f32 %v1094, %v1148
    %v1166 = vadd.f32 %v1095, %v1148
    %v1167 = vadd.f32 %v1096, %v1148
    %v1168 = vadd.f32 %v1097, %v1148
    %v1169 = vadd.f32 %v1098, %v1148
    %v1170 = vadd.f32 %v1099, %v1148
    %v1171 = vadd.f32 %v1100, %v1148
    %v1172 = vadd.f32 %v1101, %v1148
    %v1173 = vadd.f32 %v1102, %v1148
    %v1174 = vadd.f32 %v1103, %v1148
    %v1175 = vadd.f32 %v1104, %v1148
    %v1176 = vadd.f32 %v1105, %v1148
    %v1177 = vadd.f32 %v1106, %v1148
    %v1178 = vadd.f32 %v1107, %v1148
    %v1179 = vadd.f32 %v1108, %v1148
    %v1180 = vadd.f32 %v1109, %v1148
    %v1181 = vadd.f32 %v1110, %v1148
    %v1182 = vadd.f32 %v1111, %v1148
    %v1183 = vadd.f32 %v1112, %v1148
    %v1184 = vadd.f32 %v1113, %v1148
    %v1185 = vadd.f32 %v1114, %v1148
    %v1186 = vadd.f32 %v1115, %v1148
    %v1187 = vadd.f32 %v1116, %v1148
    %v1188 = vadd.f32 %v1117, %v1148
    %v1189 = vadd.f32 %v1118, %v1148
    %v1190 = vadd.f32 %v1119, %v1148
    %v1191 = vadd.f32 %v1120, %v1148
    %v1192 = vadd.f32 %v1121, %v1148
    %v1193 = vadd.f32 %v1122, %v1148
    %v1194 = vadd.f32 %v1123, %v1148
    %v1195 = vadd.f32 %v1124, %v1148
    %v1196 = vadd.f32 %v1125, %v1148
    %v1197 = vadd.f32 %v1126, %v1148
    %v1198 = vadd.f32 %v1127, %v1148
    %v1199 = vadd.f32 %v1128, %v1148
    %v1200 = vadd.f32 %v1129, %v1148
    %v1201 = vadd.f32 %v1130, %v1148
    %v1202 = vadd.f32 %v1131, %v1148
    %v1203 = vadd.f32 %v1132, %v1148
    %v1204 = vadd.f32 %v1133, %v1148
    %v1205 = vadd.f32 %v1134, %v1148
    %v1206 = vadd.f32 %v1135, %v1148
    %v1207 = vadd.f32 %v1136, %v1148
    %v1208 = vadd.f32 %v1137, %v1148
    %v1209 = vadd.f32 %v1138, %v1148
    %v1210 = vadd.f32 %v1139, %v1148
    %v1211 = vadd.f32 %v1140, %v1148
    %v1212 = vadd.f32 %v1141, %v1148
    %v1213 = vadd.f32 %v1142, %v1148
    %v1214 = vpack.c.bf16 %v1151, %v1150
    %v1215 = vpack.c.bf16 %v1153, %v1152
    %v1216 = vpack.c.bf16 %v1155, %v1154
    %v1217 = vpack.c.bf16 %v1157, %v1156
    %v1218 = vpack.c.bf16 %v1159, %v1158
    %v1219 = vpack.c.bf16 %v1161, %v1160
    %v1220 = vpack.c.bf16 %v1163, %v1162
    %v1221 = vpack.c.bf16 %v1165, %v1164
    %v1222 = vpack.c.bf16 %v1167, %v1166
    %v1223 = vpack.c.bf16 %v1169, %v1168
    %v1224 = vpack.c.bf16 %v1171, %v1170
    %v1225 = vpack.c.bf16 %v1173, %v1172
    %v1226 = vpack.c.bf16 %v1175, %v1174
    %v1227 = vpack.c.bf16 %v1177, %v1176
    %v1228 = vpack.c.bf16 %v1179, %v1178
    %v1229 = vpack.c.bf16 %v1181, %v1180
    %v1230 = vpack.c.bf16 %v1183, %v1182
    %v1231 = vpack.c.bf16 %v1185, %v1184
    %v1232 = vpack.c.bf16 %v1187, %v1186
    %v1233 = vpack.c.bf16 %v1189, %v1188
    %v1234 = vpack.c.bf16 %v1191, %v1190
    %v1235 = vpack.c.bf16 %v1193, %v1192
    %v1236 = vpack.c.bf16 %v1195, %v1194
    %v1237 = vpack.c.bf16 %v1197, %v1196
    %v1238 = vpack.c.bf16 %v1199, %v1198
    %v1239 = vpack.c.bf16 %v1201, %v1200
    %v1240 = vpack.c.bf16 %v1203, %v1202
    %v1241 = vpack.c.bf16 %v1205, %v1204
    %v1242 = vpack.c.bf16 %v1207, %v1206
    %v1243 = vpack.c.bf16 %v1209, %v1208
    %v1244 = vpack.c.bf16 %v1211, %v1210
    %v1245 = vpack.c.bf16 %v1213, %v1212
    %v1278 = vunpack.c.l.b16 %v1214
    %v1279 = vunpack.c.h.b16 %v1214
    %v1280 = vunpack.c.l.b16 %v1215
    %v1281 = vunpack.c.h.b16 %v1215
    %v1282 = vunpack.c.l.b16 %v1216
    %v1283 = vunpack.c.h.b16 %v1216
    %v1284 = vunpack.c.l.b16 %v1217
    %v1285 = vunpack.c.h.b16 %v1217
    %v1286 = vunpack.c.l.b16 %v1218
    %v1287 = vunpack.c.h.b16 %v1218
    %v1288 = vunpack.c.l.b16 %v1219
    %v1289 = vunpack.c.h.b16 %v1219
    %v1290 = vunpack.c.l.b16 %v1220
    %v1291 = vunpack.c.h.b16 %v1220
    %v1292 = vunpack.c.l.b16 %v1221
    %v1293 = vunpack.c.h.b16 %v1221
    %v1294 = vunpack.c.l.b16 %v1222
    %v1295 = vunpack.c.h.b16 %v1222
    %v1296 = vunpack.c.l.b16 %v1223
    %v1297 = vunpack.c.h.b16 %v1223
    %v1298 = vunpack.c.l.b16 %v1224
    %v1299 = vunpack.c.h.b16 %v1224
    %v1300 = vunpack.c.l.b16 %v1225
    %v1301 = vunpack.c.h.b16 %v1225
    %v1302 = vunpack.c.l.b16 %v1226
    %v1303 = vunpack.c.h.b16 %v1226
    %v1304 = vunpack.c.l.b16 %v1227
    %v1305 = vunpack.c.h.b16 %v1227
    %v1306 = vunpack.c.l.b16 %v1228
    %v1307 = vunpack.c.h.b16 %v1228
    %v1308 = vunpack.c.l.b16 %v1229
    %v1309 = vunpack.c.h.b16 %v1229
    %v1310 = vunpack.c.l.b16 %v1230
    %v1311 = vunpack.c.h.b16 %v1230
    %v1312 = vunpack.c.l.b16 %v1231
    %v1313 = vunpack.c.h.b16 %v1231
    %v1314 = vunpack.c.l.b16 %v1232
    %v1315 = vunpack.c.h.b16 %v1232
    %v1316 = vunpack.c.l.b16 %v1233
    %v1317 = vunpack.c.h.b16 %v1233
    %v1318 = vunpack.c.l.b16 %v1234
    %v1319 = vunpack.c.h.b16 %v1234
    %v1320 = vunpack.c.l.b16 %v1235
    %v1321 = vunpack.c.h.b16 %v1235
    %v1322 = vunpack.c.l.b16 %v1236
    %v1323 = vunpack.c.h.b16 %v1236
    %v1324 = vunpack.c.l.b16 %v1237
    %v1325 = vunpack.c.h.b16 %v1237
    %v1326 = vunpack.c.l.b16 %v1238
    %v1327 = vunpack.c.h.b16 %v1238
    %v1328 = vunpack.c.l.b16 %v1239
    %v1329 = vunpack.c.h.b16 %v1239
    %v1330 = vunpack.c.l.b16 %v1240
    %v1331 = vunpack.c.h.b16 %v1240
    %v1332 = vunpack.c.l.b16 %v1241
    %v1333 = vunpack.c.h.b16 %v1241
    %v1334 = vunpack.c.l.b16 %v1242
    %v1335 = vunpack.c.h.b16 %v1242
    %v1336 = vunpack.c.l.b16 %v1243
    %v1337 = vunpack.c.h.b16 %v1243
    %v1338 = vunpack.c.l.b16 %v1244
    %v1339 = vunpack.c.h.b16 %v1244
    %v1340 = vunpack.c.l.b16 %v1245
    %v1341 = vunpack.c.h.b16 %v1245
    %v1342 = vpack.c.b16 %v1278, %v1278
    %v1343 = vpack.c.b16 %v1279, %v1279
    %v1344 = vpack.c.b16 %v1280, %v1280
    %v1345 = vpack.c.b16 %v1281, %v1281
    %v1346 = vpack.c.b16 %v1282, %v1282
    %v1347 = vpack.c.b16 %v1283, %v1283
    %v1348 = vpack.c.b16 %v1284, %v1284
    %v1349 = vpack.c.b16 %v1285, %v1285
    %v1350 = vpack.c.b16 %v1286, %v1286
    %v1351 = vpack.c.b16 %v1287, %v1287
    %v1352 = vpack.c.b16 %v1288, %v1288
    %v1353 = vpack.c.b16 %v1289, %v1289
    %v1354 = vpack.c.b16 %v1290, %v1290
    %v1355 = vpack.c.b16 %v1291, %v1291
    %v1356 = vpack.c.b16 %v1292, %v1292
    %v1357 = vpack.c.b16 %v1293, %v1293
    %v1358 = vpack.c.b16 %v1294, %v1294
    %v1359 = vpack.c.b16 %v1295, %v1295
    %v1360 = vpack.c.b16 %v1296, %v1296
    %v1361 = vpack.c.b16 %v1297, %v1297
    %v1362 = vpack.c.b16 %v1298, %v1298
    %v1363 = vpack.c.b16 %v1299, %v1299
    %v1364 = vpack.c.b16 %v1300, %v1300
    %v1365 = vpack.c.b16 %v1301, %v1301
    %v1366 = vpack.c.b16 %v1302, %v1302
    %v1367 = vpack.c.b16 %v1303, %v1303
    %v1368 = vpack.c.b16 %v1304, %v1304
    %v1369 = vpack.c.b16 %v1305, %v1305
    %v1370 = vpack.c.b16 %v1306, %v1306
    %v1371 = vpack.c.b16 %v1307, %v1307
    %v1372 = vpack.c.b16 %v1308, %v1308
    %v1373 = vpack.c.b16 %v1309, %v1309
    %v1374 = vpack.c.b16 %v1310, %v1310
    %v1375 = vpack.c.b16 %v1311, %v1311
    %v1376 = vpack.c.b16 %v1312, %v1312
    %v1377 = vpack.c.b16 %v1313, %v1313
    %v1378 = vpack.c.b16 %v1314, %v1314
    %v1379 = vpack.c.b16 %v1315, %v1315
    %v1380 = vpack.c.b16 %v1316, %v1316
    %v1381 = vpack.c.b16 %v1317, %v1317
    %v1382 = vpack.c.b16 %v1318, %v1318
    %v1383 = vpack.c.b16 %v1319, %v1319
    %v1384 = vpack.c.b16 %v1320, %v1320
    %v1385 = vpack.c.b16 %v1321, %v1321
    %v1386 = vpack.c.b16 %v1322, %v1322
    %v1387 = vpack.c.b16 %v1323, %v1323
    %v1388 = vpack.c.b16 %v1324, %v1324
    %v1389 = vpack.c.b16 %v1325, %v1325
    %v1390 = vpack.c.b16 %v1326, %v1326
    %v1391 = vpack.c.b16 %v1327, %v1327
    %v1392 = vpack.c.b16 %v1328, %v1328
    %v1393 = vpack.c.b16 %v1329, %v1329
    %v1394 = vpack.c.b16 %v1330, %v1330
    %v1395 = vpack.c.b16 %v1331, %v1331
    %v1396 = vpack.c.b16 %v1332, %v1332
    %v1397 = vpack.c.b16 %v1333, %v1333
    %v1398 = vpack.c.b16 %v1334, %v1334
    %v1399 = vpack.c.b16 %v1335, %v1335
    %v1400 = vpack.c.b16 %v1336, %v1336
    %v1401 = vpack.c.b16 %v1337, %v1337
    %v1402 = vpack.c.b16 %v1338, %v1338
    %v1403 = vpack.c.b16 %v1339, %v1339
    %v1404 = vpack.c.b16 %v1340, %v1340
    %v1405 = vpack.c.b16 %v1341, %v1341
    %1470 = vst [vmem:[%s3] sm:$0xf] %v1342
    %1471 = vst [vmem:[%s3 + $0x4] sm:$0xf] %v1343
    %1472 = vst [vmem:[%s3 + $0x8] sm:$0xf] %v1344
    %1473 = vst [vmem:[%s3 + $0xc] sm:$0xf] %v1345
    %1474 = vst [vmem:[%s3 + $0x10] sm:$0xf] %v1346
    %1475 = vst [vmem:[%s3 + $0x14] sm:$0xf] %v1347
    %1476 = vst [vmem:[%s3 + $0x18] sm:$0xf] %v1348
    %1477 = vst [vmem:[%s3 + $0x1c] sm:$0xf] %v1349
    %1478 = vst [vmem:[%s3 + $0x20] sm:$0xf] %v1350
    %1479 = vst [vmem:[%s3 + $0x24] sm:$0xf] %v1351
    %1480 = vst [vmem:[%s3 + $0x28] sm:$0xf] %v1352
    %1481 = vst [vmem:[%s3 + $0x2c] sm:$0xf] %v1353
    %1482 = vst [vmem:[%s3 + $0x30] sm:$0xf] %v1354
    %1483 = vst [vmem:[%s3 + $0x34] sm:$0xf] %v1355
    %1484 = vst [vmem:[%s3 + $0x38] sm:$0xf] %v1356
    %1485 = vst [vmem:[%s3 + $0x3c] sm:$0xf] %v1357
    %1486 = vst [vmem:[%s3 + $0x40] sm:$0xf] %v1358
    %1487 = vst [vmem:[%s3 + $0x44] sm:$0xf] %v1359
    %1488 = vst [vmem:[%s3 + $0x48] sm:$0xf] %v1360
    %1489 = vst [vmem:[%s3 + $0x4c] sm:$0xf] %v1361
    %1490 = vst [vmem:[%s3 + $0x50] sm:$0xf] %v1362
    %1491 = vst [vmem:[%s3 + $0x54] sm:$0xf] %v1363
    %1492 = vst [vmem:[%s3 + $0x58] sm:$0xf] %v1364
    %1493 = vst [vmem:[%s3 + $0x5c] sm:$0xf] %v1365
    %1494 = vst [vmem:[%s3 + $0x60] sm:$0xf] %v1366
    %1495 = vst [vmem:[%s3 + $0x64] sm:$0xf] %v1367
    %1496 = vst [vmem:[%s3 + $0x68] sm:$0xf] %v1368
    %1497 = vst [vmem:[%s3 + $0x6c] sm:$0xf] %v1369
    %1498 = vst [vmem:[%s3 + $0x70] sm:$0xf] %v1370
    %1499 = vst [vmem:[%s3 + $0x74] sm:$0xf] %v1371
    %1500 = vst [vmem:[%s3 + $0x78] sm:$0xf] %v1372
    %1501 = vst [vmem:[%s3 + $0x7c] sm:$0xf] %v1373
    %1502 = vst [vmem:[%s3 + $0x80] sm:$0xf] %v1374
    %1503 = vst [vmem:[%s3 + $0x84] sm:$0xf] %v1375
    %1504 = vst [vmem:[%s3 + $0x88] sm:$0xf] %v1376
    %1505 = vst [vmem:[%s3 + $0x8c] sm:$0xf] %v1377
    %1506 = vst [vmem:[%s3 + $0x90] sm:$0xf] %v1378
    %1507 = vst [vmem:[%s3 + $0x94] sm:$0xf] %v1379
    %1508 = vst [vmem:[%s3 + $0x98] sm:$0xf] %v1380
    %1509 = vst [vmem:[%s3 + $0x9c] sm:$0xf] %v1381
    %1510 = vst [vmem:[%s3 + $0xa0] sm:$0xf] %v1382
    %1511 = vst [vmem:[%s3 + $0xa4] sm:$0xf] %v1383
    %1512 = vst [vmem:[%s3 + $0xa8] sm:$0xf] %v1384
    %1513 = vst [vmem:[%s3 + $0xac] sm:$0xf] %v1385
    %1514 = vst [vmem:[%s3 + $0xb0] sm:$0xf] %v1386
    %1515 = vst [vmem:[%s3 + $0xb4] sm:$0xf] %v1387
    %1516 = vst [vmem:[%s3 + $0xb8] sm:$0xf] %v1388
    %1517 = vst [vmem:[%s3 + $0xbc] sm:$0xf] %v1389
    %1518 = vst [vmem:[%s3 + $0xc0] sm:$0xf] %v1390
    %1519 = vst [vmem:[%s3 + $0xc4] sm:$0xf] %v1391
    %1520 = vst [vmem:[%s3 + $0xc8] sm:$0xf] %v1392
    %1521 = vst [vmem:[%s3 + $0xcc] sm:$0xf] %v1393
    %1522 = vst [vmem:[%s3 + $0xd0] sm:$0xf] %v1394
    %1523 = vst [vmem:[%s3 + $0xd4] sm:$0xf] %v1395
    %1524 = vst [vmem:[%s3 + $0xd8] sm:$0xf] %v1396
    %1525 = vst [vmem:[%s3 + $0xdc] sm:$0xf] %v1397
    %1526 = vst [vmem:[%s3 + $0xe0] sm:$0xf] %v1398
    %1527 = vst [vmem:[%s3 + $0xe4] sm:$0xf] %v1399
    %1528 = vst [vmem:[%s3 + $0xe8] sm:$0xf] %v1400
    %1529 = vst [vmem:[%s3 + $0xec] sm:$0xf] %v1401
    %1530 = vst [vmem:[%s3 + $0xf0] sm:$0xf] %v1402
    %1531 = vst [vmem:[%s3 + $0xf4] sm:$0xf] %v1403
    %1532 = vst [vmem:[%s3 + $0xf8] sm:$0xf] %v1404
    %1533 = vst [vmem:[%s3 + $0xfc] sm:$0xf] %v1405
  $region21: #{_lambda_.35} parent=0 // pred_fallthru
    _
  // Predicated region
  $region22: #{_lambda_.35} parent=0 // pred_check
    _
  $region23: #{_lambda_.35} parent=0 // pred_check_branch
    %1535 = sbr.rel (0) target = $region25
  $region24: #{_lambda_.35} parent=0 // pred_region
    _
  $region25: #{_lambda_.35} parent=0 // pred_fallthru
    _
  // Predicated region
  $region26: #{_lambda_.35} parent=0 // pred_check
    _
  $region27: #{_lambda_.35} parent=0 // pred_check_branch
    %1537 = sbr.rel (0) target = $region29
  $region28: #{_lambda_.35} parent=0 // pred_region
    _
  $region29: #{_lambda_.35} parent=0 // pred_fallthru
    _

</llo_original>
